<compile_context>
chip_gen: v7x
topology: tpu7x:2x2x1
jax: 0.10.0
libtpu: 0.0.40
codegen_flags: <defaults>
</compile_context>

<pallas_src>
import jax
import jax.numpy as jnp
from jax.experimental import pallas as pl
from jax.experimental.pallas import tpu as pltpu

_LANE = 128
_SUBLANE = 8
_VMEM_LIMIT = 48 * 1024 * 1024      # explicit scoped-VMEM limit (safe on v5e/v6e/v7x)
_TILE_BUDGET = 8 * 1024 * 1024      # per-step working-set budget used to pick the H tile


def _round_up(x, m):
    return ((x + m - 1) // m) * m


# --------------------------------------------------------------------------------------
# BN folding + weight packing (wrapper-side, tiny arrays)
# --------------------------------------------------------------------------------------
def _fold_bn(cp, eps=1e-5):
    scale = cp["gamma"] / jnp.sqrt(cp["var"] + eps)
    shift = cp["beta"] - cp["mean"] * scale
    return scale, shift


def _pack_pointwise_weight(cp, in_pos, in_pad, out_pos, out_pad, eps=1e-5):
    """1x1 conv -> (in_pad, out_pad) matmul weight with BN scale folded in."""
    w = cp["weight"]                                   # (Cout, Cin, 1, 1)
    assert w.shape[2] == 1 and w.shape[3] == 1
    scale, shift = _fold_bn(cp, eps)
    w2 = w[:, :, 0, 0].T * scale[None, :]              # (Cin, Cout)
    in_pos = jnp.asarray(in_pos, jnp.int32)
    out_pos = jnp.asarray(out_pos, jnp.int32)
    wp = jnp.zeros((in_pad, out_pad), jnp.float32)
    wp = wp.at[in_pos[:, None], out_pos[None, :]].set(w2)
    bp = jnp.zeros((1, out_pad), jnp.float32).at[0, out_pos].set(shift)
    return wp, bp


def _pack_cv2_weights(cp, h, out_pad, eps=1e-5):
    """Final 1x1 conv -> two (LANE, out_pad) weights matching the xa / xb lane blocks."""
    w = cp["weight"]                                   # (Cout, 2h, 1, 1)
    assert w.shape[2] == 1 and w.shape[3] == 1
    cout = w.shape[0]
    scale, shift = _fold_bn(cp, eps)
    w2 = w[:, :, 0, 0].T * scale[None, :]              # (2h, Cout)
    wa = jnp.zeros((_LANE, out_pad), jnp.float32).at[:h, :cout].set(w2[:h])
    wb = jnp.zeros((_LANE, out_pad), jnp.float32).at[:h, :cout].set(w2[h:])
    bp = jnp.zeros((1, out_pad), jnp.float32).at[0, :cout].set(shift)
    return wa, wb, bp


def _pack_conv_weight(cp, in_pad, out_pad, eps=1e-5):
    """KxK conv -> (KH*KW*in_pad, out_pad) im2col weight with BN scale folded in."""
    w = cp["weight"]                                   # (Cout, Cin, KH, KW)
    cout, cin, kh, kw = w.shape
    assert kh % 2 == 1 and kw % 2 == 1, "even kernel sizes unsupported (auto_pad semantics)"
    scale, shift = _fold_bn(cp, eps)
    w_hwio = jnp.transpose(w, (2, 3, 1, 0)) * scale[None, None, None, :]
    wp = jnp.zeros((kh, kw, in_pad, out_pad), jnp.float32)
    wp = wp.at[:, :, :cin, :cout].set(w_hwio)
    bp = jnp.zeros((1, out_pad), jnp.float32).at[0, :cout].set(shift)
    return wp.reshape(kh * kw * in_pad, out_pad), bp, kh, kw


# --------------------------------------------------------------------------------------
# Kernel 1: fused pointwise (1x1) conv + folded-BN bias + SiLU, split into two halves
# --------------------------------------------------------------------------------------
def _pw_split_kernel(x_ref, w_ref, b_ref, oa_ref, ob_ref):
    # x_ref: (TM, Kp) bf16   w_ref: (Kp, 2*LANE) bf16   b_ref: (1, 2*LANE) f32
    acc = jnp.dot(x_ref[...], w_ref[...], preferred_element_type=jnp.float32)
    y = acc + b_ref[...]
    y = y * jax.nn.sigmoid(y)                          # SiLU in f32
    half = oa_ref.shape[1]                             # 128-aligned lane-block slices
    oa_ref[...] = y[:, :half].astype(oa_ref.dtype)
    ob_ref[...] = y[:, half:].astype(ob_ref.dtype)


def _pointwise_conv_split(x2d, w, bias, *, out_dtype, compute_dtype=jnp.bfloat16, tm=512):
    M, kp = x2d.shape
    cout2 = w.shape[1]
    half = cout2 // 2
    tm = min(tm, _round_up(M, _SUBLANE))
    mp = _round_up(M, tm)
    xw = x2d.astype(compute_dtype)
    if mp != M:
        xw = jnp.pad(xw, ((0, mp - M), (0, 0)))
    itemsize = jnp.dtype(compute_dtype).itemsize
    cost = pl.CostEstimate(
        flops=2 * mp * kp * cout2,
        transcendentals=mp * cout2,
        bytes_accessed=(mp * kp + kp * cout2) * itemsize
        + mp * cout2 * jnp.dtype(out_dtype).itemsize,
    )
    oa, ob = pl.pallas_call(
        _pw_split_kernel,
        out_shape=(jax.ShapeDtypeStruct((mp, half), out_dtype),
                   jax.ShapeDtypeStruct((mp, half), out_dtype)),
        grid_spec=pltpu.PrefetchScalarGridSpec(
            num_scalar_prefetch=0,
            grid=(mp // tm,),
            in_specs=[
                pl.BlockSpec((tm, kp), lambda i: (i, 0)),
                pl.BlockSpec((kp, cout2), lambda i: (0, 0)),
                pl.BlockSpec((1, cout2), lambda i: (0, 0)),
            ],
            out_specs=(pl.BlockSpec((tm, half), lambda i: (i, 0)),
                       pl.BlockSpec((tm, half), lambda i: (i, 0))),
        ),
        compiler_params=pltpu.CompilerParams(
            dimension_semantics=("parallel",),
            vmem_limit_bytes=_VMEM_LIMIT,
        ),
        cost_estimate=cost,
    )(xw, w.astype(compute_dtype), bias)
    return oa[:M], ob[:M]


# --------------------------------------------------------------------------------------
# Kernel 1b: dual-input pointwise (only used when cb is empty, i.e. repeat == 0)
# --------------------------------------------------------------------------------------
def _pw_dual_kernel(a_ref, b_ref, wa_ref, wb_ref, bias_ref, o_ref):
    acc = jnp.dot(a_ref[...], wa_ref[...], preferred_element_type=jnp.float32)
    acc = acc + jnp.dot(b_ref[...], wb_ref[...], preferred_element_type=jnp.float32)
    y = acc + bias_ref[...]
    y = y * jax.nn.sigmoid(y)
    o_ref[...] = y.astype(o_ref.dtype)


def _pointwise_conv_dual(a2d, b2d, wa, wb, bias, *, out_dtype,
                         compute_dtype=jnp.bfloat16, tm=512):
    M, ka = a2d.shape
    kb = b2d.shape[1]
    coutp = wa.shape[1]
    tm = min(tm, _round_up(M, _SUBLANE))
    mp = _round_up(M, tm)
    aw = a2d.astype(compute_dtype)
    bw = b2d.astype(compute_dtype)
    if mp != M:
        aw = jnp.pad(aw, ((0, mp - M), (0, 0)))
        bw = jnp.pad(bw, ((0, mp - M), (0, 0)))
    itemsize = jnp.dtype(compute_dtype).itemsize
    cost = pl.CostEstimate(
        flops=2 * mp * (ka + kb) * coutp,
        transcendentals=mp * coutp,
        bytes_accessed=(mp * (ka + kb) + (ka + kb) * coutp) * itemsize
        + mp * coutp * jnp.dtype(out_dtype).itemsize,
    )
    out = pl.pallas_call(
        _pw_dual_kernel,
        out_shape=jax.ShapeDtypeStruct((mp, coutp), out_dtype),
        grid_spec=pltpu.PrefetchScalarGridSpec(
            num_scalar_prefetch=0,
            grid=(mp // tm,),
            in_specs=[
                pl.BlockSpec((tm, ka), lambda i: (i, 0)),
                pl.BlockSpec((tm, kb), lambda i: (i, 0)),
                pl.BlockSpec((ka, coutp), lambda i: (0, 0)),
                pl.BlockSpec((kb, coutp), lambda i: (0, 0)),
                pl.BlockSpec((1, coutp), lambda i: (0, 0)),
            ],
            out_specs=pl.BlockSpec((tm, coutp), lambda i: (i, 0)),
        ),
        compiler_params=pltpu.CompilerParams(
            dimension_semantics=("parallel",),
            vmem_limit_bytes=_VMEM_LIMIT,
        ),
        cost_estimate=cost,
    )(aw, bw, wa.astype(compute_dtype), wb.astype(compute_dtype), bias)
    return out[:M]


# --------------------------------------------------------------------------------------
# Kernel 2: fused KxK conv + folded-BN bias + SiLU
#           (+ optional fused residual add)  (+ optional fused final 1x1 conv epilogue)
# --------------------------------------------------------------------------------------
def _make_conv_kernel(has_residual, has_tail):
    def kernel(*refs):
        it = iter(refs)
        x_ref = next(it)
        w_ref = next(it)
        b_ref = next(it)
        r_ref = next(it) if has_residual else None
        if has_tail:
            xb_ref = next(it)
            wa_ref = next(it)
            wb_ref = next(it)
            b2_ref = next(it)
        o_ref = next(it)

        th, wo = o_ref.shape[0], o_ref.shape[1]       # output spatial tile
        hh, wpad, cinp = x_ref.shape                  # input tile with halo
        kh_n = hh - th + 1
        kw_n = wpad - wo + 1
        cconv = w_ref.shape[1]
        # im2col patch built ONCE per tile; tap order (kh, kw) matches the packed weight.
        cols = [x_ref[dh:dh + th, dw:dw + wo, :]
                for dh in range(kh_n) for dw in range(kw_n)]
        patch = jnp.concatenate(cols, axis=-1).reshape(th * wo, kh_n * kw_n * cinp)
        acc = jnp.dot(patch, w_ref[...], preferred_element_type=jnp.float32)
        y = acc + b_ref[...]
        y = y * jax.nn.sigmoid(y)                     # SiLU in f32, (th*wo, cconv)
        if has_residual:
            y = y + r_ref[...].reshape(th * wo, cconv).astype(jnp.float32)
        if has_tail:
            # Fused final 1x1 conv (cv2) + BN + SiLU over cat(xa_new, xb):
            #   out = SiLU(b2 + xa_new @ wa + xb @ wb)
            a = y.astype(xb_ref.dtype)                # bf16 MXU operand, f32 accumulate
            acc2 = jnp.dot(a, wa_ref[...], preferred_element_type=jnp.float32)
            acc2 = acc2 + jnp.dot(xb_ref[...].reshape(th * wo, -1), wb_ref[...],
                                  preferred_element_type=jnp.float32)
            z = acc2 + b2_ref[...]
            z = z * jax.nn.sigmoid(z)
            o_ref[...] = z.reshape(th, wo, -1).astype(o_ref.dtype)
        else:
            o_ref[...] = y.reshape(th, wo, cconv).astype(o_ref.dtype)

    return kernel


def _pick_th(H, wo, cinp, cconv, coutp, KH, KW, extra_tiles, budget=_TILE_BUDGET):
    th = _round_up(H, _SUBLANE)

    def vmem_bytes(t):
        patch = t * wo * KH * KW * cinp * 2                   # bf16 im2col patch
        acc = t * wo * (cconv + coutp) * 4                    # f32 matmul results/epilogue
        xin = 2 * (t + KH - 1) * (wo + KW - 1) * cinp * 2     # double-buffered input tile
        extras = extra_tiles * 2 * t * wo * max(cconv, _LANE) * 2  # residual / xb tiles
        outb = 2 * t * wo * coutp * 4                         # double-buffered output tile
        return patch + acc + xin + extras + outb

    while th > _SUBLANE and vmem_bytes(th) > budget:
        th = _round_up(th // 2, _SUBLANE)
    return th


def _conv_bn_silu(x, wflat, bias, KH, KW, *, residual=None, tail=None,
                  out_dtype, compute_dtype=jnp.bfloat16):
    """x: (N, H, W, Cin_pad) channels-last, lane-padded.

    Computes SiLU(BN(conv_KxK(x))) [+ residual]. If tail=(xb, wa, wb, b2) is given, the
    final 1x1 conv SiLU(b2 + xa_new@wa + xb@wb) is fused as an epilogue.
    Returns (N, H, W, Cout_pad)."""
    assert KH % 2 == 1 and KW % 2 == 1, "even kernel sizes unsupported (auto_pad semantics)"
    N, H, W, cinp = x.shape
    cconv = wflat.shape[1]
    coutp = tail[1].shape[1] if tail is not None else cconv
    assert cinp % _LANE == 0 and cconv % _LANE == 0 and coutp % _LANE == 0
    ph, pw = KH // 2, KW // 2

    wo = _round_up(W, _SUBLANE)                 # lane/sublane-friendly output width
    extra_tiles = (residual is not None) + (tail is not None)
    th = _pick_th(H, wo, cinp, cconv, coutp, KH, KW, extra_tiles)
    nt = -(-H // th)
    hpad = nt * th
    wpad = wo + KW - 1

    xw = x.astype(compute_dtype)
    # "same" halo on top/left, halo + alignment padding on bottom/right (zeros).
    x_sp = jnp.pad(xw, ((0, 0), (ph, hpad - H + ph), (pw, wo - W + pw), (0, 0)))
    # Wrapper-side halo duplication: (N, nt, th+KH-1, wpad, cinp) overlapping H tiles.
    x_tiles = jnp.stack(
        [jax.lax.slice_in_dim(x_sp, i * th, i * th + th + KH - 1, axis=1)
         for i in range(nt)], axis=1)

    def tile5(a):
        c = a.shape[-1]
        ap = jnp.pad(a.astype(compute_dtype),
                     ((0, 0), (0, hpad - H), (0, wo - W), (0, 0)))
        return ap.reshape(N, nt, th, wo, c)

    in_arrays = [x_tiles, wflat.astype(compute_dtype), bias]
    in_specs = [
        pl.BlockSpec((None, None, th + KH - 1, wpad, cinp), lambda n, t: (n, t, 0, 0, 0)),
        pl.BlockSpec((KH * KW * cinp, cconv), lambda n, t: (0, 0)),
        pl.BlockSpec((1, cconv), lambda n, t: (0, 0)),
    ]
    bytes_in = x_tiles.size * 2 + wflat.size * 2
    flops = 2 * N * hpad * wo * KH * KW * cinp * cconv
    transc = N * hpad * wo * cconv

    if residual is not None:
        rt = tile5(residual)
        in_arrays.append(rt)
        in_specs.append(
            pl.BlockSpec((None, None, th, wo, cconv), lambda n, t: (n, t, 0, 0, 0)))
        bytes_in += rt.size * 2
    if tail is not None:
        xb, w2a, w2b, b2 = tail
        xbt = tile5(xb)
        in_arrays += [xbt, w2a.astype(compute_dtype), w2b.astype(compute_dtype), b2]
        in_specs += [
            pl.BlockSpec((None, None, th, wo, xb.shape[-1]), lambda n, t: (n, t, 0, 0, 0)),
            pl.BlockSpec(w2a.shape, lambda n, t: (0, 0)),
            pl.BlockSpec(w2b.shape, lambda n, t: (0, 0)),
            pl.BlockSpec((1, coutp), lambda n, t: (0, 0)),
        ]
        bytes_in += xbt.size * 2 + (w2a.size + w2b.size) * 2
        flops += 2 * N * hpad * wo * (cconv + xb.shape[-1]) * coutp
        transc += N * hpad * wo * coutp

    cost = pl.CostEstimate(
        flops=flops, transcendentals=transc,
        bytes_accessed=bytes_in + N * hpad * wo * coutp * jnp.dtype(out_dtype).itemsize)

    out = pl.pallas_call(
        _make_conv_kernel(residual is not None, tail is not None),
        out_shape=jax.ShapeDtypeStruct((N, nt, th, wo, coutp), out_dtype),
        grid_spec=pltpu.PrefetchScalarGridSpec(
            num_scalar_prefetch=0,
            grid=(N, nt),
            in_specs=in_specs,
            out_specs=pl.BlockSpec((None, None, th, wo, coutp), lambda n, t: (n, t, 0, 0, 0)),
        ),
        compiler_params=pltpu.CompilerParams(
            dimension_semantics=("parallel", "parallel"),   # batch x H-tile: both TCs busy
            vmem_limit_bytes=_VMEM_LIMIT,
        ),
        cost_estimate=cost,
    )(*in_arrays)
    return out.reshape(N, hpad, wo, coutp)[:, :H, :W, :]


# --------------------------------------------------------------------------------------
# CSP forward (NHWC, lane-padded channels, end-to-end)
# --------------------------------------------------------------------------------------
def csp_forward(x_nchw, params, *, compute_dtype=jnp.bfloat16, eps=1e-5):
    N, C, H, W = x_nchw.shape
    assert C % 2 == 0, "CSP needs an even channel count"
    h = C // 2
    assert C <= _LANE and h <= _LANE, "TODO(synk): tile Cin/Cout for wide layers"
    out_channels = params["cv2"]["weight"].shape[0]
    cin_pad = _LANE
    cout_pad_final = _round_up(out_channels, _LANE)

    # single NCHW -> NHWC transpose + channel pad for the whole block
    x = jnp.transpose(x_nchw, (0, 2, 3, 1))
    x = jnp.pad(x, ((0, 0), (0, 0), (0, 0), (0, cin_pad - C)))

    # cv1 (1x1): the two output halves are routed into separate lane-dense 128-blocks and
    # written as two separate outputs, so chunk(2, dim=1) is free.
    ch = jnp.arange(C)
    out_pos = jnp.where(ch < h, ch, _LANE + ch - h)
    w1, b1 = _pack_pointwise_weight(params["cv1"], jnp.arange(C), cin_pad,
                                    out_pos, 2 * _LANE, eps)
    xa2d, xb2d = _pointwise_conv_split(x.reshape(N * H * W, cin_pad), w1, b1,
                                       out_dtype=compute_dtype, compute_dtype=compute_dtype)
    xa = xa2d.reshape(N, H, W, _LANE)
    xb = xb2d.reshape(N, H, W, _LANE)

    # cv2 (final 1x1) weights, split into the xa / xb lane blocks; fused into the last
    # 3x3 conv's epilogue so cat(a, b) never materializes in HBM.
    w2a, w2b, b2 = _pack_cv2_weights(params["cv2"], h, cout_pad_final, eps)

    blocks = params["cb"]
    if not blocks:
        out2d = _pointwise_conv_dual(xa2d, xb2d, w2a, w2b, b2,
                                     out_dtype=x_nchw.dtype, compute_dtype=compute_dtype)
        out = out2d.reshape(N, H, W, cout_pad_final)
    else:
        # cb: ResConvBlock(s)  xa = xa + conv3x3(conv3x3(xa)); skip fused into 2nd conv;
        # the final cv2 1x1 fused into the last block's 2nd conv.
        for bi, blk in enumerate(blocks):
            last = bi == len(blocks) - 1
            wb1, bb1, kh1, kw1 = _pack_conv_weight(blk["cv1"], _LANE, _LANE, eps)
            t = _conv_bn_silu(xa, wb1, bb1, kh1, kw1,
                              out_dtype=compute_dtype, compute_dtype=compute_dtype)
            wb2, bb2, kh2, kw2 = _pack_conv_weight(blk["cv2"], _LANE, _LANE, eps)
            if last:
                out = _conv_bn_silu(t, wb2, bb2, kh2, kw2, residual=xa,
                                    tail=(xb, w2a, w2b, b2),
                                    out_dtype=x_nchw.dtype, compute_dtype=compute_dtype)
            else:
                xa = _conv_bn_silu(t, wb2, bb2, kh2, kw2, residual=xa,
                                   out_dtype=compute_dtype, compute_dtype=compute_dtype)

    out = out[..., :out_channels]
    return jnp.transpose(out, (0, 3, 1, 2))                   # NHWC -> NCHW


# --------------------------------------------------------------------------------------
# Pure-JAX f32 reference (PyTorch CSP semantics, inference-mode BN, SiLU)
# --------------------------------------------------------------------------------------
def _conv_block_ref(x, cp, eps=1e-5):
    w = cp["weight"]
    kh, kw = w.shape[2], w.shape[3]
    y = jax.lax.conv_general_dilated(
        x, w, window_strides=(1, 1),
        padding=((kh // 2, kh // 2), (kw // 2, kw // 2)),
        dimension_numbers=("NCHW", "OIHW", "NCHW"))
    scale = cp["gamma"] / jnp.sqrt(cp["var"] + eps)
    shift = cp["beta"] - cp["mean"] * scale
    y = y * scale.reshape(1, -1, 1, 1) + shift.reshape(1, -1, 1, 1)
    return y * jax.nn.sigmoid(y)


def _csp_ref(x, params):
    y = _conv_block_ref(x, params["cv1"])
    h = y.shape[1] // 2
    xa, xb = y[:, :h], y[:, h:]
    for blk in params["cb"]:
        xa = xa + _conv_block_ref(_conv_block_ref(xa, blk["cv1"]), blk["cv2"])
    z = jnp.concatenate([xa, xb], axis=1)
    return _conv_block_ref(z, params["cv2"])


def _make_conv_params(key, cin, cout, k):
    return dict(
        weight=0.1 * jax.random.normal(key, (cout, cin, k, k), dtype=jnp.float32),
        gamma=1.0 + 0.1 * jnp.arange(cout, dtype=jnp.float32),
        beta=0.05 * jnp.arange(cout, dtype=jnp.float32),
        mean=0.01 * jnp.arange(cout, dtype=jnp.float32),
        var=1.0 + 0.02 * jnp.arange(cout, dtype=jnp.float32),
    )


if __name__ == "__main__":
    # CSP(in_channels=4, out_channels=8) with defaults repeat=1, cb_repeat=2.
    N, Cin, H, W = 2, 4, 16, 16
    Cout = 8
    h = Cin // 2

    key = jax.random.PRNGKey(0)
    kx, k1, k2, k3, k4 = jax.random.split(key, 5)
    x = jax.random.normal(kx, (N, Cin, H, W), dtype=jnp.float32)

    # Deterministic, non-trivial inference-mode BatchNorm parameters.
    # TODO(synk): training-mode BN (batch statistics) is not implemented; eval-mode affine only.
    params = {
        "cv1": _make_conv_params(k1, Cin, Cin, 1),
        "cb": [{"cv1": _make_conv_params(k2, h, h, 3),
                "cv2": _make_conv_params(k3, h, h, 3)}],   # one ResConvBlock (repeat=1, cb_repeat=2)
        "cv2": _make_conv_params(k4, 2 * h, Cout, 1),
    }

    fwd = jax.jit(csp_forward)
    out = fwd(x, params)
    out = jax.block_until_ready(out)

    ref = _csp_ref(x, params)
    assert out.shape == (N, Cout, H, W), out.shape
    # bf16 MXU operands with f32 accumulation -> compare against the f32 reference loosely.
    assert jnp.allclose(out, ref, atol=5e-2, rtol=5e-2), float(jnp.max(jnp.abs(out - ref)))

    print("KERNEL_OK")
</pallas_src>

<mosaic_0001>
module attributes {stable_mosaic.version = 11 : i64} {
  func.func @_pw_split_kernel(%arg0: i32, %arg1: memref<512x128xbf16, #tpu.memory_space<vmem>>, %arg2: memref<128x256xbf16, #tpu.memory_space<vmem>>, %arg3: memref<1x256xf32, #tpu.memory_space<vmem>>, %arg4: memref<512x128xbf16, #tpu.memory_space<vmem>>, %arg5: memref<512x128xbf16, #tpu.memory_space<vmem>>) attributes {dimension_semantics = [#tpu.dimension_semantics<parallel>], iteration_bounds = array<i64: 1>, scalar_prefetch = 0 : i64, scratch_operands = 0 : i64, tpu.core_type = #tpu.core_type<tc>, window_params = [{transform_indices = @transform_0, window_bounds = array<i64: 512, 128>}, {pipeline_mode = #tpu.pipeline_mode<synchronous>, transform_indices = @transform_1, window_bounds = array<i64: 128, 256>}, {pipeline_mode = #tpu.pipeline_mode<synchronous>, transform_indices = @transform_2, window_bounds = array<i64: 1, 256>}, {transform_indices = @transform_3, window_bounds = array<i64: 512, 128>}, {transform_indices = @transform_4, window_bounds = array<i64: 512, 128>}]} {
    %c0 = arith.constant 0 : index
    %c0_0 = arith.constant 0 : index
    %0 = vector.load %arg1[%c0, %c0_0] : memref<512x128xbf16, #tpu.memory_space<vmem>>, vector<512x128xbf16>
    %c0_1 = arith.constant 0 : index
    %c0_2 = arith.constant 0 : index
    %1 = vector.load %arg2[%c0_1, %c0_2] : memref<128x256xbf16, #tpu.memory_space<vmem>>, vector<128x256xbf16>
    %cst = arith.constant dense<0.000000e+00> : vector<512x256xf32>
    %2 = tpu.matmul %0, %1, %cst {dimension_numbers = #tpu.dot_dimension_numbers<[1], [0], [0], [1], [0, 0, 1, 1], [], []>} : vector<512x128xbf16>, vector<128x256xbf16>, vector<512x256xf32> -> vector<512x256xf32>
    %c0_3 = arith.constant 0 : index
    %c0_4 = arith.constant 0 : index
    %3 = vector.load %arg3[%c0_3, %c0_4] : memref<1x256xf32, #tpu.memory_space<vmem>>, vector<1x256xf32>
    %4 = vector.broadcast %3 : vector<1x256xf32> to vector<512x256xf32>
    %5 = arith.addf %2, %4 : vector<512x256xf32>
    %6 = arith.negf %5 : vector<512x256xf32>
    %7 = math.exp %6 : vector<512x256xf32>
    %cst_5 = arith.constant 1.000000e+00 : f32
    %8 = vector.broadcast %cst_5 : f32 to vector<512x256xf32>
    %9 = arith.addf %8, %7 : vector<512x256xf32>
    %10 = arith.divf %8, %9 : vector<512x256xf32>
    %11 = arith.mulf %5, %10 : vector<512x256xf32>
    %12 = vector.extract_strided_slice %11 {offsets = [0, 0], sizes = [512, 128], strides = [1, 1]} : vector<512x256xf32> to vector<512x128xf32>
    %13 = arith.truncf %12 : vector<512x128xf32> to vector<512x128xbf16>
    %c0_6 = arith.constant 0 : index
    %c0_7 = arith.constant 0 : index
    %14 = vector.load %arg4[%c0_6, %c0_7] : memref<512x128xbf16, #tpu.memory_space<vmem>>, vector<512x128xbf16>
    tpu.vector_store %arg4[%c0_6, %c0_7], %13 {strides = array<i32>} : memref<512x128xbf16, #tpu.memory_space<vmem>>, vector<512x128xbf16>,
    %15 = vector.extract_strided_slice %11 {offsets = [0, 128], sizes = [512, 128], strides = [1, 1]} : vector<512x256xf32> to vector<512x128xf32>
    %16 = arith.truncf %15 : vector<512x128xf32> to vector<512x128xbf16>
    %c0_8 = arith.constant 0 : index
    %c0_9 = arith.constant 0 : index
    %17 = vector.load %arg5[%c0_8, %c0_9] : memref<512x128xbf16, #tpu.memory_space<vmem>>, vector<512x128xbf16>
    tpu.vector_store %arg5[%c0_8, %c0_9], %16 {strides = array<i32>} : memref<512x128xbf16, #tpu.memory_space<vmem>>, vector<512x128xbf16>,
    return
  }
  func.func @transform_0(%arg0: i32) -> (i32, i32) {
    %c0_i32 = arith.constant 0 : i32
    %c0_i32_0 = arith.constant 0 : i32
    return %arg0, %c0_i32 : i32, i32
  }
  func.func @transform_1(%arg0: i32) -> (i32, i32) {
    %c0_i32 = arith.constant 0 : i32
    %c0_i32_0 = arith.constant 0 : i32
    %c0_i32_1 = arith.constant 0 : i32
    return %c0_i32, %c0_i32_0 : i32, i32
  }
  func.func @transform_2(%arg0: i32) -> (i32, i32) {
    %c0_i32 = arith.constant 0 : i32
    %c0_i32_0 = arith.constant 0 : i32
    %c0_i32_1 = arith.constant 0 : i32
    return %c0_i32, %c0_i32_0 : i32, i32
  }
  func.func @transform_3(%arg0: i32) -> (i32, i32) {
    %c0_i32 = arith.constant 0 : i32
    %c0_i32_0 = arith.constant 0 : i32
    return %arg0, %c0_i32 : i32, i32
  }
  func.func @transform_4(%arg0: i32) -> (i32, i32) {
    %c0_i32 = arith.constant 0 : i32
    %c0_i32_0 = arith.constant 0 : i32
    return %arg0, %c0_i32 : i32, i32
  }
}

module attributes {stable_mosaic.version = 11 : i64} {
  func.func @kernel(%arg0: i32, %arg1: i32, %arg2: memref<1x1x18x18x128xbf16, #tpu.memory_space<vmem>>, %arg3: memref<1152x128xbf16, #tpu.memory_space<vmem>>, %arg4: memref<1x128xf32, #tpu.memory_space<vmem>>, %arg5: memref<1x1x16x16x128xbf16, #tpu.memory_space<vmem>>) attributes {dimension_semantics = [#tpu.dimension_semantics<parallel>, #tpu.dimension_semantics<parallel>], iteration_bounds = array<i64: 2, 1>, scalar_prefetch = 0 : i64, scratch_operands = 0 : i64, tpu.core_type = #tpu.core_type<tc>, window_params = [{transform_indices = @transform_0, window_bounds = array<i64: 1, 1, 18, 18, 128>}, {pipeline_mode = #tpu.pipeline_mode<synchronous>, transform_indices = @transform_1, window_bounds = array<i64: 1152, 128>}, {pipeline_mode = #tpu.pipeline_mode<synchronous>, transform_indices = @transform_2, window_bounds = array<i64: 1, 128>}, {transform_indices = @transform_3, window_bounds = array<i64: 1, 1, 16, 16, 128>}]} {
    %c0 = arith.constant 0 : index
    %c0_0 = arith.constant 0 : index
    %c0_1 = arith.constant 0 : index
    %c0_2 = arith.constant 0 : index
    %c0_3 = arith.constant 0 : index
    %0 = vector.load %arg2[%c0, %c0_0, %c0_1, %c0_2, %c0_3] : memref<1x1x18x18x128xbf16, #tpu.memory_space<vmem>>, vector<1x1x16x16x128xbf16>
    %1 = vector.shape_cast %0 : vector<1x1x16x16x128xbf16> to vector<16x16x128xbf16>
    %c0_4 = arith.constant 0 : index
    %c0_5 = arith.constant 0 : index
    %c0_6 = arith.constant 0 : index
    %c1 = arith.constant 1 : index
    %c0_7 = arith.constant 0 : index
    %2 = vector.load %arg2[%c0_4, %c0_5, %c0_6, %c1, %c0_7] : memref<1x1x18x18x128xbf16, #tpu.memory_space<vmem>>, vector<1x1x16x16x128xbf16>
    %3 = vector.shape_cast %2 : vector<1x1x16x16x128xbf16> to vector<16x16x128xbf16>
    %c0_8 = arith.constant 0 : index
    %c0_9 = arith.constant 0 : index
    %c0_10 = arith.constant 0 : index
    %c2 = arith.constant 2 : index
    %c0_11 = arith.constant 0 : index
    %4 = vector.load %arg2[%c0_8, %c0_9, %c0_10, %c2, %c0_11] : memref<1x1x18x18x128xbf16, #tpu.memory_space<vmem>>, vector<1x1x16x16x128xbf16>
    %5 = vector.shape_cast %4 : vector<1x1x16x16x128xbf16> to vector<16x16x128xbf16>
    %c0_12 = arith.constant 0 : index
    %c0_13 = arith.constant 0 : index
    %c1_14 = arith.constant 1 : index
    %c0_15 = arith.constant 0 : index
    %c0_16 = arith.constant 0 : index
    %6 = vector.load %arg2[%c0_12, %c0_13, %c1_14, %c0_15, %c0_16] : memref<1x1x18x18x128xbf16, #tpu.memory_space<vmem>>, vector<1x1x16x16x128xbf16>
    %7 = vector.shape_cast %6 : vector<1x1x16x16x128xbf16> to vector<16x16x128xbf16>
    %c0_17 = arith.constant 0 : index
    %c0_18 = arith.constant 0 : index
    %c1_19 = arith.constant 1 : index
    %c1_20 = arith.constant 1 : index
    %c0_21 = arith.constant 0 : index
    %8 = vector.load %arg2[%c0_17, %c0_18, %c1_19, %c1_20, %c0_21] : memref<1x1x18x18x128xbf16, #tpu.memory_space<vmem>>, vector<1x1x16x16x128xbf16>
    %9 = vector.shape_cast %8 : vector<1x1x16x16x128xbf16> to vector<16x16x128xbf16>
    %c0_22 = arith.constant 0 : index
    %c0_23 = arith.constant 0 : index
    %c1_24 = arith.constant 1 : index
    %c2_25 = arith.constant 2 : index
    %c0_26 = arith.constant 0 : index
    %10 = vector.load %arg2[%c0_22, %c0_23, %c1_24, %c2_25, %c0_26] : memref<1x1x18x18x128xbf16, #tpu.memory_space<vmem>>, vector<1x1x16x16x128xbf16>
    %11 = vector.shape_cast %10 : vector<1x1x16x16x128xbf16> to vector<16x16x128xbf16>
    %c0_27 = arith.constant 0 : index
    %c0_28 = arith.constant 0 : index
    %c2_29 = arith.constant 2 : index
    %c0_30 = arith.constant 0 : index
    %c0_31 = arith.constant 0 : index
    %12 = vector.load %arg2[%c0_27, %c0_28, %c2_29, %c0_30, %c0_31] : memref<1x1x18x18x128xbf16, #tpu.memory_space<vmem>>, vector<1x1x16x16x128xbf16>
    %13 = vector.shape_cast %12 : vector<1x1x16x16x128xbf16> to vector<16x16x128xbf16>
    %c0_32 = arith.constant 0 : index
    %c0_33 = arith.constant 0 : index
    %c2_34 = arith.constant 2 : index
    %c1_35 = arith.constant 1 : index
    %c0_36 = arith.constant 0 : index
    %14 = vector.load %arg2[%c0_32, %c0_33, %c2_34, %c1_35, %c0_36] : memref<1x1x18x18x128xbf16, #tpu.memory_space<vmem>>, vector<1x1x16x16x128xbf16>
    %15 = vector.shape_cast %14 : vector<1x1x16x16x128xbf16> to vector<16x16x128xbf16>
    %c0_37 = arith.constant 0 : index
    %c0_38 = arith.constant 0 : index
    %c2_39 = arith.constant 2 : index
    %c2_40 = arith.constant 2 : index
    %c0_41 = arith.constant 0 : index
    %16 = vector.load %arg2[%c0_37, %c0_38, %c2_39, %c2_40, %c0_41] : memref<1x1x18x18x128xbf16, #tpu.memory_space<vmem>>, vector<1x1x16x16x128xbf16>
    %17 = vector.shape_cast %16 : vector<1x1x16x16x128xbf16> to vector<16x16x128xbf16>
    %18 = tpu.concatenate %1, %3, %5, %7, %9, %11, %13, %15, %17 in 2 : vector<16x16x128xbf16>, vector<16x16x128xbf16>, vector<16x16x128xbf16>, vector<16x16x128xbf16>, vector<16x16x128xbf16>, vector<16x16x128xbf16>, vector<16x16x128xbf16>, vector<16x16x128xbf16>, vector<16x16x128xbf16> -> vector<16x16x1152xbf16>
    %19 = vector.shape_cast %18 : vector<16x16x1152xbf16> to vector<256x1152xbf16>
    %c0_42 = arith.constant 0 : index
    %c0_43 = arith.constant 0 : index
    %20 = vector.load %arg3[%c0_42, %c0_43] : memref<1152x128xbf16, #tpu.memory_space<vmem>>, vector<1152x128xbf16>
    %cst = arith.constant dense<0.000000e+00> : vector<256x128xf32>
    %21 = tpu.matmul %19, %20, %cst {dimension_numbers = #tpu.dot_dimension_numbers<[1], [0], [0], [1], [0, 0, 1, 1], [], []>} : vector<256x1152xbf16>, vector<1152x128xbf16>, vector<256x128xf32> -> vector<256x128xf32>
    %c0_44 = arith.constant 0 : index
    %c0_45 = arith.constant 0 : index
    %22 = vector.load %arg4[%c0_44, %c0_45] : memref<1x128xf32, #tpu.memory_space<vmem>>, vector<1x128xf32>
    %23 = vector.broadcast %22 : vector<1x128xf32> to vector<256x128xf32>
    %24 = arith.addf %21, %23 : vector<256x128xf32>
    %25 = arith.negf %24 : vector<256x128xf32>
    %26 = math.exp %25 : vector<256x128xf32>
    %cst_46 = arith.constant 1.000000e+00 : f32
    %27 = vector.broadcast %cst_46 : f32 to vector<256x128xf32>
    %28 = arith.addf %27, %26 : vector<256x128xf32>
    %29 = arith.divf %27, %28 : vector<256x128xf32>
    %30 = arith.mulf %24, %29 : vector<256x128xf32>
    %31 = vector.shape_cast %30 : vector<256x128xf32> to vector<16x16x128xf32>
    %32 = arith.truncf %31 : vector<16x16x128xf32> to vector<16x16x128xbf16>
    %c0_47 = arith.constant 0 : index
    %c0_48 = arith.constant 0 : index
    %c0_49 = arith.constant 0 : index
    %c0_50 = arith.constant 0 : index
    %c0_51 = arith.constant 0 : index
    %33 = vector.load %arg5[%c0_47, %c0_48, %c0_49, %c0_50, %c0_51] : memref<1x1x16x16x128xbf16, #tpu.memory_space<vmem>>, vector<1x1x16x16x128xbf16>
    %34 = vector.shape_cast %33 : vector<1x1x16x16x128xbf16> to vector<16x16x128xbf16>
    %35 = vector.shape_cast %32 : vector<16x16x128xbf16> to vector<1x1x16x16x128xbf16>
    tpu.vector_store %arg5[%c0_47, %c0_48, %c0_49, %c0_50, %c0_51], %35 {strides = array<i32>} : memref<1x1x16x16x128xbf16, #tpu.memory_space<vmem>>, vector<1x1x16x16x128xbf16>,
    return
  }
  func.func @transform_0(%arg0: i32, %arg1: i32) -> (i32, i32, i32, i32, i32) {
    %c0_i32 = arith.constant 0 : i32
    %c0_i32_0 = arith.constant 0 : i32
    %c0_i32_1 = arith.constant 0 : i32
    %c0_i32_2 = arith.constant 0 : i32
    return %arg0, %arg1, %c0_i32, %c0_i32_0, %c0_i32_1 : i32, i32, i32, i32, i32
  }
  func.func @transform_1(%arg0: i32, %arg1: i32) -> (i32, i32) {
    %c0_i32 = arith.constant 0 : i32
    %c0_i32_0 = arith.constant 0 : i32
    %c0_i32_1 = arith.constant 0 : i32
    return %c0_i32, %c0_i32_0 : i32, i32
  }
  func.func @transform_2(%arg0: i32, %arg1: i32) -> (i32, i32) {
    %c0_i32 = arith.constant 0 : i32
    %c0_i32_0 = arith.constant 0 : i32
    %c0_i32_1 = arith.constant 0 : i32
    return %c0_i32, %c0_i32_0 : i32, i32
  }
  func.func @transform_3(%arg0: i32, %arg1: i32) -> (i32, i32, i32, i32, i32) {
    %c0_i32 = arith.constant 0 : i32
    %c0_i32_0 = arith.constant 0 : i32
    %c0_i32_1 = arith.constant 0 : i32
    %c0_i32_2 = arith.constant 0 : i32
    return %arg0, %arg1, %c0_i32, %c0_i32_0, %c0_i32_1 : i32, i32, i32, i32, i32
  }
}

module attributes {stable_mosaic.version = 11 : i64} {
  func.func @kernel(%arg0: i32, %arg1: i32, %arg2: memref<1x1x18x18x128xbf16, #tpu.memory_space<vmem>>, %arg3: memref<1152x128xbf16, #tpu.memory_space<vmem>>, %arg4: memref<1x128xf32, #tpu.memory_space<vmem>>, %arg5: memref<1x1x16x16x128xbf16, #tpu.memory_space<vmem>>, %arg6: memref<1x1x16x16x128xbf16, #tpu.memory_space<vmem>>, %arg7: memref<128x128xbf16, #tpu.memory_space<vmem>>, %arg8: memref<128x128xbf16, #tpu.memory_space<vmem>>, %arg9: memref<1x128xf32, #tpu.memory_space<vmem>>, %arg10: memref<1x1x16x16x128xf32, #tpu.memory_space<vmem>>) attributes {dimension_semantics = [#tpu.dimension_semantics<parallel>, #tpu.dimension_semantics<parallel>], iteration_bounds = array<i64: 2, 1>, scalar_prefetch = 0 : i64, scratch_operands = 0 : i64, tpu.core_type = #tpu.core_type<tc>, window_params = [{transform_indices = @transform_0, window_bounds = array<i64: 1, 1, 18, 18, 128>}, {pipeline_mode = #tpu.pipeline_mode<synchronous>, transform_indices = @transform_1, window_bounds = array<i64: 1152, 128>}, {pipeline_mode = #tpu.pipeline_mode<synchronous>, transform_indices = @transform_2, window_bounds = array<i64: 1, 128>}, {transform_indices = @transform_3, window_bounds = array<i64: 1, 1, 16, 16, 128>}, {transform_indices = @transform_4, window_bounds = array<i64: 1, 1, 16, 16, 128>}, {pipeline_mode = #tpu.pipeline_mode<synchronous>, transform_indices = @transform_5, window_bounds = array<i64: 128, 128>}, {pipeline_mode = #tpu.pipeline_mode<synchronous>, transform_indices = @transform_6, window_bounds = array<i64: 128, 128>}, {pipeline_mode = #tpu.pipeline_mode<synchronous>, transform_indices = @transform_7, window_bounds = array<i64: 1, 128>}, {transform_indices = @transform_8, window_bounds = array<i64: 1, 1, 16, 16, 128>}]} {
    %c0 = arith.constant 0 : index
    %c0_0 = arith.constant 0 : index
    %c0_1 = arith.constant 0 : index
    %c0_2 = arith.constant 0 : index
    %c0_3 = arith.constant 0 : index
    %0 = vector.load %arg2[%c0, %c0_0, %c0_1, %c0_2, %c0_3] : memref<1x1x18x18x128xbf16, #tpu.memory_space<vmem>>, vector<1x1x16x16x128xbf16>
    %1 = vector.shape_cast %0 : vector<1x1x16x16x128xbf16> to vector<16x16x128xbf16>
    %c0_4 = arith.constant 0 : index
    %c0_5 = arith.constant 0 : index
    %c0_6 = arith.constant 0 : index
    %c1 = arith.constant 1 : index
    %c0_7 = arith.constant 0 : index
    %2 = vector.load %arg2[%c0_4, %c0_5, %c0_6, %c1, %c0_7] : memref<1x1x18x18x128xbf16, #tpu.memory_space<vmem>>, vector<1x1x16x16x128xbf16>
    %3 = vector.shape_cast %2 : vector<1x1x16x16x128xbf16> to vector<16x16x128xbf16>
    %c0_8 = arith.constant 0 : index
    %c0_9 = arith.constant 0 : index
    %c0_10 = arith.constant 0 : index
    %c2 = arith.constant 2 : index
    %c0_11 = arith.constant 0 : index
    %4 = vector.load %arg2[%c0_8, %c0_9, %c0_10, %c2, %c0_11] : memref<1x1x18x18x128xbf16, #tpu.memory_space<vmem>>, vector<1x1x16x16x128xbf16>
    %5 = vector.shape_cast %4 : vector<1x1x16x16x128xbf16> to vector<16x16x128xbf16>
    %c0_12 = arith.constant 0 : index
    %c0_13 = arith.constant 0 : index
    %c1_14 = arith.constant 1 : index
    %c0_15 = arith.constant 0 : index
    %c0_16 = arith.constant 0 : index
    %6 = vector.load %arg2[%c0_12, %c0_13, %c1_14, %c0_15, %c0_16] : memref<1x1x18x18x128xbf16, #tpu.memory_space<vmem>>, vector<1x1x16x16x128xbf16>
    %7 = vector.shape_cast %6 : vector<1x1x16x16x128xbf16> to vector<16x16x128xbf16>
    %c0_17 = arith.constant 0 : index
    %c0_18 = arith.constant 0 : index
    %c1_19 = arith.constant 1 : index
    %c1_20 = arith.constant 1 : index
    %c0_21 = arith.constant 0 : index
    %8 = vector.load %arg2[%c0_17, %c0_18, %c1_19, %c1_20, %c0_21] : memref<1x1x18x18x128xbf16, #tpu.memory_space<vmem>>, vector<1x1x16x16x128xbf16>
    %9 = vector.shape_cast %8 : vector<1x1x16x16x128xbf16> to vector<16x16x128xbf16>
    %c0_22 = arith.constant 0 : index
    %c0_23 = arith.constant 0 : index
    %c1_24 = arith.constant 1 : index
    %c2_25 = arith.constant 2 : index
    %c0_26 = arith.constant 0 : index
    %10 = vector.load %arg2[%c0_22, %c0_23, %c1_24, %c2_25, %c0_26] : memref<1x1x18x18x128xbf16, #tpu.memory_space<vmem>>, vector<1x1x16x16x128xbf16>
    %11 = vector.shape_cast %10 : vector<1x1x16x16x128xbf16> to vector<16x16x128xbf16>
    %c0_27 = arith.constant 0 : index
    %c0_28 = arith.constant 0 : index
    %c2_29 = arith.constant 2 : index
    %c0_30 = arith.constant 0 : index
    %c0_31 = arith.constant 0 : index
    %12 = vector.load %arg2[%c0_27, %c0_28, %c2_29, %c0_30, %c0_31] : memref<1x1x18x18x128xbf16, #tpu.memory_space<vmem>>, vector<1x1x16x16x128xbf16>
    %13 = vector.shape_cast %12 : vector<1x1x16x16x128xbf16> to vector<16x16x128xbf16>
    %c0_32 = arith.constant 0 : index
    %c0_33 = arith.constant 0 : index
    %c2_34 = arith.constant 2 : index
    %c1_35 = arith.constant 1 : index
    %c0_36 = arith.constant 0 : index
    %14 = vector.load %arg2[%c0_32, %c0_33, %c2_34, %c1_35, %c0_36] : memref<1x1x18x18x128xbf16, #tpu.memory_space<vmem>>, vector<1x1x16x16x128xbf16>
    %15 = vector.shape_cast %14 : vector<1x1x16x16x128xbf16> to vector<16x16x128xbf16>
    %c0_37 = arith.constant 0 : index
    %c0_38 = arith.constant 0 : index
    %c2_39 = arith.constant 2 : index
    %c2_40 = arith.constant 2 : index
    %c0_41 = arith.constant 0 : index
    %16 = vector.load %arg2[%c0_37, %c0_38, %c2_39, %c2_40, %c0_41] : memref<1x1x18x18x128xbf16, #tpu.memory_space<vmem>>, vector<1x1x16x16x128xbf16>
    %17 = vector.shape_cast %16 : vector<1x1x16x16x128xbf16> to vector<16x16x128xbf16>
    %18 = tpu.concatenate %1, %3, %5, %7, %9, %11, %13, %15, %17 in 2 : vector<16x16x128xbf16>, vector<16x16x128xbf16>, vector<16x16x128xbf16>, vector<16x16x128xbf16>, vector<16x16x128xbf16>, vector<16x16x128xbf16>, vector<16x16x128xbf16>, vector<16x16x128xbf16>, vector<16x16x128xbf16> -> vector<16x16x1152xbf16>
    %19 = vector.shape_cast %18 : vector<16x16x1152xbf16> to vector<256x1152xbf16>
    %c0_42 = arith.constant 0 : index
    %c0_43 = arith.constant 0 : index
    %20 = vector.load %arg3[%c0_42, %c0_43] : memref<1152x128xbf16, #tpu.memory_space<vmem>>, vector<1152x128xbf16>
    %cst = arith.constant dense<0.000000e+00> : vector<256x128xf32>
    %21 = tpu.matmul %19, %20, %cst {dimension_numbers = #tpu.dot_dimension_numbers<[1], [0], [0], [1], [0, 0, 1, 1], [], []>} : vector<256x1152xbf16>, vector<1152x128xbf16>, vector<256x128xf32> -> vector<256x128xf32>
    %c0_44 = arith.constant 0 : index
    %c0_45 = arith.constant 0 : index
    %22 = vector.load %arg4[%c0_44, %c0_45] : memref<1x128xf32, #tpu.memory_space<vmem>>, vector<1x128xf32>
    %23 = vector.broadcast %22 : vector<1x128xf32> to vector<256x128xf32>
    %24 = arith.addf %21, %23 : vector<256x128xf32>
    %25 = arith.negf %24 : vector<256x128xf32>
    %26 = math.exp %25 : vector<256x128xf32>
    %cst_46 = arith.constant 1.000000e+00 : f32
    %27 = vector.broadcast %cst_46 : f32 to vector<256x128xf32>
    %28 = arith.addf %27, %26 : vector<256x128xf32>
    %29 = arith.divf %27, %28 : vector<256x128xf32>
    %30 = arith.mulf %24, %29 : vector<256x128xf32>
    %c0_47 = arith.constant 0 : index
    %c0_48 = arith.constant 0 : index
    %c0_49 = arith.constant 0 : index
    %c0_50 = arith.constant 0 : index
    %c0_51 = arith.constant 0 : index
    %31 = vector.load %arg5[%c0_47, %c0_48, %c0_49, %c0_50, %c0_51] : memref<1x1x16x16x128xbf16, #tpu.memory_space<vmem>>, vector<1x1x16x16x128xbf16>
    %32 = vector.shape_cast %31 : vector<1x1x16x16x128xbf16> to vector<16x16x128xbf16>
    %33 = vector.shape_cast %32 : vector<16x16x128xbf16> to vector<256x128xbf16>
    %34 = arith.extf %33 : vector<256x128xbf16> to vector<256x128xf32>
    %35 = arith.addf %30, %34 : vector<256x128xf32>
    %36 = arith.truncf %35 : vector<256x128xf32> to vector<256x128xbf16>
    %c0_52 = arith.constant 0 : index
    %c0_53 = arith.constant 0 : index
    %37 = vector.load %arg7[%c0_52, %c0_53] : memref<128x128xbf16, #tpu.memory_space<vmem>>, vector<128x128xbf16>
    %cst_54 = arith.constant dense<0.000000e+00> : vector<256x128xf32>
    %38 = tpu.matmul %36, %37, %cst_54 {dimension_numbers = #tpu.dot_dimension_numbers<[1], [0], [0], [1], [0, 0, 1, 1], [], []>} : vector<256x128xbf16>, vector<128x128xbf16>, vector<256x128xf32> -> vector<256x128xf32>
    %c0_55 = arith.constant 0 : index
    %c0_56 = arith.constant 0 : index
    %c0_57 = arith.constant 0 : index
    %c0_58 = arith.constant 0 : index
    %c0_59 = arith.constant 0 : index
    %39 = vector.load %arg6[%c0_55, %c0_56, %c0_57, %c0_58, %c0_59] : memref<1x1x16x16x128xbf16, #tpu.memory_space<vmem>>, vector<1x1x16x16x128xbf16>
    %40 = vector.shape_cast %39 : vector<1x1x16x16x128xbf16> to vector<16x16x128xbf16>
    %41 = vector.shape_cast %40 : vector<16x16x128xbf16> to vector<256x128xbf16>
    %c0_60 = arith.constant 0 : index
    %c0_61 = arith.constant 0 : index
    %42 = vector.load %arg8[%c0_60, %c0_61] : memref<128x128xbf16, #tpu.memory_space<vmem>>, vector<128x128xbf16>
    %cst_62 = arith.constant dense<0.000000e+00> : vector<256x128xf32>
    %43 = tpu.matmul %41, %42, %cst_62 {dimension_numbers = #tpu.dot_dimension_numbers<[1], [0], [0], [1], [0, 0, 1, 1], [], []>} : vector<256x128xbf16>, vector<128x128xbf16>, vector<256x128xf32> -> vector<256x128xf32>
    %44 = arith.addf %38, %43 : vector<256x128xf32>
    %c0_63 = arith.constant 0 : index
    %c0_64 = arith.constant 0 : index
    %45 = vector.load %arg9[%c0_63, %c0_64] : memref<1x128xf32, #tpu.memory_space<vmem>>, vector<1x128xf32>
    %46 = vector.broadcast %45 : vector<1x128xf32> to vector<256x128xf32>
    %47 = arith.addf %44, %46 : vector<256x128xf32>
    %48 = arith.negf %47 : vector<256x128xf32>
    %49 = math.exp %48 : vector<256x128xf32>
    %cst_65 = arith.constant 1.000000e+00 : f32
    %50 = vector.broadcast %cst_65 : f32 to vector<256x128xf32>
    %51 = arith.addf %50, %49 : vector<256x128xf32>
    %52 = arith.divf %50, %51 : vector<256x128xf32>
    %53 = arith.mulf %47, %52 : vector<256x128xf32>
    %54 = vector.shape_cast %53 : vector<256x128xf32> to vector<16x16x128xf32>
    %c0_66 = arith.constant 0 : index
    %c0_67 = arith.constant 0 : index
    %c0_68 = arith.constant 0 : index
    %c0_69 = arith.constant 0 : index
    %c0_70 = arith.constant 0 : index
    %55 = vector.load %arg10[%c0_66, %c0_67, %c0_68, %c0_69, %c0_70] : memref<1x1x16x16x128xf32, #tpu.memory_space<vmem>>, vector<1x1x16x16x128xf32>
    %56 = vector.shape_cast %55 : vector<1x1x16x16x128xf32> to vector<16x16x128xf32>
    %57 = vector.shape_cast %54 : vector<16x16x128xf32> to vector<1x1x16x16x128xf32>
    tpu.vector_store %arg10[%c0_66, %c0_67, %c0_68, %c0_69, %c0_70], %57 {strides = array<i32>} : memref<1x1x16x16x128xf32, #tpu.memory_space<vmem>>, vector<1x1x16x16x128xf32>,
    return
  }
  func.func @transform_0(%arg0: i32, %arg1: i32) -> (i32, i32, i32, i32, i32) {
    %c0_i32 = arith.constant 0 : i32
    %c0_i32_0 = arith.constant 0 : i32
    %c0_i32_1 = arith.constant 0 : i32
    %c0_i32_2 = arith.constant 0 : i32
    return %arg0, %arg1, %c0_i32, %c0_i32_0, %c0_i32_1 : i32, i32, i32, i32, i32
  }
  func.func @transform_1(%arg0: i32, %arg1: i32) -> (i32, i32) {
    %c0_i32 = arith.constant 0 : i32
    %c0_i32_0 = arith.constant 0 : i32
    %c0_i32_1 = arith.constant 0 : i32
    return %c0_i32, %c0_i32_0 : i32, i32
  }
  func.func @transform_2(%arg0: i32, %arg1: i32) -> (i32, i32) {
    %c0_i32 = arith.constant 0 : i32
    %c0_i32_0 = arith.constant 0 : i32
    %c0_i32_1 = arith.constant 0 : i32
    return %c0_i32, %c0_i32_0 : i32, i32
  }
  func.func @transform_3(%arg0: i32, %arg1: i32) -> (i32, i32, i32, i32, i32) {
    %c0_i32 = arith.constant 0 : i32
    %c0_i32_0 = arith.constant 0 : i32
    %c0_i32_1 = arith.constant 0 : i32
    %c0_i32_2 = arith.constant 0 : i32
    return %arg0, %arg1, %c0_i32, %c0_i32_0, %c0_i32_1 : i32, i32, i32, i32, i32
  }
  func.func @transform_4(%arg0: i32, %arg1: i32) -> (i32, i32, i32, i32, i32) {
    %c0_i32 = arith.constant 0 : i32
    %c0_i32_0 = arith.constant 0 : i32
    %c0_i32_1 = arith.constant 0 : i32
    %c0_i32_2 = arith.constant 0 : i32
    return %arg0, %arg1, %c0_i32, %c0_i32_0, %c0_i32_1 : i32, i32, i32, i32, i32
  }
  func.func @transform_5(%arg0: i32, %arg1: i32) -> (i32, i32) {
    %c0_i32 = arith.constant 0 : i32
    %c0_i32_0 = arith.constant 0 : i32
    %c0_i32_1 = arith.constant 0 : i32
    return %c0_i32, %c0_i32_0 : i32, i32
  }
  func.func @transform_6(%arg0: i32, %arg1: i32) -> (i32, i32) {
    %c0_i32 = arith.constant 0 : i32
    %c0_i32_0 = arith.constant 0 : i32
    %c0_i32_1 = arith.constant 0 : i32
    return %c0_i32, %c0_i32_0 : i32, i32
  }
  func.func @transform_7(%arg0: i32, %arg1: i32) -> (i32, i32) {
    %c0_i32 = arith.constant 0 : i32
    %c0_i32_0 = arith.constant 0 : i32
    %c0_i32_1 = arith.constant 0 : i32
    return %c0_i32, %c0_i32_0 : i32, i32
  }
  func.func @transform_8(%arg0: i32, %arg1: i32) -> (i32, i32, i32, i32, i32) {
    %c0_i32 = arith.constant 0 : i32
    %c0_i32_0 = arith.constant 0 : i32
    %c0_i32_1 = arith.constant 0 : i32
    %c0_i32_2 = arith.constant 0 : i32
    return %arg0, %arg1, %c0_i32, %c0_i32_0, %c0_i32_1 : i32, i32, i32, i32, i32
  }
}

</mosaic_0001>

<llo_original>
// kernel: csp_forward.3
$region0: #{csp_forward.3}
  #allocation0 [shape = 'u32[]', space=smem, size = 0x4, offset = 0x4, fixed_abs, tag = 'smem constant byte address 0x4 - core index']
  #allocation1 [shape = 'u32[144,128]{1,0:T(1,128)}', space=vmem, size = 0x12000, scoped, tag = 'internal scratch']
  %s0 = inlined_call_operand.vmem [shape: bf16[512,128], index: 0, kind: input, shape index: {}]
  %s1 = inlined_call_operand.vmem [shape: bf16[128,256], index: 1, kind: input, shape index: {}]
  %s2 = inlined_call_operand.vmem [shape: f32[1,256], index: 2, kind: input, shape index: {}]
  %s3 = inlined_call_operand.vmem [shape: bf16[512,128], index: 3, kind: output, shape index: {0}]
  %s4 = inlined_call_operand.vmem [shape: bf16[512,128], index: 4, kind: output, shape index: {1}]
  %5 = xla_tuple %s3, %s4
  %s6 = sld [smem:[#allocation0]]
  $region30: #{csp_forward.3} parent=0
    _
  %s8 = ssub.s32 1, %s6
  %s9 = scalar_select 0, %s8, %s6
  // Predicated region
  $region2: #{csp_forward.3} parent=0 // pred_check
    _
  $region3: #{csp_forward.3} parent=0 // pred_check_branch
    %11 = sbr.rel (0) target = $region5
  $region4: #{csp_forward.3} parent=0 // pred_region
    _
  $region5: #{csp_forward.3} parent=0 // pred_fallthru
    _
  // Predicated region
  $region6: #{csp_forward.3} parent=0 // pred_check
    _
  $region7: #{csp_forward.3} parent=0 // pred_check_branch
    %13 = sbr.rel (0) target = $region9
  $region8: #{csp_forward.3} parent=0 // pred_region
    _
  $region9: #{csp_forward.3} parent=0 // pred_fallthru
    _
  // Predicated region
  $region10: #{csp_forward.3} parent=0 // pred_check
    _
  $region11: #{csp_forward.3} parent=0 // pred_check_branch
    %15 = sbr.rel (0) target = $region13
  $region12: #{csp_forward.3} parent=0 // pred_region
    _
  $region13: #{csp_forward.3} parent=0 // pred_fallthru
    _
  %v17 = vld [vmem:[%s0] sm:$0xf]
  %v18 = vld [vmem:[%s0 + $0x4] sm:$0xf]
  %v19 = vld [vmem:[%s0 + $0x8] sm:$0xf]
  %v20 = vld [vmem:[%s0 + $0xc] sm:$0xf]
  %v21 = vld [vmem:[%s0 + $0x10] sm:$0xf]
  %v22 = vld [vmem:[%s0 + $0x14] sm:$0xf]
  %v23 = vld [vmem:[%s0 + $0x18] sm:$0xf]
  %v24 = vld [vmem:[%s0 + $0x1c] sm:$0xf]
  %v25 = vld [vmem:[%s0 + $0x20] sm:$0xf]
  %v26 = vld [vmem:[%s0 + $0x24] sm:$0xf]
  %v27 = vld [vmem:[%s0 + $0x28] sm:$0xf]
  %v28 = vld [vmem:[%s0 + $0x2c] sm:$0xf]
  %v29 = vld [vmem:[%s0 + $0x30] sm:$0xf]
  %v30 = vld [vmem:[%s0 + $0x34] sm:$0xf]
  %v31 = vld [vmem:[%s0 + $0x38] sm:$0xf]
  %v32 = vld [vmem:[%s0 + $0x3c] sm:$0xf]
  %v33 = vld [vmem:[%s0 + $0x40] sm:$0xf]
  %v34 = vld [vmem:[%s0 + $0x44] sm:$0xf]
  %v35 = vld [vmem:[%s0 + $0x48] sm:$0xf]
  %v36 = vld [vmem:[%s0 + $0x4c] sm:$0xf]
  %v37 = vld [vmem:[%s0 + $0x50] sm:$0xf]
  %v38 = vld [vmem:[%s0 + $0x54] sm:$0xf]
  %v39 = vld [vmem:[%s0 + $0x58] sm:$0xf]
  %v40 = vld [vmem:[%s0 + $0x5c] sm:$0xf]
  %v41 = vld [vmem:[%s0 + $0x60] sm:$0xf]
  %v42 = vld [vmem:[%s0 + $0x64] sm:$0xf]
  %v43 = vld [vmem:[%s0 + $0x68] sm:$0xf]
  %v44 = vld [vmem:[%s0 + $0x6c] sm:$0xf]
  %v45 = vld [vmem:[%s0 + $0x70] sm:$0xf]
  %v46 = vld [vmem:[%s0 + $0x74] sm:$0xf]
  %v47 = vld [vmem:[%s0 + $0x78] sm:$0xf]
  %v48 = vld [vmem:[%s0 + $0x7c] sm:$0xf]
  %v49 = vld [vmem:[%s0 + $0x80] sm:$0xf]
  %v50 = vld [vmem:[%s0 + $0x84] sm:$0xf]
  %v51 = vld [vmem:[%s0 + $0x88] sm:$0xf]
  %v52 = vld [vmem:[%s0 + $0x8c] sm:$0xf]
  %v53 = vld [vmem:[%s0 + $0x90] sm:$0xf]
  %v54 = vld [vmem:[%s0 + $0x94] sm:$0xf]
  %v55 = vld [vmem:[%s0 + $0x98] sm:$0xf]
  %v56 = vld [vmem:[%s0 + $0x9c] sm:$0xf]
  %v57 = vld [vmem:[%s0 + $0xa0] sm:$0xf]
  %v58 = vld [vmem:[%s0 + $0xa4] sm:$0xf]
  %v59 = vld [vmem:[%s0 + $0xa8] sm:$0xf]
  %v60 = vld [vmem:[%s0 + $0xac] sm:$0xf]
  %v61 = vld [vmem:[%s0 + $0xb0] sm:$0xf]
  %v62 = vld [vmem:[%s0 + $0xb4] sm:$0xf]
  %v63 = vld [vmem:[%s0 + $0xb8] sm:$0xf]
  %v64 = vld [vmem:[%s0 + $0xbc] sm:$0xf]
  %v65 = vld [vmem:[%s0 + $0xc0] sm:$0xf]
  %v66 = vld [vmem:[%s0 + $0xc4] sm:$0xf]
  %v67 = vld [vmem:[%s0 + $0xc8] sm:$0xf]
  %v68 = vld [vmem:[%s0 + $0xcc] sm:$0xf]
  %v69 = vld [vmem:[%s0 + $0xd0] sm:$0xf]
  %v70 = vld [vmem:[%s0 + $0xd4] sm:$0xf]
  %v71 = vld [vmem:[%s0 + $0xd8] sm:$0xf]
  %v72 = vld [vmem:[%s0 + $0xdc] sm:$0xf]
  %v73 = vld [vmem:[%s0 + $0xe0] sm:$0xf]
  %v74 = vld [vmem:[%s0 + $0xe4] sm:$0xf]
  %v75 = vld [vmem:[%s0 + $0xe8] sm:$0xf]
  %v76 = vld [vmem:[%s0 + $0xec] sm:$0xf]
  %v77 = vld [vmem:[%s0 + $0xf0] sm:$0xf]
  %v78 = vld [vmem:[%s0 + $0xf4] sm:$0xf]
  %v79 = vld [vmem:[%s0 + $0xf8] sm:$0xf]
  %v80 = vld [vmem:[%s0 + $0xfc] sm:$0xf]
  %v81 = vld [vmem:[%s1] sm:$0xff]
  %v82 = vld [vmem:[%s1 + $0x8] sm:$0xff]
  %v83 = vld [vmem:[%s1 + $0x10] sm:$0xff]
  %v84 = vld [vmem:[%s1 + $0x18] sm:$0xff]
  %v85 = vld [vmem:[%s1 + $0x20] sm:$0xff]
  %v86 = vld [vmem:[%s1 + $0x28] sm:$0xff]
  %v87 = vld [vmem:[%s1 + $0x30] sm:$0xff]
  %v88 = vld [vmem:[%s1 + $0x38] sm:$0xff]
  %v89 = vld [vmem:[%s1 + $0x40] sm:$0xff]
  %v90 = vld [vmem:[%s1 + $0x48] sm:$0xff]
  %v91 = vld [vmem:[%s1 + $0x50] sm:$0xff]
  %v92 = vld [vmem:[%s1 + $0x58] sm:$0xff]
  %v93 = vld [vmem:[%s1 + $0x60] sm:$0xff]
  %v94 = vld [vmem:[%s1 + $0x68] sm:$0xff]
  %v95 = vld [vmem:[%s1 + $0x70] sm:$0xff]
  %v96 = vld [vmem:[%s1 + $0x78] sm:$0xff]
  %v97 = vld [vmem:[%s2] sm:$0x3]
  %v99 = vlaneseq
  %v100 = vshrl.u32 %v99, 7
  %v101 = vsub.s32 0, %v100
  %v102 = vrot.slane %v97, %v101
  %v103 = vlaneseq
  %v104 = vshrl.u32 %v103, 7
  %v105 = vsub.s32 1, %v104
  %v106 = vrot.slane %v97, %v105
  %v173 = vunpack.c.l.b16 %v17
  %v174 = vunpack.c.l.b16 %v18
  %v175 = vunpack.c.l.b16 %v19
  %v176 = vunpack.c.l.b16 %v20
  %v177 = vunpack.c.l.b16 %v21
  %v178 = vunpack.c.l.b16 %v22
  %v179 = vunpack.c.l.b16 %v23
  %v180 = vunpack.c.l.b16 %v24
  %v181 = vunpack.c.l.b16 %v25
  %v182 = vunpack.c.l.b16 %v26
  %v183 = vunpack.c.l.b16 %v27
  %v184 = vunpack.c.l.b16 %v28
  %v185 = vunpack.c.l.b16 %v29
  %v186 = vunpack.c.l.b16 %v30
  %v187 = vunpack.c.l.b16 %v31
  %v188 = vunpack.c.l.b16 %v32
  %v189 = vunpack.c.l.b16 %v33
  %v190 = vunpack.c.l.b16 %v34
  %v191 = vunpack.c.l.b16 %v35
  %v192 = vunpack.c.l.b16 %v36
  %v193 = vunpack.c.l.b16 %v37
  %v194 = vunpack.c.l.b16 %v38
  %v195 = vunpack.c.l.b16 %v39
  %v196 = vunpack.c.l.b16 %v40
  %v197 = vunpack.c.l.b16 %v41
  %v198 = vunpack.c.l.b16 %v42
  %v199 = vunpack.c.l.b16 %v43
  %v200 = vunpack.c.l.b16 %v44
  %v201 = vunpack.c.l.b16 %v45
  %v202 = vunpack.c.l.b16 %v46
  %v203 = vunpack.c.l.b16 %v47
  %v204 = vunpack.c.l.b16 %v48
  %v205 = vunpack.c.l.b16 %v49
  %v206 = vunpack.c.l.b16 %v50
  %v207 = vunpack.c.l.b16 %v51
  %v208 = vunpack.c.l.b16 %v52
  %v209 = vunpack.c.l.b16 %v53
  %v210 = vunpack.c.l.b16 %v54
  %v211 = vunpack.c.l.b16 %v55
  %v212 = vunpack.c.l.b16 %v56
  %v213 = vunpack.c.l.b16 %v57
  %v214 = vunpack.c.l.b16 %v58
  %v215 = vunpack.c.l.b16 %v59
  %v216 = vunpack.c.l.b16 %v60
  %v217 = vunpack.c.l.b16 %v61
  %v218 = vunpack.c.l.b16 %v62
  %v219 = vunpack.c.l.b16 %v63
  %v220 = vunpack.c.l.b16 %v64
  %v221 = vunpack.c.l.b16 %v65
  %v222 = vunpack.c.l.b16 %v66
  %v223 = vunpack.c.l.b16 %v67
  %v224 = vunpack.c.l.b16 %v68
  %v225 = vunpack.c.l.b16 %v69
  %v226 = vunpack.c.l.b16 %v70
  %v227 = vunpack.c.l.b16 %v71
  %v228 = vunpack.c.l.b16 %v72
  %v229 = vunpack.c.l.b16 %v73
  %v230 = vunpack.c.l.b16 %v74
  %v231 = vunpack.c.l.b16 %v75
  %v232 = vunpack.c.l.b16 %v76
  %v233 = vunpack.c.l.b16 %v77
  %v234 = vunpack.c.l.b16 %v78
  %v235 = vunpack.c.l.b16 %v79
  %v236 = vunpack.c.l.b16 %v80
  %v237 = vpack.c.b16 %v174, %v173
  %v238 = vpack.c.b16 %v176, %v175
  %v239 = vpack.c.b16 %v178, %v177
  %v240 = vpack.c.b16 %v180, %v179
  %v241 = vpack.c.b16 %v182, %v181
  %v242 = vpack.c.b16 %v184, %v183
  %v243 = vpack.c.b16 %v186, %v185
  %v244 = vpack.c.b16 %v188, %v187
  %v245 = vpack.c.b16 %v190, %v189
  %v246 = vpack.c.b16 %v192, %v191
  %v247 = vpack.c.b16 %v194, %v193
  %v248 = vpack.c.b16 %v196, %v195
  %v249 = vpack.c.b16 %v198, %v197
  %v250 = vpack.c.b16 %v200, %v199
  %v251 = vpack.c.b16 %v202, %v201
  %v252 = vpack.c.b16 %v204, %v203
  %v253 = vpack.c.b16 %v206, %v205
  %v254 = vpack.c.b16 %v208, %v207
  %v255 = vpack.c.b16 %v210, %v209
  %v256 = vpack.c.b16 %v212, %v211
  %v257 = vpack.c.b16 %v214, %v213
  %v258 = vpack.c.b16 %v216, %v215
  %v259 = vpack.c.b16 %v218, %v217
  %v260 = vpack.c.b16 %v220, %v219
  %v261 = vpack.c.b16 %v222, %v221
  %v262 = vpack.c.b16 %v224, %v223
  %v263 = vpack.c.b16 %v226, %v225
  %v264 = vpack.c.b16 %v228, %v227
  %v265 = vpack.c.b16 %v230, %v229
  %v266 = vpack.c.b16 %v232, %v231
  %v267 = vpack.c.b16 %v234, %v233
  %v268 = vpack.c.b16 %v236, %v235
  %v317 = vunpack.c.l.b16 %v81
  %v318 = vunpack.c.h.b16 %v81
  %v319 = vunpack.c.l.b16 %v82
  %v320 = vunpack.c.h.b16 %v82
  %v321 = vunpack.c.l.b16 %v83
  %v322 = vunpack.c.h.b16 %v83
  %v323 = vunpack.c.l.b16 %v84
  %v324 = vunpack.c.h.b16 %v84
  %v325 = vunpack.c.l.b16 %v85
  %v326 = vunpack.c.h.b16 %v85
  %v327 = vunpack.c.l.b16 %v86
  %v328 = vunpack.c.h.b16 %v86
  %v329 = vunpack.c.l.b16 %v87
  %v330 = vunpack.c.h.b16 %v87
  %v331 = vunpack.c.l.b16 %v88
  %v332 = vunpack.c.h.b16 %v88
  %v333 = vunpack.c.l.b16 %v89
  %v334 = vunpack.c.h.b16 %v89
  %v335 = vunpack.c.l.b16 %v90
  %v336 = vunpack.c.h.b16 %v90
  %v337 = vunpack.c.l.b16 %v91
  %v338 = vunpack.c.h.b16 %v91
  %v339 = vunpack.c.l.b16 %v92
  %v340 = vunpack.c.h.b16 %v92
  %v341 = vunpack.c.l.b16 %v93
  %v342 = vunpack.c.h.b16 %v93
  %v343 = vunpack.c.l.b16 %v94
  %v344 = vunpack.c.h.b16 %v94
  %v345 = vunpack.c.l.b16 %v95
  %v346 = vunpack.c.h.b16 %v95
  %v347 = vunpack.c.l.b16 %v96
  %v348 = vunpack.c.h.b16 %v96
  %v349 = vpack.c.b16 %v319, %v317
  %v350 = vpack.c.b16 %v320, %v318
  %v351 = vpack.c.b16 %v323, %v321
  %v352 = vpack.c.b16 %v324, %v322
  %v353 = vpack.c.b16 %v327, %v325
  %v354 = vpack.c.b16 %v328, %v326
  %v355 = vpack.c.b16 %v331, %v329
  %v356 = vpack.c.b16 %v332, %v330
  %v357 = vpack.c.b16 %v335, %v333
  %v358 = vpack.c.b16 %v336, %v334
  %v359 = vpack.c.b16 %v339, %v337
  %v360 = vpack.c.b16 %v340, %v338
  %v361 = vpack.c.b16 %v343, %v341
  %v362 = vpack.c.b16 %v344, %v342
  %v363 = vpack.c.b16 %v347, %v345
  %v364 = vpack.c.b16 %v348, %v346
  %381 = vmatprep.subr.bf16.mxu0 %v350
  %382 = vmatpush1.bf16.msra.mxu0 %v349
  %383 = vmatprep.subr.bf16.mxu0 %v352
  %384 = vmatpush1.bf16.msra.mxu0 %v351
  %385 = vmatprep.subr.bf16.mxu0 %v354
  %386 = vmatpush1.bf16.msra.mxu0 %v353
  %387 = vmatprep.subr.bf16.mxu0 %v356
  %388 = vmatpush1.bf16.msra.mxu0 %v355
  %389 = vmatprep.subr.bf16.mxu0 %v358
  %390 = vmatpush1.bf16.msra.mxu0 %v357
  %391 = vmatprep.subr.bf16.mxu0 %v360
  %392 = vmatpush1.bf16.msra.mxu0 %v359
  %393 = vmatprep.subr.bf16.mxu0 %v362
  %394 = vmatpush1.bf16.msra.mxu0 %v361
  %395 = vmatprep.subr.bf16.mxu0 %v364
  %396 = vmatpush1.bf16.msra.mxu0 %v363
  %397 = vmatprep.subr.bf16.mxu0 0
  %398 = vmatpush1.bf16.msra.mxu0 0
  %399 = vmatprep.subr.bf16.mxu0 0
  %400 = vmatpush1.bf16.msra.mxu0 0
  %401 = vmatprep.subr.bf16.mxu0 0
  %402 = vmatpush1.bf16.msra.mxu0 0
  %403 = vmatprep.subr.bf16.mxu0 0
  %404 = vmatpush1.bf16.msra.mxu0 0
  %405 = vmatprep.subr.bf16.mxu0 0
  %406 = vmatpush1.bf16.msra.mxu0 0
  %407 = vmatprep.subr.bf16.mxu0 0
  %408 = vmatpush1.bf16.msra.mxu0 0
  %409 = vmatprep.subr.bf16.mxu0 0
  %410 = vmatpush1.bf16.msra.mxu0 0
  %411 = vmatprep.subr.bf16.mxu0 0
  %412 = vmatpush1.bf16.msra.mxu0 0
  %413 = vmatprep.mubr.bf16.mxu0 0
  %414 = vmatmul.mubr.bf16.gmra.mrb[0].mxu0 %v237
  %v415 = vpop.f32.mrb[0].mxu0
  %v416 = vadd.f32 %v102, %v415
  %v417 = vpop.f32.mrb[0].mxu0
  %v418 = vadd.f32 %v106, %v417
  %v419 = vpop.f32.mrb[0].mxu0
  %v420 = vadd.f32 %v102, %v419
  %v421 = vpop.f32.mrb[0].mxu0
  %v422 = vadd.f32 %v106, %v421
  %423 = vmatprep.mubr.bf16.mxu0 0
  %424 = vmatmul.mubr.bf16.gmra.mrb[0].mxu0 %v238
  %v425 = vpop.f32.mrb[0].mxu0
  %v426 = vadd.f32 %v102, %v425
  %v427 = vpop.f32.mrb[0].mxu0
  %v428 = vadd.f32 %v106, %v427
  %v429 = vpop.f32.mrb[0].mxu0
  %v430 = vadd.f32 %v102, %v429
  %v431 = vpop.f32.mrb[0].mxu0
  %v432 = vadd.f32 %v106, %v431
  %433 = vmatprep.mubr.bf16.mxu0 0
  %434 = vmatmul.mubr.bf16.gmra.mrb[0].mxu0 %v239
  %v435 = vpop.f32.mrb[0].mxu0
  %v436 = vadd.f32 %v102, %v435
  %v437 = vpop.f32.mrb[0].mxu0
  %v438 = vadd.f32 %v106, %v437
  %v439 = vpop.f32.mrb[0].mxu0
  %v440 = vadd.f32 %v102, %v439
  %v441 = vpop.f32.mrb[0].mxu0
  %v442 = vadd.f32 %v106, %v441
  %443 = vmatprep.mubr.bf16.mxu0 0
  %444 = vmatmul.mubr.bf16.gmra.mrb[0].mxu0 %v240
  %v445 = vpop.f32.mrb[0].mxu0
  %v446 = vadd.f32 %v102, %v445
  %v447 = vpop.f32.mrb[0].mxu0
  %v448 = vadd.f32 %v106, %v447
  %v449 = vpop.f32.mrb[0].mxu0
  %v450 = vadd.f32 %v102, %v449
  %v451 = vpop.f32.mrb[0].mxu0
  %v452 = vadd.f32 %v106, %v451
  %453 = vmatprep.mubr.bf16.mxu0 0
  %454 = vmatmul.mubr.bf16.gmra.mrb[0].mxu0 %v241
  %v455 = vpop.f32.mrb[0].mxu0
  %v456 = vadd.f32 %v102, %v455
  %v457 = vpop.f32.mrb[0].mxu0
  %v458 = vadd.f32 %v106, %v457
  %v459 = vpop.f32.mrb[0].mxu0
  %v460 = vadd.f32 %v102, %v459
  %v461 = vpop.f32.mrb[0].mxu0
  %v462 = vadd.f32 %v106, %v461
  %463 = vmatprep.mubr.bf16.mxu0 0
  %464 = vmatmul.mubr.bf16.gmra.mrb[0].mxu0 %v242
  %v465 = vpop.f32.mrb[0].mxu0
  %v466 = vadd.f32 %v102, %v465
  %v467 = vpop.f32.mrb[0].mxu0
  %v468 = vadd.f32 %v106, %v467
  %v469 = vpop.f32.mrb[0].mxu0
  %v470 = vadd.f32 %v102, %v469
  %v471 = vpop.f32.mrb[0].mxu0
  %v472 = vadd.f32 %v106, %v471
  %473 = vmatprep.mubr.bf16.mxu0 0
  %474 = vmatmul.mubr.bf16.gmra.mrb[0].mxu0 %v243
  %v475 = vpop.f32.mrb[0].mxu0
  %v476 = vadd.f32 %v102, %v475
  %v477 = vpop.f32.mrb[0].mxu0
  %v478 = vadd.f32 %v106, %v477
  %v479 = vpop.f32.mrb[0].mxu0
  %v480 = vadd.f32 %v102, %v479
  %v481 = vpop.f32.mrb[0].mxu0
  %v482 = vadd.f32 %v106, %v481
  %483 = vmatprep.mubr.bf16.mxu0 0
  %484 = vmatmul.mubr.bf16.gmra.mrb[0].mxu0 %v244
  %v485 = vpop.f32.mrb[0].mxu0
  %v486 = vadd.f32 %v102, %v485
  %v487 = vpop.f32.mrb[0].mxu0
  %v488 = vadd.f32 %v106, %v487
  %v489 = vpop.f32.mrb[0].mxu0
  %v490 = vadd.f32 %v102, %v489
  %v491 = vpop.f32.mrb[0].mxu0
  %v492 = vadd.f32 %v106, %v491
  %493 = vmatprep.mubr.bf16.mxu0 0
  %494 = vmatmul.mubr.bf16.gmra.mrb[0].mxu0 %v245
  %v495 = vpop.f32.mrb[0].mxu0
  %v496 = vadd.f32 %v102, %v495
  %v497 = vpop.f32.mrb[0].mxu0
  %v498 = vadd.f32 %v106, %v497
  %v499 = vpop.f32.mrb[0].mxu0
  %v500 = vadd.f32 %v102, %v499
  %v501 = vpop.f32.mrb[0].mxu0
  %v502 = vadd.f32 %v106, %v501
  %503 = vmatprep.mubr.bf16.mxu0 0
  %504 = vmatmul.mubr.bf16.gmra.mrb[0].mxu0 %v246
  %v505 = vpop.f32.mrb[0].mxu0
  %v506 = vadd.f32 %v102, %v505
  %v507 = vpop.f32.mrb[0].mxu0
  %v508 = vadd.f32 %v106, %v507
  %v509 = vpop.f32.mrb[0].mxu0
  %v510 = vadd.f32 %v102, %v509
  %v511 = vpop.f32.mrb[0].mxu0
  %v512 = vadd.f32 %v106, %v511
  %513 = vmatprep.mubr.bf16.mxu0 0
  %514 = vmatmul.mubr.bf16.gmra.mrb[0].mxu0 %v247
  %v515 = vpop.f32.mrb[0].mxu0
  %v516 = vadd.f32 %v102, %v515
  %v517 = vpop.f32.mrb[0].mxu0
  %v518 = vadd.f32 %v106, %v517
  %v519 = vpop.f32.mrb[0].mxu0
  %v520 = vadd.f32 %v102, %v519
  %v521 = vpop.f32.mrb[0].mxu0
  %v522 = vadd.f32 %v106, %v521
  %523 = vmatprep.mubr.bf16.mxu0 0
  %524 = vmatmul.mubr.bf16.gmra.mrb[0].mxu0 %v248
  %v525 = vpop.f32.mrb[0].mxu0
  %v526 = vadd.f32 %v102, %v525
  %v527 = vpop.f32.mrb[0].mxu0
  %v528 = vadd.f32 %v106, %v527
  %v529 = vpop.f32.mrb[0].mxu0
  %v530 = vadd.f32 %v102, %v529
  %v531 = vpop.f32.mrb[0].mxu0
  %v532 = vadd.f32 %v106, %v531
  %533 = vmatprep.mubr.bf16.mxu0 0
  %534 = vmatmul.mubr.bf16.gmra.mrb[0].mxu0 %v249
  %v535 = vpop.f32.mrb[0].mxu0
  %v536 = vadd.f32 %v102, %v535
  %v537 = vpop.f32.mrb[0].mxu0
  %v538 = vadd.f32 %v106, %v537
  %v539 = vpop.f32.mrb[0].mxu0
  %v540 = vadd.f32 %v102, %v539
  %v541 = vpop.f32.mrb[0].mxu0
  %v542 = vadd.f32 %v106, %v541
  %543 = vmatprep.mubr.bf16.mxu0 0
  %544 = vmatmul.mubr.bf16.gmra.mrb[0].mxu0 %v250
  %v545 = vpop.f32.mrb[0].mxu0
  %v546 = vadd.f32 %v102, %v545
  %v547 = vpop.f32.mrb[0].mxu0
  %v548 = vadd.f32 %v106, %v547
  %v549 = vpop.f32.mrb[0].mxu0
  %v550 = vadd.f32 %v102, %v549
  %v551 = vpop.f32.mrb[0].mxu0
  %v552 = vadd.f32 %v106, %v551
  %553 = vmatprep.mubr.bf16.mxu0 0
  %554 = vmatmul.mubr.bf16.gmra.mrb[0].mxu0 %v251
  %v555 = vpop.f32.mrb[0].mxu0
  %v556 = vadd.f32 %v102, %v555
  %v557 = vpop.f32.mrb[0].mxu0
  %v558 = vadd.f32 %v106, %v557
  %v559 = vpop.f32.mrb[0].mxu0
  %v560 = vadd.f32 %v102, %v559
  %v561 = vpop.f32.mrb[0].mxu0
  %v562 = vadd.f32 %v106, %v561
  %563 = vmatprep.mubr.bf16.mxu0 0
  %564 = vmatmul.mubr.bf16.gmra.mrb[0].mxu0 %v252
  %v565 = vpop.f32.mrb[0].mxu0
  %v566 = vadd.f32 %v102, %v565
  %v567 = vpop.f32.mrb[0].mxu0
  %v568 = vadd.f32 %v106, %v567
  %v569 = vpop.f32.mrb[0].mxu0
  %v570 = vadd.f32 %v102, %v569
  %v571 = vpop.f32.mrb[0].mxu0
  %v572 = vadd.f32 %v106, %v571
  %573 = vmatprep.mubr.bf16.mxu0 0
  %574 = vmatmul.mubr.bf16.gmra.mrb[0].mxu0 %v253
  %v575 = vpop.f32.mrb[0].mxu0
  %v576 = vadd.f32 %v102, %v575
  %v577 = vpop.f32.mrb[0].mxu0
  %v578 = vadd.f32 %v106, %v577
  %v579 = vpop.f32.mrb[0].mxu0
  %v580 = vadd.f32 %v102, %v579
  %v581 = vpop.f32.mrb[0].mxu0
  %v582 = vadd.f32 %v106, %v581
  %583 = vmatprep.mubr.bf16.mxu0 0
  %584 = vmatmul.mubr.bf16.gmra.mrb[0].mxu0 %v254
  %v585 = vpop.f32.mrb[0].mxu0
  %v586 = vadd.f32 %v102, %v585
  %v587 = vpop.f32.mrb[0].mxu0
  %v588 = vadd.f32 %v106, %v587
  %v589 = vpop.f32.mrb[0].mxu0
  %v590 = vadd.f32 %v102, %v589
  %v591 = vpop.f32.mrb[0].mxu0
  %v592 = vadd.f32 %v106, %v591
  %593 = vmatprep.mubr.bf16.mxu0 0
  %594 = vmatmul.mubr.bf16.gmra.mrb[0].mxu0 %v255
  %v595 = vpop.f32.mrb[0].mxu0
  %v596 = vadd.f32 %v102, %v595
  %v597 = vpop.f32.mrb[0].mxu0
  %v598 = vadd.f32 %v106, %v597
  %v599 = vpop.f32.mrb[0].mxu0
  %v600 = vadd.f32 %v102, %v599
  %v601 = vpop.f32.mrb[0].mxu0
  %v602 = vadd.f32 %v106, %v601
  %603 = vmatprep.mubr.bf16.mxu0 0
  %604 = vmatmul.mubr.bf16.gmra.mrb[0].mxu0 %v256
  %v605 = vpop.f32.mrb[0].mxu0
  %v606 = vadd.f32 %v102, %v605
  %v607 = vpop.f32.mrb[0].mxu0
  %v608 = vadd.f32 %v106, %v607
  %v609 = vpop.f32.mrb[0].mxu0
  %v610 = vadd.f32 %v102, %v609
  %v611 = vpop.f32.mrb[0].mxu0
  %v612 = vadd.f32 %v106, %v611
  %613 = vmatprep.mubr.bf16.mxu0 0
  %614 = vmatmul.mubr.bf16.gmra.mrb[0].mxu0 %v257
  %v615 = vpop.f32.mrb[0].mxu0
  %v616 = vadd.f32 %v102, %v615
  %v617 = vpop.f32.mrb[0].mxu0
  %v618 = vadd.f32 %v106, %v617
  %v619 = vpop.f32.mrb[0].mxu0
  %v620 = vadd.f32 %v102, %v619
  %v621 = vpop.f32.mrb[0].mxu0
  %v622 = vadd.f32 %v106, %v621
  %623 = vmatprep.mubr.bf16.mxu0 0
  %624 = vmatmul.mubr.bf16.gmra.mrb[0].mxu0 %v258
  %v625 = vpop.f32.mrb[0].mxu0
  %v626 = vadd.f32 %v102, %v625
  %v627 = vpop.f32.mrb[0].mxu0
  %v628 = vadd.f32 %v106, %v627
  %v629 = vpop.f32.mrb[0].mxu0
  %v630 = vadd.f32 %v102, %v629
  %v631 = vpop.f32.mrb[0].mxu0
  %v632 = vadd.f32 %v106, %v631
  %633 = vmatprep.mubr.bf16.mxu0 0
  %634 = vmatmul.mubr.bf16.gmra.mrb[0].mxu0 %v259
  %v635 = vpop.f32.mrb[0].mxu0
  %v636 = vadd.f32 %v102, %v635
  %v637 = vpop.f32.mrb[0].mxu0
  %v638 = vadd.f32 %v106, %v637
  %v639 = vpop.f32.mrb[0].mxu0
  %v640 = vadd.f32 %v102, %v639
  %v641 = vpop.f32.mrb[0].mxu0
  %v642 = vadd.f32 %v106, %v641
  %643 = vmatprep.mubr.bf16.mxu0 0
  %644 = vmatmul.mubr.bf16.gmra.mrb[0].mxu0 %v260
  %v645 = vpop.f32.mrb[0].mxu0
  %v646 = vadd.f32 %v102, %v645
  %v647 = vpop.f32.mrb[0].mxu0
  %v648 = vadd.f32 %v106, %v647
  %v649 = vpop.f32.mrb[0].mxu0
  %v650 = vadd.f32 %v102, %v649
  %v651 = vpop.f32.mrb[0].mxu0
  %v652 = vadd.f32 %v106, %v651
  %653 = vmatprep.mubr.bf16.mxu0 0
  %654 = vmatmul.mubr.bf16.gmra.mrb[0].mxu0 %v261
  %v655 = vpop.f32.mrb[0].mxu0
  %v656 = vadd.f32 %v102, %v655
  %v657 = vpop.f32.mrb[0].mxu0
  %v658 = vadd.f32 %v106, %v657
  %v659 = vpop.f32.mrb[0].mxu0
  %v660 = vadd.f32 %v102, %v659
  %v661 = vpop.f32.mrb[0].mxu0
  %v662 = vadd.f32 %v106, %v661
  %663 = vmatprep.mubr.bf16.mxu0 0
  %664 = vmatmul.mubr.bf16.gmra.mrb[0].mxu0 %v262
  %v665 = vpop.f32.mrb[0].mxu0
  %v666 = vadd.f32 %v102, %v665
  %v667 = vpop.f32.mrb[0].mxu0
  %v668 = vadd.f32 %v106, %v667
  %v669 = vpop.f32.mrb[0].mxu0
  %v670 = vadd.f32 %v102, %v669
  %v671 = vpop.f32.mrb[0].mxu0
  %v672 = vadd.f32 %v106, %v671
  %673 = vmatprep.mubr.bf16.mxu0 0
  %674 = vmatmul.mubr.bf16.gmra.mrb[0].mxu0 %v263
  %v675 = vpop.f32.mrb[0].mxu0
  %v676 = vadd.f32 %v102, %v675
  %v677 = vpop.f32.mrb[0].mxu0
  %v678 = vadd.f32 %v106, %v677
  %v679 = vpop.f32.mrb[0].mxu0
  %v680 = vadd.f32 %v102, %v679
  %v681 = vpop.f32.mrb[0].mxu0
  %v682 = vadd.f32 %v106, %v681
  %683 = vmatprep.mubr.bf16.mxu0 0
  %684 = vmatmul.mubr.bf16.gmra.mrb[0].mxu0 %v264
  %v685 = vpop.f32.mrb[0].mxu0
  %v686 = vadd.f32 %v102, %v685
  %v687 = vpop.f32.mrb[0].mxu0
  %v688 = vadd.f32 %v106, %v687
  %v689 = vpop.f32.mrb[0].mxu0
  %v690 = vadd.f32 %v102, %v689
  %v691 = vpop.f32.mrb[0].mxu0
  %v692 = vadd.f32 %v106, %v691
  %693 = vmatprep.mubr.bf16.mxu0 0
  %694 = vmatmul.mubr.bf16.gmra.mrb[0].mxu0 %v265
  %v695 = vpop.f32.mrb[0].mxu0
  %v696 = vadd.f32 %v102, %v695
  %v697 = vpop.f32.mrb[0].mxu0
  %v698 = vadd.f32 %v106, %v697
  %v699 = vpop.f32.mrb[0].mxu0
  %v700 = vadd.f32 %v102, %v699
  %v701 = vpop.f32.mrb[0].mxu0
  %v702 = vadd.f32 %v106, %v701
  %703 = vmatprep.mubr.bf16.mxu0 0
  %704 = vmatmul.mubr.bf16.gmra.mrb[0].mxu0 %v266
  %v705 = vpop.f32.mrb[0].mxu0
  %v706 = vadd.f32 %v102, %v705
  %v707 = vpop.f32.mrb[0].mxu0
  %v708 = vadd.f32 %v106, %v707
  %v709 = vpop.f32.mrb[0].mxu0
  %v710 = vadd.f32 %v102, %v709
  %v711 = vpop.f32.mrb[0].mxu0
  %v712 = vadd.f32 %v106, %v711
  %713 = vmatprep.mubr.bf16.mxu0 0
  %714 = vmatmul.mubr.bf16.gmra.mrb[0].mxu0 %v267
  %v715 = vpop.f32.mrb[0].mxu0
  %v716 = vadd.f32 %v102, %v715
  %v717 = vpop.f32.mrb[0].mxu0
  %v718 = vadd.f32 %v106, %v717
  %v719 = vpop.f32.mrb[0].mxu0
  %v720 = vadd.f32 %v102, %v719
  %v721 = vpop.f32.mrb[0].mxu0
  %v722 = vadd.f32 %v106, %v721
  %723 = vmatprep.mubr.bf16.mxu0 0
  %724 = vmatmul.mubr.bf16.gmra.mrb[0].mxu0 %v268
  %v725 = vpop.f32.mrb[0].mxu0
  %v726 = vadd.f32 %v102, %v725
  %v727 = vpop.f32.mrb[0].mxu0
  %v728 = vadd.f32 %v106, %v727
  %v729 = vpop.f32.mrb[0].mxu0
  %v730 = vadd.f32 %v102, %v729
  %v731 = vpop.f32.mrb[0].mxu0
  %v732 = vadd.f32 %v106, %v731
  %733 = vdwg.mxu0
  %v734 = vxor.u32 %v416, 2147483648
  %v735 = vxor.u32 %v418, 2147483648
  %v736 = vxor.u32 %v420, 2147483648
  %v737 = vxor.u32 %v422, 2147483648
  %v738 = vxor.u32 %v426, 2147483648
  %v739 = vxor.u32 %v428, 2147483648
  %v740 = vxor.u32 %v430, 2147483648
  %v741 = vxor.u32 %v432, 2147483648
  %v742 = vxor.u32 %v436, 2147483648
  %v743 = vxor.u32 %v438, 2147483648
  %v744 = vxor.u32 %v440, 2147483648
  %v745 = vxor.u32 %v442, 2147483648
  %v746 = vxor.u32 %v446, 2147483648
  %v747 = vxor.u32 %v448, 2147483648
  %v748 = vxor.u32 %v450, 2147483648
  %v749 = vxor.u32 %v452, 2147483648
  %v750 = vxor.u32 %v456, 2147483648
  %v751 = vxor.u32 %v458, 2147483648
  %v752 = vxor.u32 %v460, 2147483648
  %v753 = vxor.u32 %v462, 2147483648
  %v754 = vxor.u32 %v466, 2147483648
  %v755 = vxor.u32 %v468, 2147483648
  %v756 = vxor.u32 %v470, 2147483648
  %v757 = vxor.u32 %v472, 2147483648
  %v758 = vxor.u32 %v476, 2147483648
  %v759 = vxor.u32 %v478, 2147483648
  %v760 = vxor.u32 %v480, 2147483648
  %v761 = vxor.u32 %v482, 2147483648
  %v762 = vxor.u32 %v486, 2147483648
  %v763 = vxor.u32 %v488, 2147483648
  %v764 = vxor.u32 %v490, 2147483648
  %v765 = vxor.u32 %v492, 2147483648
  %v766 = vxor.u32 %v496, 2147483648
  %v767 = vxor.u32 %v498, 2147483648
  %v768 = vxor.u32 %v500, 2147483648
  %v769 = vxor.u32 %v502, 2147483648
  %v770 = vxor.u32 %v506, 2147483648
  %v771 = vxor.u32 %v508, 2147483648
  %v772 = vxor.u32 %v510, 2147483648
  %v773 = vxor.u32 %v512, 2147483648
  %v774 = vxor.u32 %v516, 2147483648
  %v775 = vxor.u32 %v518, 2147483648
  %v776 = vxor.u32 %v520, 2147483648
  %v777 = vxor.u32 %v522, 2147483648
  %v778 = vxor.u32 %v526, 2147483648
  %v779 = vxor.u32 %v528, 2147483648
  %v780 = vxor.u32 %v530, 2147483648
  %v781 = vxor.u32 %v532, 2147483648
  %v782 = vxor.u32 %v536, 2147483648
  %v783 = vxor.u32 %v538, 2147483648
  %v784 = vxor.u32 %v540, 2147483648
  %v785 = vxor.u32 %v542, 2147483648
  %v786 = vxor.u32 %v546, 2147483648
  %v787 = vxor.u32 %v548, 2147483648
  %v788 = vxor.u32 %v550, 2147483648
  %v789 = vxor.u32 %v552, 2147483648
  %v790 = vxor.u32 %v556, 2147483648
  %v791 = vxor.u32 %v558, 2147483648
  %v792 = vxor.u32 %v560, 2147483648
  %v793 = vxor.u32 %v562, 2147483648
  %v794 = vxor.u32 %v566, 2147483648
  %v795 = vxor.u32 %v568, 2147483648
  %v796 = vxor.u32 %v570, 2147483648
  %v797 = vxor.u32 %v572, 2147483648
  %v798 = vxor.u32 %v576, 2147483648
  %v799 = vxor.u32 %v578, 2147483648
  %v800 = vxor.u32 %v580, 2147483648
  %v801 = vxor.u32 %v582, 2147483648
  %v802 = vxor.u32 %v586, 2147483648
  %v803 = vxor.u32 %v588, 2147483648
  %v804 = vxor.u32 %v590, 2147483648
  %v805 = vxor.u32 %v592, 2147483648
  %v806 = vxor.u32 %v596, 2147483648
  %v807 = vxor.u32 %v598, 2147483648
  %v808 = vxor.u32 %v600, 2147483648
  %v809 = vxor.u32 %v602, 2147483648
  %v810 = vxor.u32 %v606, 2147483648
  %v811 = vxor.u32 %v608, 2147483648
  %v812 = vxor.u32 %v610, 2147483648
  %v813 = vxor.u32 %v612, 2147483648
  %v814 = vxor.u32 %v616, 2147483648
  %v815 = vxor.u32 %v618, 2147483648
  %v816 = vxor.u32 %v620, 2147483648
  %v817 = vxor.u32 %v622, 2147483648
  %v818 = vxor.u32 %v626, 2147483648
  %v819 = vxor.u32 %v628, 2147483648
  %v820 = vxor.u32 %v630, 2147483648
  %v821 = vxor.u32 %v632, 2147483648
  %v822 = vxor.u32 %v636, 2147483648
  %v823 = vxor.u32 %v638, 2147483648
  %v824 = vxor.u32 %v640, 2147483648
  %v825 = vxor.u32 %v642, 2147483648
  %v826 = vxor.u32 %v646, 2147483648
  %v827 = vxor.u32 %v648, 2147483648
  %v828 = vxor.u32 %v650, 2147483648
  %v829 = vxor.u32 %v652, 2147483648
  %v830 = vxor.u32 %v656, 2147483648
  %v831 = vxor.u32 %v658, 2147483648
  %v832 = vxor.u32 %v660, 2147483648
  %v833 = vxor.u32 %v662, 2147483648
  %v834 = vxor.u32 %v666, 2147483648
  %v835 = vxor.u32 %v668, 2147483648
  %v836 = vxor.u32 %v670, 2147483648
  %v837 = vxor.u32 %v672, 2147483648
  %v838 = vxor.u32 %v676, 2147483648
  %v839 = vxor.u32 %v678, 2147483648
  %v840 = vxor.u32 %v680, 2147483648
  %v841 = vxor.u32 %v682, 2147483648
  %v842 = vxor.u32 %v686, 2147483648
  %v843 = vxor.u32 %v688, 2147483648
  %v844 = vxor.u32 %v690, 2147483648
  %v845 = vxor.u32 %v692, 2147483648
  %v846 = vxor.u32 %v696, 2147483648
  %v847 = vxor.u32 %v698, 2147483648
  %v848 = vxor.u32 %v700, 2147483648
  %v849 = vxor.u32 %v702, 2147483648
  %v850 = vxor.u32 %v706, 2147483648
  %v851 = vxor.u32 %v708, 2147483648
  %v852 = vxor.u32 %v710, 2147483648
  %v853 = vxor.u32 %v712, 2147483648
  %v854 = vxor.u32 %v716, 2147483648
  %v855 = vxor.u32 %v718, 2147483648
  %v856 = vxor.u32 %v720, 2147483648
  %v857 = vxor.u32 %v722, 2147483648
  %v858 = vxor.u32 %v726, 2147483648
  %v859 = vxor.u32 %v728, 2147483648
  %v860 = vxor.u32 %v730, 2147483648
  %v861 = vxor.u32 %v732, 2147483648
  %v862 = vmul.f32 %v734, 1.442695
  %v863 = vpow.pop %v862
  %v864 = vmul.f32 %v735, 1.442695
  %v865 = vpow.pop %v864
  %v866 = vmul.f32 %v736, 1.442695
  %v867 = vpow.pop %v866
  %v868 = vmul.f32 %v737, 1.442695
  %v869 = vpow.pop %v868
  %v870 = vmul.f32 %v738, 1.442695
  %v871 = vpow.pop %v870
  %v872 = vmul.f32 %v739, 1.442695
  %v873 = vpow.pop %v872
  %v874 = vmul.f32 %v740, 1.442695
  %v875 = vpow.pop %v874
  %v876 = vmul.f32 %v741, 1.442695
  %v877 = vpow.pop %v876
  %v878 = vmul.f32 %v742, 1.442695
  %v879 = vpow.pop %v878
  %v880 = vmul.f32 %v743, 1.442695
  %v881 = vpow.pop %v880
  %v882 = vmul.f32 %v744, 1.442695
  %v883 = vpow.pop %v882
  %v884 = vmul.f32 %v745, 1.442695
  %v885 = vpow.pop %v884
  %v886 = vmul.f32 %v746, 1.442695
  %v887 = vpow.pop %v886
  %v888 = vmul.f32 %v747, 1.442695
  %v889 = vpow.pop %v888
  %v890 = vmul.f32 %v748, 1.442695
  %v891 = vpow.pop %v890
  %v892 = vmul.f32 %v749, 1.442695
  %v893 = vpow.pop %v892
  %v894 = vmul.f32 %v750, 1.442695
  %v895 = vpow.pop %v894
  %v896 = vmul.f32 %v751, 1.442695
  %v897 = vpow.pop %v896
  %v898 = vmul.f32 %v752, 1.442695
  %v899 = vpow.pop %v898
  %v900 = vmul.f32 %v753, 1.442695
  %v901 = vpow.pop %v900
  %v902 = vmul.f32 %v754, 1.442695
  %v903 = vpow.pop %v902
  %v904 = vmul.f32 %v755, 1.442695
  %v905 = vpow.pop %v904
  %v906 = vmul.f32 %v756, 1.442695
  %v907 = vpow.pop %v906
  %v908 = vmul.f32 %v757, 1.442695
  %v909 = vpow.pop %v908
  %v910 = vmul.f32 %v758, 1.442695
  %v911 = vpow.pop %v910
  %v912 = vmul.f32 %v759, 1.442695
  %v913 = vpow.pop %v912
  %v914 = vmul.f32 %v760, 1.442695
  %v915 = vpow.pop %v914
  %v916 = vmul.f32 %v761, 1.442695
  %v917 = vpow.pop %v916
  %v918 = vmul.f32 %v762, 1.442695
  %v919 = vpow.pop %v918
  %v920 = vmul.f32 %v763, 1.442695
  %v921 = vpow.pop %v920
  %v922 = vmul.f32 %v764, 1.442695
  %v923 = vpow.pop %v922
  %v924 = vmul.f32 %v765, 1.442695
  %v925 = vpow.pop %v924
  %v926 = vmul.f32 %v766, 1.442695
  %v927 = vpow.pop %v926
  %v928 = vmul.f32 %v767, 1.442695
  %v929 = vpow.pop %v928
  %v930 = vmul.f32 %v768, 1.442695
  %v931 = vpow.pop %v930
  %v932 = vmul.f32 %v769, 1.442695
  %v933 = vpow.pop %v932
  %v934 = vmul.f32 %v770, 1.442695
  %v935 = vpow.pop %v934
  %v936 = vmul.f32 %v771, 1.442695
  %v937 = vpow.pop %v936
  %v938 = vmul.f32 %v772, 1.442695
  %v939 = vpow.pop %v938
  %v940 = vmul.f32 %v773, 1.442695
  %v941 = vpow.pop %v940
  %v942 = vmul.f32 %v774, 1.442695
  %v943 = vpow.pop %v942
  %v944 = vmul.f32 %v775, 1.442695
  %v945 = vpow.pop %v944
  %v946 = vmul.f32 %v776, 1.442695
  %v947 = vpow.pop %v946
  %v948 = vmul.f32 %v777, 1.442695
  %v949 = vpow.pop %v948
  %v950 = vmul.f32 %v778, 1.442695
  %v951 = vpow.pop %v950
  %v952 = vmul.f32 %v779, 1.442695
  %v953 = vpow.pop %v952
  %v954 = vmul.f32 %v780, 1.442695
  %v955 = vpow.pop %v954
  %v956 = vmul.f32 %v781, 1.442695
  %v957 = vpow.pop %v956
  %v958 = vmul.f32 %v782, 1.442695
  %v959 = vpow.pop %v958
  %v960 = vmul.f32 %v783, 1.442695
  %v961 = vpow.pop %v960
  %v962 = vmul.f32 %v784, 1.442695
  %v963 = vpow.pop %v962
  %v964 = vmul.f32 %v785, 1.442695
  %v965 = vpow.pop %v964
  %v966 = vmul.f32 %v786, 1.442695
  %v967 = vpow.pop %v966
  %v968 = vmul.f32 %v787, 1.442695
  %v969 = vpow.pop %v968
  %v970 = vmul.f32 %v788, 1.442695
  %v971 = vpow.pop %v970
  %v972 = vmul.f32 %v789, 1.442695
  %v973 = vpow.pop %v972
  %v974 = vmul.f32 %v790, 1.442695
  %v975 = vpow.pop %v974
  %v976 = vmul.f32 %v791, 1.442695
  %v977 = vpow.pop %v976
  %v978 = vmul.f32 %v792, 1.442695
  %v979 = vpow.pop %v978
  %v980 = vmul.f32 %v793, 1.442695
  %v981 = vpow.pop %v980
  %v982 = vmul.f32 %v794, 1.442695
  %v983 = vpow.pop %v982
  %v984 = vmul.f32 %v795, 1.442695
  %v985 = vpow.pop %v984
  %v986 = vmul.f32 %v796, 1.442695
  %v987 = vpow.pop %v986
  %v988 = vmul.f32 %v797, 1.442695
  %v989 = vpow.pop %v988
  %v990 = vmul.f32 %v798, 1.442695
  %v991 = vpow.pop %v990
  %v992 = vmul.f32 %v799, 1.442695
  %v993 = vpow.pop %v992
  %v994 = vmul.f32 %v800, 1.442695
  %v995 = vpow.pop %v994
  %v996 = vmul.f32 %v801, 1.442695
  %v997 = vpow.pop %v996
  %v998 = vmul.f32 %v802, 1.442695
  %v999 = vpow.pop %v998
  %v1000 = vmul.f32 %v803, 1.442695
  %v1001 = vpow.pop %v1000
  %v1002 = vmul.f32 %v804, 1.442695
  %v1003 = vpow.pop %v1002
  %v1004 = vmul.f32 %v805, 1.442695
  %v1005 = vpow.pop %v1004
  %v1006 = vmul.f32 %v806, 1.442695
  %v1007 = vpow.pop %v1006
  %v1008 = vmul.f32 %v807, 1.442695
  %v1009 = vpow.pop %v1008
  %v1010 = vmul.f32 %v808, 1.442695
  %v1011 = vpow.pop %v1010
  %v1012 = vmul.f32 %v809, 1.442695
  %v1013 = vpow.pop %v1012
  %v1014 = vmul.f32 %v810, 1.442695
  %v1015 = vpow.pop %v1014
  %v1016 = vmul.f32 %v811, 1.442695
  %v1017 = vpow.pop %v1016
  %v1018 = vmul.f32 %v812, 1.442695
  %v1019 = vpow.pop %v1018
  %v1020 = vmul.f32 %v813, 1.442695
  %v1021 = vpow.pop %v1020
  %v1022 = vmul.f32 %v814, 1.442695
  %v1023 = vpow.pop %v1022
  %v1024 = vmul.f32 %v815, 1.442695
  %v1025 = vpow.pop %v1024
  %v1026 = vmul.f32 %v816, 1.442695
  %v1027 = vpow.pop %v1026
  %v1028 = vmul.f32 %v817, 1.442695
  %v1029 = vpow.pop %v1028
  %v1030 = vmul.f32 %v818, 1.442695
  %v1031 = vpow.pop %v1030
  %v1032 = vmul.f32 %v819, 1.442695
  %v1033 = vpow.pop %v1032
  %v1034 = vmul.f32 %v820, 1.442695
  %v1035 = vpow.pop %v1034
  %v1036 = vmul.f32 %v821, 1.442695
  %v1037 = vpow.pop %v1036
  %v1038 = vmul.f32 %v822, 1.442695
  %v1039 = vpow.pop %v1038
  %v1040 = vmul.f32 %v823, 1.442695
  %v1041 = vpow.pop %v1040
  %v1042 = vmul.f32 %v824, 1.442695
  %v1043 = vpow.pop %v1042
  %v1044 = vmul.f32 %v825, 1.442695
  %v1045 = vpow.pop %v1044
  %v1046 = vmul.f32 %v826, 1.442695
  %v1047 = vpow.pop %v1046
  %v1048 = vmul.f32 %v827, 1.442695
  %v1049 = vpow.pop %v1048
  %v1050 = vmul.f32 %v828, 1.442695
  %v1051 = vpow.pop %v1050
  %v1052 = vmul.f32 %v829, 1.442695
  %v1053 = vpow.pop %v1052
  %v1054 = vmul.f32 %v830, 1.442695
  %v1055 = vpow.pop %v1054
  %v1056 = vmul.f32 %v831, 1.442695
  %v1057 = vpow.pop %v1056
  %v1058 = vmul.f32 %v832, 1.442695
  %v1059 = vpow.pop %v1058
  %v1060 = vmul.f32 %v833, 1.442695
  %v1061 = vpow.pop %v1060
  %v1062 = vmul.f32 %v834, 1.442695
  %v1063 = vpow.pop %v1062
  %v1064 = vmul.f32 %v835, 1.442695
  %v1065 = vpow.pop %v1064
  %v1066 = vmul.f32 %v836, 1.442695
  %v1067 = vpow.pop %v1066
  %v1068 = vmul.f32 %v837, 1.442695
  %v1069 = vpow.pop %v1068
  %v1070 = vmul.f32 %v838, 1.442695
  %v1071 = vpow.pop %v1070
  %v1072 = vmul.f32 %v839, 1.442695
  %v1073 = vpow.pop %v1072
  %v1074 = vmul.f32 %v840, 1.442695
  %v1075 = vpow.pop %v1074
  %v1076 = vmul.f32 %v841, 1.442695
  %v1077 = vpow.pop %v1076
  %v1078 = vmul.f32 %v842, 1.442695
  %v1079 = vpow.pop %v1078
  %v1080 = vmul.f32 %v843, 1.442695
  %v1081 = vpow.pop %v1080
  %v1082 = vmul.f32 %v844, 1.442695
  %v1083 = vpow.pop %v1082
  %v1084 = vmul.f32 %v845, 1.442695
  %v1085 = vpow.pop %v1084
  %v1086 = vmul.f32 %v846, 1.442695
  %v1087 = vpow.pop %v1086
  %v1088 = vmul.f32 %v847, 1.442695
  %v1089 = vpow.pop %v1088
  %v1090 = vmul.f32 %v848, 1.442695
  %v1091 = vpow.pop %v1090
  %v1092 = vmul.f32 %v849, 1.442695
  %v1093 = vpow.pop %v1092
  %v1094 = vmul.f32 %v850, 1.442695
  %v1095 = vpow.pop %v1094
  %v1096 = vmul.f32 %v851, 1.442695
  %v1097 = vpow.pop %v1096
  %v1098 = vmul.f32 %v852, 1.442695
  %v1099 = vpow.pop %v1098
  %v1100 = vmul.f32 %v853, 1.442695
  %v1101 = vpow.pop %v1100
  %v1102 = vmul.f32 %v854, 1.442695
  %v1103 = vpow.pop %v1102
  %v1104 = vmul.f32 %v855, 1.442695
  %v1105 = vpow.pop %v1104
  %v1106 = vmul.f32 %v856, 1.442695
  %v1107 = vpow.pop %v1106
  %v1108 = vmul.f32 %v857, 1.442695
  %v1109 = vpow.pop %v1108
  %v1110 = vmul.f32 %v858, 1.442695
  %v1111 = vpow.pop %v1110
  %v1112 = vmul.f32 %v859, 1.442695
  %v1113 = vpow.pop %v1112
  %v1114 = vmul.f32 %v860, 1.442695
  %v1115 = vpow.pop %v1114
  %v1116 = vmul.f32 %v861, 1.442695
  %v1117 = vpow.pop %v1116
  %v1118 = vadd.f32 %v863, 1.0
  %v1119 = vadd.f32 %v865, 1.0
  %v1120 = vadd.f32 %v867, 1.0
  %v1121 = vadd.f32 %v869, 1.0
  %v1122 = vadd.f32 %v871, 1.0
  %v1123 = vadd.f32 %v873, 1.0
  %v1124 = vadd.f32 %v875, 1.0
  %v1125 = vadd.f32 %v877, 1.0
  %v1126 = vadd.f32 %v879, 1.0
  %v1127 = vadd.f32 %v881, 1.0
  %v1128 = vadd.f32 %v883, 1.0
  %v1129 = vadd.f32 %v885, 1.0
  %v1130 = vadd.f32 %v887, 1.0
  %v1131 = vadd.f32 %v889, 1.0
  %v1132 = vadd.f32 %v891, 1.0
  %v1133 = vadd.f32 %v893, 1.0
  %v1134 = vadd.f32 %v895, 1.0
  %v1135 = vadd.f32 %v897, 1.0
  %v1136 = vadd.f32 %v899, 1.0
  %v1137 = vadd.f32 %v901, 1.0
  %v1138 = vadd.f32 %v903, 1.0
  %v1139 = vadd.f32 %v905, 1.0
  %v1140 = vadd.f32 %v907, 1.0
  %v1141 = vadd.f32 %v909, 1.0
  %v1142 = vadd.f32 %v911, 1.0
  %v1143 = vadd.f32 %v913, 1.0
  %v1144 = vadd.f32 %v915, 1.0
  %v1145 = vadd.f32 %v917, 1.0
  %v1146 = vadd.f32 %v919, 1.0
  %v1147 = vadd.f32 %v921, 1.0
  %v1148 = vadd.f32 %v923, 1.0
  %v1149 = vadd.f32 %v925, 1.0
  %v1150 = vadd.f32 %v927, 1.0
  %v1151 = vadd.f32 %v929, 1.0
  %v1152 = vadd.f32 %v931, 1.0
  %v1153 = vadd.f32 %v933, 1.0
  %v1154 = vadd.f32 %v935, 1.0
  %v1155 = vadd.f32 %v937, 1.0
  %v1156 = vadd.f32 %v939, 1.0
  %v1157 = vadd.f32 %v941, 1.0
  %v1158 = vadd.f32 %v943, 1.0
  %v1159 = vadd.f32 %v945, 1.0
  %v1160 = vadd.f32 %v947, 1.0
  %v1161 = vadd.f32 %v949, 1.0
  %v1162 = vadd.f32 %v951, 1.0
  %v1163 = vadd.f32 %v953, 1.0
  %v1164 = vadd.f32 %v955, 1.0
  %v1165 = vadd.f32 %v957, 1.0
  %v1166 = vadd.f32 %v959, 1.0
  %v1167 = vadd.f32 %v961, 1.0
  %v1168 = vadd.f32 %v963, 1.0
  %v1169 = vadd.f32 %v965, 1.0
  %v1170 = vadd.f32 %v967, 1.0
  %v1171 = vadd.f32 %v969, 1.0
  %v1172 = vadd.f32 %v971, 1.0
  %v1173 = vadd.f32 %v973, 1.0
  %v1174 = vadd.f32 %v975, 1.0
  %v1175 = vadd.f32 %v977, 1.0
  %v1176 = vadd.f32 %v979, 1.0
  %v1177 = vadd.f32 %v981, 1.0
  %v1178 = vadd.f32 %v983, 1.0
  %v1179 = vadd.f32 %v985, 1.0
  %v1180 = vadd.f32 %v987, 1.0
  %v1181 = vadd.f32 %v989, 1.0
  %v1182 = vadd.f32 %v991, 1.0
  %v1183 = vadd.f32 %v993, 1.0
  %v1184 = vadd.f32 %v995, 1.0
  %v1185 = vadd.f32 %v997, 1.0
  %v1186 = vadd.f32 %v999, 1.0
  %v1187 = vadd.f32 %v1001, 1.0
  %v1188 = vadd.f32 %v1003, 1.0
  %v1189 = vadd.f32 %v1005, 1.0
  %v1190 = vadd.f32 %v1007, 1.0
  %v1191 = vadd.f32 %v1009, 1.0
  %v1192 = vadd.f32 %v1011, 1.0
  %v1193 = vadd.f32 %v1013, 1.0
  %v1194 = vadd.f32 %v1015, 1.0
  %v1195 = vadd.f32 %v1017, 1.0
  %v1196 = vadd.f32 %v1019, 1.0
  %v1197 = vadd.f32 %v1021, 1.0
  %v1198 = vadd.f32 %v1023, 1.0
  %v1199 = vadd.f32 %v1025, 1.0
  %v1200 = vadd.f32 %v1027, 1.0
  %v1201 = vadd.f32 %v1029, 1.0
  %v1202 = vadd.f32 %v1031, 1.0
  %v1203 = vadd.f32 %v1033, 1.0
  %v1204 = vadd.f32 %v1035, 1.0
  %v1205 = vadd.f32 %v1037, 1.0
  %v1206 = vadd.f32 %v1039, 1.0
  %v1207 = vadd.f32 %v1041, 1.0
  %v1208 = vadd.f32 %v1043, 1.0
  %v1209 = vadd.f32 %v1045, 1.0
  %v1210 = vadd.f32 %v1047, 1.0
  %v1211 = vadd.f32 %v1049, 1.0
  %v1212 = vadd.f32 %v1051, 1.0
  %v1213 = vadd.f32 %v1053, 1.0
  %v1214 = vadd.f32 %v1055, 1.0
  %v1215 = vadd.f32 %v1057, 1.0
  %v1216 = vadd.f32 %v1059, 1.0
  %v1217 = vadd.f32 %v1061, 1.0
  %v1218 = vadd.f32 %v1063, 1.0
  %v1219 = vadd.f32 %v1065, 1.0
  %v1220 = vadd.f32 %v1067, 1.0
  %v1221 = vadd.f32 %v1069, 1.0
  %v1222 = vadd.f32 %v1071, 1.0
  %v1223 = vadd.f32 %v1073, 1.0
  %v1224 = vadd.f32 %v1075, 1.0
  %v1225 = vadd.f32 %v1077, 1.0
  %v1226 = vadd.f32 %v1079, 1.0
  %v1227 = vadd.f32 %v1081, 1.0
  %v1228 = vadd.f32 %v1083, 1.0
  %v1229 = vadd.f32 %v1085, 1.0
  %v1230 = vadd.f32 %v1087, 1.0
  %v1231 = vadd.f32 %v1089, 1.0
  %v1232 = vadd.f32 %v1091, 1.0
  %v1233 = vadd.f32 %v1093, 1.0
  %v1234 = vadd.f32 %v1095, 1.0
  %v1235 = vadd.f32 %v1097, 1.0
  %v1236 = vadd.f32 %v1099, 1.0
  %v1237 = vadd.f32 %v1101, 1.0
  %v1238 = vadd.f32 %v1103, 1.0
  %v1239 = vadd.f32 %v1105, 1.0
  %v1240 = vadd.f32 %v1107, 1.0
  %v1241 = vadd.f32 %v1109, 1.0
  %v1242 = vadd.f32 %v1111, 1.0
  %v1243 = vadd.f32 %v1113, 1.0
  %v1244 = vadd.f32 %v1115, 1.0
  %v1245 = vadd.f32 %v1117, 1.0
  %v1246 = vrcp.pop %v1118
  %v1247 = vmul.f32 1.0, %v1246
  %v1248 = vrcp.pop %v1119
  %v1249 = vmul.f32 1.0, %v1248
  %v1250 = vrcp.pop %v1120
  %v1251 = vmul.f32 1.0, %v1250
  %v1252 = vrcp.pop %v1121
  %v1253 = vmul.f32 1.0, %v1252
  %v1254 = vrcp.pop %v1122
  %v1255 = vmul.f32 1.0, %v1254
  %v1256 = vrcp.pop %v1123
  %v1257 = vmul.f32 1.0, %v1256
  %v1258 = vrcp.pop %v1124
  %v1259 = vmul.f32 1.0, %v1258
  %v1260 = vrcp.pop %v1125
  %v1261 = vmul.f32 1.0, %v1260
  %v1262 = vrcp.pop %v1126
  %v1263 = vmul.f32 1.0, %v1262
  %v1264 = vrcp.pop %v1127
  %v1265 = vmul.f32 1.0, %v1264
  %v1266 = vrcp.pop %v1128
  %v1267 = vmul.f32 1.0, %v1266
  %v1268 = vrcp.pop %v1129
  %v1269 = vmul.f32 1.0, %v1268
  %v1270 = vrcp.pop %v1130
  %v1271 = vmul.f32 1.0, %v1270
  %v1272 = vrcp.pop %v1131
  %v1273 = vmul.f32 1.0, %v1272
  %v1274 = vrcp.pop %v1132
  %v1275 = vmul.f32 1.0, %v1274
  %v1276 = vrcp.pop %v1133
  %v1277 = vmul.f32 1.0, %v1276
  %v1278 = vrcp.pop %v1134
  %v1279 = vmul.f32 1.0, %v1278
  %v1280 = vrcp.pop %v1135
  %v1281 = vmul.f32 1.0, %v1280
  %v1282 = vrcp.pop %v1136
  %v1283 = vmul.f32 1.0, %v1282
  %v1284 = vrcp.pop %v1137
  %v1285 = vmul.f32 1.0, %v1284
  %v1286 = vrcp.pop %v1138
  %v1287 = vmul.f32 1.0, %v1286
  %v1288 = vrcp.pop %v1139
  %v1289 = vmul.f32 1.0, %v1288
  %v1290 = vrcp.pop %v1140
  %v1291 = vmul.f32 1.0, %v1290
  %v1292 = vrcp.pop %v1141
  %v1293 = vmul.f32 1.0, %v1292
  %v1294 = vrcp.pop %v1142
  %v1295 = vmul.f32 1.0, %v1294
  %v1296 = vrcp.pop %v1143
  %v1297 = vmul.f32 1.0, %v1296
  %v1298 = vrcp.pop %v1144
  %v1299 = vmul.f32 1.0, %v1298
  %v1300 = vrcp.pop %v1145
  %v1301 = vmul.f32 1.0, %v1300
  %v1302 = vrcp.pop %v1146
  %v1303 = vmul.f32 1.0, %v1302
  %v1304 = vrcp.pop %v1147
  %v1305 = vmul.f32 1.0, %v1304
  %v1306 = vrcp.pop %v1148
  %v1307 = vmul.f32 1.0, %v1306
  %v1308 = vrcp.pop %v1149
  %v1309 = vmul.f32 1.0, %v1308
  %v1310 = vrcp.pop %v1150
  %v1311 = vmul.f32 1.0, %v1310
  %v1312 = vrcp.pop %v1151
  %v1313 = vmul.f32 1.0, %v1312
  %v1314 = vrcp.pop %v1152
  %v1315 = vmul.f32 1.0, %v1314
  %v1316 = vrcp.pop %v1153
  %v1317 = vmul.f32 1.0, %v1316
  %v1318 = vrcp.pop %v1154
  %v1319 = vmul.f32 1.0, %v1318
  %v1320 = vrcp.pop %v1155
  %v1321 = vmul.f32 1.0, %v1320
  %v1322 = vrcp.pop %v1156
  %v1323 = vmul.f32 1.0, %v1322
  %v1324 = vrcp.pop %v1157
  %v1325 = vmul.f32 1.0, %v1324
  %v1326 = vrcp.pop %v1158
  %v1327 = vmul.f32 1.0, %v1326
  %v1328 = vrcp.pop %v1159
  %v1329 = vmul.f32 1.0, %v1328
  %v1330 = vrcp.pop %v1160
  %v1331 = vmul.f32 1.0, %v1330
  %v1332 = vrcp.pop %v1161
  %v1333 = vmul.f32 1.0, %v1332
  %v1334 = vrcp.pop %v1162
  %v1335 = vmul.f32 1.0, %v1334
  %v1336 = vrcp.pop %v1163
  %v1337 = vmul.f32 1.0, %v1336
  %v1338 = vrcp.pop %v1164
  %v1339 = vmul.f32 1.0, %v1338
  %v1340 = vrcp.pop %v1165
  %v1341 = vmul.f32 1.0, %v1340
  %v1342 = vrcp.pop %v1166
  %v1343 = vmul.f32 1.0, %v1342
  %v1344 = vrcp.pop %v1167
  %v1345 = vmul.f32 1.0, %v1344
  %v1346 = vrcp.pop %v1168
  %v1347 = vmul.f32 1.0, %v1346
  %v1348 = vrcp.pop %v1169
  %v1349 = vmul.f32 1.0, %v1348
  %v1350 = vrcp.pop %v1170
  %v1351 = vmul.f32 1.0, %v1350
  %v1352 = vrcp.pop %v1171
  %v1353 = vmul.f32 1.0, %v1352
  %v1354 = vrcp.pop %v1172
  %v1355 = vmul.f32 1.0, %v1354
  %v1356 = vrcp.pop %v1173
  %v1357 = vmul.f32 1.0, %v1356
  %v1358 = vrcp.pop %v1174
  %v1359 = vmul.f32 1.0, %v1358
  %v1360 = vrcp.pop %v1175
  %v1361 = vmul.f32 1.0, %v1360
  %v1362 = vrcp.pop %v1176
  %v1363 = vmul.f32 1.0, %v1362
  %v1364 = vrcp.pop %v1177
  %v1365 = vmul.f32 1.0, %v1364
  %v1366 = vrcp.pop %v1178
  %v1367 = vmul.f32 1.0, %v1366
  %v1368 = vrcp.pop %v1179
  %v1369 = vmul.f32 1.0, %v1368
  %v1370 = vrcp.pop %v1180
  %v1371 = vmul.f32 1.0, %v1370
  %v1372 = vrcp.pop %v1181
  %v1373 = vmul.f32 1.0, %v1372
  %v1374 = vrcp.pop %v1182
  %v1375 = vmul.f32 1.0, %v1374
  %v1376 = vrcp.pop %v1183
  %v1377 = vmul.f32 1.0, %v1376
  %v1378 = vrcp.pop %v1184
  %v1379 = vmul.f32 1.0, %v1378
  %v1380 = vrcp.pop %v1185
  %v1381 = vmul.f32 1.0, %v1380
  %v1382 = vrcp.pop %v1186
  %v1383 = vmul.f32 1.0, %v1382
  %v1384 = vrcp.pop %v1187
  %v1385 = vmul.f32 1.0, %v1384
  %v1386 = vrcp.pop %v1188
  %v1387 = vmul.f32 1.0, %v1386
  %v1388 = vrcp.pop %v1189
  %v1389 = vmul.f32 1.0, %v1388
  %v1390 = vrcp.pop %v1190
  %v1391 = vmul.f32 1.0, %v1390
  %v1392 = vrcp.pop %v1191
  %v1393 = vmul.f32 1.0, %v1392
  %v1394 = vrcp.pop %v1192
  %v1395 = vmul.f32 1.0, %v1394
  %v1396 = vrcp.pop %v1193
  %v1397 = vmul.f32 1.0, %v1396
  %v1398 = vrcp.pop %v1194
  %v1399 = vmul.f32 1.0, %v1398
  %v1400 = vrcp.pop %v1195
  %v1401 = vmul.f32 1.0, %v1400
  %v1402 = vrcp.pop %v1196
  %v1403 = vmul.f32 1.0, %v1402
  %v1404 = vrcp.pop %v1197
  %v1405 = vmul.f32 1.0, %v1404
  %v1406 = vrcp.pop %v1198
  %v1407 = vmul.f32 1.0, %v1406
  %v1408 = vrcp.pop %v1199
  %v1409 = vmul.f32 1.0, %v1408
  %v1410 = vrcp.pop %v1200
  %v1411 = vmul.f32 1.0, %v1410
  %v1412 = vrcp.pop %v1201
  %v1413 = vmul.f32 1.0, %v1412
  %v1414 = vrcp.pop %v1202
  %v1415 = vmul.f32 1.0, %v1414
  %v1416 = vrcp.pop %v1203
  %v1417 = vmul.f32 1.0, %v1416
  %v1418 = vrcp.pop %v1204
  %v1419 = vmul.f32 1.0, %v1418
  %v1420 = vrcp.pop %v1205
  %v1421 = vmul.f32 1.0, %v1420
  %v1422 = vrcp.pop %v1206
  %v1423 = vmul.f32 1.0, %v1422
  %v1424 = vrcp.pop %v1207
  %v1425 = vmul.f32 1.0, %v1424
  %v1426 = vrcp.pop %v1208
  %v1427 = vmul.f32 1.0, %v1426
  %v1428 = vrcp.pop %v1209
  %v1429 = vmul.f32 1.0, %v1428
  %v1430 = vrcp.pop %v1210
  %v1431 = vmul.f32 1.0, %v1430
  %v1432 = vrcp.pop %v1211
  %v1433 = vmul.f32 1.0, %v1432
  %v1434 = vrcp.pop %v1212
  %v1435 = vmul.f32 1.0, %v1434
  %v1436 = vrcp.pop %v1213
  %v1437 = vmul.f32 1.0, %v1436
  %v1438 = vrcp.pop %v1214
  %v1439 = vmul.f32 1.0, %v1438
  %v1440 = vrcp.pop %v1215
  %v1441 = vmul.f32 1.0, %v1440
  %v1442 = vrcp.pop %v1216
  %v1443 = vmul.f32 1.0, %v1442
  %v1444 = vrcp.pop %v1217
  %v1445 = vmul.f32 1.0, %v1444
  %v1446 = vrcp.pop %v1218
  %v1447 = vmul.f32 1.0, %v1446
  %v1448 = vrcp.pop %v1219
  %v1449 = vmul.f32 1.0, %v1448
  %v1450 = vrcp.pop %v1220
  %v1451 = vmul.f32 1.0, %v1450
  %v1452 = vrcp.pop %v1221
  %v1453 = vmul.f32 1.0, %v1452
  %v1454 = vrcp.pop %v1222
  %v1455 = vmul.f32 1.0, %v1454
  %v1456 = vrcp.pop %v1223
  %v1457 = vmul.f32 1.0, %v1456
  %v1458 = vrcp.pop %v1224
  %v1459 = vmul.f32 1.0, %v1458
  %v1460 = vrcp.pop %v1225
  %v1461 = vmul.f32 1.0, %v1460
  %v1462 = vrcp.pop %v1226
  %v1463 = vmul.f32 1.0, %v1462
  %v1464 = vrcp.pop %v1227
  %v1465 = vmul.f32 1.0, %v1464
  %v1466 = vrcp.pop %v1228
  %v1467 = vmul.f32 1.0, %v1466
  %v1468 = vrcp.pop %v1229
  %v1469 = vmul.f32 1.0, %v1468
  %v1470 = vrcp.pop %v1230
  %v1471 = vmul.f32 1.0, %v1470
  %v1472 = vrcp.pop %v1231
  %v1473 = vmul.f32 1.0, %v1472
  %v1474 = vrcp.pop %v1232
  %v1475 = vmul.f32 1.0, %v1474
  %v1476 = vrcp.pop %v1233
  %v1477 = vmul.f32 1.0, %v1476
  %v1478 = vrcp.pop %v1234
  %v1479 = vmul.f32 1.0, %v1478
  %v1480 = vrcp.pop %v1235
  %v1481 = vmul.f32 1.0, %v1480
  %v1482 = vrcp.pop %v1236
  %v1483 = vmul.f32 1.0, %v1482
  %v1484 = vrcp.pop %v1237
  %v1485 = vmul.f32 1.0, %v1484
  %v1486 = vrcp.pop %v1238
  %v1487 = vmul.f32 1.0, %v1486
  %v1488 = vrcp.pop %v1239
  %v1489 = vmul.f32 1.0, %v1488
  %v1490 = vrcp.pop %v1240
  %v1491 = vmul.f32 1.0, %v1490
  %v1492 = vrcp.pop %v1241
  %v1493 = vmul.f32 1.0, %v1492
  %v1494 = vrcp.pop %v1242
  %v1495 = vmul.f32 1.0, %v1494
  %v1496 = vrcp.pop %v1243
  %v1497 = vmul.f32 1.0, %v1496
  %v1498 = vrcp.pop %v1244
  %v1499 = vmul.f32 1.0, %v1498
  %v1500 = vrcp.pop %v1245
  %v1501 = vmul.f32 1.0, %v1500
  %v1502 = vmul.f32 %v416, %v1247
  %v1503 = vmul.f32 %v418, %v1249
  %v1504 = vmul.f32 %v420, %v1251
  %v1505 = vmul.f32 %v422, %v1253
  %v1506 = vmul.f32 %v426, %v1255
  %v1507 = vmul.f32 %v428, %v1257
  %v1508 = vmul.f32 %v430, %v1259
  %v1509 = vmul.f32 %v432, %v1261
  %v1510 = vmul.f32 %v436, %v1263
  %v1511 = vmul.f32 %v438, %v1265
  %v1512 = vmul.f32 %v440, %v1267
  %v1513 = vmul.f32 %v442, %v1269
  %v1514 = vmul.f32 %v446, %v1271
  %v1515 = vmul.f32 %v448, %v1273
  %v1516 = vmul.f32 %v450, %v1275
  %v1517 = vmul.f32 %v452, %v1277
  %v1518 = vmul.f32 %v456, %v1279
  %v1519 = vmul.f32 %v458, %v1281
  %v1520 = vmul.f32 %v460, %v1283
  %v1521 = vmul.f32 %v462, %v1285
  %v1522 = vmul.f32 %v466, %v1287
  %v1523 = vmul.f32 %v468, %v1289
  %v1524 = vmul.f32 %v470, %v1291
  %v1525 = vmul.f32 %v472, %v1293
  %v1526 = vmul.f32 %v476, %v1295
  %v1527 = vmul.f32 %v478, %v1297
  %v1528 = vmul.f32 %v480, %v1299
  %v1529 = vmul.f32 %v482, %v1301
  %v1530 = vmul.f32 %v486, %v1303
  %v1531 = vmul.f32 %v488, %v1305
  %v1532 = vmul.f32 %v490, %v1307
  %v1533 = vmul.f32 %v492, %v1309
  %v1534 = vmul.f32 %v496, %v1311
  %v1535 = vmul.f32 %v498, %v1313
  %v1536 = vmul.f32 %v500, %v1315
  %v1537 = vmul.f32 %v502, %v1317
  %v1538 = vmul.f32 %v506, %v1319
  %v1539 = vmul.f32 %v508, %v1321
  %v1540 = vmul.f32 %v510, %v1323
  %v1541 = vmul.f32 %v512, %v1325
  %v1542 = vmul.f32 %v516, %v1327
  %v1543 = vmul.f32 %v518, %v1329
  %v1544 = vmul.f32 %v520, %v1331
  %v1545 = vmul.f32 %v522, %v1333
  %v1546 = vmul.f32 %v526, %v1335
  %v1547 = vmul.f32 %v528, %v1337
  %v1548 = vmul.f32 %v530, %v1339
  %v1549 = vmul.f32 %v532, %v1341
  %v1550 = vmul.f32 %v536, %v1343
  %v1551 = vmul.f32 %v538, %v1345
  %v1552 = vmul.f32 %v540, %v1347
  %v1553 = vmul.f32 %v542, %v1349
  %v1554 = vmul.f32 %v546, %v1351
  %v1555 = vmul.f32 %v548, %v1353
  %v1556 = vmul.f32 %v550, %v1355
  %v1557 = vmul.f32 %v552, %v1357
  %v1558 = vmul.f32 %v556, %v1359
  %v1559 = vmul.f32 %v558, %v1361
  %v1560 = vmul.f32 %v560, %v1363
  %v1561 = vmul.f32 %v562, %v1365
  %v1562 = vmul.f32 %v566, %v1367
  %v1563 = vmul.f32 %v568, %v1369
  %v1564 = vmul.f32 %v570, %v1371
  %v1565 = vmul.f32 %v572, %v1373
  %v1566 = vmul.f32 %v576, %v1375
  %v1567 = vmul.f32 %v578, %v1377
  %v1568 = vmul.f32 %v580, %v1379
  %v1569 = vmul.f32 %v582, %v1381
  %v1570 = vmul.f32 %v586, %v1383
  %v1571 = vmul.f32 %v588, %v1385
  %v1572 = vmul.f32 %v590, %v1387
  %v1573 = vmul.f32 %v592, %v1389
  %v1574 = vmul.f32 %v596, %v1391
  %v1575 = vmul.f32 %v598, %v1393
  %v1576 = vmul.f32 %v600, %v1395
  %v1577 = vmul.f32 %v602, %v1397
  %v1578 = vmul.f32 %v606, %v1399
  %v1579 = vmul.f32 %v608, %v1401
  %v1580 = vmul.f32 %v610, %v1403
  %v1581 = vmul.f32 %v612, %v1405
  %v1582 = vmul.f32 %v616, %v1407
  %v1583 = vmul.f32 %v618, %v1409
  %v1584 = vmul.f32 %v620, %v1411
  %v1585 = vmul.f32 %v622, %v1413
  %v1586 = vmul.f32 %v626, %v1415
  %v1587 = vmul.f32 %v628, %v1417
  %v1588 = vmul.f32 %v630, %v1419
  %v1589 = vmul.f32 %v632, %v1421
  %v1590 = vmul.f32 %v636, %v1423
  %v1591 = vmul.f32 %v638, %v1425
  %v1592 = vmul.f32 %v640, %v1427
  %v1593 = vmul.f32 %v642, %v1429
  %v1594 = vmul.f32 %v646, %v1431
  %v1595 = vmul.f32 %v648, %v1433
  %v1596 = vmul.f32 %v650, %v1435
  %v1597 = vmul.f32 %v652, %v1437
  %v1598 = vmul.f32 %v656, %v1439
  %v1599 = vmul.f32 %v658, %v1441
  %v1600 = vmul.f32 %v660, %v1443
  %v1601 = vmul.f32 %v662, %v1445
  %v1602 = vmul.f32 %v666, %v1447
  %v1603 = vmul.f32 %v668, %v1449
  %v1604 = vmul.f32 %v670, %v1451
  %v1605 = vmul.f32 %v672, %v1453
  %v1606 = vmul.f32 %v676, %v1455
  %v1607 = vmul.f32 %v678, %v1457
  %v1608 = vmul.f32 %v680, %v1459
  %v1609 = vmul.f32 %v682, %v1461
  %v1610 = vmul.f32 %v686, %v1463
  %v1611 = vmul.f32 %v688, %v1465
  %v1612 = vmul.f32 %v690, %v1467
  %v1613 = vmul.f32 %v692, %v1469
  %v1614 = vmul.f32 %v696, %v1471
  %v1615 = vmul.f32 %v698, %v1473
  %v1616 = vmul.f32 %v700, %v1475
  %v1617 = vmul.f32 %v702, %v1477
  %v1618 = vmul.f32 %v706, %v1479
  %v1619 = vmul.f32 %v708, %v1481
  %v1620 = vmul.f32 %v710, %v1483
  %v1621 = vmul.f32 %v712, %v1485
  %v1622 = vmul.f32 %v716, %v1487
  %v1623 = vmul.f32 %v718, %v1489
  %v1624 = vmul.f32 %v720, %v1491
  %v1625 = vmul.f32 %v722, %v1493
  %v1626 = vmul.f32 %v726, %v1495
  %v1627 = vmul.f32 %v728, %v1497
  %v1628 = vmul.f32 %v730, %v1499
  %v1629 = vmul.f32 %v732, %v1501
  %v1630 = vpack.c.bf16 %v1504, %v1502
  %v1631 = vpack.c.bf16 %v1508, %v1506
  %v1632 = vpack.c.bf16 %v1512, %v1510
  %v1633 = vpack.c.bf16 %v1516, %v1514
  %v1634 = vpack.c.bf16 %v1520, %v1518
  %v1635 = vpack.c.bf16 %v1524, %v1522
  %v1636 = vpack.c.bf16 %v1528, %v1526
  %v1637 = vpack.c.bf16 %v1532, %v1530
  %v1638 = vpack.c.bf16 %v1536, %v1534
  %v1639 = vpack.c.bf16 %v1540, %v1538
  %v1640 = vpack.c.bf16 %v1544, %v1542
  %v1641 = vpack.c.bf16 %v1548, %v1546
  %v1642 = vpack.c.bf16 %v1552, %v1550
  %v1643 = vpack.c.bf16 %v1556, %v1554
  %v1644 = vpack.c.bf16 %v1560, %v1558
  %v1645 = vpack.c.bf16 %v1564, %v1562
  %v1646 = vpack.c.bf16 %v1568, %v1566
  %v1647 = vpack.c.bf16 %v1572, %v1570
  %v1648 = vpack.c.bf16 %v1576, %v1574
  %v1649 = vpack.c.bf16 %v1580, %v1578
  %v1650 = vpack.c.bf16 %v1584, %v1582
  %v1651 = vpack.c.bf16 %v1588, %v1586
  %v1652 = vpack.c.bf16 %v1592, %v1590
  %v1653 = vpack.c.bf16 %v1596, %v1594
  %v1654 = vpack.c.bf16 %v1600, %v1598
  %v1655 = vpack.c.bf16 %v1604, %v1602
  %v1656 = vpack.c.bf16 %v1608, %v1606
  %v1657 = vpack.c.bf16 %v1612, %v1610
  %v1658 = vpack.c.bf16 %v1616, %v1614
  %v1659 = vpack.c.bf16 %v1620, %v1618
  %v1660 = vpack.c.bf16 %v1624, %v1622
  %v1661 = vpack.c.bf16 %v1628, %v1626
  %v1694 = vunpack.c.l.b16 %v1630
  %v1695 = vunpack.c.h.b16 %v1630
  %v1696 = vunpack.c.l.b16 %v1631
  %v1697 = vunpack.c.h.b16 %v1631
  %v1698 = vunpack.c.l.b16 %v1632
  %v1699 = vunpack.c.h.b16 %v1632
  %v1700 = vunpack.c.l.b16 %v1633
  %v1701 = vunpack.c.h.b16 %v1633
  %v1702 = vunpack.c.l.b16 %v1634
  %v1703 = vunpack.c.h.b16 %v1634
  %v1704 = vunpack.c.l.b16 %v1635
  %v1705 = vunpack.c.h.b16 %v1635
  %v1706 = vunpack.c.l.b16 %v1636
  %v1707 = vunpack.c.h.b16 %v1636
  %v1708 = vunpack.c.l.b16 %v1637
  %v1709 = vunpack.c.h.b16 %v1637
  %v1710 = vunpack.c.l.b16 %v1638
  %v1711 = vunpack.c.h.b16 %v1638
  %v1712 = vunpack.c.l.b16 %v1639
  %v1713 = vunpack.c.h.b16 %v1639
  %v1714 = vunpack.c.l.b16 %v1640
  %v1715 = vunpack.c.h.b16 %v1640
  %v1716 = vunpack.c.l.b16 %v1641
  %v1717 = vunpack.c.h.b16 %v1641
  %v1718 = vunpack.c.l.b16 %v1642
  %v1719 = vunpack.c.h.b16 %v1642
  %v1720 = vunpack.c.l.b16 %v1643
  %v1721 = vunpack.c.h.b16 %v1643
  %v1722 = vunpack.c.l.b16 %v1644
  %v1723 = vunpack.c.h.b16 %v1644
  %v1724 = vunpack.c.l.b16 %v1645
  %v1725 = vunpack.c.h.b16 %v1645
  %v1726 = vunpack.c.l.b16 %v1646
  %v1727 = vunpack.c.h.b16 %v1646
  %v1728 = vunpack.c.l.b16 %v1647
  %v1729 = vunpack.c.h.b16 %v1647
  %v1730 = vunpack.c.l.b16 %v1648
  %v1731 = vunpack.c.h.b16 %v1648
  %v1732 = vunpack.c.l.b16 %v1649
  %v1733 = vunpack.c.h.b16 %v1649
  %v1734 = vunpack.c.l.b16 %v1650
  %v1735 = vunpack.c.h.b16 %v1650
  %v1736 = vunpack.c.l.b16 %v1651
  %v1737 = vunpack.c.h.b16 %v1651
  %v1738 = vunpack.c.l.b16 %v1652
  %v1739 = vunpack.c.h.b16 %v1652
  %v1740 = vunpack.c.l.b16 %v1653
  %v1741 = vunpack.c.h.b16 %v1653
  %v1742 = vunpack.c.l.b16 %v1654
  %v1743 = vunpack.c.h.b16 %v1654
  %v1744 = vunpack.c.l.b16 %v1655
  %v1745 = vunpack.c.h.b16 %v1655
  %v1746 = vunpack.c.l.b16 %v1656
  %v1747 = vunpack.c.h.b16 %v1656
  %v1748 = vunpack.c.l.b16 %v1657
  %v1749 = vunpack.c.h.b16 %v1657
  %v1750 = vunpack.c.l.b16 %v1658
  %v1751 = vunpack.c.h.b16 %v1658
  %v1752 = vunpack.c.l.b16 %v1659
  %v1753 = vunpack.c.h.b16 %v1659
  %v1754 = vunpack.c.l.b16 %v1660
  %v1755 = vunpack.c.h.b16 %v1660
  %v1756 = vunpack.c.l.b16 %v1661
  %v1757 = vunpack.c.h.b16 %v1661
  %v1758 = vpack.c.b16 %v1694, %v1694
  %v1759 = vpack.c.b16 %v1695, %v1695
  %v1760 = vpack.c.b16 %v1696, %v1696
  %v1761 = vpack.c.b16 %v1697, %v1697
  %v1762 = vpack.c.b16 %v1698, %v1698
  %v1763 = vpack.c.b16 %v1699, %v1699
  %v1764 = vpack.c.b16 %v1700, %v1700
  %v1765 = vpack.c.b16 %v1701, %v1701
  %v1766 = vpack.c.b16 %v1702, %v1702
  %v1767 = vpack.c.b16 %v1703, %v1703
  %v1768 = vpack.c.b16 %v1704, %v1704
  %v1769 = vpack.c.b16 %v1705, %v1705
  %v1770 = vpack.c.b16 %v1706, %v1706
  %v1771 = vpack.c.b16 %v1707, %v1707
  %v1772 = vpack.c.b16 %v1708, %v1708
  %v1773 = vpack.c.b16 %v1709, %v1709
  %v1774 = vpack.c.b16 %v1710, %v1710
  %v1775 = vpack.c.b16 %v1711, %v1711
  %v1776 = vpack.c.b16 %v1712, %v1712
  %v1777 = vpack.c.b16 %v1713, %v1713
  %v1778 = vpack.c.b16 %v1714, %v1714
  %v1779 = vpack.c.b16 %v1715, %v1715
  %v1780 = vpack.c.b16 %v1716, %v1716
  %v1781 = vpack.c.b16 %v1717, %v1717
  %v1782 = vpack.c.b16 %v1718, %v1718
  %v1783 = vpack.c.b16 %v1719, %v1719
  %v1784 = vpack.c.b16 %v1720, %v1720
  %v1785 = vpack.c.b16 %v1721, %v1721
  %v1786 = vpack.c.b16 %v1722, %v1722
  %v1787 = vpack.c.b16 %v1723, %v1723
  %v1788 = vpack.c.b16 %v1724, %v1724
  %v1789 = vpack.c.b16 %v1725, %v1725
  %v1790 = vpack.c.b16 %v1726, %v1726
  %v1791 = vpack.c.b16 %v1727, %v1727
  %v1792 = vpack.c.b16 %v1728, %v1728
  %v1793 = vpack.c.b16 %v1729, %v1729
  %v1794 = vpack.c.b16 %v1730, %v1730
  %v1795 = vpack.c.b16 %v1731, %v1731
  %v1796 = vpack.c.b16 %v1732, %v1732
  %v1797 = vpack.c.b16 %v1733, %v1733
  %v1798 = vpack.c.b16 %v1734, %v1734
  %v1799 = vpack.c.b16 %v1735, %v1735
  %v1800 = vpack.c.b16 %v1736, %v1736
  %v1801 = vpack.c.b16 %v1737, %v1737
  %v1802 = vpack.c.b16 %v1738, %v1738
  %v1803 = vpack.c.b16 %v1739, %v1739
  %v1804 = vpack.c.b16 %v1740, %v1740
  %v1805 = vpack.c.b16 %v1741, %v1741
  %v1806 = vpack.c.b16 %v1742, %v1742
  %v1807 = vpack.c.b16 %v1743, %v1743
  %v1808 = vpack.c.b16 %v1744, %v1744
  %v1809 = vpack.c.b16 %v1745, %v1745
  %v1810 = vpack.c.b16 %v1746, %v1746
  %v1811 = vpack.c.b16 %v1747, %v1747
  %v1812 = vpack.c.b16 %v1748, %v1748
  %v1813 = vpack.c.b16 %v1749, %v1749
  %v1814 = vpack.c.b16 %v1750, %v1750
  %v1815 = vpack.c.b16 %v1751, %v1751
  %v1816 = vpack.c.b16 %v1752, %v1752
  %v1817 = vpack.c.b16 %v1753, %v1753
  %v1818 = vpack.c.b16 %v1754, %v1754
  %v1819 = vpack.c.b16 %v1755, %v1755
  %v1820 = vpack.c.b16 %v1756, %v1756
  %v1821 = vpack.c.b16 %v1757, %v1757
  %1886 = vst [vmem:[%s3] sm:$0xf] %v1758
  %1887 = vst [vmem:[%s3 + $0x4] sm:$0xf] %v1759
  %1888 = vst [vmem:[%s3 + $0x8] sm:$0xf] %v1760
  %1889 = vst [vmem:[%s3 + $0xc] sm:$0xf] %v1761
  %1890 = vst [vmem:[%s3 + $0x10] sm:$0xf] %v1762
  %1891 = vst [vmem:[%s3 + $0x14] sm:$0xf] %v1763
  %1892 = vst [vmem:[%s3 + $0x18] sm:$0xf] %v1764
  %1893 = vst [vmem:[%s3 + $0x1c] sm:$0xf] %v1765
  %1894 = vst [vmem:[%s3 + $0x20] sm:$0xf] %v1766
  %1895 = vst [vmem:[%s3 + $0x24] sm:$0xf] %v1767
  %1896 = vst [vmem:[%s3 + $0x28] sm:$0xf] %v1768
  %1897 = vst [vmem:[%s3 + $0x2c] sm:$0xf] %v1769
  %1898 = vst [vmem:[%s3 + $0x30] sm:$0xf] %v1770
  %1899 = vst [vmem:[%s3 + $0x34] sm:$0xf] %v1771
  %1900 = vst [vmem:[%s3 + $0x38] sm:$0xf] %v1772
  %1901 = vst [vmem:[%s3 + $0x3c] sm:$0xf] %v1773
  %1902 = vst [vmem:[%s3 + $0x40] sm:$0xf] %v1774
  %1903 = vst [vmem:[%s3 + $0x44] sm:$0xf] %v1775
  %1904 = vst [vmem:[%s3 + $0x48] sm:$0xf] %v1776
  %1905 = vst [vmem:[%s3 + $0x4c] sm:$0xf] %v1777
  %1906 = vst [vmem:[%s3 + $0x50] sm:$0xf] %v1778
  %1907 = vst [vmem:[%s3 + $0x54] sm:$0xf] %v1779
  %1908 = vst [vmem:[%s3 + $0x58] sm:$0xf] %v1780
  %1909 = vst [vmem:[%s3 + $0x5c] sm:$0xf] %v1781
  %1910 = vst [vmem:[%s3 + $0x60] sm:$0xf] %v1782
  %1911 = vst [vmem:[%s3 + $0x64] sm:$0xf] %v1783
  %1912 = vst [vmem:[%s3 + $0x68] sm:$0xf] %v1784
  %1913 = vst [vmem:[%s3 + $0x6c] sm:$0xf] %v1785
  %1914 = vst [vmem:[%s3 + $0x70] sm:$0xf] %v1786
  %1915 = vst [vmem:[%s3 + $0x74] sm:$0xf] %v1787
  %1916 = vst [vmem:[%s3 + $0x78] sm:$0xf] %v1788
  %1917 = vst [vmem:[%s3 + $0x7c] sm:$0xf] %v1789
  %1918 = vst [vmem:[%s3 + $0x80] sm:$0xf] %v1790
  %1919 = vst [vmem:[%s3 + $0x84] sm:$0xf] %v1791
  %1920 = vst [vmem:[%s3 + $0x88] sm:$0xf] %v1792
  %1921 = vst [vmem:[%s3 + $0x8c] sm:$0xf] %v1793
  %1922 = vst [vmem:[%s3 + $0x90] sm:$0xf] %v1794
  %1923 = vst [vmem:[%s3 + $0x94] sm:$0xf] %v1795
  %1924 = vst [vmem:[%s3 + $0x98] sm:$0xf] %v1796
  %1925 = vst [vmem:[%s3 + $0x9c] sm:$0xf] %v1797
  %1926 = vst [vmem:[%s3 + $0xa0] sm:$0xf] %v1798
  %1927 = vst [vmem:[%s3 + $0xa4] sm:$0xf] %v1799
  %1928 = vst [vmem:[%s3 + $0xa8] sm:$0xf] %v1800
  %1929 = vst [vmem:[%s3 + $0xac] sm:$0xf] %v1801
  %1930 = vst [vmem:[%s3 + $0xb0] sm:$0xf] %v1802
  %1931 = vst [vmem:[%s3 + $0xb4] sm:$0xf] %v1803
  %1932 = vst [vmem:[%s3 + $0xb8] sm:$0xf] %v1804
  %1933 = vst [vmem:[%s3 + $0xbc] sm:$0xf] %v1805
  %1934 = vst [vmem:[%s3 + $0xc0] sm:$0xf] %v1806
  %1935 = vst [vmem:[%s3 + $0xc4] sm:$0xf] %v1807
  %1936 = vst [vmem:[%s3 + $0xc8] sm:$0xf] %v1808
  %1937 = vst [vmem:[%s3 + $0xcc] sm:$0xf] %v1809
  %1938 = vst [vmem:[%s3 + $0xd0] sm:$0xf] %v1810
  %1939 = vst [vmem:[%s3 + $0xd4] sm:$0xf] %v1811
  %1940 = vst [vmem:[%s3 + $0xd8] sm:$0xf] %v1812
  %1941 = vst [vmem:[%s3 + $0xdc] sm:$0xf] %v1813
  %1942 = vst [vmem:[%s3 + $0xe0] sm:$0xf] %v1814
  %1943 = vst [vmem:[%s3 + $0xe4] sm:$0xf] %v1815
  %1944 = vst [vmem:[%s3 + $0xe8] sm:$0xf] %v1816
  %1945 = vst [vmem:[%s3 + $0xec] sm:$0xf] %v1817
  %1946 = vst [vmem:[%s3 + $0xf0] sm:$0xf] %v1818
  %1947 = vst [vmem:[%s3 + $0xf4] sm:$0xf] %v1819
  %1948 = vst [vmem:[%s3 + $0xf8] sm:$0xf] %v1820
  %1949 = vst [vmem:[%s3 + $0xfc] sm:$0xf] %v1821
  %v1950 = vpack.c.bf16 %v1505, %v1503
  %v1951 = vpack.c.bf16 %v1509, %v1507
  %v1952 = vpack.c.bf16 %v1513, %v1511
  %v1953 = vpack.c.bf16 %v1517, %v1515
  %v1954 = vpack.c.bf16 %v1521, %v1519
  %v1955 = vpack.c.bf16 %v1525, %v1523
  %v1956 = vpack.c.bf16 %v1529, %v1527
  %v1957 = vpack.c.bf16 %v1533, %v1531
  %v1958 = vpack.c.bf16 %v1537, %v1535
  %v1959 = vpack.c.bf16 %v1541, %v1539
  %v1960 = vpack.c.bf16 %v1545, %v1543
  %v1961 = vpack.c.bf16 %v1549, %v1547
  %v1962 = vpack.c.bf16 %v1553, %v1551
  %v1963 = vpack.c.bf16 %v1557, %v1555
  %v1964 = vpack.c.bf16 %v1561, %v1559
  %v1965 = vpack.c.bf16 %v1565, %v1563
  %v1966 = vpack.c.bf16 %v1569, %v1567
  %v1967 = vpack.c.bf16 %v1573, %v1571
  %v1968 = vpack.c.bf16 %v1577, %v1575
  %v1969 = vpack.c.bf16 %v1581, %v1579
  %v1970 = vpack.c.bf16 %v1585, %v1583
  %v1971 = vpack.c.bf16 %v1589, %v1587
  %v1972 = vpack.c.bf16 %v1593, %v1591
  %v1973 = vpack.c.bf16 %v1597, %v1595
  %v1974 = vpack.c.bf16 %v1601, %v1599
  %v1975 = vpack.c.bf16 %v1605, %v1603
  %v1976 = vpack.c.bf16 %v1609, %v1607
  %v1977 = vpack.c.bf16 %v1613, %v1611
  %v1978 = vpack.c.bf16 %v1617, %v1615
  %v1979 = vpack.c.bf16 %v1621, %v1619
  %v1980 = vpack.c.bf16 %v1625, %v1623
  %v1981 = vpack.c.bf16 %v1629, %v1627
  %v2014 = vunpack.c.l.b16 %v1950
  %v2015 = vunpack.c.h.b16 %v1950
  %v2016 = vunpack.c.l.b16 %v1951
  %v2017 = vunpack.c.h.b16 %v1951
  %v2018 = vunpack.c.l.b16 %v1952
  %v2019 = vunpack.c.h.b16 %v1952
  %v2020 = vunpack.c.l.b16 %v1953
  %v2021 = vunpack.c.h.b16 %v1953
  %v2022 = vunpack.c.l.b16 %v1954
  %v2023 = vunpack.c.h.b16 %v1954
  %v2024 = vunpack.c.l.b16 %v1955
  %v2025 = vunpack.c.h.b16 %v1955
  %v2026 = vunpack.c.l.b16 %v1956
  %v2027 = vunpack.c.h.b16 %v1956
  %v2028 = vunpack.c.l.b16 %v1957
  %v2029 = vunpack.c.h.b16 %v1957
  %v2030 = vunpack.c.l.b16 %v1958
  %v2031 = vunpack.c.h.b16 %v1958
  %v2032 = vunpack.c.l.b16 %v1959
  %v2033 = vunpack.c.h.b16 %v1959
  %v2034 = vunpack.c.l.b16 %v1960
  %v2035 = vunpack.c.h.b16 %v1960
  %v2036 = vunpack.c.l.b16 %v1961
  %v2037 = vunpack.c.h.b16 %v1961
  %v2038 = vunpack.c.l.b16 %v1962
  %v2039 = vunpack.c.h.b16 %v1962
  %v2040 = vunpack.c.l.b16 %v1963
  %v2041 = vunpack.c.h.b16 %v1963
  %v2042 = vunpack.c.l.b16 %v1964
  %v2043 = vunpack.c.h.b16 %v1964
  %v2044 = vunpack.c.l.b16 %v1965
  %v2045 = vunpack.c.h.b16 %v1965
  %v2046 = vunpack.c.l.b16 %v1966
  %v2047 = vunpack.c.h.b16 %v1966
  %v2048 = vunpack.c.l.b16 %v1967
  %v2049 = vunpack.c.h.b16 %v1967
  %v2050 = vunpack.c.l.b16 %v1968
  %v2051 = vunpack.c.h.b16 %v1968
  %v2052 = vunpack.c.l.b16 %v1969
  %v2053 = vunpack.c.h.b16 %v1969
  %v2054 = vunpack.c.l.b16 %v1970
  %v2055 = vunpack.c.h.b16 %v1970
  %v2056 = vunpack.c.l.b16 %v1971
  %v2057 = vunpack.c.h.b16 %v1971
  %v2058 = vunpack.c.l.b16 %v1972
  %v2059 = vunpack.c.h.b16 %v1972
  %v2060 = vunpack.c.l.b16 %v1973
  %v2061 = vunpack.c.h.b16 %v1973
  %v2062 = vunpack.c.l.b16 %v1974
  %v2063 = vunpack.c.h.b16 %v1974
  %v2064 = vunpack.c.l.b16 %v1975
  %v2065 = vunpack.c.h.b16 %v1975
  %v2066 = vunpack.c.l.b16 %v1976
  %v2067 = vunpack.c.h.b16 %v1976
  %v2068 = vunpack.c.l.b16 %v1977
  %v2069 = vunpack.c.h.b16 %v1977
  %v2070 = vunpack.c.l.b16 %v1978
  %v2071 = vunpack.c.h.b16 %v1978
  %v2072 = vunpack.c.l.b16 %v1979
  %v2073 = vunpack.c.h.b16 %v1979
  %v2074 = vunpack.c.l.b16 %v1980
  %v2075 = vunpack.c.h.b16 %v1980
  %v2076 = vunpack.c.l.b16 %v1981
  %v2077 = vunpack.c.h.b16 %v1981
  %v2078 = vpack.c.b16 %v2014, %v2014
  %v2079 = vpack.c.b16 %v2015, %v2015
  %v2080 = vpack.c.b16 %v2016, %v2016
  %v2081 = vpack.c.b16 %v2017, %v2017
  %v2082 = vpack.c.b16 %v2018, %v2018
  %v2083 = vpack.c.b16 %v2019, %v2019
  %v2084 = vpack.c.b16 %v2020, %v2020
  %v2085 = vpack.c.b16 %v2021, %v2021
  %v2086 = vpack.c.b16 %v2022, %v2022
  %v2087 = vpack.c.b16 %v2023, %v2023
  %v2088 = vpack.c.b16 %v2024, %v2024
  %v2089 = vpack.c.b16 %v2025, %v2025
  %v2090 = vpack.c.b16 %v2026, %v2026
  %v2091 = vpack.c.b16 %v2027, %v2027
  %v2092 = vpack.c.b16 %v2028, %v2028
  %v2093 = vpack.c.b16 %v2029, %v2029
  %v2094 = vpack.c.b16 %v2030, %v2030
  %v2095 = vpack.c.b16 %v2031, %v2031
  %v2096 = vpack.c.b16 %v2032, %v2032
  %v2097 = vpack.c.b16 %v2033, %v2033
  %v2098 = vpack.c.b16 %v2034, %v2034
  %v2099 = vpack.c.b16 %v2035, %v2035
  %v2100 = vpack.c.b16 %v2036, %v2036
  %v2101 = vpack.c.b16 %v2037, %v2037
  %v2102 = vpack.c.b16 %v2038, %v2038
  %v2103 = vpack.c.b16 %v2039, %v2039
  %v2104 = vpack.c.b16 %v2040, %v2040
  %v2105 = vpack.c.b16 %v2041, %v2041
  %v2106 = vpack.c.b16 %v2042, %v2042
  %v2107 = vpack.c.b16 %v2043, %v2043
  %v2108 = vpack.c.b16 %v2044, %v2044
  %v2109 = vpack.c.b16 %v2045, %v2045
  %v2110 = vpack.c.b16 %v2046, %v2046
  %v2111 = vpack.c.b16 %v2047, %v2047
  %v2112 = vpack.c.b16 %v2048, %v2048
  %v2113 = vpack.c.b16 %v2049, %v2049
  %v2114 = vpack.c.b16 %v2050, %v2050
  %v2115 = vpack.c.b16 %v2051, %v2051
  %v2116 = vpack.c.b16 %v2052, %v2052
  %v2117 = vpack.c.b16 %v2053, %v2053
  %v2118 = vpack.c.b16 %v2054, %v2054
  %v2119 = vpack.c.b16 %v2055, %v2055
  %v2120 = vpack.c.b16 %v2056, %v2056
  %v2121 = vpack.c.b16 %v2057, %v2057
  %v2122 = vpack.c.b16 %v2058, %v2058
  %v2123 = vpack.c.b16 %v2059, %v2059
  %v2124 = vpack.c.b16 %v2060, %v2060
  %v2125 = vpack.c.b16 %v2061, %v2061
  %v2126 = vpack.c.b16 %v2062, %v2062
  %v2127 = vpack.c.b16 %v2063, %v2063
  %v2128 = vpack.c.b16 %v2064, %v2064
  %v2129 = vpack.c.b16 %v2065, %v2065
  %v2130 = vpack.c.b16 %v2066, %v2066
  %v2131 = vpack.c.b16 %v2067, %v2067
  %v2132 = vpack.c.b16 %v2068, %v2068
  %v2133 = vpack.c.b16 %v2069, %v2069
  %v2134 = vpack.c.b16 %v2070, %v2070
  %v2135 = vpack.c.b16 %v2071, %v2071
  %v2136 = vpack.c.b16 %v2072, %v2072
  %v2137 = vpack.c.b16 %v2073, %v2073
  %v2138 = vpack.c.b16 %v2074, %v2074
  %v2139 = vpack.c.b16 %v2075, %v2075
  %v2140 = vpack.c.b16 %v2076, %v2076
  %v2141 = vpack.c.b16 %v2077, %v2077
  %2206 = vst [vmem:[%s4] sm:$0xf] %v2078
  %2207 = vst [vmem:[%s4 + $0x4] sm:$0xf] %v2079
  %2208 = vst [vmem:[%s4 + $0x8] sm:$0xf] %v2080
  %2209 = vst [vmem:[%s4 + $0xc] sm:$0xf] %v2081
  %2210 = vst [vmem:[%s4 + $0x10] sm:$0xf] %v2082
  %2211 = vst [vmem:[%s4 + $0x14] sm:$0xf] %v2083
  %2212 = vst [vmem:[%s4 + $0x18] sm:$0xf] %v2084
  %2213 = vst [vmem:[%s4 + $0x1c] sm:$0xf] %v2085
  %2214 = vst [vmem:[%s4 + $0x20] sm:$0xf] %v2086
  %2215 = vst [vmem:[%s4 + $0x24] sm:$0xf] %v2087
  %2216 = vst [vmem:[%s4 + $0x28] sm:$0xf] %v2088
  %2217 = vst [vmem:[%s4 + $0x2c] sm:$0xf] %v2089
  %2218 = vst [vmem:[%s4 + $0x30] sm:$0xf] %v2090
  %2219 = vst [vmem:[%s4 + $0x34] sm:$0xf] %v2091
  %2220 = vst [vmem:[%s4 + $0x38] sm:$0xf] %v2092
  %2221 = vst [vmem:[%s4 + $0x3c] sm:$0xf] %v2093
  %2222 = vst [vmem:[%s4 + $0x40] sm:$0xf] %v2094
  %2223 = vst [vmem:[%s4 + $0x44] sm:$0xf] %v2095
  %2224 = vst [vmem:[%s4 + $0x48] sm:$0xf] %v2096
  %2225 = vst [vmem:[%s4 + $0x4c] sm:$0xf] %v2097
  %2226 = vst [vmem:[%s4 + $0x50] sm:$0xf] %v2098
  %2227 = vst [vmem:[%s4 + $0x54] sm:$0xf] %v2099
  %2228 = vst [vmem:[%s4 + $0x58] sm:$0xf] %v2100
  %2229 = vst [vmem:[%s4 + $0x5c] sm:$0xf] %v2101
  %2230 = vst [vmem:[%s4 + $0x60] sm:$0xf] %v2102
  %2231 = vst [vmem:[%s4 + $0x64] sm:$0xf] %v2103
  %2232 = vst [vmem:[%s4 + $0x68] sm:$0xf] %v2104
  %2233 = vst [vmem:[%s4 + $0x6c] sm:$0xf] %v2105
  %2234 = vst [vmem:[%s4 + $0x70] sm:$0xf] %v2106
  %2235 = vst [vmem:[%s4 + $0x74] sm:$0xf] %v2107
  %2236 = vst [vmem:[%s4 + $0x78] sm:$0xf] %v2108
  %2237 = vst [vmem:[%s4 + $0x7c] sm:$0xf] %v2109
  %2238 = vst [vmem:[%s4 + $0x80] sm:$0xf] %v2110
  %2239 = vst [vmem:[%s4 + $0x84] sm:$0xf] %v2111
  %2240 = vst [vmem:[%s4 + $0x88] sm:$0xf] %v2112
  %2241 = vst [vmem:[%s4 + $0x8c] sm:$0xf] %v2113
  %2242 = vst [vmem:[%s4 + $0x90] sm:$0xf] %v2114
  %2243 = vst [vmem:[%s4 + $0x94] sm:$0xf] %v2115
  %2244 = vst [vmem:[%s4 + $0x98] sm:$0xf] %v2116
  %2245 = vst [vmem:[%s4 + $0x9c] sm:$0xf] %v2117
  %2246 = vst [vmem:[%s4 + $0xa0] sm:$0xf] %v2118
  %2247 = vst [vmem:[%s4 + $0xa4] sm:$0xf] %v2119
  %2248 = vst [vmem:[%s4 + $0xa8] sm:$0xf] %v2120
  %2249 = vst [vmem:[%s4 + $0xac] sm:$0xf] %v2121
  %2250 = vst [vmem:[%s4 + $0xb0] sm:$0xf] %v2122
  %2251 = vst [vmem:[%s4 + $0xb4] sm:$0xf] %v2123
  %2252 = vst [vmem:[%s4 + $0xb8] sm:$0xf] %v2124
  %2253 = vst [vmem:[%s4 + $0xbc] sm:$0xf] %v2125
  %2254 = vst [vmem:[%s4 + $0xc0] sm:$0xf] %v2126
  %2255 = vst [vmem:[%s4 + $0xc4] sm:$0xf] %v2127
  %2256 = vst [vmem:[%s4 + $0xc8] sm:$0xf] %v2128
  %2257 = vst [vmem:[%s4 + $0xcc] sm:$0xf] %v2129
  %2258 = vst [vmem:[%s4 + $0xd0] sm:$0xf] %v2130
  %2259 = vst [vmem:[%s4 + $0xd4] sm:$0xf] %v2131
  %2260 = vst [vmem:[%s4 + $0xd8] sm:$0xf] %v2132
  %2261 = vst [vmem:[%s4 + $0xdc] sm:$0xf] %v2133
  %2262 = vst [vmem:[%s4 + $0xe0] sm:$0xf] %v2134
  %2263 = vst [vmem:[%s4 + $0xe4] sm:$0xf] %v2135
  %2264 = vst [vmem:[%s4 + $0xe8] sm:$0xf] %v2136
  %2265 = vst [vmem:[%s4 + $0xec] sm:$0xf] %v2137
  %2266 = vst [vmem:[%s4 + $0xf0] sm:$0xf] %v2138
  %2267 = vst [vmem:[%s4 + $0xf4] sm:$0xf] %v2139
  %2268 = vst [vmem:[%s4 + $0xf8] sm:$0xf] %v2140
  %2269 = vst [vmem:[%s4 + $0xfc] sm:$0xf] %v2141
  // Predicated region
  $region14: #{csp_forward.3} parent=0 // pred_check
    _
  $region15: #{csp_forward.3} parent=0 // pred_check_branch
    %2271 = sbr.rel (0) target = $region17
  $region16: #{csp_forward.3} parent=0 // pred_region
    _
  $region17: #{csp_forward.3} parent=0 // pred_fallthru
    _
  // Predicated region
  $region18: #{csp_forward.3} parent=0 // pred_check
    _
  $region19: #{csp_forward.3} parent=0 // pred_check_branch
    %2273 = sbr.rel (0) target = $region21
  $region20: #{csp_forward.3} parent=0 // pred_region
    _
  $region21: #{csp_forward.3} parent=0 // pred_fallthru
    _
  // Predicated region
  $region22: #{csp_forward.3} parent=0 // pred_check
    _
  $region23: #{csp_forward.3} parent=0 // pred_check_branch
    %2275 = sbr.rel (0) target = $region25
  $region24: #{csp_forward.3} parent=0 // pred_region
    _
  $region25: #{csp_forward.3} parent=0 // pred_fallthru
    _
  // Predicated region
  $region26: #{csp_forward.3} parent=0 // pred_check
    _
  $region27: #{csp_forward.3} parent=0 // pred_check_branch
    %2277 = sbr.rel (0) target = $region29
  $region28: #{csp_forward.3} parent=0 // pred_region
    _
  $region29: #{csp_forward.3} parent=0 // pred_fallthru
    _

// kernel: csp_forward.4
$region0: #{csp_forward.4}
  #allocation0 [shape = 'u32[]', space=smem, size = 0x4, offset = 0x4, fixed_abs, tag = 'smem constant byte address 0x4 - core index']
  #allocation1 [shape = 'u32[144,128]{1,0:T(1,128)}', space=vmem, size = 0x12000, scoped, tag = 'internal scratch']
  %s0 = inlined_call_operand.vmem [shape: bf16[2,1,18,18,128], index: 0, kind: input, shape index: {}]
  %s1 = inlined_call_operand.vmem [shape: bf16[1152,128], index: 1, kind: input, shape index: {}]
  %s2 = inlined_call_operand.vmem [shape: f32[1,128], index: 2, kind: input, shape index: {}]
  %s3 = inlined_call_operand.vmem [shape: bf16[2,1,16,16,128], index: 3, kind: output, shape index: {}]
  %s4 = sld [smem:[#allocation0]]
  $region45: #{csp_forward.4} parent=0
    _
  %s6 = ssub.s32 1, %s4
  %s7 = scalar_select 0, %s6, %s4
  loop: start=0, step=1, limit=4
  $region2: #{csp_forward.4} parent=0 // loop_pre_header
    _
  $region3: #{csp_forward.4} parent=0 // loop_header
    %s9 = sphi 0, %s13
    %p10 = scmp.ge.s32.totalorder %s9, 4
    %s16 = sphi 0, %s28
    %s17 = sphi 0, %s24
    %s18 = sphi 0, %s16
    %s19 = sphi 0, %s17
    %s20 = sphi 0, %s18
    %s21 = sphi 0, %s19
    %s33 = sphi 0, %s35
    %s36 = sphi 0, %s33
    %s37 = sphi 0, %s36
    %s53 = sphi 0, %s37
    %s57 = sphi 0, %s57
    %s59 = sphi 0, %s57
    %s60 = sphi 0, %s59
    %s74 = sphi 0, %s60
    %s78 = sphi 0, %s78
    %s80 = sphi 0, %s78
    %s81 = sphi 0, %s80
    %s95 = sphi 0, %s81
    %s103 = sphi 0, %s105
    %s106 = sphi 0, %s103
    %s107 = sphi 0, %s106
    %s123 = sphi 0, %s107
  $region4: #{csp_forward.4} parent=0 // loop_header_branch
    %12 = sbr.rel (%p10) target = $region8
  $region5: #{csp_forward.4} parent=0 // loop_body
    %s14 = ssub.s32 %s9, 1
    %s15 = ssub.s32 %s9, 2
    %s22 = sadd.s32 1, %s17
    %p23 = scmp.ge.s32.totalorder %s22, 1
    %s24 = scalar_select %p23, 0, %s22
    %s25 = sadd.s32 1, %s16
    %s26 = scalar_select %p23, %s25, %s16
    %p27 = scmp.ge.s32.totalorder %s26, 2
    %s28 = scalar_select %p27, 0, %s26
    %s29 = ssub.s32 %s16, %s28
    %s30 = ssub.s32 %s17, %s24
    %s31 = sor.u32 %s29, %s30
    %p32 = scmp.eq.s32.totalorder %s31, 0
    %s34 = sadd.s32 %s33, 1
    %s35 = scalar_select %p32, %s33, %s34
    %p38 = pneg %p32
    %p39 = scmp.eq.s32.totalorder %s9, 1
    %p40 = por %p38, %p39
    %p41 = scmp.ne.s32.totalorder %s33, %s36
    %p42 = scmp.eq.s32.totalorder %s9, 0
    %p43 = por %p41, %p42
    %p44 = scmp.ne.s32.totalorder %s33, %s36
    %p45 = scmp.eq.s32.totalorder %s14, 1
    %p46 = por %p44, %p45
    %p47 = scmp.ne.s32.totalorder %s36, %s37
    %p48 = scmp.eq.s32.totalorder %s14, 0
    %p49 = por %p47, %p48
    %p50 = scmp.ne.s32.totalorder %s36, %s37
    %p51 = scmp.eq.s32.totalorder %s15, 1
    %p52 = por %p50, %p51
    %p54 = scmp.ne.s32.totalorder %s37, %s53
    %p55 = scmp.eq.s32.totalorder %s15, 0
    %p56 = por %p54, %p55
    %s58 = sadd.s32 %s57, 1
    %p61 = scmp.eq.s32.totalorder %s9, 1
    %p62 = scmp.ne.s32.totalorder %s57, %s59
    %p63 = scmp.eq.s32.totalorder %s9, 0
    %p64 = por %p62, %p63
    %p65 = scmp.ne.s32.totalorder %s57, %s59
    %p66 = scmp.eq.s32.totalorder %s14, 1
    %p67 = por %p65, %p66
    %p68 = scmp.ne.s32.totalorder %s59, %s60
    %p69 = scmp.eq.s32.totalorder %s14, 0
    %p70 = por %p68, %p69
    %p71 = scmp.ne.s32.totalorder %s59, %s60
    %p72 = scmp.eq.s32.totalorder %s15, 1
    %p73 = por %p71, %p72
    %p75 = scmp.ne.s32.totalorder %s60, %s74
    %p76 = scmp.eq.s32.totalorder %s15, 0
    %p77 = por %p75, %p76
    %s79 = sadd.s32 %s78, 1
    %p82 = scmp.eq.s32.totalorder %s9, 1
    %p83 = scmp.ne.s32.totalorder %s78, %s80
    %p84 = scmp.eq.s32.totalorder %s9, 0
    %p85 = por %p83, %p84
    %p86 = scmp.ne.s32.totalorder %s78, %s80
    %p87 = scmp.eq.s32.totalorder %s14, 1
    %p88 = por %p86, %p87
    %p89 = scmp.ne.s32.totalorder %s80, %s81
    %p90 = scmp.eq.s32.totalorder %s14, 0
    %p91 = por %p89, %p90
    %p92 = scmp.ne.s32.totalorder %s80, %s81
    %p93 = scmp.eq.s32.totalorder %s15, 1
    %p94 = por %p92, %p93
    %p96 = scmp.ne.s32.totalorder %s81, %s95
    %p97 = scmp.eq.s32.totalorder %s15, 0
    %p98 = por %p96, %p97
    %s99 = ssub.s32 %s16, %s28
    %s100 = ssub.s32 %s17, %s24
    %s101 = sor.u32 %s99, %s100
    %p102 = scmp.eq.s32.totalorder %s101, 0
    %s104 = sadd.s32 %s103, 1
    %s105 = scalar_select %p102, %s103, %s104
    %p108 = pneg %p102
    %p109 = scmp.eq.s32.totalorder %s9, 1
    %p110 = por %p108, %p109
    %p111 = scmp.ne.s32.totalorder %s103, %s106
    %p112 = scmp.eq.s32.totalorder %s9, 0
    %p113 = por %p111, %p112
    %p114 = scmp.ne.s32.totalorder %s103, %s106
    %p115 = scmp.eq.s32.totalorder %s14, 1
    %p116 = por %p114, %p115
    %p117 = scmp.ne.s32.totalorder %s106, %s107
    %p118 = scmp.eq.s32.totalorder %s14, 0
    %p119 = por %p117, %p118
    %p120 = scmp.ne.s32.totalorder %s106, %s107
    %p121 = scmp.eq.s32.totalorder %s15, 1
    %p122 = por %p120, %p121
    %p124 = scmp.ne.s32.totalorder %s107, %s123
    %p125 = scmp.eq.s32.totalorder %s15, 0
    %p126 = por %p124, %p125
    %p127 = scmp.le.s32.totalorder 1, %s9
    %p128 = scmp.lt.s32.totalorder %s9, 3
    %p129 = pnand %p127, %p128
    %p130 = pneg %p129
    // Predicated region
    $region9: #{csp_forward.4} parent=5 // pred_check
      _
    $region10: #{csp_forward.4} parent=5 // pred_check_branch
      %132 = sbr.rel (%p129) target = $region12
    $region11: #{csp_forward.4} parent=5 // pred_region
      %s133 = ssub.s32 %s9, 1
      // Predicated region
      $region13: #{csp_forward.4} parent=11 // pred_check
        %p134 = pneg %p70
      $region14: #{csp_forward.4} parent=11 // pred_check_branch
        %136 = sbr.rel (%p134) target = $region16
      $region15: #{csp_forward.4} parent=11 // pred_region
        _
      $region16: #{csp_forward.4} parent=11 // pred_fallthru
        _
      // Predicated region
      $region17: #{csp_forward.4} parent=11 // pred_check
        %p137 = pneg %p91
      $region18: #{csp_forward.4} parent=11 // pred_check_branch
        %139 = sbr.rel (%p137) target = $region20
      $region19: #{csp_forward.4} parent=11 // pred_region
        _
      $region20: #{csp_forward.4} parent=11 // pred_fallthru
        _
    $region12: #{csp_forward.4} parent=5 // pred_fallthru
      _
    %p140 = scmp.lt.s32.totalorder %s9, 2
    // Predicated region
    $region21: #{csp_forward.4} parent=5 // pred_check
      %p141 = pneg %p140
    $region22: #{csp_forward.4} parent=5 // pred_check_branch
      %143 = sbr.rel (%p141) target = $region24
    $region23: #{csp_forward.4} parent=5 // pred_region
      // Predicated region
      $region25: #{csp_forward.4} parent=23 // pred_check
        %p144 = pneg %p43
      $region26: #{csp_forward.4} parent=23 // pred_check_branch
        %146 = sbr.rel (%p144) target = $region28
      $region27: #{csp_forward.4} parent=23 // pred_region
        %p147 = scmp.lt.s32.totalorder %s16, 1
        %s148 = scalar_select %p147, %s16, 1
        %p149 = scmp.lt.s32.totalorder %s17, 0
        %s150 = scalar_select %p149, %s17, 0
        %s151 = smul.addr %s150, 54
        %s152 = smul.addr %s148, 54
        %s153 = sadd.s32 %s151, %s152
        %s154 = smul.addr %s153, 4
        %s155 = scalar_lea.vmem %s0, %s154
      $region28: #{csp_forward.4} parent=23 // pred_fallthru
        _
    $region24: #{csp_forward.4} parent=5 // pred_fallthru
      _
    %p156 = scmp.le.s32.totalorder 1, %s9
    %p157 = scmp.lt.s32.totalorder %s9, 3
    %p158 = pnand %p156, %p157
    %p159 = pneg %p158
    // Predicated region
    $region29: #{csp_forward.4} parent=5 // pred_check
      _
    $region30: #{csp_forward.4} parent=5 // pred_check_branch
      %161 = sbr.rel (%p158) target = $region32
    $region31: #{csp_forward.4} parent=5 // pred_region
      %s162 = ssub.s32 %s9, 1
      %p163 = scmp.lt.s32.totalorder %s18, 1
      %s164 = scalar_select %p163, %s18, 1
      %p165 = scmp.lt.s32.totalorder %s19, 0
      %s166 = scalar_select %p165, %s19, 0
      %s167 = smul.addr %s166, 54
      %s168 = smul.addr %s164, 54
      %s169 = sadd.s32 %s167, %s168
      %s170 = smul.addr %s169, 4
      %s171 = scalar_lea.vmem %s0, %s170
      %p172 = pneg %p49
      %p173 = pneg %p46
      %p174 = pneg %p70
      %p175 = pneg %p67
      %p176 = pneg %p91
      %p177 = pneg %p88
      %p178 = pneg %p119
      %p179 = pneg %p116
      %p180 = scmp.lt.s32.totalorder %s18, 1
      %s181 = scalar_select %p180, %s18, 1
      %p182 = scmp.lt.s32.totalorder %s19, 0
      %s183 = scalar_select %p182, %s19, 0
      %s184 = smul.addr %s183, 32
      %s185 = smul.addr %s181, 32
      %s186 = sadd.s32 %s184, %s185
      %s187 = smul.addr %s186, 4
      %s188 = scalar_lea.vmem %s3, %s187
      %p189 = scmp.lt.s32.totalorder %s18, 1
      %s190 = scalar_select %p189, %s18, 1
      %p191 = scmp.lt.s32.totalorder %s19, 0
      %s192 = scalar_select %p191, %s19, 0
      %s193 = smul.addr %s192, 54
      %s194 = smul.addr %s190, 54
      %s195 = sadd.s32 %s193, %s194
      %s196 = smul.addr %s195, 4
      %s197 = scalar_lea.vmem %s0, %s196
      %p198 = scmp.lt.s32.totalorder %s18, 1
      %s199 = scalar_select %p198, %s18, 1
      %p200 = scmp.lt.s32.totalorder %s19, 0
      %s201 = scalar_select %p200, %s19, 0
      %s202 = smul.addr %s201, 32
      %s203 = smul.addr %s199, 32
      %s204 = sadd.s32 %s202, %s203
      %s205 = smul.addr %s204, 4
      %s206 = scalar_lea.vmem %s3, %s205
      %v208 = vld [vmem:[%s197] sm:$0xf]
      %v209 = vld [vmem:[%s197 + $0x4] sm:$0xf]
      %v210 = vld [vmem:[%s197 + $0xc] sm:$0xf]
      %v211 = vld [vmem:[%s197 + $0x10] sm:$0xf]
      %v212 = vld [vmem:[%s197 + $0x18] sm:$0xf]
      %v213 = vld [vmem:[%s197 + $0x1c] sm:$0xf]
      %v214 = vld [vmem:[%s197 + $0x24] sm:$0xf]
      %v215 = vld [vmem:[%s197 + $0x28] sm:$0xf]
      %v216 = vld [vmem:[%s197 + $0x30] sm:$0xf]
      %v217 = vld [vmem:[%s197 + $0x34] sm:$0xf]
      %v218 = vld [vmem:[%s197 + $0x3c] sm:$0xf]
      %v219 = vld [vmem:[%s197 + $0x40] sm:$0xf]
      %v220 = vld [vmem:[%s197 + $0x48] sm:$0xf]
      %v221 = vld [vmem:[%s197 + $0x4c] sm:$0xf]
      %v222 = vld [vmem:[%s197 + $0x54] sm:$0xf]
      %v223 = vld [vmem:[%s197 + $0x58] sm:$0xf]
      %v224 = vld [vmem:[%s197 + $0x60] sm:$0xf]
      %v225 = vld [vmem:[%s197 + $0x64] sm:$0xf]
      %v226 = vld [vmem:[%s197 + $0x6c] sm:$0xf]
      %v227 = vld [vmem:[%s197 + $0x70] sm:$0xf]
      %v228 = vld [vmem:[%s197 + $0x78] sm:$0xf]
      %v229 = vld [vmem:[%s197 + $0x7c] sm:$0xf]
      %v230 = vld [vmem:[%s197 + $0x84] sm:$0xf]
      %v231 = vld [vmem:[%s197 + $0x88] sm:$0xf]
      %v232 = vld [vmem:[%s197 + $0x90] sm:$0xf]
      %v233 = vld [vmem:[%s197 + $0x94] sm:$0xf]
      %v234 = vld [vmem:[%s197 + $0x9c] sm:$0xf]
      %v235 = vld [vmem:[%s197 + $0xa0] sm:$0xf]
      %v236 = vld [vmem:[%s197 + $0xa8] sm:$0xf]
      %v237 = vld [vmem:[%s197 + $0xac] sm:$0xf]
      %v238 = vld [vmem:[%s197 + $0xb4] sm:$0xf]
      %v239 = vld [vmem:[%s197 + $0xb8] sm:$0xf]
      %v240 = vld [vmem:[%s197 + $0x8] sm:$0x1]
      %v241 = vld [vmem:[%s197 + $0x14] sm:$0x1]
      %v242 = vld [vmem:[%s197 + $0x20] sm:$0x1]
      %v243 = vld [vmem:[%s197 + $0x2c] sm:$0x1]
      %v244 = vld [vmem:[%s197 + $0x38] sm:$0x1]
      %v245 = vld [vmem:[%s197 + $0x44] sm:$0x1]
      %v246 = vld [vmem:[%s197 + $0x50] sm:$0x1]
      %v247 = vld [vmem:[%s197 + $0x5c] sm:$0x1]
      %v248 = vld [vmem:[%s197 + $0x68] sm:$0x1]
      %v249 = vld [vmem:[%s197 + $0x74] sm:$0x1]
      %v250 = vld [vmem:[%s197 + $0x80] sm:$0x1]
      %v251 = vld [vmem:[%s197 + $0x8c] sm:$0x1]
      %v252 = vld [vmem:[%s197 + $0x98] sm:$0x1]
      %v253 = vld [vmem:[%s197 + $0xa4] sm:$0x1]
      %v254 = vld [vmem:[%s197 + $0xb0] sm:$0x1]
      %v255 = vld [vmem:[%s197 + $0xbc] sm:$0x1]
      %v256 = vld [vmem:[%s197] sm:$0xe]
      %v257 = vld [vmem:[%s197 + $0xc] sm:$0xe]
      %v258 = vld [vmem:[%s197 + $0x18] sm:$0xe]
      %v259 = vld [vmem:[%s197 + $0x24] sm:$0xe]
      %v260 = vld [vmem:[%s197 + $0x30] sm:$0xe]
      %v261 = vld [vmem:[%s197 + $0x3c] sm:$0xe]
      %v262 = vld [vmem:[%s197 + $0x48] sm:$0xe]
      %v263 = vld [vmem:[%s197 + $0x54] sm:$0xe]
      %v264 = vld [vmem:[%s197 + $0x60] sm:$0xe]
      %v265 = vld [vmem:[%s197 + $0x6c] sm:$0xe]
      %v266 = vld [vmem:[%s197 + $0x78] sm:$0xe]
      %v267 = vld [vmem:[%s197 + $0x84] sm:$0xe]
      %v268 = vld [vmem:[%s197 + $0x90] sm:$0xe]
      %v269 = vld [vmem:[%s197 + $0x9c] sm:$0xe]
      %v270 = vld [vmem:[%s197 + $0xa8] sm:$0xe]
      %v271 = vld [vmem:[%s197 + $0xb4] sm:$0xe]
      %s272 = scalar_lea.vmem %s197, 12
      %v273 = vld [vmem:[%s272] sm:$0xf]
      %v274 = vld [vmem:[%s272 + $0x4] sm:$0xf]
      %v275 = vld [vmem:[%s272 + $0xc] sm:$0xf]
      %v276 = vld [vmem:[%s272 + $0x10] sm:$0xf]
      %v277 = vld [vmem:[%s272 + $0x18] sm:$0xf]
      %v278 = vld [vmem:[%s272 + $0x1c] sm:$0xf]
      %v279 = vld [vmem:[%s272 + $0x24] sm:$0xf]
      %v280 = vld [vmem:[%s272 + $0x28] sm:$0xf]
      %v281 = vld [vmem:[%s272 + $0x30] sm:$0xf]
      %v282 = vld [vmem:[%s272 + $0x34] sm:$0xf]
      %v283 = vld [vmem:[%s272 + $0x3c] sm:$0xf]
      %v284 = vld [vmem:[%s272 + $0x40] sm:$0xf]
      %v285 = vld [vmem:[%s272 + $0x48] sm:$0xf]
      %v286 = vld [vmem:[%s272 + $0x4c] sm:$0xf]
      %v287 = vld [vmem:[%s272 + $0x54] sm:$0xf]
      %v288 = vld [vmem:[%s272 + $0x58] sm:$0xf]
      %v289 = vld [vmem:[%s272 + $0x60] sm:$0xf]
      %v290 = vld [vmem:[%s272 + $0x64] sm:$0xf]
      %v291 = vld [vmem:[%s272 + $0x6c] sm:$0xf]
      %v292 = vld [vmem:[%s272 + $0x70] sm:$0xf]
      %v293 = vld [vmem:[%s272 + $0x78] sm:$0xf]
      %v294 = vld [vmem:[%s272 + $0x7c] sm:$0xf]
      %v295 = vld [vmem:[%s272 + $0x84] sm:$0xf]
      %v296 = vld [vmem:[%s272 + $0x88] sm:$0xf]
      %v297 = vld [vmem:[%s272 + $0x90] sm:$0xf]
      %v298 = vld [vmem:[%s272 + $0x94] sm:$0xf]
      %v299 = vld [vmem:[%s272 + $0x9c] sm:$0xf]
      %v300 = vld [vmem:[%s272 + $0xa0] sm:$0xf]
      %v301 = vld [vmem:[%s272 + $0xa8] sm:$0xf]
      %v302 = vld [vmem:[%s272 + $0xac] sm:$0xf]
      %v303 = vld [vmem:[%s272 + $0xb4] sm:$0xf]
      %v304 = vld [vmem:[%s272 + $0xb8] sm:$0xf]
      %v305 = vld [vmem:[%s272 + $0x8] sm:$0x1]
      %v306 = vld [vmem:[%s272 + $0x14] sm:$0x1]
      %v307 = vld [vmem:[%s272 + $0x20] sm:$0x1]
      %v308 = vld [vmem:[%s272 + $0x2c] sm:$0x1]
      %v309 = vld [vmem:[%s272 + $0x38] sm:$0x1]
      %v310 = vld [vmem:[%s272 + $0x44] sm:$0x1]
      %v311 = vld [vmem:[%s272 + $0x50] sm:$0x1]
      %v312 = vld [vmem:[%s272 + $0x5c] sm:$0x1]
      %v313 = vld [vmem:[%s272 + $0x68] sm:$0x1]
      %v314 = vld [vmem:[%s272 + $0x74] sm:$0x1]
      %v315 = vld [vmem:[%s272 + $0x80] sm:$0x1]
      %v316 = vld [vmem:[%s272 + $0x8c] sm:$0x1]
      %v317 = vld [vmem:[%s272 + $0x98] sm:$0x1]
      %v318 = vld [vmem:[%s272 + $0xa4] sm:$0x1]
      %v319 = vld [vmem:[%s272 + $0xb0] sm:$0x1]
      %v320 = vld [vmem:[%s272 + $0xbc] sm:$0x1]
      %v321 = vld [vmem:[%s272] sm:$0xe]
      %v322 = vld [vmem:[%s272 + $0xc] sm:$0xe]
      %v323 = vld [vmem:[%s272 + $0x18] sm:$0xe]
      %v324 = vld [vmem:[%s272 + $0x24] sm:$0xe]
      %v325 = vld [vmem:[%s272 + $0x30] sm:$0xe]
      %v326 = vld [vmem:[%s272 + $0x3c] sm:$0xe]
      %v327 = vld [vmem:[%s272 + $0x48] sm:$0xe]
      %v328 = vld [vmem:[%s272 + $0x54] sm:$0xe]
      %v329 = vld [vmem:[%s272 + $0x60] sm:$0xe]
      %v330 = vld [vmem:[%s272 + $0x6c] sm:$0xe]
      %v331 = vld [vmem:[%s272 + $0x78] sm:$0xe]
      %v332 = vld [vmem:[%s272 + $0x84] sm:$0xe]
      %v333 = vld [vmem:[%s272 + $0x90] sm:$0xe]
      %v334 = vld [vmem:[%s272 + $0x9c] sm:$0xe]
      %v335 = vld [vmem:[%s272 + $0xa8] sm:$0xe]
      %v336 = vld [vmem:[%s272 + $0xb4] sm:$0xe]
      %s337 = scalar_lea.vmem %s197, 24
      %v338 = vld [vmem:[%s337] sm:$0xf]
      %v339 = vld [vmem:[%s337 + $0x4] sm:$0xf]
      %v340 = vld [vmem:[%s337 + $0xc] sm:$0xf]
      %v341 = vld [vmem:[%s337 + $0x10] sm:$0xf]
      %v342 = vld [vmem:[%s337 + $0x18] sm:$0xf]
      %v343 = vld [vmem:[%s337 + $0x1c] sm:$0xf]
      %v344 = vld [vmem:[%s337 + $0x24] sm:$0xf]
      %v345 = vld [vmem:[%s337 + $0x28] sm:$0xf]
      %v346 = vld [vmem:[%s337 + $0x30] sm:$0xf]
      %v347 = vld [vmem:[%s337 + $0x34] sm:$0xf]
      %v348 = vld [vmem:[%s337 + $0x3c] sm:$0xf]
      %v349 = vld [vmem:[%s337 + $0x40] sm:$0xf]
      %v350 = vld [vmem:[%s337 + $0x48] sm:$0xf]
      %v351 = vld [vmem:[%s337 + $0x4c] sm:$0xf]
      %v352 = vld [vmem:[%s337 + $0x54] sm:$0xf]
      %v353 = vld [vmem:[%s337 + $0x58] sm:$0xf]
      %v354 = vld [vmem:[%s337 + $0x60] sm:$0xf]
      %v355 = vld [vmem:[%s337 + $0x64] sm:$0xf]
      %v356 = vld [vmem:[%s337 + $0x6c] sm:$0xf]
      %v357 = vld [vmem:[%s337 + $0x70] sm:$0xf]
      %v358 = vld [vmem:[%s337 + $0x78] sm:$0xf]
      %v359 = vld [vmem:[%s337 + $0x7c] sm:$0xf]
      %v360 = vld [vmem:[%s337 + $0x84] sm:$0xf]
      %v361 = vld [vmem:[%s337 + $0x88] sm:$0xf]
      %v362 = vld [vmem:[%s337 + $0x90] sm:$0xf]
      %v363 = vld [vmem:[%s337 + $0x94] sm:$0xf]
      %v364 = vld [vmem:[%s337 + $0x9c] sm:$0xf]
      %v365 = vld [vmem:[%s337 + $0xa0] sm:$0xf]
      %v366 = vld [vmem:[%s337 + $0xa8] sm:$0xf]
      %v367 = vld [vmem:[%s337 + $0xac] sm:$0xf]
      %v368 = vld [vmem:[%s337 + $0xb4] sm:$0xf]
      %v369 = vld [vmem:[%s337 + $0xb8] sm:$0xf]
      %v370 = vld [vmem:[%s337 + $0x8] sm:$0x1]
      %v371 = vld [vmem:[%s337 + $0x14] sm:$0x1]
      %v372 = vld [vmem:[%s337 + $0x20] sm:$0x1]
      %v373 = vld [vmem:[%s337 + $0x2c] sm:$0x1]
      %v374 = vld [vmem:[%s337 + $0x38] sm:$0x1]
      %v375 = vld [vmem:[%s337 + $0x44] sm:$0x1]
      %v376 = vld [vmem:[%s337 + $0x50] sm:$0x1]
      %v377 = vld [vmem:[%s337 + $0x5c] sm:$0x1]
      %v378 = vld [vmem:[%s337 + $0x68] sm:$0x1]
      %v379 = vld [vmem:[%s337 + $0x74] sm:$0x1]
      %v380 = vld [vmem:[%s337 + $0x80] sm:$0x1]
      %v381 = vld [vmem:[%s337 + $0x8c] sm:$0x1]
      %v382 = vld [vmem:[%s337 + $0x98] sm:$0x1]
      %v383 = vld [vmem:[%s337 + $0xa4] sm:$0x1]
      %v384 = vld [vmem:[%s337 + $0xb0] sm:$0x1]
      %v385 = vld [vmem:[%s337 + $0xbc] sm:$0x1]
      %v386 = vld [vmem:[%s337] sm:$0xe]
      %v387 = vld [vmem:[%s337 + $0xc] sm:$0xe]
      %v388 = vld [vmem:[%s337 + $0x18] sm:$0xe]
      %v389 = vld [vmem:[%s337 + $0x24] sm:$0xe]
      %v390 = vld [vmem:[%s337 + $0x30] sm:$0xe]
      %v391 = vld [vmem:[%s337 + $0x3c] sm:$0xe]
      %v392 = vld [vmem:[%s337 + $0x48] sm:$0xe]
      %v393 = vld [vmem:[%s337 + $0x54] sm:$0xe]
      %v394 = vld [vmem:[%s337 + $0x60] sm:$0xe]
      %v395 = vld [vmem:[%s337 + $0x6c] sm:$0xe]
      %v396 = vld [vmem:[%s337 + $0x78] sm:$0xe]
      %v397 = vld [vmem:[%s337 + $0x84] sm:$0xe]
      %v398 = vld [vmem:[%s337 + $0x90] sm:$0xe]
      %v399 = vld [vmem:[%s337 + $0x9c] sm:$0xe]
      %v400 = vld [vmem:[%s337 + $0xa8] sm:$0xe]
      %v401 = vld [vmem:[%s337 + $0xb4] sm:$0xe]
      %v434 = vunpack.c.l.b16 %v208
      %v435 = vunpack.c.l.b16 %v209
      %v436 = vunpack.c.l.b16 %v210
      %v437 = vunpack.c.l.b16 %v211
      %v438 = vunpack.c.l.b16 %v212
      %v439 = vunpack.c.l.b16 %v213
      %v440 = vunpack.c.l.b16 %v214
      %v441 = vunpack.c.l.b16 %v215
      %v442 = vunpack.c.l.b16 %v216
      %v443 = vunpack.c.l.b16 %v217
      %v444 = vunpack.c.l.b16 %v218
      %v445 = vunpack.c.l.b16 %v219
      %v446 = vunpack.c.l.b16 %v220
      %v447 = vunpack.c.l.b16 %v221
      %v448 = vunpack.c.l.b16 %v222
      %v449 = vunpack.c.l.b16 %v223
      %v450 = vunpack.c.l.b16 %v224
      %v451 = vunpack.c.l.b16 %v225
      %v452 = vunpack.c.l.b16 %v226
      %v453 = vunpack.c.l.b16 %v227
      %v454 = vunpack.c.l.b16 %v228
      %v455 = vunpack.c.l.b16 %v229
      %v456 = vunpack.c.l.b16 %v230
      %v457 = vunpack.c.l.b16 %v231
      %v458 = vunpack.c.l.b16 %v232
      %v459 = vunpack.c.l.b16 %v233
      %v460 = vunpack.c.l.b16 %v234
      %v461 = vunpack.c.l.b16 %v235
      %v462 = vunpack.c.l.b16 %v236
      %v463 = vunpack.c.l.b16 %v237
      %v464 = vunpack.c.l.b16 %v238
      %v465 = vunpack.c.l.b16 %v239
      %v466 = vpack.c.b16 %v435, %v434
      %v467 = vpack.c.b16 %v437, %v436
      %v468 = vpack.c.b16 %v439, %v438
      %v469 = vpack.c.b16 %v441, %v440
      %v470 = vpack.c.b16 %v443, %v442
      %v471 = vpack.c.b16 %v445, %v444
      %v472 = vpack.c.b16 %v447, %v446
      %v473 = vpack.c.b16 %v449, %v448
      %v474 = vpack.c.b16 %v451, %v450
      %v475 = vpack.c.b16 %v453, %v452
      %v476 = vpack.c.b16 %v455, %v454
      %v477 = vpack.c.b16 %v457, %v456
      %v478 = vpack.c.b16 %v459, %v458
      %v479 = vpack.c.b16 %v461, %v460
      %v480 = vpack.c.b16 %v463, %v462
      %v481 = vpack.c.b16 %v465, %v464
      %v514 = vunpack.c.l.b16 %v240
      %v515 = vunpack.c.l.b16 %v241
      %v516 = vunpack.c.l.b16 %v242
      %v517 = vunpack.c.l.b16 %v243
      %v518 = vunpack.c.l.b16 %v244
      %v519 = vunpack.c.l.b16 %v245
      %v520 = vunpack.c.l.b16 %v246
      %v521 = vunpack.c.l.b16 %v247
      %v522 = vunpack.c.l.b16 %v248
      %v523 = vunpack.c.l.b16 %v249
      %v524 = vunpack.c.l.b16 %v250
      %v525 = vunpack.c.l.b16 %v251
      %v526 = vunpack.c.l.b16 %v252
      %v527 = vunpack.c.l.b16 %v253
      %v528 = vunpack.c.l.b16 %v254
      %v529 = vunpack.c.l.b16 %v255
      %v530 = vpack.c.b16 %v514, %v514
      %v531 = vpack.c.b16 %v515, %v515
      %v532 = vpack.c.b16 %v516, %v516
      %v533 = vpack.c.b16 %v517, %v517
      %v534 = vpack.c.b16 %v518, %v518
      %v535 = vpack.c.b16 %v519, %v519
      %v536 = vpack.c.b16 %v520, %v520
      %v537 = vpack.c.b16 %v521, %v521
      %v538 = vpack.c.b16 %v522, %v522
      %v539 = vpack.c.b16 %v523, %v523
      %v540 = vpack.c.b16 %v524, %v524
      %v541 = vpack.c.b16 %v525, %v525
      %v542 = vpack.c.b16 %v526, %v526
      %v543 = vpack.c.b16 %v527, %v527
      %v544 = vpack.c.b16 %v528, %v528
      %v545 = vpack.c.b16 %v529, %v529
      %vm546 = vsmask.f32 7424
      %v548 = vshrl.u32 %v466, 16
      %v550 = vshll.u32 %v466, 16
      %v552 = vrot.slane %v550, 1
      %v553 = vor.u32 %v548, %v552
      %v555 = vshll.u32 %v530, 16
      %v557 = vrot.slane %v555, 1
      %v558 = vsel %vm546, %v553, %v557
      %v560 = vshrl.u32 %v467, 16
      %v562 = vshll.u32 %v467, 16
      %v564 = vrot.slane %v562, 1
      %v565 = vor.u32 %v560, %v564
      %v567 = vshll.u32 %v531, 16
      %v569 = vrot.slane %v567, 1
      %v570 = vsel %vm546, %v565, %v569
      %v572 = vshrl.u32 %v468, 16
      %v574 = vshll.u32 %v468, 16
      %v576 = vrot.slane %v574, 1
      %v577 = vor.u32 %v572, %v576
      %v579 = vshll.u32 %v532, 16
      %v581 = vrot.slane %v579, 1
      %v582 = vsel %vm546, %v577, %v581
      %v584 = vshrl.u32 %v469, 16
      %v586 = vshll.u32 %v469, 16
      %v588 = vrot.slane %v586, 1
      %v589 = vor.u32 %v584, %v588
      %v591 = vshll.u32 %v533, 16
      %v593 = vrot.slane %v591, 1
      %v594 = vsel %vm546, %v589, %v593
      %v596 = vshrl.u32 %v470, 16
      %v598 = vshll.u32 %v470, 16
      %v600 = vrot.slane %v598, 1
      %v601 = vor.u32 %v596, %v600
      %v603 = vshll.u32 %v534, 16
      %v605 = vrot.slane %v603, 1
      %v606 = vsel %vm546, %v601, %v605
      %v608 = vshrl.u32 %v471, 16
      %v610 = vshll.u32 %v471, 16
      %v612 = vrot.slane %v610, 1
      %v613 = vor.u32 %v608, %v612
      %v615 = vshll.u32 %v535, 16
      %v617 = vrot.slane %v615, 1
      %v618 = vsel %vm546, %v613, %v617
      %v620 = vshrl.u32 %v472, 16
      %v622 = vshll.u32 %v472, 16
      %v624 = vrot.slane %v622, 1
      %v625 = vor.u32 %v620, %v624
      %v627 = vshll.u32 %v536, 16
      %v629 = vrot.slane %v627, 1
      %v630 = vsel %vm546, %v625, %v629
      %v632 = vshrl.u32 %v473, 16
      %v634 = vshll.u32 %v473, 16
      %v636 = vrot.slane %v634, 1
      %v637 = vor.u32 %v632, %v636
      %v639 = vshll.u32 %v537, 16
      %v641 = vrot.slane %v639, 1
      %v642 = vsel %vm546, %v637, %v641
      %v644 = vshrl.u32 %v474, 16
      %v646 = vshll.u32 %v474, 16
      %v648 = vrot.slane %v646, 1
      %v649 = vor.u32 %v644, %v648
      %v651 = vshll.u32 %v538, 16
      %v653 = vrot.slane %v651, 1
      %v654 = vsel %vm546, %v649, %v653
      %v656 = vshrl.u32 %v475, 16
      %v658 = vshll.u32 %v475, 16
      %v660 = vrot.slane %v658, 1
      %v661 = vor.u32 %v656, %v660
      %v663 = vshll.u32 %v539, 16
      %v665 = vrot.slane %v663, 1
      %v666 = vsel %vm546, %v661, %v665
      %v668 = vshrl.u32 %v476, 16
      %v670 = vshll.u32 %v476, 16
      %v672 = vrot.slane %v670, 1
      %v673 = vor.u32 %v668, %v672
      %v675 = vshll.u32 %v540, 16
      %v677 = vrot.slane %v675, 1
      %v678 = vsel %vm546, %v673, %v677
      %v680 = vshrl.u32 %v477, 16
      %v682 = vshll.u32 %v477, 16
      %v684 = vrot.slane %v682, 1
      %v685 = vor.u32 %v680, %v684
      %v687 = vshll.u32 %v541, 16
      %v689 = vrot.slane %v687, 1
      %v690 = vsel %vm546, %v685, %v689
      %v692 = vshrl.u32 %v478, 16
      %v694 = vshll.u32 %v478, 16
      %v696 = vrot.slane %v694, 1
      %v697 = vor.u32 %v692, %v696
      %v699 = vshll.u32 %v542, 16
      %v701 = vrot.slane %v699, 1
      %v702 = vsel %vm546, %v697, %v701
      %v704 = vshrl.u32 %v479, 16
      %v706 = vshll.u32 %v479, 16
      %v708 = vrot.slane %v706, 1
      %v709 = vor.u32 %v704, %v708
      %v711 = vshll.u32 %v543, 16
      %v713 = vrot.slane %v711, 1
      %v714 = vsel %vm546, %v709, %v713
      %v716 = vshrl.u32 %v480, 16
      %v718 = vshll.u32 %v480, 16
      %v720 = vrot.slane %v718, 1
      %v721 = vor.u32 %v716, %v720
      %v723 = vshll.u32 %v544, 16
      %v725 = vrot.slane %v723, 1
      %v726 = vsel %vm546, %v721, %v725
      %v728 = vshrl.u32 %v481, 16
      %v730 = vshll.u32 %v481, 16
      %v732 = vrot.slane %v730, 1
      %v733 = vor.u32 %v728, %v732
      %v735 = vshll.u32 %v545, 16
      %v737 = vrot.slane %v735, 1
      %v738 = vsel %vm546, %v733, %v737
      %v771 = vunpack.c.l.b16 %v256
      %v772 = vunpack.c.l.b16 %v257
      %v773 = vunpack.c.l.b16 %v258
      %v774 = vunpack.c.l.b16 %v259
      %v775 = vunpack.c.l.b16 %v260
      %v776 = vunpack.c.l.b16 %v261
      %v777 = vunpack.c.l.b16 %v262
      %v778 = vunpack.c.l.b16 %v263
      %v779 = vunpack.c.l.b16 %v264
      %v780 = vunpack.c.l.b16 %v265
      %v781 = vunpack.c.l.b16 %v266
      %v782 = vunpack.c.l.b16 %v267
      %v783 = vunpack.c.l.b16 %v268
      %v784 = vunpack.c.l.b16 %v269
      %v785 = vunpack.c.l.b16 %v270
      %v786 = vunpack.c.l.b16 %v271
      %v787 = vpack.c.b16 %v435, %v771
      %v788 = vpack.c.b16 %v437, %v772
      %v789 = vpack.c.b16 %v439, %v773
      %v790 = vpack.c.b16 %v441, %v774
      %v791 = vpack.c.b16 %v443, %v775
      %v792 = vpack.c.b16 %v445, %v776
      %v793 = vpack.c.b16 %v447, %v777
      %v794 = vpack.c.b16 %v449, %v778
      %v795 = vpack.c.b16 %v451, %v779
      %v796 = vpack.c.b16 %v453, %v780
      %v797 = vpack.c.b16 %v455, %v781
      %v798 = vpack.c.b16 %v457, %v782
      %v799 = vpack.c.b16 %v459, %v783
      %v800 = vpack.c.b16 %v461, %v784
      %v801 = vpack.c.b16 %v463, %v785
      %v802 = vpack.c.b16 %v465, %v786
      %vm803 = vcmask 1046528
      %v804 = vrot.slane %v787, 1
      %v805 = vrot.slane %v530, 1
      %v806 = vsel %vm803, %v804, %v805
      %v807 = vrot.slane %v788, 1
      %v808 = vrot.slane %v531, 1
      %v809 = vsel %vm803, %v807, %v808
      %v810 = vrot.slane %v789, 1
      %v811 = vrot.slane %v532, 1
      %v812 = vsel %vm803, %v810, %v811
      %v813 = vrot.slane %v790, 1
      %v814 = vrot.slane %v533, 1
      %v815 = vsel %vm803, %v813, %v814
      %v816 = vrot.slane %v791, 1
      %v817 = vrot.slane %v534, 1
      %v818 = vsel %vm803, %v816, %v817
      %v819 = vrot.slane %v792, 1
      %v820 = vrot.slane %v535, 1
      %v821 = vsel %vm803, %v819, %v820
      %v822 = vrot.slane %v793, 1
      %v823 = vrot.slane %v536, 1
      %v824 = vsel %vm803, %v822, %v823
      %v825 = vrot.slane %v794, 1
      %v826 = vrot.slane %v537, 1
      %v827 = vsel %vm803, %v825, %v826
      %v828 = vrot.slane %v795, 1
      %v829 = vrot.slane %v538, 1
      %v830 = vsel %vm803, %v828, %v829
      %v831 = vrot.slane %v796, 1
      %v832 = vrot.slane %v539, 1
      %v833 = vsel %vm803, %v831, %v832
      %v834 = vrot.slane %v797, 1
      %v835 = vrot.slane %v540, 1
      %v836 = vsel %vm803, %v834, %v835
      %v837 = vrot.slane %v798, 1
      %v838 = vrot.slane %v541, 1
      %v839 = vsel %vm803, %v837, %v838
      %v840 = vrot.slane %v799, 1
      %v841 = vrot.slane %v542, 1
      %v842 = vsel %vm803, %v840, %v841
      %v843 = vrot.slane %v800, 1
      %v844 = vrot.slane %v543, 1
      %v845 = vsel %vm803, %v843, %v844
      %v846 = vrot.slane %v801, 1
      %v847 = vrot.slane %v544, 1
      %v848 = vsel %vm803, %v846, %v847
      %v849 = vrot.slane %v802, 1
      %v850 = vrot.slane %v545, 1
      %v851 = vsel %vm803, %v849, %v850
      %v900 = vunpack.c.l.b16 %v273
      %v901 = vunpack.c.l.b16 %v274
      %v902 = vunpack.c.l.b16 %v275
      %v903 = vunpack.c.l.b16 %v276
      %v904 = vunpack.c.l.b16 %v277
      %v905 = vunpack.c.l.b16 %v278
      %v906 = vunpack.c.l.b16 %v279
      %v907 = vunpack.c.l.b16 %v280
      %v908 = vunpack.c.l.b16 %v281
      %v909 = vunpack.c.l.b16 %v282
      %v910 = vunpack.c.l.b16 %v283
      %v911 = vunpack.c.l.b16 %v284
      %v912 = vunpack.c.l.b16 %v285
      %v913 = vunpack.c.l.b16 %v286
      %v914 = vunpack.c.l.b16 %v287
      %v915 = vunpack.c.l.b16 %v288
      %v916 = vunpack.c.l.b16 %v289
      %v917 = vunpack.c.l.b16 %v290
      %v918 = vunpack.c.l.b16 %v291
      %v919 = vunpack.c.l.b16 %v292
      %v920 = vunpack.c.l.b16 %v293
      %v921 = vunpack.c.l.b16 %v294
      %v922 = vunpack.c.l.b16 %v295
      %v923 = vunpack.c.l.b16 %v296
      %v924 = vunpack.c.l.b16 %v297
      %v925 = vunpack.c.l.b16 %v298
      %v926 = vunpack.c.l.b16 %v299
      %v927 = vunpack.c.l.b16 %v300
      %v928 = vunpack.c.l.b16 %v301
      %v929 = vunpack.c.l.b16 %v302
      %v930 = vunpack.c.l.b16 %v303
      %v931 = vunpack.c.l.b16 %v304
      %v932 = vpack.c.b16 %v901, %v900
      %v933 = vpack.c.b16 %v903, %v902
      %v934 = vpack.c.b16 %v905, %v904
      %v935 = vpack.c.b16 %v907, %v906
      %v936 = vpack.c.b16 %v909, %v908
      %v937 = vpack.c.b16 %v911, %v910
      %v938 = vpack.c.b16 %v913, %v912
      %v939 = vpack.c.b16 %v915, %v914
      %v940 = vpack.c.b16 %v917, %v916
      %v941 = vpack.c.b16 %v919, %v918
      %v942 = vpack.c.b16 %v921, %v920
      %v943 = vpack.c.b16 %v923, %v922
      %v944 = vpack.c.b16 %v925, %v924
      %v945 = vpack.c.b16 %v927, %v926
      %v946 = vpack.c.b16 %v929, %v928
      %v947 = vpack.c.b16 %v931, %v930
      %v980 = vunpack.c.l.b16 %v305
      %v981 = vunpack.c.l.b16 %v306
      %v982 = vunpack.c.l.b16 %v307
      %v983 = vunpack.c.l.b16 %v308
      %v984 = vunpack.c.l.b16 %v309
      %v985 = vunpack.c.l.b16 %v310
      %v986 = vunpack.c.l.b16 %v311
      %v987 = vunpack.c.l.b16 %v312
      %v988 = vunpack.c.l.b16 %v313
      %v989 = vunpack.c.l.b16 %v314
      %v990 = vunpack.c.l.b16 %v315
      %v991 = vunpack.c.l.b16 %v316
      %v992 = vunpack.c.l.b16 %v317
      %v993 = vunpack.c.l.b16 %v318
      %v994 = vunpack.c.l.b16 %v319
      %v995 = vunpack.c.l.b16 %v320
      %v996 = vpack.c.b16 %v980, %v980
      %v997 = vpack.c.b16 %v981, %v981
      %v998 = vpack.c.b16 %v982, %v982
      %v999 = vpack.c.b16 %v983, %v983
      %v1000 = vpack.c.b16 %v984, %v984
      %v1001 = vpack.c.b16 %v985, %v985
      %v1002 = vpack.c.b16 %v986, %v986
      %v1003 = vpack.c.b16 %v987, %v987
      %v1004 = vpack.c.b16 %v988, %v988
      %v1005 = vpack.c.b16 %v989, %v989
      %v1006 = vpack.c.b16 %v990, %v990
      %v1007 = vpack.c.b16 %v991, %v991
      %v1008 = vpack.c.b16 %v992, %v992
      %v1009 = vpack.c.b16 %v993, %v993
      %v1010 = vpack.c.b16 %v994, %v994
      %v1011 = vpack.c.b16 %v995, %v995
      %v1013 = vshrl.u32 %v932, 16
      %v1015 = vshll.u32 %v932, 16
      %v1017 = vrot.slane %v1015, 1
      %v1018 = vor.u32 %v1013, %v1017
      %v1020 = vshll.u32 %v996, 16
      %v1022 = vrot.slane %v1020, 1
      %v1023 = vsel %vm546, %v1018, %v1022
      %v1025 = vshrl.u32 %v933, 16
      %v1027 = vshll.u32 %v933, 16
      %v1029 = vrot.slane %v1027, 1
      %v1030 = vor.u32 %v1025, %v1029
      %v1032 = vshll.u32 %v997, 16
      %v1034 = vrot.slane %v1032, 1
      %v1035 = vsel %vm546, %v1030, %v1034
      %v1037 = vshrl.u32 %v934, 16
      %v1039 = vshll.u32 %v934, 16
      %v1041 = vrot.slane %v1039, 1
      %v1042 = vor.u32 %v1037, %v1041
      %v1044 = vshll.u32 %v998, 16
      %v1046 = vrot.slane %v1044, 1
      %v1047 = vsel %vm546, %v1042, %v1046
      %v1049 = vshrl.u32 %v935, 16
      %v1051 = vshll.u32 %v935, 16
      %v1053 = vrot.slane %v1051, 1
      %v1054 = vor.u32 %v1049, %v1053
      %v1056 = vshll.u32 %v999, 16
      %v1058 = vrot.slane %v1056, 1
      %v1059 = vsel %vm546, %v1054, %v1058
      %v1061 = vshrl.u32 %v936, 16
      %v1063 = vshll.u32 %v936, 16
      %v1065 = vrot.slane %v1063, 1
      %v1066 = vor.u32 %v1061, %v1065
      %v1068 = vshll.u32 %v1000, 16
      %v1070 = vrot.slane %v1068, 1
      %v1071 = vsel %vm546, %v1066, %v1070
      %v1073 = vshrl.u32 %v937, 16
      %v1075 = vshll.u32 %v937, 16
      %v1077 = vrot.slane %v1075, 1
      %v1078 = vor.u32 %v1073, %v1077
      %v1080 = vshll.u32 %v1001, 16
      %v1082 = vrot.slane %v1080, 1
      %v1083 = vsel %vm546, %v1078, %v1082
      %v1085 = vshrl.u32 %v938, 16
      %v1087 = vshll.u32 %v938, 16
      %v1089 = vrot.slane %v1087, 1
      %v1090 = vor.u32 %v1085, %v1089
      %v1092 = vshll.u32 %v1002, 16
      %v1094 = vrot.slane %v1092, 1
      %v1095 = vsel %vm546, %v1090, %v1094
      %v1097 = vshrl.u32 %v939, 16
      %v1099 = vshll.u32 %v939, 16
      %v1101 = vrot.slane %v1099, 1
      %v1102 = vor.u32 %v1097, %v1101
      %v1104 = vshll.u32 %v1003, 16
      %v1106 = vrot.slane %v1104, 1
      %v1107 = vsel %vm546, %v1102, %v1106
      %v1109 = vshrl.u32 %v940, 16
      %v1111 = vshll.u32 %v940, 16
      %v1113 = vrot.slane %v1111, 1
      %v1114 = vor.u32 %v1109, %v1113
      %v1116 = vshll.u32 %v1004, 16
      %v1118 = vrot.slane %v1116, 1
      %v1119 = vsel %vm546, %v1114, %v1118
      %v1121 = vshrl.u32 %v941, 16
      %v1123 = vshll.u32 %v941, 16
      %v1125 = vrot.slane %v1123, 1
      %v1126 = vor.u32 %v1121, %v1125
      %v1128 = vshll.u32 %v1005, 16
      %v1130 = vrot.slane %v1128, 1
      %v1131 = vsel %vm546, %v1126, %v1130
      %v1133 = vshrl.u32 %v942, 16
      %v1135 = vshll.u32 %v942, 16
      %v1137 = vrot.slane %v1135, 1
      %v1138 = vor.u32 %v1133, %v1137
      %v1140 = vshll.u32 %v1006, 16
      %v1142 = vrot.slane %v1140, 1
      %v1143 = vsel %vm546, %v1138, %v1142
      %v1145 = vshrl.u32 %v943, 16
      %v1147 = vshll.u32 %v943, 16
      %v1149 = vrot.slane %v1147, 1
      %v1150 = vor.u32 %v1145, %v1149
      %v1152 = vshll.u32 %v1007, 16
      %v1154 = vrot.slane %v1152, 1
      %v1155 = vsel %vm546, %v1150, %v1154
      %v1157 = vshrl.u32 %v944, 16
      %v1159 = vshll.u32 %v944, 16
      %v1161 = vrot.slane %v1159, 1
      %v1162 = vor.u32 %v1157, %v1161
      %v1164 = vshll.u32 %v1008, 16
      %v1166 = vrot.slane %v1164, 1
      %v1167 = vsel %vm546, %v1162, %v1166
      %v1169 = vshrl.u32 %v945, 16
      %v1171 = vshll.u32 %v945, 16
      %v1173 = vrot.slane %v1171, 1
      %v1174 = vor.u32 %v1169, %v1173
      %v1176 = vshll.u32 %v1009, 16
      %v1178 = vrot.slane %v1176, 1
      %v1179 = vsel %vm546, %v1174, %v1178
      %v1181 = vshrl.u32 %v946, 16
      %v1183 = vshll.u32 %v946, 16
      %v1185 = vrot.slane %v1183, 1
      %v1186 = vor.u32 %v1181, %v1185
      %v1188 = vshll.u32 %v1010, 16
      %v1190 = vrot.slane %v1188, 1
      %v1191 = vsel %vm546, %v1186, %v1190
      %v1193 = vshrl.u32 %v947, 16
      %v1195 = vshll.u32 %v947, 16
      %v1197 = vrot.slane %v1195, 1
      %v1198 = vor.u32 %v1193, %v1197
      %v1200 = vshll.u32 %v1011, 16
      %v1202 = vrot.slane %v1200, 1
      %v1203 = vsel %vm546, %v1198, %v1202
      %v1236 = vunpack.c.l.b16 %v321
      %v1237 = vunpack.c.l.b16 %v322
      %v1238 = vunpack.c.l.b16 %v323
      %v1239 = vunpack.c.l.b16 %v324
      %v1240 = vunpack.c.l.b16 %v325
      %v1241 = vunpack.c.l.b16 %v326
      %v1242 = vunpack.c.l.b16 %v327
      %v1243 = vunpack.c.l.b16 %v328
      %v1244 = vunpack.c.l.b16 %v329
      %v1245 = vunpack.c.l.b16 %v330
      %v1246 = vunpack.c.l.b16 %v331
      %v1247 = vunpack.c.l.b16 %v332
      %v1248 = vunpack.c.l.b16 %v333
      %v1249 = vunpack.c.l.b16 %v334
      %v1250 = vunpack.c.l.b16 %v335
      %v1251 = vunpack.c.l.b16 %v336
      %v1252 = vpack.c.b16 %v901, %v1236
      %v1253 = vpack.c.b16 %v903, %v1237
      %v1254 = vpack.c.b16 %v905, %v1238
      %v1255 = vpack.c.b16 %v907, %v1239
      %v1256 = vpack.c.b16 %v909, %v1240
      %v1257 = vpack.c.b16 %v911, %v1241
      %v1258 = vpack.c.b16 %v913, %v1242
      %v1259 = vpack.c.b16 %v915, %v1243
      %v1260 = vpack.c.b16 %v917, %v1244
      %v1261 = vpack.c.b16 %v919, %v1245
      %v1262 = vpack.c.b16 %v921, %v1246
      %v1263 = vpack.c.b16 %v923, %v1247
      %v1264 = vpack.c.b16 %v925, %v1248
      %v1265 = vpack.c.b16 %v927, %v1249
      %v1266 = vpack.c.b16 %v929, %v1250
      %v1267 = vpack.c.b16 %v931, %v1251
      %v1268 = vrot.slane %v1252, 1
      %v1269 = vrot.slane %v996, 1
      %v1270 = vsel %vm803, %v1268, %v1269
      %v1271 = vrot.slane %v1253, 1
      %v1272 = vrot.slane %v997, 1
      %v1273 = vsel %vm803, %v1271, %v1272
      %v1274 = vrot.slane %v1254, 1
      %v1275 = vrot.slane %v998, 1
      %v1276 = vsel %vm803, %v1274, %v1275
      %v1277 = vrot.slane %v1255, 1
      %v1278 = vrot.slane %v999, 1
      %v1279 = vsel %vm803, %v1277, %v1278
      %v1280 = vrot.slane %v1256, 1
      %v1281 = vrot.slane %v1000, 1
      %v1282 = vsel %vm803, %v1280, %v1281
      %v1283 = vrot.slane %v1257, 1
      %v1284 = vrot.slane %v1001, 1
      %v1285 = vsel %vm803, %v1283, %v1284
      %v1286 = vrot.slane %v1258, 1
      %v1287 = vrot.slane %v1002, 1
      %v1288 = vsel %vm803, %v1286, %v1287
      %v1289 = vrot.slane %v1259, 1
      %v1290 = vrot.slane %v1003, 1
      %v1291 = vsel %vm803, %v1289, %v1290
      %v1292 = vrot.slane %v1260, 1
      %v1293 = vrot.slane %v1004, 1
      %v1294 = vsel %vm803, %v1292, %v1293
      %v1295 = vrot.slane %v1261, 1
      %v1296 = vrot.slane %v1005, 1
      %v1297 = vsel %vm803, %v1295, %v1296
      %v1298 = vrot.slane %v1262, 1
      %v1299 = vrot.slane %v1006, 1
      %v1300 = vsel %vm803, %v1298, %v1299
      %v1301 = vrot.slane %v1263, 1
      %v1302 = vrot.slane %v1007, 1
      %v1303 = vsel %vm803, %v1301, %v1302
      %v1304 = vrot.slane %v1264, 1
      %v1305 = vrot.slane %v1008, 1
      %v1306 = vsel %vm803, %v1304, %v1305
      %v1307 = vrot.slane %v1265, 1
      %v1308 = vrot.slane %v1009, 1
      %v1309 = vsel %vm803, %v1307, %v1308
      %v1310 = vrot.slane %v1266, 1
      %v1311 = vrot.slane %v1010, 1
      %v1312 = vsel %vm803, %v1310, %v1311
      %v1313 = vrot.slane %v1267, 1
      %v1314 = vrot.slane %v1011, 1
      %v1315 = vsel %vm803, %v1313, %v1314
      %v1364 = vunpack.c.l.b16 %v338
      %v1365 = vunpack.c.l.b16 %v339
      %v1366 = vunpack.c.l.b16 %v340
      %v1367 = vunpack.c.l.b16 %v341
      %v1368 = vunpack.c.l.b16 %v342
      %v1369 = vunpack.c.l.b16 %v343
      %v1370 = vunpack.c.l.b16 %v344
      %v1371 = vunpack.c.l.b16 %v345
      %v1372 = vunpack.c.l.b16 %v346
      %v1373 = vunpack.c.l.b16 %v347
      %v1374 = vunpack.c.l.b16 %v348
      %v1375 = vunpack.c.l.b16 %v349
      %v1376 = vunpack.c.l.b16 %v350
      %v1377 = vunpack.c.l.b16 %v351
      %v1378 = vunpack.c.l.b16 %v352
      %v1379 = vunpack.c.l.b16 %v353
      %v1380 = vunpack.c.l.b16 %v354
      %v1381 = vunpack.c.l.b16 %v355
      %v1382 = vunpack.c.l.b16 %v356
      %v1383 = vunpack.c.l.b16 %v357
      %v1384 = vunpack.c.l.b16 %v358
      %v1385 = vunpack.c.l.b16 %v359
      %v1386 = vunpack.c.l.b16 %v360
      %v1387 = vunpack.c.l.b16 %v361
      %v1388 = vunpack.c.l.b16 %v362
      %v1389 = vunpack.c.l.b16 %v363
      %v1390 = vunpack.c.l.b16 %v364
      %v1391 = vunpack.c.l.b16 %v365
      %v1392 = vunpack.c.l.b16 %v366
      %v1393 = vunpack.c.l.b16 %v367
      %v1394 = vunpack.c.l.b16 %v368
      %v1395 = vunpack.c.l.b16 %v369
      %v1396 = vpack.c.b16 %v1365, %v1364
      %v1397 = vpack.c.b16 %v1367, %v1366
      %v1398 = vpack.c.b16 %v1369, %v1368
      %v1399 = vpack.c.b16 %v1371, %v1370
      %v1400 = vpack.c.b16 %v1373, %v1372
      %v1401 = vpack.c.b16 %v1375, %v1374
      %v1402 = vpack.c.b16 %v1377, %v1376
      %v1403 = vpack.c.b16 %v1379, %v1378
      %v1404 = vpack.c.b16 %v1381, %v1380
      %v1405 = vpack.c.b16 %v1383, %v1382
      %v1406 = vpack.c.b16 %v1385, %v1384
      %v1407 = vpack.c.b16 %v1387, %v1386
      %v1408 = vpack.c.b16 %v1389, %v1388
      %v1409 = vpack.c.b16 %v1391, %v1390
      %v1410 = vpack.c.b16 %v1393, %v1392
      %v1411 = vpack.c.b16 %v1395, %v1394
      %v1444 = vunpack.c.l.b16 %v370
      %v1445 = vunpack.c.l.b16 %v371
      %v1446 = vunpack.c.l.b16 %v372
      %v1447 = vunpack.c.l.b16 %v373
      %v1448 = vunpack.c.l.b16 %v374
      %v1449 = vunpack.c.l.b16 %v375
      %v1450 = vunpack.c.l.b16 %v376
      %v1451 = vunpack.c.l.b16 %v377
      %v1452 = vunpack.c.l.b16 %v378
      %v1453 = vunpack.c.l.b16 %v379
      %v1454 = vunpack.c.l.b16 %v380
      %v1455 = vunpack.c.l.b16 %v381
      %v1456 = vunpack.c.l.b16 %v382
      %v1457 = vunpack.c.l.b16 %v383
      %v1458 = vunpack.c.l.b16 %v384
      %v1459 = vunpack.c.l.b16 %v385
      %v1460 = vpack.c.b16 %v1444, %v1444
      %v1461 = vpack.c.b16 %v1445, %v1445
      %v1462 = vpack.c.b16 %v1446, %v1446
      %v1463 = vpack.c.b16 %v1447, %v1447
      %v1464 = vpack.c.b16 %v1448, %v1448
      %v1465 = vpack.c.b16 %v1449, %v1449
      %v1466 = vpack.c.b16 %v1450, %v1450
      %v1467 = vpack.c.b16 %v1451, %v1451
      %v1468 = vpack.c.b16 %v1452, %v1452
      %v1469 = vpack.c.b16 %v1453, %v1453
      %v1470 = vpack.c.b16 %v1454, %v1454
      %v1471 = vpack.c.b16 %v1455, %v1455
      %v1472 = vpack.c.b16 %v1456, %v1456
      %v1473 = vpack.c.b16 %v1457, %v1457
      %v1474 = vpack.c.b16 %v1458, %v1458
      %v1475 = vpack.c.b16 %v1459, %v1459
      %v1477 = vshrl.u32 %v1396, 16
      %v1479 = vshll.u32 %v1396, 16
      %v1481 = vrot.slane %v1479, 1
      %v1482 = vor.u32 %v1477, %v1481
      %v1484 = vshll.u32 %v1460, 16
      %v1486 = vrot.slane %v1484, 1
      %v1487 = vsel %vm546, %v1482, %v1486
      %v1489 = vshrl.u32 %v1397, 16
      %v1491 = vshll.u32 %v1397, 16
      %v1493 = vrot.slane %v1491, 1
      %v1494 = vor.u32 %v1489, %v1493
      %v1496 = vshll.u32 %v1461, 16
      %v1498 = vrot.slane %v1496, 1
      %v1499 = vsel %vm546, %v1494, %v1498
      %v1501 = vshrl.u32 %v1398, 16
      %v1503 = vshll.u32 %v1398, 16
      %v1505 = vrot.slane %v1503, 1
      %v1506 = vor.u32 %v1501, %v1505
      %v1508 = vshll.u32 %v1462, 16
      %v1510 = vrot.slane %v1508, 1
      %v1511 = vsel %vm546, %v1506, %v1510
      %v1513 = vshrl.u32 %v1399, 16
      %v1515 = vshll.u32 %v1399, 16
      %v1517 = vrot.slane %v1515, 1
      %v1518 = vor.u32 %v1513, %v1517
      %v1520 = vshll.u32 %v1463, 16
      %v1522 = vrot.slane %v1520, 1
      %v1523 = vsel %vm546, %v1518, %v1522
      %v1525 = vshrl.u32 %v1400, 16
      %v1527 = vshll.u32 %v1400, 16
      %v1529 = vrot.slane %v1527, 1
      %v1530 = vor.u32 %v1525, %v1529
      %v1532 = vshll.u32 %v1464, 16
      %v1534 = vrot.slane %v1532, 1
      %v1535 = vsel %vm546, %v1530, %v1534
      %v1537 = vshrl.u32 %v1401, 16
      %v1539 = vshll.u32 %v1401, 16
      %v1541 = vrot.slane %v1539, 1
      %v1542 = vor.u32 %v1537, %v1541
      %v1544 = vshll.u32 %v1465, 16
      %v1546 = vrot.slane %v1544, 1
      %v1547 = vsel %vm546, %v1542, %v1546
      %v1549 = vshrl.u32 %v1402, 16
      %v1551 = vshll.u32 %v1402, 16
      %v1553 = vrot.slane %v1551, 1
      %v1554 = vor.u32 %v1549, %v1553
      %v1556 = vshll.u32 %v1466, 16
      %v1558 = vrot.slane %v1556, 1
      %v1559 = vsel %vm546, %v1554, %v1558
      %v1561 = vshrl.u32 %v1403, 16
      %v1563 = vshll.u32 %v1403, 16
      %v1565 = vrot.slane %v1563, 1
      %v1566 = vor.u32 %v1561, %v1565
      %v1568 = vshll.u32 %v1467, 16
      %v1570 = vrot.slane %v1568, 1
      %v1571 = vsel %vm546, %v1566, %v1570
      %v1573 = vshrl.u32 %v1404, 16
      %v1575 = vshll.u32 %v1404, 16
      %v1577 = vrot.slane %v1575, 1
      %v1578 = vor.u32 %v1573, %v1577
      %v1580 = vshll.u32 %v1468, 16
      %v1582 = vrot.slane %v1580, 1
      %v1583 = vsel %vm546, %v1578, %v1582
      %v1585 = vshrl.u32 %v1405, 16
      %v1587 = vshll.u32 %v1405, 16
      %v1589 = vrot.slane %v1587, 1
      %v1590 = vor.u32 %v1585, %v1589
      %v1592 = vshll.u32 %v1469, 16
      %v1594 = vrot.slane %v1592, 1
      %v1595 = vsel %vm546, %v1590, %v1594
      %v1597 = vshrl.u32 %v1406, 16
      %v1599 = vshll.u32 %v1406, 16
      %v1601 = vrot.slane %v1599, 1
      %v1602 = vor.u32 %v1597, %v1601
      %v1604 = vshll.u32 %v1470, 16
      %v1606 = vrot.slane %v1604, 1
      %v1607 = vsel %vm546, %v1602, %v1606
      %v1609 = vshrl.u32 %v1407, 16
      %v1611 = vshll.u32 %v1407, 16
      %v1613 = vrot.slane %v1611, 1
      %v1614 = vor.u32 %v1609, %v1613
      %v1616 = vshll.u32 %v1471, 16
      %v1618 = vrot.slane %v1616, 1
      %v1619 = vsel %vm546, %v1614, %v1618
      %v1621 = vshrl.u32 %v1408, 16
      %v1623 = vshll.u32 %v1408, 16
      %v1625 = vrot.slane %v1623, 1
      %v1626 = vor.u32 %v1621, %v1625
      %v1628 = vshll.u32 %v1472, 16
      %v1630 = vrot.slane %v1628, 1
      %v1631 = vsel %vm546, %v1626, %v1630
      %v1633 = vshrl.u32 %v1409, 16
      %v1635 = vshll.u32 %v1409, 16
      %v1637 = vrot.slane %v1635, 1
      %v1638 = vor.u32 %v1633, %v1637
      %v1640 = vshll.u32 %v1473, 16
      %v1642 = vrot.slane %v1640, 1
      %v1643 = vsel %vm546, %v1638, %v1642
      %v1645 = vshrl.u32 %v1410, 16
      %v1647 = vshll.u32 %v1410, 16
      %v1649 = vrot.slane %v1647, 1
      %v1650 = vor.u32 %v1645, %v1649
      %v1652 = vshll.u32 %v1474, 16
      %v1654 = vrot.slane %v1652, 1
      %v1655 = vsel %vm546, %v1650, %v1654
      %v1657 = vshrl.u32 %v1411, 16
      %v1659 = vshll.u32 %v1411, 16
      %v1661 = vrot.slane %v1659, 1
      %v1662 = vor.u32 %v1657, %v1661
      %v1664 = vshll.u32 %v1475, 16
      %v1666 = vrot.slane %v1664, 1
      %v1667 = vsel %vm546, %v1662, %v1666
      %v1700 = vunpack.c.l.b16 %v386
      %v1701 = vunpack.c.l.b16 %v387
      %v1702 = vunpack.c.l.b16 %v388
      %v1703 = vunpack.c.l.b16 %v389
      %v1704 = vunpack.c.l.b16 %v390
      %v1705 = vunpack.c.l.b16 %v391
      %v1706 = vunpack.c.l.b16 %v392
      %v1707 = vunpack.c.l.b16 %v393
      %v1708 = vunpack.c.l.b16 %v394
      %v1709 = vunpack.c.l.b16 %v395
      %v1710 = vunpack.c.l.b16 %v396
      %v1711 = vunpack.c.l.b16 %v397
      %v1712 = vunpack.c.l.b16 %v398
      %v1713 = vunpack.c.l.b16 %v399
      %v1714 = vunpack.c.l.b16 %v400
      %v1715 = vunpack.c.l.b16 %v401
      %v1716 = vpack.c.b16 %v1365, %v1700
      %v1717 = vpack.c.b16 %v1367, %v1701
      %v1718 = vpack.c.b16 %v1369, %v1702
      %v1719 = vpack.c.b16 %v1371, %v1703
      %v1720 = vpack.c.b16 %v1373, %v1704
      %v1721 = vpack.c.b16 %v1375, %v1705
      %v1722 = vpack.c.b16 %v1377, %v1706
      %v1723 = vpack.c.b16 %v1379, %v1707
      %v1724 = vpack.c.b16 %v1381, %v1708
      %v1725 = vpack.c.b16 %v1383, %v1709
      %v1726 = vpack.c.b16 %v1385, %v1710
      %v1727 = vpack.c.b16 %v1387, %v1711
      %v1728 = vpack.c.b16 %v1389, %v1712
      %v1729 = vpack.c.b16 %v1391, %v1713
      %v1730 = vpack.c.b16 %v1393, %v1714
      %v1731 = vpack.c.b16 %v1395, %v1715
      %v1732 = vrot.slane %v1716, 1
      %v1733 = vrot.slane %v1460, 1
      %v1734 = vsel %vm803, %v1732, %v1733
      %v1735 = vrot.slane %v1717, 1
      %v1736 = vrot.slane %v1461, 1
      %v1737 = vsel %vm803, %v1735, %v1736
      %v1738 = vrot.slane %v1718, 1
      %v1739 = vrot.slane %v1462, 1
      %v1740 = vsel %vm803, %v1738, %v1739
      %v1741 = vrot.slane %v1719, 1
      %v1742 = vrot.slane %v1463, 1
      %v1743 = vsel %vm803, %v1741, %v1742
      %v1744 = vrot.slane %v1720, 1
      %v1745 = vrot.slane %v1464, 1
      %v1746 = vsel %vm803, %v1744, %v1745
      %v1747 = vrot.slane %v1721, 1
      %v1748 = vrot.slane %v1465, 1
      %v1749 = vsel %vm803, %v1747, %v1748
      %v1750 = vrot.slane %v1722, 1
      %v1751 = vrot.slane %v1466, 1
      %v1752 = vsel %vm803, %v1750, %v1751
      %v1753 = vrot.slane %v1723, 1
      %v1754 = vrot.slane %v1467, 1
      %v1755 = vsel %vm803, %v1753, %v1754
      %v1756 = vrot.slane %v1724, 1
      %v1757 = vrot.slane %v1468, 1
      %v1758 = vsel %vm803, %v1756, %v1757
      %v1759 = vrot.slane %v1725, 1
      %v1760 = vrot.slane %v1469, 1
      %v1761 = vsel %vm803, %v1759, %v1760
      %v1762 = vrot.slane %v1726, 1
      %v1763 = vrot.slane %v1470, 1
      %v1764 = vsel %vm803, %v1762, %v1763
      %v1765 = vrot.slane %v1727, 1
      %v1766 = vrot.slane %v1471, 1
      %v1767 = vsel %vm803, %v1765, %v1766
      %v1768 = vrot.slane %v1728, 1
      %v1769 = vrot.slane %v1472, 1
      %v1770 = vsel %vm803, %v1768, %v1769
      %v1771 = vrot.slane %v1729, 1
      %v1772 = vrot.slane %v1473, 1
      %v1773 = vsel %vm803, %v1771, %v1772
      %v1774 = vrot.slane %v1730, 1
      %v1775 = vrot.slane %v1474, 1
      %v1776 = vsel %vm803, %v1774, %v1775
      %v1777 = vrot.slane %v1731, 1
      %v1778 = vrot.slane %v1475, 1
      %v1779 = vsel %vm803, %v1777, %v1778
      %v1796 = vld [vmem:[%s1] sm:$0xf]
      %v1797 = vld [vmem:[%s1 + $0x4] sm:$0xf]
      %v1798 = vld [vmem:[%s1 + $0x8] sm:$0xf]
      %v1799 = vld [vmem:[%s1 + $0xc] sm:$0xf]
      %v1800 = vld [vmem:[%s1 + $0x10] sm:$0xf]
      %v1801 = vld [vmem:[%s1 + $0x14] sm:$0xf]
      %v1802 = vld [vmem:[%s1 + $0x18] sm:$0xf]
      %v1803 = vld [vmem:[%s1 + $0x1c] sm:$0xf]
      %v1804 = vld [vmem:[%s1 + $0x20] sm:$0xf]
      %v1805 = vld [vmem:[%s1 + $0x24] sm:$0xf]
      %v1806 = vld [vmem:[%s1 + $0x28] sm:$0xf]
      %v1807 = vld [vmem:[%s1 + $0x2c] sm:$0xf]
      %v1808 = vld [vmem:[%s1 + $0x30] sm:$0xf]
      %v1809 = vld [vmem:[%s1 + $0x34] sm:$0xf]
      %v1810 = vld [vmem:[%s1 + $0x38] sm:$0xf]
      %v1811 = vld [vmem:[%s1 + $0x3c] sm:$0xf]
      %v1812 = vld [vmem:[%s1 + $0x40] sm:$0xf]
      %v1813 = vld [vmem:[%s1 + $0x44] sm:$0xf]
      %v1814 = vld [vmem:[%s1 + $0x48] sm:$0xf]
      %v1815 = vld [vmem:[%s1 + $0x4c] sm:$0xf]
      %v1816 = vld [vmem:[%s1 + $0x50] sm:$0xf]
      %v1817 = vld [vmem:[%s1 + $0x54] sm:$0xf]
      %v1818 = vld [vmem:[%s1 + $0x58] sm:$0xf]
      %v1819 = vld [vmem:[%s1 + $0x5c] sm:$0xf]
      %v1820 = vld [vmem:[%s1 + $0x60] sm:$0xf]
      %v1821 = vld [vmem:[%s1 + $0x64] sm:$0xf]
      %v1822 = vld [vmem:[%s1 + $0x68] sm:$0xf]
      %v1823 = vld [vmem:[%s1 + $0x6c] sm:$0xf]
      %v1824 = vld [vmem:[%s1 + $0x70] sm:$0xf]
      %v1825 = vld [vmem:[%s1 + $0x74] sm:$0xf]
      %v1826 = vld [vmem:[%s1 + $0x78] sm:$0xf]
      %v1827 = vld [vmem:[%s1 + $0x7c] sm:$0xf]
      %v1828 = vld [vmem:[%s1 + $0x80] sm:$0xf]
      %v1829 = vld [vmem:[%s1 + $0x84] sm:$0xf]
      %v1830 = vld [vmem:[%s1 + $0x88] sm:$0xf]
      %v1831 = vld [vmem:[%s1 + $0x8c] sm:$0xf]
      %v1832 = vld [vmem:[%s1 + $0x90] sm:$0xf]
      %v1833 = vld [vmem:[%s1 + $0x94] sm:$0xf]
      %v1834 = vld [vmem:[%s1 + $0x98] sm:$0xf]
      %v1835 = vld [vmem:[%s1 + $0x9c] sm:$0xf]
      %v1836 = vld [vmem:[%s1 + $0xa0] sm:$0xf]
      %v1837 = vld [vmem:[%s1 + $0xa4] sm:$0xf]
      %v1838 = vld [vmem:[%s1 + $0xa8] sm:$0xf]
      %v1839 = vld [vmem:[%s1 + $0xac] sm:$0xf]
      %v1840 = vld [vmem:[%s1 + $0xb0] sm:$0xf]
      %v1841 = vld [vmem:[%s1 + $0xb4] sm:$0xf]
      %v1842 = vld [vmem:[%s1 + $0xb8] sm:$0xf]
      %v1843 = vld [vmem:[%s1 + $0xbc] sm:$0xf]
      %v1844 = vld [vmem:[%s1 + $0xc0] sm:$0xf]
      %v1845 = vld [vmem:[%s1 + $0xc4] sm:$0xf]
      %v1846 = vld [vmem:[%s1 + $0xc8] sm:$0xf]
      %v1847 = vld [vmem:[%s1 + $0xcc] sm:$0xf]
      %v1848 = vld [vmem:[%s1 + $0xd0] sm:$0xf]
      %v1849 = vld [vmem:[%s1 + $0xd4] sm:$0xf]
      %v1850 = vld [vmem:[%s1 + $0xd8] sm:$0xf]
      %v1851 = vld [vmem:[%s1 + $0xdc] sm:$0xf]
      %v1852 = vld [vmem:[%s1 + $0xe0] sm:$0xf]
      %v1853 = vld [vmem:[%s1 + $0xe4] sm:$0xf]
      %v1854 = vld [vmem:[%s1 + $0xe8] sm:$0xf]
      %v1855 = vld [vmem:[%s1 + $0xec] sm:$0xf]
      %v1856 = vld [vmem:[%s1 + $0xf0] sm:$0xf]
      %v1857 = vld [vmem:[%s1 + $0xf4] sm:$0xf]
      %v1858 = vld [vmem:[%s1 + $0xf8] sm:$0xf]
      %v1859 = vld [vmem:[%s1 + $0xfc] sm:$0xf]
      %v1860 = vld [vmem:[%s1 + $0x100] sm:$0xf]
      %v1861 = vld [vmem:[%s1 + $0x104] sm:$0xf]
      %v1862 = vld [vmem:[%s1 + $0x108] sm:$0xf]
      %v1863 = vld [vmem:[%s1 + $0x10c] sm:$0xf]
      %v1864 = vld [vmem:[%s1 + $0x110] sm:$0xf]
      %v1865 = vld [vmem:[%s1 + $0x114] sm:$0xf]
      %v1866 = vld [vmem:[%s1 + $0x118] sm:$0xf]
      %v1867 = vld [vmem:[%s1 + $0x11c] sm:$0xf]
      %v1868 = vld [vmem:[%s1 + $0x120] sm:$0xf]
      %v1869 = vld [vmem:[%s1 + $0x124] sm:$0xf]
      %v1870 = vld [vmem:[%s1 + $0x128] sm:$0xf]
      %v1871 = vld [vmem:[%s1 + $0x12c] sm:$0xf]
      %v1872 = vld [vmem:[%s1 + $0x130] sm:$0xf]
      %v1873 = vld [vmem:[%s1 + $0x134] sm:$0xf]
      %v1874 = vld [vmem:[%s1 + $0x138] sm:$0xf]
      %v1875 = vld [vmem:[%s1 + $0x13c] sm:$0xf]
      %v1876 = vld [vmem:[%s1 + $0x140] sm:$0xf]
      %v1877 = vld [vmem:[%s1 + $0x144] sm:$0xf]
      %v1878 = vld [vmem:[%s1 + $0x148] sm:$0xf]
      %v1879 = vld [vmem:[%s1 + $0x14c] sm:$0xf]
      %v1880 = vld [vmem:[%s1 + $0x150] sm:$0xf]
      %v1881 = vld [vmem:[%s1 + $0x154] sm:$0xf]
      %v1882 = vld [vmem:[%s1 + $0x158] sm:$0xf]
      %v1883 = vld [vmem:[%s1 + $0x15c] sm:$0xf]
      %v1884 = vld [vmem:[%s1 + $0x160] sm:$0xf]
      %v1885 = vld [vmem:[%s1 + $0x164] sm:$0xf]
      %v1886 = vld [vmem:[%s1 + $0x168] sm:$0xf]
      %v1887 = vld [vmem:[%s1 + $0x16c] sm:$0xf]
      %v1888 = vld [vmem:[%s1 + $0x170] sm:$0xf]
      %v1889 = vld [vmem:[%s1 + $0x174] sm:$0xf]
      %v1890 = vld [vmem:[%s1 + $0x178] sm:$0xf]
      %v1891 = vld [vmem:[%s1 + $0x17c] sm:$0xf]
      %v1892 = vld [vmem:[%s1 + $0x180] sm:$0xf]
      %v1893 = vld [vmem:[%s1 + $0x184] sm:$0xf]
      %v1894 = vld [vmem:[%s1 + $0x188] sm:$0xf]
      %v1895 = vld [vmem:[%s1 + $0x18c] sm:$0xf]
      %v1896 = vld [vmem:[%s1 + $0x190] sm:$0xf]
      %v1897 = vld [vmem:[%s1 + $0x194] sm:$0xf]
      %v1898 = vld [vmem:[%s1 + $0x198] sm:$0xf]
      %v1899 = vld [vmem:[%s1 + $0x19c] sm:$0xf]
      %v1900 = vld [vmem:[%s1 + $0x1a0] sm:$0xf]
      %v1901 = vld [vmem:[%s1 + $0x1a4] sm:$0xf]
      %v1902 = vld [vmem:[%s1 + $0x1a8] sm:$0xf]
      %v1903 = vld [vmem:[%s1 + $0x1ac] sm:$0xf]
      %v1904 = vld [vmem:[%s1 + $0x1b0] sm:$0xf]
      %v1905 = vld [vmem:[%s1 + $0x1b4] sm:$0xf]
      %v1906 = vld [vmem:[%s1 + $0x1b8] sm:$0xf]
      %v1907 = vld [vmem:[%s1 + $0x1bc] sm:$0xf]
      %v1908 = vld [vmem:[%s1 + $0x1c0] sm:$0xf]
      %v1909 = vld [vmem:[%s1 + $0x1c4] sm:$0xf]
      %v1910 = vld [vmem:[%s1 + $0x1c8] sm:$0xf]
      %v1911 = vld [vmem:[%s1 + $0x1cc] sm:$0xf]
      %v1912 = vld [vmem:[%s1 + $0x1d0] sm:$0xf]
      %v1913 = vld [vmem:[%s1 + $0x1d4] sm:$0xf]
      %v1914 = vld [vmem:[%s1 + $0x1d8] sm:$0xf]
      %v1915 = vld [vmem:[%s1 + $0x1dc] sm:$0xf]
      %v1916 = vld [vmem:[%s1 + $0x1e0] sm:$0xf]
      %v1917 = vld [vmem:[%s1 + $0x1e4] sm:$0xf]
      %v1918 = vld [vmem:[%s1 + $0x1e8] sm:$0xf]
      %v1919 = vld [vmem:[%s1 + $0x1ec] sm:$0xf]
      %v1920 = vld [vmem:[%s1 + $0x1f0] sm:$0xf]
      %v1921 = vld [vmem:[%s1 + $0x1f4] sm:$0xf]
      %v1922 = vld [vmem:[%s1 + $0x1f8] sm:$0xf]
      %v1923 = vld [vmem:[%s1 + $0x1fc] sm:$0xf]
      %v1924 = vld [vmem:[%s1 + $0x200] sm:$0xf]
      %v1925 = vld [vmem:[%s1 + $0x204] sm:$0xf]
      %v1926 = vld [vmem:[%s1 + $0x208] sm:$0xf]
      %v1927 = vld [vmem:[%s1 + $0x20c] sm:$0xf]
      %v1928 = vld [vmem:[%s1 + $0x210] sm:$0xf]
      %v1929 = vld [vmem:[%s1 + $0x214] sm:$0xf]
      %v1930 = vld [vmem:[%s1 + $0x218] sm:$0xf]
      %v1931 = vld [vmem:[%s1 + $0x21c] sm:$0xf]
      %v1932 = vld [vmem:[%s1 + $0x220] sm:$0xf]
      %v1933 = vld [vmem:[%s1 + $0x224] sm:$0xf]
      %v1934 = vld [vmem:[%s1 + $0x228] sm:$0xf]
      %v1935 = vld [vmem:[%s1 + $0x22c] sm:$0xf]
      %v1936 = vld [vmem:[%s1 + $0x230] sm:$0xf]
      %v1937 = vld [vmem:[%s1 + $0x234] sm:$0xf]
      %v1938 = vld [vmem:[%s1 + $0x238] sm:$0xf]
      %v1939 = vld [vmem:[%s1 + $0x23c] sm:$0xf]
      %v1940 = vld [vmem:[%s2] sm:$0x1]
      %v1942 = vlaneseq
      %v1943 = vshrl.u32 %v1942, 7
      %v1944 = vsub.s32 0, %v1943
      %v1945 = vrot.slane %v1940, %v1944
      %v2091 = vunpack.c.l.b16 %v1796
      %v2092 = vunpack.c.l.b16 %v1797
      %v2093 = vunpack.c.l.b16 %v1798
      %v2094 = vunpack.c.l.b16 %v1799
      %v2095 = vunpack.c.l.b16 %v1800
      %v2096 = vunpack.c.l.b16 %v1801
      %v2097 = vunpack.c.l.b16 %v1802
      %v2098 = vunpack.c.l.b16 %v1803
      %v2099 = vunpack.c.l.b16 %v1804
      %v2100 = vunpack.c.l.b16 %v1805
      %v2101 = vunpack.c.l.b16 %v1806
      %v2102 = vunpack.c.l.b16 %v1807
      %v2103 = vunpack.c.l.b16 %v1808
      %v2104 = vunpack.c.l.b16 %v1809
      %v2105 = vunpack.c.l.b16 %v1810
      %v2106 = vunpack.c.l.b16 %v1811
      %v2107 = vunpack.c.l.b16 %v1812
      %v2108 = vunpack.c.l.b16 %v1813
      %v2109 = vunpack.c.l.b16 %v1814
      %v2110 = vunpack.c.l.b16 %v1815
      %v2111 = vunpack.c.l.b16 %v1816
      %v2112 = vunpack.c.l.b16 %v1817
      %v2113 = vunpack.c.l.b16 %v1818
      %v2114 = vunpack.c.l.b16 %v1819
      %v2115 = vunpack.c.l.b16 %v1820
      %v2116 = vunpack.c.l.b16 %v1821
      %v2117 = vunpack.c.l.b16 %v1822
      %v2118 = vunpack.c.l.b16 %v1823
      %v2119 = vunpack.c.l.b16 %v1824
      %v2120 = vunpack.c.l.b16 %v1825
      %v2121 = vunpack.c.l.b16 %v1826
      %v2122 = vunpack.c.l.b16 %v1827
      %v2123 = vunpack.c.l.b16 %v1828
      %v2124 = vunpack.c.l.b16 %v1829
      %v2125 = vunpack.c.l.b16 %v1830
      %v2126 = vunpack.c.l.b16 %v1831
      %v2127 = vunpack.c.l.b16 %v1832
      %v2128 = vunpack.c.l.b16 %v1833
      %v2129 = vunpack.c.l.b16 %v1834
      %v2130 = vunpack.c.l.b16 %v1835
      %v2131 = vunpack.c.l.b16 %v1836
      %v2132 = vunpack.c.l.b16 %v1837
      %v2133 = vunpack.c.l.b16 %v1838
      %v2134 = vunpack.c.l.b16 %v1839
      %v2135 = vunpack.c.l.b16 %v1840
      %v2136 = vunpack.c.l.b16 %v1841
      %v2137 = vunpack.c.l.b16 %v1842
      %v2138 = vunpack.c.l.b16 %v1843
      %v2139 = vunpack.c.l.b16 %v1844
      %v2140 = vunpack.c.l.b16 %v1845
      %v2141 = vunpack.c.l.b16 %v1846
      %v2142 = vunpack.c.l.b16 %v1847
      %v2143 = vunpack.c.l.b16 %v1848
      %v2144 = vunpack.c.l.b16 %v1849
      %v2145 = vunpack.c.l.b16 %v1850
      %v2146 = vunpack.c.l.b16 %v1851
      %v2147 = vunpack.c.l.b16 %v1852
      %v2148 = vunpack.c.l.b16 %v1853
      %v2149 = vunpack.c.l.b16 %v1854
      %v2150 = vunpack.c.l.b16 %v1855
      %v2151 = vunpack.c.l.b16 %v1856
      %v2152 = vunpack.c.l.b16 %v1857
      %v2153 = vunpack.c.l.b16 %v1858
      %v2154 = vunpack.c.l.b16 %v1859
      %v2155 = vunpack.c.l.b16 %v1860
      %v2156 = vunpack.c.l.b16 %v1861
      %v2157 = vunpack.c.l.b16 %v1862
      %v2158 = vunpack.c.l.b16 %v1863
      %v2159 = vunpack.c.l.b16 %v1864
      %v2160 = vunpack.c.l.b16 %v1865
      %v2161 = vunpack.c.l.b16 %v1866
      %v2162 = vunpack.c.l.b16 %v1867
      %v2163 = vunpack.c.l.b16 %v1868
      %v2164 = vunpack.c.l.b16 %v1869
      %v2165 = vunpack.c.l.b16 %v1870
      %v2166 = vunpack.c.l.b16 %v1871
      %v2167 = vunpack.c.l.b16 %v1872
      %v2168 = vunpack.c.l.b16 %v1873
      %v2169 = vunpack.c.l.b16 %v1874
      %v2170 = vunpack.c.l.b16 %v1875
      %v2171 = vunpack.c.l.b16 %v1876
      %v2172 = vunpack.c.l.b16 %v1877
      %v2173 = vunpack.c.l.b16 %v1878
      %v2174 = vunpack.c.l.b16 %v1879
      %v2175 = vunpack.c.l.b16 %v1880
      %v2176 = vunpack.c.l.b16 %v1881
      %v2177 = vunpack.c.l.b16 %v1882
      %v2178 = vunpack.c.l.b16 %v1883
      %v2179 = vunpack.c.l.b16 %v1884
      %v2180 = vunpack.c.l.b16 %v1885
      %v2181 = vunpack.c.l.b16 %v1886
      %v2182 = vunpack.c.l.b16 %v1887
      %v2183 = vunpack.c.l.b16 %v1888
      %v2184 = vunpack.c.l.b16 %v1889
      %v2185 = vunpack.c.l.b16 %v1890
      %v2186 = vunpack.c.l.b16 %v1891
      %v2187 = vunpack.c.l.b16 %v1892
      %v2188 = vunpack.c.l.b16 %v1893
      %v2189 = vunpack.c.l.b16 %v1894
      %v2190 = vunpack.c.l.b16 %v1895
      %v2191 = vunpack.c.l.b16 %v1896
      %v2192 = vunpack.c.l.b16 %v1897
      %v2193 = vunpack.c.l.b16 %v1898
      %v2194 = vunpack.c.l.b16 %v1899
      %v2195 = vunpack.c.l.b16 %v1900
      %v2196 = vunpack.c.l.b16 %v1901
      %v2197 = vunpack.c.l.b16 %v1902
      %v2198 = vunpack.c.l.b16 %v1903
      %v2199 = vunpack.c.l.b16 %v1904
      %v2200 = vunpack.c.l.b16 %v1905
      %v2201 = vunpack.c.l.b16 %v1906
      %v2202 = vunpack.c.l.b16 %v1907
      %v2203 = vunpack.c.l.b16 %v1908
      %v2204 = vunpack.c.l.b16 %v1909
      %v2205 = vunpack.c.l.b16 %v1910
      %v2206 = vunpack.c.l.b16 %v1911
      %v2207 = vunpack.c.l.b16 %v1912
      %v2208 = vunpack.c.l.b16 %v1913
      %v2209 = vunpack.c.l.b16 %v1914
      %v2210 = vunpack.c.l.b16 %v1915
      %v2211 = vunpack.c.l.b16 %v1916
      %v2212 = vunpack.c.l.b16 %v1917
      %v2213 = vunpack.c.l.b16 %v1918
      %v2214 = vunpack.c.l.b16 %v1919
      %v2215 = vunpack.c.l.b16 %v1920
      %v2216 = vunpack.c.l.b16 %v1921
      %v2217 = vunpack.c.l.b16 %v1922
      %v2218 = vunpack.c.l.b16 %v1923
      %v2219 = vunpack.c.l.b16 %v1924
      %v2220 = vunpack.c.l.b16 %v1925
      %v2221 = vunpack.c.l.b16 %v1926
      %v2222 = vunpack.c.l.b16 %v1927
      %v2223 = vunpack.c.l.b16 %v1928
      %v2224 = vunpack.c.l.b16 %v1929
      %v2225 = vunpack.c.l.b16 %v1930
      %v2226 = vunpack.c.l.b16 %v1931
      %v2227 = vunpack.c.l.b16 %v1932
      %v2228 = vunpack.c.l.b16 %v1933
      %v2229 = vunpack.c.l.b16 %v1934
      %v2230 = vunpack.c.l.b16 %v1935
      %v2231 = vunpack.c.l.b16 %v1936
      %v2232 = vunpack.c.l.b16 %v1937
      %v2233 = vunpack.c.l.b16 %v1938
      %v2234 = vunpack.c.l.b16 %v1939
      %v2235 = vpack.c.b16 %v2092, %v2091
      %v2236 = vpack.c.b16 %v2094, %v2093
      %v2237 = vpack.c.b16 %v2096, %v2095
      %v2238 = vpack.c.b16 %v2098, %v2097
      %v2239 = vpack.c.b16 %v2100, %v2099
      %v2240 = vpack.c.b16 %v2102, %v2101
      %v2241 = vpack.c.b16 %v2104, %v2103
      %v2242 = vpack.c.b16 %v2106, %v2105
      %v2243 = vpack.c.b16 %v2108, %v2107
      %v2244 = vpack.c.b16 %v2110, %v2109
      %v2245 = vpack.c.b16 %v2112, %v2111
      %v2246 = vpack.c.b16 %v2114, %v2113
      %v2247 = vpack.c.b16 %v2116, %v2115
      %v2248 = vpack.c.b16 %v2118, %v2117
      %v2249 = vpack.c.b16 %v2120, %v2119
      %v2250 = vpack.c.b16 %v2122, %v2121
      %v2251 = vpack.c.b16 %v2124, %v2123
      %v2252 = vpack.c.b16 %v2126, %v2125
      %v2253 = vpack.c.b16 %v2128, %v2127
      %v2254 = vpack.c.b16 %v2130, %v2129
      %v2255 = vpack.c.b16 %v2132, %v2131
      %v2256 = vpack.c.b16 %v2134, %v2133
      %v2257 = vpack.c.b16 %v2136, %v2135
      %v2258 = vpack.c.b16 %v2138, %v2137
      %v2259 = vpack.c.b16 %v2140, %v2139
      %v2260 = vpack.c.b16 %v2142, %v2141
      %v2261 = vpack.c.b16 %v2144, %v2143
      %v2262 = vpack.c.b16 %v2146, %v2145
      %v2263 = vpack.c.b16 %v2148, %v2147
      %v2264 = vpack.c.b16 %v2150, %v2149
      %v2265 = vpack.c.b16 %v2152, %v2151
      %v2266 = vpack.c.b16 %v2154, %v2153
      %v2267 = vpack.c.b16 %v2156, %v2155
      %v2268 = vpack.c.b16 %v2158, %v2157
      %v2269 = vpack.c.b16 %v2160, %v2159
      %v2270 = vpack.c.b16 %v2162, %v2161
      %v2271 = vpack.c.b16 %v2164, %v2163
      %v2272 = vpack.c.b16 %v2166, %v2165
      %v2273 = vpack.c.b16 %v2168, %v2167
      %v2274 = vpack.c.b16 %v2170, %v2169
      %v2275 = vpack.c.b16 %v2172, %v2171
      %v2276 = vpack.c.b16 %v2174, %v2173
      %v2277 = vpack.c.b16 %v2176, %v2175
      %v2278 = vpack.c.b16 %v2178, %v2177
      %v2279 = vpack.c.b16 %v2180, %v2179
      %v2280 = vpack.c.b16 %v2182, %v2181
      %v2281 = vpack.c.b16 %v2184, %v2183
      %v2282 = vpack.c.b16 %v2186, %v2185
      %v2283 = vpack.c.b16 %v2188, %v2187
      %v2284 = vpack.c.b16 %v2190, %v2189
      %v2285 = vpack.c.b16 %v2192, %v2191
      %v2286 = vpack.c.b16 %v2194, %v2193
      %v2287 = vpack.c.b16 %v2196, %v2195
      %v2288 = vpack.c.b16 %v2198, %v2197
      %v2289 = vpack.c.b16 %v2200, %v2199
      %v2290 = vpack.c.b16 %v2202, %v2201
      %v2291 = vpack.c.b16 %v2204, %v2203
      %v2292 = vpack.c.b16 %v2206, %v2205
      %v2293 = vpack.c.b16 %v2208, %v2207
      %v2294 = vpack.c.b16 %v2210, %v2209
      %v2295 = vpack.c.b16 %v2212, %v2211
      %v2296 = vpack.c.b16 %v2214, %v2213
      %v2297 = vpack.c.b16 %v2216, %v2215
      %v2298 = vpack.c.b16 %v2218, %v2217
      %v2299 = vpack.c.b16 %v2220, %v2219
      %v2300 = vpack.c.b16 %v2222, %v2221
      %v2301 = vpack.c.b16 %v2224, %v2223
      %v2302 = vpack.c.b16 %v2226, %v2225
      %v2303 = vpack.c.b16 %v2228, %v2227
      %v2304 = vpack.c.b16 %v2230, %v2229
      %v2305 = vpack.c.b16 %v2232, %v2231
      %v2306 = vpack.c.b16 %v2234, %v2233
      %2379 = vmatprep.subr.bf16.mxu0 0
      %2380 = vmatpush1.bf16.msra.mxu0 %v2235
      %2381 = vmatprep.subr.bf16.mxu0 0
      %2382 = vmatpush1.bf16.msra.mxu0 %v2236
      %2383 = vmatprep.subr.bf16.mxu0 0
      %2384 = vmatpush1.bf16.msra.mxu0 %v2237
      %2385 = vmatprep.subr.bf16.mxu0 0
      %2386 = vmatpush1.bf16.msra.mxu0 %v2238
      %2387 = vmatprep.subr.bf16.mxu0 0
      %2388 = vmatpush1.bf16.msra.mxu0 %v2239
      %2389 = vmatprep.subr.bf16.mxu0 0
      %2390 = vmatpush1.bf16.msra.mxu0 %v2240
      %2391 = vmatprep.subr.bf16.mxu0 0
      %2392 = vmatpush1.bf16.msra.mxu0 %v2241
      %2393 = vmatprep.subr.bf16.mxu0 0
      %2394 = vmatpush1.bf16.msra.mxu0 %v2242
      %2395 = vmatprep.subr.bf16.mxu0 0
      %2396 = vmatpush1.bf16.msra.mxu0 %v2243
      %2397 = vmatprep.subr.bf16.mxu0 0
      %2398 = vmatpush1.bf16.msra.mxu0 %v2244
      %2399 = vmatprep.subr.bf16.mxu0 0
      %2400 = vmatpush1.bf16.msra.mxu0 %v2245
      %2401 = vmatprep.subr.bf16.mxu0 0
      %2402 = vmatpush1.bf16.msra.mxu0 %v2246
      %2403 = vmatprep.subr.bf16.mxu0 0
      %2404 = vmatpush1.bf16.msra.mxu0 %v2247
      %2405 = vmatprep.subr.bf16.mxu0 0
      %2406 = vmatpush1.bf16.msra.mxu0 %v2248
      %2407 = vmatprep.subr.bf16.mxu0 0
      %2408 = vmatpush1.bf16.msra.mxu0 %v2249
      %2409 = vmatprep.subr.bf16.mxu0 0
      %2410 = vmatpush1.bf16.msra.mxu0 %v2250
      %2411 = vmatprep.mubr.bf16.mxu0 %v558
      %2412 = vmatmul.mubr.bf16.gmra.mrb[0].mxu0 %v466
      %v2413 = vpop.f32.mrb[0].mxu0
      %v2414 = vadd.f32 %v1945, %v2413
      %v2415 = vpop.f32.mrb[0].mxu0
      %v2416 = vpop.f32.mrb[0].mxu0
      %v2417 = vadd.f32 %v1945, %v2416
      %v2418 = vpop.f32.mrb[0].mxu0
      %2419 = vmatprep.mubr.bf16.mxu0 %v570
      %2420 = vmatmul.mubr.bf16.gmra.mrb[0].mxu0 %v467
      %v2421 = vpop.f32.mrb[0].mxu0
      %v2422 = vadd.f32 %v1945, %v2421
      %v2423 = vpop.f32.mrb[0].mxu0
      %v2424 = vpop.f32.mrb[0].mxu0
      %v2425 = vadd.f32 %v1945, %v2424
      %v2426 = vpop.f32.mrb[0].mxu0
      %2427 = vmatprep.mubr.bf16.mxu0 %v582
      %2428 = vmatmul.mubr.bf16.gmra.mrb[0].mxu0 %v468
      %v2429 = vpop.f32.mrb[0].mxu0
      %v2430 = vadd.f32 %v1945, %v2429
      %v2431 = vpop.f32.mrb[0].mxu0
      %v2432 = vpop.f32.mrb[0].mxu0
      %v2433 = vadd.f32 %v1945, %v2432
      %v2434 = vpop.f32.mrb[0].mxu0
      %2435 = vmatprep.mubr.bf16.mxu0 %v594
      %2436 = vmatmul.mubr.bf16.gmra.mrb[0].mxu0 %v469
      %v2437 = vpop.f32.mrb[0].mxu0
      %v2438 = vadd.f32 %v1945, %v2437
      %v2439 = vpop.f32.mrb[0].mxu0
      %v2440 = vpop.f32.mrb[0].mxu0
      %v2441 = vadd.f32 %v1945, %v2440
      %v2442 = vpop.f32.mrb[0].mxu0
      %2443 = vmatprep.mubr.bf16.mxu0 %v606
      %2444 = vmatmul.mubr.bf16.gmra.mrb[0].mxu0 %v470
      %v2445 = vpop.f32.mrb[0].mxu0
      %v2446 = vadd.f32 %v1945, %v2445
      %v2447 = vpop.f32.mrb[0].mxu0
      %v2448 = vpop.f32.mrb[0].mxu0
      %v2449 = vadd.f32 %v1945, %v2448
      %v2450 = vpop.f32.mrb[0].mxu0
      %2451 = vmatprep.mubr.bf16.mxu0 %v618
      %2452 = vmatmul.mubr.bf16.gmra.mrb[0].mxu0 %v471
      %v2453 = vpop.f32.mrb[0].mxu0
      %v2454 = vadd.f32 %v1945, %v2453
      %v2455 = vpop.f32.mrb[0].mxu0
      %v2456 = vpop.f32.mrb[0].mxu0
      %v2457 = vadd.f32 %v1945, %v2456
      %v2458 = vpop.f32.mrb[0].mxu0
      %2459 = vmatprep.mubr.bf16.mxu0 %v630
      %2460 = vmatmul.mubr.bf16.gmra.mrb[0].mxu0 %v472
      %v2461 = vpop.f32.mrb[0].mxu0
      %v2462 = vadd.f32 %v1945, %v2461
      %v2463 = vpop.f32.mrb[0].mxu0
      %v2464 = vpop.f32.mrb[0].mxu0
      %v2465 = vadd.f32 %v1945, %v2464
      %v2466 = vpop.f32.mrb[0].mxu0
      %2467 = vmatprep.mubr.bf16.mxu0 %v642
      %2468 = vmatmul.mubr.bf16.gmra.mrb[0].mxu0 %v473
      %v2469 = vpop.f32.mrb[0].mxu0
      %v2470 = vadd.f32 %v1945, %v2469
      %v2471 = vpop.f32.mrb[0].mxu0
      %v2472 = vpop.f32.mrb[0].mxu0
      %v2473 = vadd.f32 %v1945, %v2472
      %v2474 = vpop.f32.mrb[0].mxu0
      %2475 = vmatprep.mubr.bf16.mxu0 %v654
      %2476 = vmatmul.mubr.bf16.gmra.mrb[0].mxu0 %v474
      %v2477 = vpop.f32.mrb[0].mxu0
      %v2478 = vadd.f32 %v1945, %v2477
      %v2479 = vpop.f32.mrb[0].mxu0
      %v2480 = vpop.f32.mrb[0].mxu0
      %v2481 = vadd.f32 %v1945, %v2480
      %v2482 = vpop.f32.mrb[0].mxu0
      %2483 = vmatprep.mubr.bf16.mxu0 %v666
      %2484 = vmatmul.mubr.bf16.gmra.mrb[0].mxu0 %v475
      %v2485 = vpop.f32.mrb[0].mxu0
      %v2486 = vadd.f32 %v1945, %v2485
      %v2487 = vpop.f32.mrb[0].mxu0
      %v2488 = vpop.f32.mrb[0].mxu0
      %v2489 = vadd.f32 %v1945, %v2488
      %v2490 = vpop.f32.mrb[0].mxu0
      %2491 = vmatprep.mubr.bf16.mxu0 %v678
      %2492 = vmatmul.mubr.bf16.gmra.mrb[0].mxu0 %v476
      %v2493 = vpop.f32.mrb[0].mxu0
      %v2494 = vadd.f32 %v1945, %v2493
      %v2495 = vpop.f32.mrb[0].mxu0
      %v2496 = vpop.f32.mrb[0].mxu0
      %v2497 = vadd.f32 %v1945, %v2496
      %v2498 = vpop.f32.mrb[0].mxu0
      %2499 = vmatprep.mubr.bf16.mxu0 %v690
      %2500 = vmatmul.mubr.bf16.gmra.mrb[0].mxu0 %v477
      %v2501 = vpop.f32.mrb[0].mxu0
      %v2502 = vadd.f32 %v1945, %v2501
      %v2503 = vpop.f32.mrb[0].mxu0
      %v2504 = vpop.f32.mrb[0].mxu0
      %v2505 = vadd.f32 %v1945, %v2504
      %v2506 = vpop.f32.mrb[0].mxu0
      %2507 = vmatprep.mubr.bf16.mxu0 %v702
      %2508 = vmatmul.mubr.bf16.gmra.mrb[0].mxu0 %v478
      %v2509 = vpop.f32.mrb[0].mxu0
      %v2510 = vadd.f32 %v1945, %v2509
      %v2511 = vpop.f32.mrb[0].mxu0
      %v2512 = vpop.f32.mrb[0].mxu0
      %v2513 = vadd.f32 %v1945, %v2512
      %v2514 = vpop.f32.mrb[0].mxu0
      %2515 = vmatprep.mubr.bf16.mxu0 %v714
      %2516 = vmatmul.mubr.bf16.gmra.mrb[0].mxu0 %v479
      %v2517 = vpop.f32.mrb[0].mxu0
      %v2518 = vadd.f32 %v1945, %v2517
      %v2519 = vpop.f32.mrb[0].mxu0
      %v2520 = vpop.f32.mrb[0].mxu0
      %v2521 = vadd.f32 %v1945, %v2520
      %v2522 = vpop.f32.mrb[0].mxu0
      %2523 = vmatprep.mubr.bf16.mxu0 %v726
      %2524 = vmatmul.mubr.bf16.gmra.mrb[0].mxu0 %v480
      %v2525 = vpop.f32.mrb[0].mxu0
      %v2526 = vadd.f32 %v1945, %v2525
      %v2527 = vpop.f32.mrb[0].mxu0
      %v2528 = vpop.f32.mrb[0].mxu0
      %v2529 = vadd.f32 %v1945, %v2528
      %v2530 = vpop.f32.mrb[0].mxu0
      %2531 = vmatprep.mubr.bf16.mxu0 %v738
      %2532 = vmatmul.mubr.bf16.gmra.mrb[0].mxu0 %v481
      %v2533 = vpop.f32.mrb[0].mxu0
      %v2534 = vadd.f32 %v1945, %v2533
      %v2535 = vpop.f32.mrb[0].mxu0
      %v2536 = vpop.f32.mrb[0].mxu0
      %v2537 = vadd.f32 %v1945, %v2536
      %v2538 = vpop.f32.mrb[0].mxu0
      %2539 = vdwg.mxu0
      %2540 = vmatprep.subr.bf16.mxu0 0
      %2541 = vmatpush1.bf16.msra.mxu0 %v2251
      %2542 = vmatprep.subr.bf16.mxu0 0
      %2543 = vmatpush1.bf16.msra.mxu0 %v2252
      %2544 = vmatprep.subr.bf16.mxu0 0
      %2545 = vmatpush1.bf16.msra.mxu0 %v2253
      %2546 = vmatprep.subr.bf16.mxu0 0
      %2547 = vmatpush1.bf16.msra.mxu0 %v2254
      %2548 = vmatprep.subr.bf16.mxu0 0
      %2549 = vmatpush1.bf16.msra.mxu0 %v2255
      %2550 = vmatprep.subr.bf16.mxu0 0
      %2551 = vmatpush1.bf16.msra.mxu0 %v2256
      %2552 = vmatprep.subr.bf16.mxu0 0
      %2553 = vmatpush1.bf16.msra.mxu0 %v2257
      %2554 = vmatprep.subr.bf16.mxu0 0
      %2555 = vmatpush1.bf16.msra.mxu0 %v2258
      %2556 = vmatprep.subr.bf16.mxu0 0
      %2557 = vmatpush1.bf16.msra.mxu0 %v2259
      %2558 = vmatprep.subr.bf16.mxu0 0
      %2559 = vmatpush1.bf16.msra.mxu0 %v2260
      %2560 = vmatprep.subr.bf16.mxu0 0
      %2561 = vmatpush1.bf16.msra.mxu0 %v2261
      %2562 = vmatprep.subr.bf16.mxu0 0
      %2563 = vmatpush1.bf16.msra.mxu0 %v2262
      %2564 = vmatprep.subr.bf16.mxu0 0
      %2565 = vmatpush1.bf16.msra.mxu0 %v2263
      %2566 = vmatprep.subr.bf16.mxu0 0
      %2567 = vmatpush1.bf16.msra.mxu0 %v2264
      %2568 = vmatprep.subr.bf16.mxu0 0
      %2569 = vmatpush1.bf16.msra.mxu0 %v2265
      %2570 = vmatprep.subr.bf16.mxu0 0
      %2571 = vmatpush1.bf16.msra.mxu0 %v2266
      %2572 = vmatprep.mubr.bf16.mxu0 %v932
      %2573 = vmatmul.mubr.bf16.gmra.mrb[0].mxu0 %v806
      %v2574 = vpop.f32.mrb[0].mxu0
      %v2575 = vadd.f32 %v2414, %v2574
      %v2576 = vpop.f32.mrb[0].mxu0
      %v2577 = vpop.f32.mrb[0].mxu0
      %v2578 = vadd.f32 %v2417, %v2577
      %v2579 = vpop.f32.mrb[0].mxu0
      %2580 = vmatprep.mubr.bf16.mxu0 %v933
      %2581 = vmatmul.mubr.bf16.gmra.mrb[0].mxu0 %v809
      %v2582 = vpop.f32.mrb[0].mxu0
      %v2583 = vadd.f32 %v2422, %v2582
      %v2584 = vpop.f32.mrb[0].mxu0
      %v2585 = vpop.f32.mrb[0].mxu0
      %v2586 = vadd.f32 %v2425, %v2585
      %v2587 = vpop.f32.mrb[0].mxu0
      %2588 = vmatprep.mubr.bf16.mxu0 %v934
      %2589 = vmatmul.mubr.bf16.gmra.mrb[0].mxu0 %v812
      %v2590 = vpop.f32.mrb[0].mxu0
      %v2591 = vadd.f32 %v2430, %v2590
      %v2592 = vpop.f32.mrb[0].mxu0
      %v2593 = vpop.f32.mrb[0].mxu0
      %v2594 = vadd.f32 %v2433, %v2593
      %v2595 = vpop.f32.mrb[0].mxu0
      %2596 = vmatprep.mubr.bf16.mxu0 %v935
      %2597 = vmatmul.mubr.bf16.gmra.mrb[0].mxu0 %v815
      %v2598 = vpop.f32.mrb[0].mxu0
      %v2599 = vadd.f32 %v2438, %v2598
      %v2600 = vpop.f32.mrb[0].mxu0
      %v2601 = vpop.f32.mrb[0].mxu0
      %v2602 = vadd.f32 %v2441, %v2601
      %v2603 = vpop.f32.mrb[0].mxu0
      %2604 = vmatprep.mubr.bf16.mxu0 %v936
      %2605 = vmatmul.mubr.bf16.gmra.mrb[0].mxu0 %v818
      %v2606 = vpop.f32.mrb[0].mxu0
      %v2607 = vadd.f32 %v2446, %v2606
      %v2608 = vpop.f32.mrb[0].mxu0
      %v2609 = vpop.f32.mrb[0].mxu0
      %v2610 = vadd.f32 %v2449, %v2609
      %v2611 = vpop.f32.mrb[0].mxu0
      %2612 = vmatprep.mubr.bf16.mxu0 %v937
      %2613 = vmatmul.mubr.bf16.gmra.mrb[0].mxu0 %v821
      %v2614 = vpop.f32.mrb[0].mxu0
      %v2615 = vadd.f32 %v2454, %v2614
      %v2616 = vpop.f32.mrb[0].mxu0
      %v2617 = vpop.f32.mrb[0].mxu0
      %v2618 = vadd.f32 %v2457, %v2617
      %v2619 = vpop.f32.mrb[0].mxu0
      %2620 = vmatprep.mubr.bf16.mxu0 %v938
      %2621 = vmatmul.mubr.bf16.gmra.mrb[0].mxu0 %v824
      %v2622 = vpop.f32.mrb[0].mxu0
      %v2623 = vadd.f32 %v2462, %v2622
      %v2624 = vpop.f32.mrb[0].mxu0
      %v2625 = vpop.f32.mrb[0].mxu0
      %v2626 = vadd.f32 %v2465, %v2625
      %v2627 = vpop.f32.mrb[0].mxu0
      %2628 = vmatprep.mubr.bf16.mxu0 %v939
      %2629 = vmatmul.mubr.bf16.gmra.mrb[0].mxu0 %v827
      %v2630 = vpop.f32.mrb[0].mxu0
      %v2631 = vadd.f32 %v2470, %v2630
      %v2632 = vpop.f32.mrb[0].mxu0
      %v2633 = vpop.f32.mrb[0].mxu0
      %v2634 = vadd.f32 %v2473, %v2633
      %v2635 = vpop.f32.mrb[0].mxu0
      %2636 = vmatprep.mubr.bf16.mxu0 %v940
      %2637 = vmatmul.mubr.bf16.gmra.mrb[0].mxu0 %v830
      %v2638 = vpop.f32.mrb[0].mxu0
      %v2639 = vadd.f32 %v2478, %v2638
      %v2640 = vpop.f32.mrb[0].mxu0
      %v2641 = vpop.f32.mrb[0].mxu0
      %v2642 = vadd.f32 %v2481, %v2641
      %v2643 = vpop.f32.mrb[0].mxu0
      %2644 = vmatprep.mubr.bf16.mxu0 %v941
      %2645 = vmatmul.mubr.bf16.gmra.mrb[0].mxu0 %v833
      %v2646 = vpop.f32.mrb[0].mxu0
      %v2647 = vadd.f32 %v2486, %v2646
      %v2648 = vpop.f32.mrb[0].mxu0
      %v2649 = vpop.f32.mrb[0].mxu0
      %v2650 = vadd.f32 %v2489, %v2649
      %v2651 = vpop.f32.mrb[0].mxu0
      %2652 = vmatprep.mubr.bf16.mxu0 %v942
      %2653 = vmatmul.mubr.bf16.gmra.mrb[0].mxu0 %v836
      %v2654 = vpop.f32.mrb[0].mxu0
      %v2655 = vadd.f32 %v2494, %v2654
      %v2656 = vpop.f32.mrb[0].mxu0
      %v2657 = vpop.f32.mrb[0].mxu0
      %v2658 = vadd.f32 %v2497, %v2657
      %v2659 = vpop.f32.mrb[0].mxu0
      %2660 = vmatprep.mubr.bf16.mxu0 %v943
      %2661 = vmatmul.mubr.bf16.gmra.mrb[0].mxu0 %v839
      %v2662 = vpop.f32.mrb[0].mxu0
      %v2663 = vadd.f32 %v2502, %v2662
      %v2664 = vpop.f32.mrb[0].mxu0
      %v2665 = vpop.f32.mrb[0].mxu0
      %v2666 = vadd.f32 %v2505, %v2665
      %v2667 = vpop.f32.mrb[0].mxu0
      %2668 = vmatprep.mubr.bf16.mxu0 %v944
      %2669 = vmatmul.mubr.bf16.gmra.mrb[0].mxu0 %v842
      %v2670 = vpop.f32.mrb[0].mxu0
      %v2671 = vadd.f32 %v2510, %v2670
      %v2672 = vpop.f32.mrb[0].mxu0
      %v2673 = vpop.f32.mrb[0].mxu0
      %v2674 = vadd.f32 %v2513, %v2673
      %v2675 = vpop.f32.mrb[0].mxu0
      %2676 = vmatprep.mubr.bf16.mxu0 %v945
      %2677 = vmatmul.mubr.bf16.gmra.mrb[0].mxu0 %v845
      %v2678 = vpop.f32.mrb[0].mxu0
      %v2679 = vadd.f32 %v2518, %v2678
      %v2680 = vpop.f32.mrb[0].mxu0
      %v2681 = vpop.f32.mrb[0].mxu0
      %v2682 = vadd.f32 %v2521, %v2681
      %v2683 = vpop.f32.mrb[0].mxu0
      %2684 = vmatprep.mubr.bf16.mxu0 %v946
      %2685 = vmatmul.mubr.bf16.gmra.mrb[0].mxu0 %v848
      %v2686 = vpop.f32.mrb[0].mxu0
      %v2687 = vadd.f32 %v2526, %v2686
      %v2688 = vpop.f32.mrb[0].mxu0
      %v2689 = vpop.f32.mrb[0].mxu0
      %v2690 = vadd.f32 %v2529, %v2689
      %v2691 = vpop.f32.mrb[0].mxu0
      %2692 = vmatprep.mubr.bf16.mxu0 %v947
      %2693 = vmatmul.mubr.bf16.gmra.mrb[0].mxu0 %v851
      %v2694 = vpop.f32.mrb[0].mxu0
      %v2695 = vadd.f32 %v2534, %v2694
      %v2696 = vpop.f32.mrb[0].mxu0
      %v2697 = vpop.f32.mrb[0].mxu0
      %v2698 = vadd.f32 %v2537, %v2697
      %v2699 = vpop.f32.mrb[0].mxu0
      %2700 = vdwg.mxu0
      %2701 = vmatprep.subr.bf16.mxu0 0
      %2702 = vmatpush1.bf16.msra.mxu0 %v2267
      %2703 = vmatprep.subr.bf16.mxu0 0
      %2704 = vmatpush1.bf16.msra.mxu0 %v2268
      %2705 = vmatprep.subr.bf16.mxu0 0
      %2706 = vmatpush1.bf16.msra.mxu0 %v2269
      %2707 = vmatprep.subr.bf16.mxu0 0
      %2708 = vmatpush1.bf16.msra.mxu0 %v2270
      %2709 = vmatprep.subr.bf16.mxu0 0
      %2710 = vmatpush1.bf16.msra.mxu0 %v2271
      %2711 = vmatprep.subr.bf16.mxu0 0
      %2712 = vmatpush1.bf16.msra.mxu0 %v2272
      %2713 = vmatprep.subr.bf16.mxu0 0
      %2714 = vmatpush1.bf16.msra.mxu0 %v2273
      %2715 = vmatprep.subr.bf16.mxu0 0
      %2716 = vmatpush1.bf16.msra.mxu0 %v2274
      %2717 = vmatprep.subr.bf16.mxu0 0
      %2718 = vmatpush1.bf16.msra.mxu0 %v2275
      %2719 = vmatprep.subr.bf16.mxu0 0
      %2720 = vmatpush1.bf16.msra.mxu0 %v2276
      %2721 = vmatprep.subr.bf16.mxu0 0
      %2722 = vmatpush1.bf16.msra.mxu0 %v2277
      %2723 = vmatprep.subr.bf16.mxu0 0
      %2724 = vmatpush1.bf16.msra.mxu0 %v2278
      %2725 = vmatprep.subr.bf16.mxu0 0
      %2726 = vmatpush1.bf16.msra.mxu0 %v2279
      %2727 = vmatprep.subr.bf16.mxu0 0
      %2728 = vmatpush1.bf16.msra.mxu0 %v2280
      %2729 = vmatprep.subr.bf16.mxu0 0
      %2730 = vmatpush1.bf16.msra.mxu0 %v2281
      %2731 = vmatprep.subr.bf16.mxu0 0
      %2732 = vmatpush1.bf16.msra.mxu0 %v2282
      %2733 = vmatprep.mubr.bf16.mxu0 %v1270
      %2734 = vmatmul.mubr.bf16.gmra.mrb[0].mxu0 %v1023
      %v2735 = vpop.f32.mrb[0].mxu0
      %v2736 = vadd.f32 %v2575, %v2735
      %v2737 = vpop.f32.mrb[0].mxu0
      %v2738 = vpop.f32.mrb[0].mxu0
      %v2739 = vadd.f32 %v2578, %v2738
      %v2740 = vpop.f32.mrb[0].mxu0
      %2741 = vmatprep.mubr.bf16.mxu0 %v1273
      %2742 = vmatmul.mubr.bf16.gmra.mrb[0].mxu0 %v1035
      %v2743 = vpop.f32.mrb[0].mxu0
      %v2744 = vadd.f32 %v2583, %v2743
      %v2745 = vpop.f32.mrb[0].mxu0
      %v2746 = vpop.f32.mrb[0].mxu0
      %v2747 = vadd.f32 %v2586, %v2746
      %v2748 = vpop.f32.mrb[0].mxu0
      %2749 = vmatprep.mubr.bf16.mxu0 %v1276
      %2750 = vmatmul.mubr.bf16.gmra.mrb[0].mxu0 %v1047
      %v2751 = vpop.f32.mrb[0].mxu0
      %v2752 = vadd.f32 %v2591, %v2751
      %v2753 = vpop.f32.mrb[0].mxu0
      %v2754 = vpop.f32.mrb[0].mxu0
      %v2755 = vadd.f32 %v2594, %v2754
      %v2756 = vpop.f32.mrb[0].mxu0
      %2757 = vmatprep.mubr.bf16.mxu0 %v1279
      %2758 = vmatmul.mubr.bf16.gmra.mrb[0].mxu0 %v1059
      %v2759 = vpop.f32.mrb[0].mxu0
      %v2760 = vadd.f32 %v2599, %v2759
      %v2761 = vpop.f32.mrb[0].mxu0
      %v2762 = vpop.f32.mrb[0].mxu0
      %v2763 = vadd.f32 %v2602, %v2762
      %v2764 = vpop.f32.mrb[0].mxu0
      %2765 = vmatprep.mubr.bf16.mxu0 %v1282
      %2766 = vmatmul.mubr.bf16.gmra.mrb[0].mxu0 %v1071
      %v2767 = vpop.f32.mrb[0].mxu0
      %v2768 = vadd.f32 %v2607, %v2767
      %v2769 = vpop.f32.mrb[0].mxu0
      %v2770 = vpop.f32.mrb[0].mxu0
      %v2771 = vadd.f32 %v2610, %v2770
      %v2772 = vpop.f32.mrb[0].mxu0
      %2773 = vmatprep.mubr.bf16.mxu0 %v1285
      %2774 = vmatmul.mubr.bf16.gmra.mrb[0].mxu0 %v1083
      %v2775 = vpop.f32.mrb[0].mxu0
      %v2776 = vadd.f32 %v2615, %v2775
      %v2777 = vpop.f32.mrb[0].mxu0
      %v2778 = vpop.f32.mrb[0].mxu0
      %v2779 = vadd.f32 %v2618, %v2778
      %v2780 = vpop.f32.mrb[0].mxu0
      %2781 = vmatprep.mubr.bf16.mxu0 %v1288
      %2782 = vmatmul.mubr.bf16.gmra.mrb[0].mxu0 %v1095
      %v2783 = vpop.f32.mrb[0].mxu0
      %v2784 = vadd.f32 %v2623, %v2783
      %v2785 = vpop.f32.mrb[0].mxu0
      %v2786 = vpop.f32.mrb[0].mxu0
      %v2787 = vadd.f32 %v2626, %v2786
      %v2788 = vpop.f32.mrb[0].mxu0
      %2789 = vmatprep.mubr.bf16.mxu0 %v1291
      %2790 = vmatmul.mubr.bf16.gmra.mrb[0].mxu0 %v1107
      %v2791 = vpop.f32.mrb[0].mxu0
      %v2792 = vadd.f32 %v2631, %v2791
      %v2793 = vpop.f32.mrb[0].mxu0
      %v2794 = vpop.f32.mrb[0].mxu0
      %v2795 = vadd.f32 %v2634, %v2794
      %v2796 = vpop.f32.mrb[0].mxu0
      %2797 = vmatprep.mubr.bf16.mxu0 %v1294
      %2798 = vmatmul.mubr.bf16.gmra.mrb[0].mxu0 %v1119
      %v2799 = vpop.f32.mrb[0].mxu0
      %v2800 = vadd.f32 %v2639, %v2799
      %v2801 = vpop.f32.mrb[0].mxu0
      %v2802 = vpop.f32.mrb[0].mxu0
      %v2803 = vadd.f32 %v2642, %v2802
      %v2804 = vpop.f32.mrb[0].mxu0
      %2805 = vmatprep.mubr.bf16.mxu0 %v1297
      %2806 = vmatmul.mubr.bf16.gmra.mrb[0].mxu0 %v1131
      %v2807 = vpop.f32.mrb[0].mxu0
      %v2808 = vadd.f32 %v2647, %v2807
      %v2809 = vpop.f32.mrb[0].mxu0
      %v2810 = vpop.f32.mrb[0].mxu0
      %v2811 = vadd.f32 %v2650, %v2810
      %v2812 = vpop.f32.mrb[0].mxu0
      %2813 = vmatprep.mubr.bf16.mxu0 %v1300
      %2814 = vmatmul.mubr.bf16.gmra.mrb[0].mxu0 %v1143
      %v2815 = vpop.f32.mrb[0].mxu0
      %v2816 = vadd.f32 %v2655, %v2815
      %v2817 = vpop.f32.mrb[0].mxu0
      %v2818 = vpop.f32.mrb[0].mxu0
      %v2819 = vadd.f32 %v2658, %v2818
      %v2820 = vpop.f32.mrb[0].mxu0
      %2821 = vmatprep.mubr.bf16.mxu0 %v1303
      %2822 = vmatmul.mubr.bf16.gmra.mrb[0].mxu0 %v1155
      %v2823 = vpop.f32.mrb[0].mxu0
      %v2824 = vadd.f32 %v2663, %v2823
      %v2825 = vpop.f32.mrb[0].mxu0
      %v2826 = vpop.f32.mrb[0].mxu0
      %v2827 = vadd.f32 %v2666, %v2826
      %v2828 = vpop.f32.mrb[0].mxu0
      %2829 = vmatprep.mubr.bf16.mxu0 %v1306
      %2830 = vmatmul.mubr.bf16.gmra.mrb[0].mxu0 %v1167
      %v2831 = vpop.f32.mrb[0].mxu0
      %v2832 = vadd.f32 %v2671, %v2831
      %v2833 = vpop.f32.mrb[0].mxu0
      %v2834 = vpop.f32.mrb[0].mxu0
      %v2835 = vadd.f32 %v2674, %v2834
      %v2836 = vpop.f32.mrb[0].mxu0
      %2837 = vmatprep.mubr.bf16.mxu0 %v1309
      %2838 = vmatmul.mubr.bf16.gmra.mrb[0].mxu0 %v1179
      %v2839 = vpop.f32.mrb[0].mxu0
      %v2840 = vadd.f32 %v2679, %v2839
      %v2841 = vpop.f32.mrb[0].mxu0
      %v2842 = vpop.f32.mrb[0].mxu0
      %v2843 = vadd.f32 %v2682, %v2842
      %v2844 = vpop.f32.mrb[0].mxu0
      %2845 = vmatprep.mubr.bf16.mxu0 %v1312
      %2846 = vmatmul.mubr.bf16.gmra.mrb[0].mxu0 %v1191
      %v2847 = vpop.f32.mrb[0].mxu0
      %v2848 = vadd.f32 %v2687, %v2847
      %v2849 = vpop.f32.mrb[0].mxu0
      %v2850 = vpop.f32.mrb[0].mxu0
      %v2851 = vadd.f32 %v2690, %v2850
      %v2852 = vpop.f32.mrb[0].mxu0
      %2853 = vmatprep.mubr.bf16.mxu0 %v1315
      %2854 = vmatmul.mubr.bf16.gmra.mrb[0].mxu0 %v1203
      %v2855 = vpop.f32.mrb[0].mxu0
      %v2856 = vadd.f32 %v2695, %v2855
      %v2857 = vpop.f32.mrb[0].mxu0
      %v2858 = vpop.f32.mrb[0].mxu0
      %v2859 = vadd.f32 %v2698, %v2858
      %v2860 = vpop.f32.mrb[0].mxu0
      %2861 = vdwg.mxu0
      %2862 = vmatprep.subr.bf16.mxu0 0
      %2863 = vmatpush1.bf16.msra.mxu0 %v2283
      %2864 = vmatprep.subr.bf16.mxu0 0
      %2865 = vmatpush1.bf16.msra.mxu0 %v2284
      %2866 = vmatprep.subr.bf16.mxu0 0
      %2867 = vmatpush1.bf16.msra.mxu0 %v2285
      %2868 = vmatprep.subr.bf16.mxu0 0
      %2869 = vmatpush1.bf16.msra.mxu0 %v2286
      %2870 = vmatprep.subr.bf16.mxu0 0
      %2871 = vmatpush1.bf16.msra.mxu0 %v2287
      %2872 = vmatprep.subr.bf16.mxu0 0
      %2873 = vmatpush1.bf16.msra.mxu0 %v2288
      %2874 = vmatprep.subr.bf16.mxu0 0
      %2875 = vmatpush1.bf16.msra.mxu0 %v2289
      %2876 = vmatprep.subr.bf16.mxu0 0
      %2877 = vmatpush1.bf16.msra.mxu0 %v2290
      %2878 = vmatprep.subr.bf16.mxu0 0
      %2879 = vmatpush1.bf16.msra.mxu0 %v2291
      %2880 = vmatprep.subr.bf16.mxu0 0
      %2881 = vmatpush1.bf16.msra.mxu0 %v2292
      %2882 = vmatprep.subr.bf16.mxu0 0
      %2883 = vmatpush1.bf16.msra.mxu0 %v2293
      %2884 = vmatprep.subr.bf16.mxu0 0
      %2885 = vmatpush1.bf16.msra.mxu0 %v2294
      %2886 = vmatprep.subr.bf16.mxu0 0
      %2887 = vmatpush1.bf16.msra.mxu0 %v2295
      %2888 = vmatprep.subr.bf16.mxu0 0
      %2889 = vmatpush1.bf16.msra.mxu0 %v2296
      %2890 = vmatprep.subr.bf16.mxu0 0
      %2891 = vmatpush1.bf16.msra.mxu0 %v2297
      %2892 = vmatprep.subr.bf16.mxu0 0
      %2893 = vmatpush1.bf16.msra.mxu0 %v2298
      %2894 = vmatprep.mubr.bf16.mxu0 %v1487
      %2895 = vmatmul.mubr.bf16.gmra.mrb[0].mxu0 %v1396
      %v2896 = vpop.f32.mrb[0].mxu0
      %v2897 = vadd.f32 %v2736, %v2896
      %v2898 = vpop.f32.mrb[0].mxu0
      %v2899 = vpop.f32.mrb[0].mxu0
      %v2900 = vadd.f32 %v2739, %v2899
      %v2901 = vpop.f32.mrb[0].mxu0
      %2902 = vmatprep.mubr.bf16.mxu0 %v1499
      %2903 = vmatmul.mubr.bf16.gmra.mrb[0].mxu0 %v1397
      %v2904 = vpop.f32.mrb[0].mxu0
      %v2905 = vadd.f32 %v2744, %v2904
      %v2906 = vpop.f32.mrb[0].mxu0
      %v2907 = vpop.f32.mrb[0].mxu0
      %v2908 = vadd.f32 %v2747, %v2907
      %v2909 = vpop.f32.mrb[0].mxu0
      %2910 = vmatprep.mubr.bf16.mxu0 %v1511
      %2911 = vmatmul.mubr.bf16.gmra.mrb[0].mxu0 %v1398
      %v2912 = vpop.f32.mrb[0].mxu0
      %v2913 = vadd.f32 %v2752, %v2912
      %v2914 = vpop.f32.mrb[0].mxu0
      %v2915 = vpop.f32.mrb[0].mxu0
      %v2916 = vadd.f32 %v2755, %v2915
      %v2917 = vpop.f32.mrb[0].mxu0
      %2918 = vmatprep.mubr.bf16.mxu0 %v1523
      %2919 = vmatmul.mubr.bf16.gmra.mrb[0].mxu0 %v1399
      %v2920 = vpop.f32.mrb[0].mxu0
      %v2921 = vadd.f32 %v2760, %v2920
      %v2922 = vpop.f32.mrb[0].mxu0
      %v2923 = vpop.f32.mrb[0].mxu0
      %v2924 = vadd.f32 %v2763, %v2923
      %v2925 = vpop.f32.mrb[0].mxu0
      %2926 = vmatprep.mubr.bf16.mxu0 %v1535
      %2927 = vmatmul.mubr.bf16.gmra.mrb[0].mxu0 %v1400
      %v2928 = vpop.f32.mrb[0].mxu0
      %v2929 = vadd.f32 %v2768, %v2928
      %v2930 = vpop.f32.mrb[0].mxu0
      %v2931 = vpop.f32.mrb[0].mxu0
      %v2932 = vadd.f32 %v2771, %v2931
      %v2933 = vpop.f32.mrb[0].mxu0
      %2934 = vmatprep.mubr.bf16.mxu0 %v1547
      %2935 = vmatmul.mubr.bf16.gmra.mrb[0].mxu0 %v1401
      %v2936 = vpop.f32.mrb[0].mxu0
      %v2937 = vadd.f32 %v2776, %v2936
      %v2938 = vpop.f32.mrb[0].mxu0
      %v2939 = vpop.f32.mrb[0].mxu0
      %v2940 = vadd.f32 %v2779, %v2939
      %v2941 = vpop.f32.mrb[0].mxu0
      %2942 = vmatprep.mubr.bf16.mxu0 %v1559
      %2943 = vmatmul.mubr.bf16.gmra.mrb[0].mxu0 %v1402
      %v2944 = vpop.f32.mrb[0].mxu0
      %v2945 = vadd.f32 %v2784, %v2944
      %v2946 = vpop.f32.mrb[0].mxu0
      %v2947 = vpop.f32.mrb[0].mxu0
      %v2948 = vadd.f32 %v2787, %v2947
      %v2949 = vpop.f32.mrb[0].mxu0
      %2950 = vmatprep.mubr.bf16.mxu0 %v1571
      %2951 = vmatmul.mubr.bf16.gmra.mrb[0].mxu0 %v1403
      %v2952 = vpop.f32.mrb[0].mxu0
      %v2953 = vadd.f32 %v2792, %v2952
      %v2954 = vpop.f32.mrb[0].mxu0
      %v2955 = vpop.f32.mrb[0].mxu0
      %v2956 = vadd.f32 %v2795, %v2955
      %v2957 = vpop.f32.mrb[0].mxu0
      %2958 = vmatprep.mubr.bf16.mxu0 %v1583
      %2959 = vmatmul.mubr.bf16.gmra.mrb[0].mxu0 %v1404
      %v2960 = vpop.f32.mrb[0].mxu0
      %v2961 = vadd.f32 %v2800, %v2960
      %v2962 = vpop.f32.mrb[0].mxu0
      %v2963 = vpop.f32.mrb[0].mxu0
      %v2964 = vadd.f32 %v2803, %v2963
      %v2965 = vpop.f32.mrb[0].mxu0
      %2966 = vmatprep.mubr.bf16.mxu0 %v1595
      %2967 = vmatmul.mubr.bf16.gmra.mrb[0].mxu0 %v1405
      %v2968 = vpop.f32.mrb[0].mxu0
      %v2969 = vadd.f32 %v2808, %v2968
      %v2970 = vpop.f32.mrb[0].mxu0
      %v2971 = vpop.f32.mrb[0].mxu0
      %v2972 = vadd.f32 %v2811, %v2971
      %v2973 = vpop.f32.mrb[0].mxu0
      %2974 = vmatprep.mubr.bf16.mxu0 %v1607
      %2975 = vmatmul.mubr.bf16.gmra.mrb[0].mxu0 %v1406
      %v2976 = vpop.f32.mrb[0].mxu0
      %v2977 = vadd.f32 %v2816, %v2976
      %v2978 = vpop.f32.mrb[0].mxu0
      %v2979 = vpop.f32.mrb[0].mxu0
      %v2980 = vadd.f32 %v2819, %v2979
      %v2981 = vpop.f32.mrb[0].mxu0
      %2982 = vmatprep.mubr.bf16.mxu0 %v1619
      %2983 = vmatmul.mubr.bf16.gmra.mrb[0].mxu0 %v1407
      %v2984 = vpop.f32.mrb[0].mxu0
      %v2985 = vadd.f32 %v2824, %v2984
      %v2986 = vpop.f32.mrb[0].mxu0
      %v2987 = vpop.f32.mrb[0].mxu0
      %v2988 = vadd.f32 %v2827, %v2987
      %v2989 = vpop.f32.mrb[0].mxu0
      %2990 = vmatprep.mubr.bf16.mxu0 %v1631
      %2991 = vmatmul.mubr.bf16.gmra.mrb[0].mxu0 %v1408
      %v2992 = vpop.f32.mrb[0].mxu0
      %v2993 = vadd.f32 %v2832, %v2992
      %v2994 = vpop.f32.mrb[0].mxu0
      %v2995 = vpop.f32.mrb[0].mxu0
      %v2996 = vadd.f32 %v2835, %v2995
      %v2997 = vpop.f32.mrb[0].mxu0
      %2998 = vmatprep.mubr.bf16.mxu0 %v1643
      %2999 = vmatmul.mubr.bf16.gmra.mrb[0].mxu0 %v1409
      %v3000 = vpop.f32.mrb[0].mxu0
      %v3001 = vadd.f32 %v2840, %v3000
      %v3002 = vpop.f32.mrb[0].mxu0
      %v3003 = vpop.f32.mrb[0].mxu0
      %v3004 = vadd.f32 %v2843, %v3003
      %v3005 = vpop.f32.mrb[0].mxu0
      %3006 = vmatprep.mubr.bf16.mxu0 %v1655
      %3007 = vmatmul.mubr.bf16.gmra.mrb[0].mxu0 %v1410
      %v3008 = vpop.f32.mrb[0].mxu0
      %v3009 = vadd.f32 %v2848, %v3008
      %v3010 = vpop.f32.mrb[0].mxu0
      %v3011 = vpop.f32.mrb[0].mxu0
      %v3012 = vadd.f32 %v2851, %v3011
      %v3013 = vpop.f32.mrb[0].mxu0
      %3014 = vmatprep.mubr.bf16.mxu0 %v1667
      %3015 = vmatmul.mubr.bf16.gmra.mrb[0].mxu0 %v1411
      %v3016 = vpop.f32.mrb[0].mxu0
      %v3017 = vadd.f32 %v2856, %v3016
      %v3018 = vpop.f32.mrb[0].mxu0
      %v3019 = vpop.f32.mrb[0].mxu0
      %v3020 = vadd.f32 %v2859, %v3019
      %v3021 = vpop.f32.mrb[0].mxu0
      %3022 = vdwg.mxu0
      %3023 = vmatprep.subr.bf16.mxu0 0
      %3024 = vmatpush1.bf16.msra.mxu0 %v2299
      %3025 = vmatprep.subr.bf16.mxu0 0
      %3026 = vmatpush1.bf16.msra.mxu0 %v2300
      %3027 = vmatprep.subr.bf16.mxu0 0
      %3028 = vmatpush1.bf16.msra.mxu0 %v2301
      %3029 = vmatprep.subr.bf16.mxu0 0
      %3030 = vmatpush1.bf16.msra.mxu0 %v2302
      %3031 = vmatprep.subr.bf16.mxu0 0
      %3032 = vmatpush1.bf16.msra.mxu0 %v2303
      %3033 = vmatprep.subr.bf16.mxu0 0
      %3034 = vmatpush1.bf16.msra.mxu0 %v2304
      %3035 = vmatprep.subr.bf16.mxu0 0
      %3036 = vmatpush1.bf16.msra.mxu0 %v2305
      %3037 = vmatprep.subr.bf16.mxu0 0
      %3038 = vmatpush1.bf16.msra.mxu0 %v2306
      %3039 = vmatprep.subr.bf16.mxu0 0
      %3040 = vmatpush1.bf16.msra.mxu0 0
      %3041 = vmatprep.subr.bf16.mxu0 0
      %3042 = vmatpush1.bf16.msra.mxu0 0
      %3043 = vmatprep.subr.bf16.mxu0 0
      %3044 = vmatpush1.bf16.msra.mxu0 0
      %3045 = vmatprep.subr.bf16.mxu0 0
      %3046 = vmatpush1.bf16.msra.mxu0 0
      %3047 = vmatprep.subr.bf16.mxu0 0
      %3048 = vmatpush1.bf16.msra.mxu0 0
      %3049 = vmatprep.subr.bf16.mxu0 0
      %3050 = vmatpush1.bf16.msra.mxu0 0
      %3051 = vmatprep.subr.bf16.mxu0 0
      %3052 = vmatpush1.bf16.msra.mxu0 0
      %3053 = vmatprep.subr.bf16.mxu0 0
      %3054 = vmatpush1.bf16.msra.mxu0 0
      %3055 = vmatprep.mubr.bf16.mxu0 0
      %3056 = vmatmul.mubr.bf16.gmra.mrb[0].mxu0 %v1734
      %v3057 = vpop.f32.mrb[0].mxu0
      %v3058 = vadd.f32 %v2897, %v3057
      %v3059 = vpop.f32.mrb[0].mxu0
      %v3060 = vpop.f32.mrb[0].mxu0
      %v3061 = vadd.f32 %v2900, %v3060
      %v3062 = vpop.f32.mrb[0].mxu0
      %3063 = vmatprep.mubr.bf16.mxu0 0
      %3064 = vmatmul.mubr.bf16.gmra.mrb[0].mxu0 %v1737
      %v3065 = vpop.f32.mrb[0].mxu0
      %v3066 = vadd.f32 %v2905, %v3065
      %v3067 = vpop.f32.mrb[0].mxu0
      %v3068 = vpop.f32.mrb[0].mxu0
      %v3069 = vadd.f32 %v2908, %v3068
      %v3070 = vpop.f32.mrb[0].mxu0
      %3071 = vmatprep.mubr.bf16.mxu0 0
      %3072 = vmatmul.mubr.bf16.gmra.mrb[0].mxu0 %v1740
      %v3073 = vpop.f32.mrb[0].mxu0
      %v3074 = vadd.f32 %v2913, %v3073
      %v3075 = vpop.f32.mrb[0].mxu0
      %v3076 = vpop.f32.mrb[0].mxu0
      %v3077 = vadd.f32 %v2916, %v3076
      %v3078 = vpop.f32.mrb[0].mxu0
      %3079 = vmatprep.mubr.bf16.mxu0 0
      %3080 = vmatmul.mubr.bf16.gmra.mrb[0].mxu0 %v1743
      %v3081 = vpop.f32.mrb[0].mxu0
      %v3082 = vadd.f32 %v2921, %v3081
      %v3083 = vpop.f32.mrb[0].mxu0
      %v3084 = vpop.f32.mrb[0].mxu0
      %v3085 = vadd.f32 %v2924, %v3084
      %v3086 = vpop.f32.mrb[0].mxu0
      %3087 = vmatprep.mubr.bf16.mxu0 0
      %3088 = vmatmul.mubr.bf16.gmra.mrb[0].mxu0 %v1746
      %v3089 = vpop.f32.mrb[0].mxu0
      %v3090 = vadd.f32 %v2929, %v3089
      %v3091 = vpop.f32.mrb[0].mxu0
      %v3092 = vpop.f32.mrb[0].mxu0
      %v3093 = vadd.f32 %v2932, %v3092
      %v3094 = vpop.f32.mrb[0].mxu0
      %3095 = vmatprep.mubr.bf16.mxu0 0
      %3096 = vmatmul.mubr.bf16.gmra.mrb[0].mxu0 %v1749
      %v3097 = vpop.f32.mrb[0].mxu0
      %v3098 = vadd.f32 %v2937, %v3097
      %v3099 = vpop.f32.mrb[0].mxu0
      %v3100 = vpop.f32.mrb[0].mxu0
      %v3101 = vadd.f32 %v2940, %v3100
      %v3102 = vpop.f32.mrb[0].mxu0
      %3103 = vmatprep.mubr.bf16.mxu0 0
      %3104 = vmatmul.mubr.bf16.gmra.mrb[0].mxu0 %v1752
      %v3105 = vpop.f32.mrb[0].mxu0
      %v3106 = vadd.f32 %v2945, %v3105
      %v3107 = vpop.f32.mrb[0].mxu0
      %v3108 = vpop.f32.mrb[0].mxu0
      %v3109 = vadd.f32 %v2948, %v3108
      %v3110 = vpop.f32.mrb[0].mxu0
      %3111 = vmatprep.mubr.bf16.mxu0 0
      %3112 = vmatmul.mubr.bf16.gmra.mrb[0].mxu0 %v1755
      %v3113 = vpop.f32.mrb[0].mxu0
      %v3114 = vadd.f32 %v2953, %v3113
      %v3115 = vpop.f32.mrb[0].mxu0
      %v3116 = vpop.f32.mrb[0].mxu0
      %v3117 = vadd.f32 %v2956, %v3116
      %v3118 = vpop.f32.mrb[0].mxu0
      %3119 = vmatprep.mubr.bf16.mxu0 0
      %3120 = vmatmul.mubr.bf16.gmra.mrb[0].mxu0 %v1758
      %v3121 = vpop.f32.mrb[0].mxu0
      %v3122 = vadd.f32 %v2961, %v3121
      %v3123 = vpop.f32.mrb[0].mxu0
      %v3124 = vpop.f32.mrb[0].mxu0
      %v3125 = vadd.f32 %v2964, %v3124
      %v3126 = vpop.f32.mrb[0].mxu0
      %3127 = vmatprep.mubr.bf16.mxu0 0
      %3128 = vmatmul.mubr.bf16.gmra.mrb[0].mxu0 %v1761
      %v3129 = vpop.f32.mrb[0].mxu0
      %v3130 = vadd.f32 %v2969, %v3129
      %v3131 = vpop.f32.mrb[0].mxu0
      %v3132 = vpop.f32.mrb[0].mxu0
      %v3133 = vadd.f32 %v2972, %v3132
      %v3134 = vpop.f32.mrb[0].mxu0
      %3135 = vmatprep.mubr.bf16.mxu0 0
      %3136 = vmatmul.mubr.bf16.gmra.mrb[0].mxu0 %v1764
      %v3137 = vpop.f32.mrb[0].mxu0
      %v3138 = vadd.f32 %v2977, %v3137
      %v3139 = vpop.f32.mrb[0].mxu0
      %v3140 = vpop.f32.mrb[0].mxu0
      %v3141 = vadd.f32 %v2980, %v3140
      %v3142 = vpop.f32.mrb[0].mxu0
      %3143 = vmatprep.mubr.bf16.mxu0 0
      %3144 = vmatmul.mubr.bf16.gmra.mrb[0].mxu0 %v1767
      %v3145 = vpop.f32.mrb[0].mxu0
      %v3146 = vadd.f32 %v2985, %v3145
      %v3147 = vpop.f32.mrb[0].mxu0
      %v3148 = vpop.f32.mrb[0].mxu0
      %v3149 = vadd.f32 %v2988, %v3148
      %v3150 = vpop.f32.mrb[0].mxu0
      %3151 = vmatprep.mubr.bf16.mxu0 0
      %3152 = vmatmul.mubr.bf16.gmra.mrb[0].mxu0 %v1770
      %v3153 = vpop.f32.mrb[0].mxu0
      %v3154 = vadd.f32 %v2993, %v3153
      %v3155 = vpop.f32.mrb[0].mxu0
      %v3156 = vpop.f32.mrb[0].mxu0
      %v3157 = vadd.f32 %v2996, %v3156
      %v3158 = vpop.f32.mrb[0].mxu0
      %3159 = vmatprep.mubr.bf16.mxu0 0
      %3160 = vmatmul.mubr.bf16.gmra.mrb[0].mxu0 %v1773
      %v3161 = vpop.f32.mrb[0].mxu0
      %v3162 = vadd.f32 %v3001, %v3161
      %v3163 = vpop.f32.mrb[0].mxu0
      %v3164 = vpop.f32.mrb[0].mxu0
      %v3165 = vadd.f32 %v3004, %v3164
      %v3166 = vpop.f32.mrb[0].mxu0
      %3167 = vmatprep.mubr.bf16.mxu0 0
      %3168 = vmatmul.mubr.bf16.gmra.mrb[0].mxu0 %v1776
      %v3169 = vpop.f32.mrb[0].mxu0
      %v3170 = vadd.f32 %v3009, %v3169
      %v3171 = vpop.f32.mrb[0].mxu0
      %v3172 = vpop.f32.mrb[0].mxu0
      %v3173 = vadd.f32 %v3012, %v3172
      %v3174 = vpop.f32.mrb[0].mxu0
      %3175 = vmatprep.mubr.bf16.mxu0 0
      %3176 = vmatmul.mubr.bf16.gmra.mrb[0].mxu0 %v1779
      %v3177 = vpop.f32.mrb[0].mxu0
      %v3178 = vadd.f32 %v3017, %v3177
      %v3179 = vpop.f32.mrb[0].mxu0
      %v3180 = vpop.f32.mrb[0].mxu0
      %v3181 = vadd.f32 %v3020, %v3180
      %v3182 = vpop.f32.mrb[0].mxu0
      %3183 = vdwg.mxu0
      %v3184 = vxor.u32 %v3058, 2147483648
      %v3185 = vxor.u32 %v3061, 2147483648
      %v3186 = vxor.u32 %v3066, 2147483648
      %v3187 = vxor.u32 %v3069, 2147483648
      %v3188 = vxor.u32 %v3074, 2147483648
      %v3189 = vxor.u32 %v3077, 2147483648
      %v3190 = vxor.u32 %v3082, 2147483648
      %v3191 = vxor.u32 %v3085, 2147483648
      %v3192 = vxor.u32 %v3090, 2147483648
      %v3193 = vxor.u32 %v3093, 2147483648
      %v3194 = vxor.u32 %v3098, 2147483648
      %v3195 = vxor.u32 %v3101, 2147483648
      %v3196 = vxor.u32 %v3106, 2147483648
      %v3197 = vxor.u32 %v3109, 2147483648
      %v3198 = vxor.u32 %v3114, 2147483648
      %v3199 = vxor.u32 %v3117, 2147483648
      %v3200 = vxor.u32 %v3122, 2147483648
      %v3201 = vxor.u32 %v3125, 2147483648
      %v3202 = vxor.u32 %v3130, 2147483648
      %v3203 = vxor.u32 %v3133, 2147483648
      %v3204 = vxor.u32 %v3138, 2147483648
      %v3205 = vxor.u32 %v3141, 2147483648
      %v3206 = vxor.u32 %v3146, 2147483648
      %v3207 = vxor.u32 %v3149, 2147483648
      %v3208 = vxor.u32 %v3154, 2147483648
      %v3209 = vxor.u32 %v3157, 2147483648
      %v3210 = vxor.u32 %v3162, 2147483648
      %v3211 = vxor.u32 %v3165, 2147483648
      %v3212 = vxor.u32 %v3170, 2147483648
      %v3213 = vxor.u32 %v3173, 2147483648
      %v3214 = vxor.u32 %v3178, 2147483648
      %v3215 = vxor.u32 %v3181, 2147483648
      %v3216 = vmul.f32 %v3184, 1.442695
      %v3217 = vpow.pop %v3216
      %v3218 = vmul.f32 %v3185, 1.442695
      %v3219 = vpow.pop %v3218
      %v3220 = vmul.f32 %v3186, 1.442695
      %v3221 = vpow.pop %v3220
      %v3222 = vmul.f32 %v3187, 1.442695
      %v3223 = vpow.pop %v3222
      %v3224 = vmul.f32 %v3188, 1.442695
      %v3225 = vpow.pop %v3224
      %v3226 = vmul.f32 %v3189, 1.442695
      %v3227 = vpow.pop %v3226
      %v3228 = vmul.f32 %v3190, 1.442695
      %v3229 = vpow.pop %v3228
      %v3230 = vmul.f32 %v3191, 1.442695
      %v3231 = vpow.pop %v3230
      %v3232 = vmul.f32 %v3192, 1.442695
      %v3233 = vpow.pop %v3232
      %v3234 = vmul.f32 %v3193, 1.442695
      %v3235 = vpow.pop %v3234
      %v3236 = vmul.f32 %v3194, 1.442695
      %v3237 = vpow.pop %v3236
      %v3238 = vmul.f32 %v3195, 1.442695
      %v3239 = vpow.pop %v3238
      %v3240 = vmul.f32 %v3196, 1.442695
      %v3241 = vpow.pop %v3240
      %v3242 = vmul.f32 %v3197, 1.442695
      %v3243 = vpow.pop %v3242
      %v3244 = vmul.f32 %v3198, 1.442695
      %v3245 = vpow.pop %v3244
      %v3246 = vmul.f32 %v3199, 1.442695
      %v3247 = vpow.pop %v3246
      %v3248 = vmul.f32 %v3200, 1.442695
      %v3249 = vpow.pop %v3248
      %v3250 = vmul.f32 %v3201, 1.442695
      %v3251 = vpow.pop %v3250
      %v3252 = vmul.f32 %v3202, 1.442695
      %v3253 = vpow.pop %v3252
      %v3254 = vmul.f32 %v3203, 1.442695
      %v3255 = vpow.pop %v3254
      %v3256 = vmul.f32 %v3204, 1.442695
      %v3257 = vpow.pop %v3256
      %v3258 = vmul.f32 %v3205, 1.442695
      %v3259 = vpow.pop %v3258
      %v3260 = vmul.f32 %v3206, 1.442695
      %v3261 = vpow.pop %v3260
      %v3262 = vmul.f32 %v3207, 1.442695
      %v3263 = vpow.pop %v3262
      %v3264 = vmul.f32 %v3208, 1.442695
      %v3265 = vpow.pop %v3264
      %v3266 = vmul.f32 %v3209, 1.442695
      %v3267 = vpow.pop %v3266
      %v3268 = vmul.f32 %v3210, 1.442695
      %v3269 = vpow.pop %v3268
      %v3270 = vmul.f32 %v3211, 1.442695
      %v3271 = vpow.pop %v3270
      %v3272 = vmul.f32 %v3212, 1.442695
      %v3273 = vpow.pop %v3272
      %v3274 = vmul.f32 %v3213, 1.442695
      %v3275 = vpow.pop %v3274
      %v3276 = vmul.f32 %v3214, 1.442695
      %v3277 = vpow.pop %v3276
      %v3278 = vmul.f32 %v3215, 1.442695
      %v3279 = vpow.pop %v3278
      %v3280 = vadd.f32 %v3217, 1.0
      %v3281 = vadd.f32 %v3219, 1.0
      %v3282 = vadd.f32 %v3221, 1.0
      %v3283 = vadd.f32 %v3223, 1.0
      %v3284 = vadd.f32 %v3225, 1.0
      %v3285 = vadd.f32 %v3227, 1.0
      %v3286 = vadd.f32 %v3229, 1.0
      %v3287 = vadd.f32 %v3231, 1.0
      %v3288 = vadd.f32 %v3233, 1.0
      %v3289 = vadd.f32 %v3235, 1.0
      %v3290 = vadd.f32 %v3237, 1.0
      %v3291 = vadd.f32 %v3239, 1.0
      %v3292 = vadd.f32 %v3241, 1.0
      %v3293 = vadd.f32 %v3243, 1.0
      %v3294 = vadd.f32 %v3245, 1.0
      %v3295 = vadd.f32 %v3247, 1.0
      %v3296 = vadd.f32 %v3249, 1.0
      %v3297 = vadd.f32 %v3251, 1.0
      %v3298 = vadd.f32 %v3253, 1.0
      %v3299 = vadd.f32 %v3255, 1.0
      %v3300 = vadd.f32 %v3257, 1.0
      %v3301 = vadd.f32 %v3259, 1.0
      %v3302 = vadd.f32 %v3261, 1.0
      %v3303 = vadd.f32 %v3263, 1.0
      %v3304 = vadd.f32 %v3265, 1.0
      %v3305 = vadd.f32 %v3267, 1.0
      %v3306 = vadd.f32 %v3269, 1.0
      %v3307 = vadd.f32 %v3271, 1.0
      %v3308 = vadd.f32 %v3273, 1.0
      %v3309 = vadd.f32 %v3275, 1.0
      %v3310 = vadd.f32 %v3277, 1.0
      %v3311 = vadd.f32 %v3279, 1.0
      %v3312 = vrcp.pop %v3280
      %v3313 = vmul.f32 1.0, %v3312
      %v3314 = vrcp.pop %v3281
      %v3315 = vmul.f32 1.0, %v3314
      %v3316 = vrcp.pop %v3282
      %v3317 = vmul.f32 1.0, %v3316
      %v3318 = vrcp.pop %v3283
      %v3319 = vmul.f32 1.0, %v3318
      %v3320 = vrcp.pop %v3284
      %v3321 = vmul.f32 1.0, %v3320
      %v3322 = vrcp.pop %v3285
      %v3323 = vmul.f32 1.0, %v3322
      %v3324 = vrcp.pop %v3286
      %v3325 = vmul.f32 1.0, %v3324
      %v3326 = vrcp.pop %v3287
      %v3327 = vmul.f32 1.0, %v3326
      %v3328 = vrcp.pop %v3288
      %v3329 = vmul.f32 1.0, %v3328
      %v3330 = vrcp.pop %v3289
      %v3331 = vmul.f32 1.0, %v3330
      %v3332 = vrcp.pop %v3290
      %v3333 = vmul.f32 1.0, %v3332
      %v3334 = vrcp.pop %v3291
      %v3335 = vmul.f32 1.0, %v3334
      %v3336 = vrcp.pop %v3292
      %v3337 = vmul.f32 1.0, %v3336
      %v3338 = vrcp.pop %v3293
      %v3339 = vmul.f32 1.0, %v3338
      %v3340 = vrcp.pop %v3294
      %v3341 = vmul.f32 1.0, %v3340
      %v3342 = vrcp.pop %v3295
      %v3343 = vmul.f32 1.0, %v3342
      %v3344 = vrcp.pop %v3296
      %v3345 = vmul.f32 1.0, %v3344
      %v3346 = vrcp.pop %v3297
      %v3347 = vmul.f32 1.0, %v3346
      %v3348 = vrcp.pop %v3298
      %v3349 = vmul.f32 1.0, %v3348
      %v3350 = vrcp.pop %v3299
      %v3351 = vmul.f32 1.0, %v3350
      %v3352 = vrcp.pop %v3300
      %v3353 = vmul.f32 1.0, %v3352
      %v3354 = vrcp.pop %v3301
      %v3355 = vmul.f32 1.0, %v3354
      %v3356 = vrcp.pop %v3302
      %v3357 = vmul.f32 1.0, %v3356
      %v3358 = vrcp.pop %v3303
      %v3359 = vmul.f32 1.0, %v3358
      %v3360 = vrcp.pop %v3304
      %v3361 = vmul.f32 1.0, %v3360
      %v3362 = vrcp.pop %v3305
      %v3363 = vmul.f32 1.0, %v3362
      %v3364 = vrcp.pop %v3306
      %v3365 = vmul.f32 1.0, %v3364
      %v3366 = vrcp.pop %v3307
      %v3367 = vmul.f32 1.0, %v3366
      %v3368 = vrcp.pop %v3308
      %v3369 = vmul.f32 1.0, %v3368
      %v3370 = vrcp.pop %v3309
      %v3371 = vmul.f32 1.0, %v3370
      %v3372 = vrcp.pop %v3310
      %v3373 = vmul.f32 1.0, %v3372
      %v3374 = vrcp.pop %v3311
      %v3375 = vmul.f32 1.0, %v3374
      %v3376 = vmul.f32 %v3058, %v3313
      %v3377 = vmul.f32 %v3061, %v3315
      %v3378 = vmul.f32 %v3066, %v3317
      %v3379 = vmul.f32 %v3069, %v3319
      %v3380 = vmul.f32 %v3074, %v3321
      %v3381 = vmul.f32 %v3077, %v3323
      %v3382 = vmul.f32 %v3082, %v3325
      %v3383 = vmul.f32 %v3085, %v3327
      %v3384 = vmul.f32 %v3090, %v3329
      %v3385 = vmul.f32 %v3093, %v3331
      %v3386 = vmul.f32 %v3098, %v3333
      %v3387 = vmul.f32 %v3101, %v3335
      %v3388 = vmul.f32 %v3106, %v3337
      %v3389 = vmul.f32 %v3109, %v3339
      %v3390 = vmul.f32 %v3114, %v3341
      %v3391 = vmul.f32 %v3117, %v3343
      %v3392 = vmul.f32 %v3122, %v3345
      %v3393 = vmul.f32 %v3125, %v3347
      %v3394 = vmul.f32 %v3130, %v3349
      %v3395 = vmul.f32 %v3133, %v3351
      %v3396 = vmul.f32 %v3138, %v3353
      %v3397 = vmul.f32 %v3141, %v3355
      %v3398 = vmul.f32 %v3146, %v3357
      %v3399 = vmul.f32 %v3149, %v3359
      %v3400 = vmul.f32 %v3154, %v3361
      %v3401 = vmul.f32 %v3157, %v3363
      %v3402 = vmul.f32 %v3162, %v3365
      %v3403 = vmul.f32 %v3165, %v3367
      %v3404 = vmul.f32 %v3170, %v3369
      %v3405 = vmul.f32 %v3173, %v3371
      %v3406 = vmul.f32 %v3178, %v3373
      %v3407 = vmul.f32 %v3181, %v3375
      %v3408 = vpack.c.bf16 %v3377, %v3376
      %v3409 = vpack.c.bf16 %v3379, %v3378
      %v3410 = vpack.c.bf16 %v3381, %v3380
      %v3411 = vpack.c.bf16 %v3383, %v3382
      %v3412 = vpack.c.bf16 %v3385, %v3384
      %v3413 = vpack.c.bf16 %v3387, %v3386
      %v3414 = vpack.c.bf16 %v3389, %v3388
      %v3415 = vpack.c.bf16 %v3391, %v3390
      %v3416 = vpack.c.bf16 %v3393, %v3392
      %v3417 = vpack.c.bf16 %v3395, %v3394
      %v3418 = vpack.c.bf16 %v3397, %v3396
      %v3419 = vpack.c.bf16 %v3399, %v3398
      %v3420 = vpack.c.bf16 %v3401, %v3400
      %v3421 = vpack.c.bf16 %v3403, %v3402
      %v3422 = vpack.c.bf16 %v3405, %v3404
      %v3423 = vpack.c.bf16 %v3407, %v3406
      %v3440 = vunpack.c.l.b16 %v3408
      %v3441 = vunpack.c.h.b16 %v3408
      %v3442 = vunpack.c.l.b16 %v3409
      %v3443 = vunpack.c.h.b16 %v3409
      %v3444 = vunpack.c.l.b16 %v3410
      %v3445 = vunpack.c.h.b16 %v3410
      %v3446 = vunpack.c.l.b16 %v3411
      %v3447 = vunpack.c.h.b16 %v3411
      %v3448 = vunpack.c.l.b16 %v3412
      %v3449 = vunpack.c.h.b16 %v3412
      %v3450 = vunpack.c.l.b16 %v3413
      %v3451 = vunpack.c.h.b16 %v3413
      %v3452 = vunpack.c.l.b16 %v3414
      %v3453 = vunpack.c.h.b16 %v3414
      %v3454 = vunpack.c.l.b16 %v3415
      %v3455 = vunpack.c.h.b16 %v3415
      %v3456 = vunpack.c.l.b16 %v3416
      %v3457 = vunpack.c.h.b16 %v3416
      %v3458 = vunpack.c.l.b16 %v3417
      %v3459 = vunpack.c.h.b16 %v3417
      %v3460 = vunpack.c.l.b16 %v3418
      %v3461 = vunpack.c.h.b16 %v3418
      %v3462 = vunpack.c.l.b16 %v3419
      %v3463 = vunpack.c.h.b16 %v3419
      %v3464 = vunpack.c.l.b16 %v3420
      %v3465 = vunpack.c.h.b16 %v3420
      %v3466 = vunpack.c.l.b16 %v3421
      %v3467 = vunpack.c.h.b16 %v3421
      %v3468 = vunpack.c.l.b16 %v3422
      %v3469 = vunpack.c.h.b16 %v3422
      %v3470 = vunpack.c.l.b16 %v3423
      %v3471 = vunpack.c.h.b16 %v3423
      %v3472 = vpack.c.b16 %v3440, %v3440
      %v3473 = vpack.c.b16 %v3441, %v3441
      %v3474 = vpack.c.b16 %v3442, %v3442
      %v3475 = vpack.c.b16 %v3443, %v3443
      %v3476 = vpack.c.b16 %v3444, %v3444
      %v3477 = vpack.c.b16 %v3445, %v3445
      %v3478 = vpack.c.b16 %v3446, %v3446
      %v3479 = vpack.c.b16 %v3447, %v3447
      %v3480 = vpack.c.b16 %v3448, %v3448
      %v3481 = vpack.c.b16 %v3449, %v3449
      %v3482 = vpack.c.b16 %v3450, %v3450
      %v3483 = vpack.c.b16 %v3451, %v3451
      %v3484 = vpack.c.b16 %v3452, %v3452
      %v3485 = vpack.c.b16 %v3453, %v3453
      %v3486 = vpack.c.b16 %v3454, %v3454
      %v3487 = vpack.c.b16 %v3455, %v3455
      %v3488 = vpack.c.b16 %v3456, %v3456
      %v3489 = vpack.c.b16 %v3457, %v3457
      %v3490 = vpack.c.b16 %v3458, %v3458
      %v3491 = vpack.c.b16 %v3459, %v3459
      %v3492 = vpack.c.b16 %v3460, %v3460
      %v3493 = vpack.c.b16 %v3461, %v3461
      %v3494 = vpack.c.b16 %v3462, %v3462
      %v3495 = vpack.c.b16 %v3463, %v3463
      %v3496 = vpack.c.b16 %v3464, %v3464
      %v3497 = vpack.c.b16 %v3465, %v3465
      %v3498 = vpack.c.b16 %v3466, %v3466
      %v3499 = vpack.c.b16 %v3467, %v3467
      %v3500 = vpack.c.b16 %v3468, %v3468
      %v3501 = vpack.c.b16 %v3469, %v3469
      %v3502 = vpack.c.b16 %v3470, %v3470
      %v3503 = vpack.c.b16 %v3471, %v3471
      %3536 = vst [vmem:[%s206] sm:$0xf] %v3472
      %3537 = vst [vmem:[%s206 + $0x4] sm:$0xf] %v3473
      %3538 = vst [vmem:[%s206 + $0x8] sm:$0xf] %v3474
      %3539 = vst [vmem:[%s206 + $0xc] sm:$0xf] %v3475
      %3540 = vst [vmem:[%s206 + $0x10] sm:$0xf] %v3476
      %3541 = vst [vmem:[%s206 + $0x14] sm:$0xf] %v3477
      %3542 = vst [vmem:[%s206 + $0x18] sm:$0xf] %v3478
      %3543 = vst [vmem:[%s206 + $0x1c] sm:$0xf] %v3479
      %3544 = vst [vmem:[%s206 + $0x20] sm:$0xf] %v3480
      %3545 = vst [vmem:[%s206 + $0x24] sm:$0xf] %v3481
      %3546 = vst [vmem:[%s206 + $0x28] sm:$0xf] %v3482
      %3547 = vst [vmem:[%s206 + $0x2c] sm:$0xf] %v3483
      %3548 = vst [vmem:[%s206 + $0x30] sm:$0xf] %v3484
      %3549 = vst [vmem:[%s206 + $0x34] sm:$0xf] %v3485
      %3550 = vst [vmem:[%s206 + $0x38] sm:$0xf] %v3486
      %3551 = vst [vmem:[%s206 + $0x3c] sm:$0xf] %v3487
      %3552 = vst [vmem:[%s206 + $0x40] sm:$0xf] %v3488
      %3553 = vst [vmem:[%s206 + $0x44] sm:$0xf] %v3489
      %3554 = vst [vmem:[%s206 + $0x48] sm:$0xf] %v3490
      %3555 = vst [vmem:[%s206 + $0x4c] sm:$0xf] %v3491
      %3556 = vst [vmem:[%s206 + $0x50] sm:$0xf] %v3492
      %3557 = vst [vmem:[%s206 + $0x54] sm:$0xf] %v3493
      %3558 = vst [vmem:[%s206 + $0x58] sm:$0xf] %v3494
      %3559 = vst [vmem:[%s206 + $0x5c] sm:$0xf] %v3495
      %3560 = vst [vmem:[%s206 + $0x60] sm:$0xf] %v3496
      %3561 = vst [vmem:[%s206 + $0x64] sm:$0xf] %v3497
      %3562 = vst [vmem:[%s206 + $0x68] sm:$0xf] %v3498
      %3563 = vst [vmem:[%s206 + $0x6c] sm:$0xf] %v3499
      %3564 = vst [vmem:[%s206 + $0x70] sm:$0xf] %v3500
      %3565 = vst [vmem:[%s206 + $0x74] sm:$0xf] %v3501
      %3566 = vst [vmem:[%s206 + $0x78] sm:$0xf] %v3502
      %3567 = vst [vmem:[%s206 + $0x7c] sm:$0xf] %v3503
      %p3568 = scmp.lt.s32.totalorder %s18, 1
      %s3569 = scalar_select %p3568, %s18, 1
      %p3570 = scmp.lt.s32.totalorder %s19, 0
      %s3571 = scalar_select %p3570, %s19, 0
      %s3572 = smul.addr %s3571, 32
      %s3573 = smul.addr %s3569, 32
      %s3574 = sadd.s32 %s3572, %s3573
      %s3575 = smul.addr %s3574, 4
      %s3576 = scalar_lea.vmem %s3, %s3575
      // Predicated region
      $region33: #{csp_forward.4} parent=31 // pred_check
        %p3577 = pneg %p116
      $region34: #{csp_forward.4} parent=31 // pred_check_branch
        %3579 = sbr.rel (%p3577) target = $region36
      $region35: #{csp_forward.4} parent=31 // pred_region
        _
      $region36: #{csp_forward.4} parent=31 // pred_fallthru
        _
    $region32: #{csp_forward.4} parent=5 // pred_fallthru
      _
    %p3580 = scmp.le.s32.totalorder 2, %s9
    // Predicated region
    $region37: #{csp_forward.4} parent=5 // pred_check
      %p3581 = pneg %p3580
    $region38: #{csp_forward.4} parent=5 // pred_check_branch
      %3583 = sbr.rel (%p3581) target = $region40
    $region39: #{csp_forward.4} parent=5 // pred_region
      %s3584 = ssub.s32 %s9, 2
      // Predicated region
      $region41: #{csp_forward.4} parent=39 // pred_check
        %p3585 = pneg %p122
      $region42: #{csp_forward.4} parent=39 // pred_check_branch
        %3587 = sbr.rel (%p3585) target = $region44
      $region43: #{csp_forward.4} parent=39 // pred_region
        %p3588 = scmp.lt.s32.totalorder %s20, 1
        %s3589 = scalar_select %p3588, %s20, 1
        %p3590 = scmp.lt.s32.totalorder %s21, 0
        %s3591 = scalar_select %p3590, %s21, 0
        %s3592 = smul.addr %s3591, 32
        %s3593 = smul.addr %s3589, 32
        %s3594 = sadd.s32 %s3592, %s3593
        %s3595 = smul.addr %s3594, 4
        %s3596 = scalar_lea.vmem %s3, %s3595
      $region44: #{csp_forward.4} parent=39 // pred_fallthru
        _
    $region40: #{csp_forward.4} parent=5 // pred_fallthru
      _
  $region6: #{csp_forward.4} parent=0 // loop_footer
    %s13 = sadd.s32 1, %s9
  $region7: #{csp_forward.4} parent=0 // loop_footer_branch
    %8 = sbr.rel target = $region3
  $region8: #{csp_forward.4} parent=0 // loop_exit
    _

// kernel: csp_forward.5
$region0: #{csp_forward.5}
  #allocation0 [shape = 'u32[]', space=smem, size = 0x4, offset = 0x4, fixed_abs, tag = 'smem constant byte address 0x4 - core index']
  #allocation1 [shape = 'u32[144,128]{1,0:T(1,128)}', space=vmem, size = 0x12000, scoped, tag = 'internal scratch']
  %s0 = inlined_call_operand.vmem [shape: bf16[2,1,18,18,128], index: 0, kind: input, shape index: {}]
  %s1 = inlined_call_operand.vmem [shape: bf16[1152,128], index: 1, kind: input, shape index: {}]
  %s2 = inlined_call_operand.vmem [shape: f32[1,128], index: 2, kind: input, shape index: {}]
  %s3 = inlined_call_operand.vmem [shape: bf16[2,1,16,16,128], index: 3, kind: input, shape index: {}]
  %s4 = inlined_call_operand.vmem [shape: bf16[2,1,16,16,128], index: 4, kind: input, shape index: {}]
  %s5 = inlined_call_operand.vmem [shape: bf16[128,128], index: 5, kind: input, shape index: {}]
  %s6 = inlined_call_operand.vmem [shape: bf16[128,128], index: 6, kind: input, shape index: {}]
  %s7 = inlined_call_operand.vmem [shape: f32[1,128], index: 7, kind: input, shape index: {}]
  %s8 = inlined_call_operand.vmem [shape: f32[2,1,16,16,128], index: 8, kind: output, shape index: {}]
  %s9 = sld [smem:[#allocation0]]
  $region65: #{csp_forward.5} parent=0
    _
  %s11 = ssub.s32 1, %s9
  %s12 = scalar_select 0, %s11, %s9
  loop: start=0, step=1, limit=4
  $region2: #{csp_forward.5} parent=0 // loop_pre_header
    _
  $region3: #{csp_forward.5} parent=0 // loop_header
    %s14 = sphi 0, %s18
    %p15 = scmp.ge.s32.totalorder %s14, 4
    %s21 = sphi 0, %s33
    %s22 = sphi 0, %s29
    %s23 = sphi 0, %s21
    %s24 = sphi 0, %s22
    %s25 = sphi 0, %s23
    %s26 = sphi 0, %s24
    %s38 = sphi 0, %s40
    %s41 = sphi 0, %s38
    %s42 = sphi 0, %s41
    %s58 = sphi 0, %s42
    %s62 = sphi 0, %s62
    %s64 = sphi 0, %s62
    %s65 = sphi 0, %s64
    %s79 = sphi 0, %s65
    %s83 = sphi 0, %s83
    %s85 = sphi 0, %s83
    %s86 = sphi 0, %s85
    %s100 = sphi 0, %s86
    %s108 = sphi 0, %s110
    %s111 = sphi 0, %s108
    %s112 = sphi 0, %s111
    %s128 = sphi 0, %s112
    %s136 = sphi 0, %s138
    %s139 = sphi 0, %s136
    %s140 = sphi 0, %s139
    %s156 = sphi 0, %s140
    %s160 = sphi 0, %s160
    %s162 = sphi 0, %s160
    %s163 = sphi 0, %s162
    %s177 = sphi 0, %s163
    %s181 = sphi 0, %s181
    %s183 = sphi 0, %s181
    %s184 = sphi 0, %s183
    %s198 = sphi 0, %s184
    %s202 = sphi 0, %s202
    %s204 = sphi 0, %s202
    %s205 = sphi 0, %s204
    %s219 = sphi 0, %s205
    %s227 = sphi 0, %s229
    %s230 = sphi 0, %s227
    %s231 = sphi 0, %s230
    %s247 = sphi 0, %s231
  $region4: #{csp_forward.5} parent=0 // loop_header_branch
    %17 = sbr.rel (%p15) target = $region8
  $region5: #{csp_forward.5} parent=0 // loop_body
    %s19 = ssub.s32 %s14, 1
    %s20 = ssub.s32 %s14, 2
    %s27 = sadd.s32 1, %s22
    %p28 = scmp.ge.s32.totalorder %s27, 1
    %s29 = scalar_select %p28, 0, %s27
    %s30 = sadd.s32 1, %s21
    %s31 = scalar_select %p28, %s30, %s21
    %p32 = scmp.ge.s32.totalorder %s31, 2
    %s33 = scalar_select %p32, 0, %s31
    %s34 = ssub.s32 %s21, %s33
    %s35 = ssub.s32 %s22, %s29
    %s36 = sor.u32 %s34, %s35
    %p37 = scmp.eq.s32.totalorder %s36, 0
    %s39 = sadd.s32 %s38, 1
    %s40 = scalar_select %p37, %s38, %s39
    %p43 = pneg %p37
    %p44 = scmp.eq.s32.totalorder %s14, 1
    %p45 = por %p43, %p44
    %p46 = scmp.ne.s32.totalorder %s38, %s41
    %p47 = scmp.eq.s32.totalorder %s14, 0
    %p48 = por %p46, %p47
    %p49 = scmp.ne.s32.totalorder %s38, %s41
    %p50 = scmp.eq.s32.totalorder %s19, 1
    %p51 = por %p49, %p50
    %p52 = scmp.ne.s32.totalorder %s41, %s42
    %p53 = scmp.eq.s32.totalorder %s19, 0
    %p54 = por %p52, %p53
    %p55 = scmp.ne.s32.totalorder %s41, %s42
    %p56 = scmp.eq.s32.totalorder %s20, 1
    %p57 = por %p55, %p56
    %p59 = scmp.ne.s32.totalorder %s42, %s58
    %p60 = scmp.eq.s32.totalorder %s20, 0
    %p61 = por %p59, %p60
    %s63 = sadd.s32 %s62, 1
    %p66 = scmp.eq.s32.totalorder %s14, 1
    %p67 = scmp.ne.s32.totalorder %s62, %s64
    %p68 = scmp.eq.s32.totalorder %s14, 0
    %p69 = por %p67, %p68
    %p70 = scmp.ne.s32.totalorder %s62, %s64
    %p71 = scmp.eq.s32.totalorder %s19, 1
    %p72 = por %p70, %p71
    %p73 = scmp.ne.s32.totalorder %s64, %s65
    %p74 = scmp.eq.s32.totalorder %s19, 0
    %p75 = por %p73, %p74
    %p76 = scmp.ne.s32.totalorder %s64, %s65
    %p77 = scmp.eq.s32.totalorder %s20, 1
    %p78 = por %p76, %p77
    %p80 = scmp.ne.s32.totalorder %s65, %s79
    %p81 = scmp.eq.s32.totalorder %s20, 0
    %p82 = por %p80, %p81
    %s84 = sadd.s32 %s83, 1
    %p87 = scmp.eq.s32.totalorder %s14, 1
    %p88 = scmp.ne.s32.totalorder %s83, %s85
    %p89 = scmp.eq.s32.totalorder %s14, 0
    %p90 = por %p88, %p89
    %p91 = scmp.ne.s32.totalorder %s83, %s85
    %p92 = scmp.eq.s32.totalorder %s19, 1
    %p93 = por %p91, %p92
    %p94 = scmp.ne.s32.totalorder %s85, %s86
    %p95 = scmp.eq.s32.totalorder %s19, 0
    %p96 = por %p94, %p95
    %p97 = scmp.ne.s32.totalorder %s85, %s86
    %p98 = scmp.eq.s32.totalorder %s20, 1
    %p99 = por %p97, %p98
    %p101 = scmp.ne.s32.totalorder %s86, %s100
    %p102 = scmp.eq.s32.totalorder %s20, 0
    %p103 = por %p101, %p102
    %s104 = ssub.s32 %s21, %s33
    %s105 = ssub.s32 %s22, %s29
    %s106 = sor.u32 %s104, %s105
    %p107 = scmp.eq.s32.totalorder %s106, 0
    %s109 = sadd.s32 %s108, 1
    %s110 = scalar_select %p107, %s108, %s109
    %p113 = pneg %p107
    %p114 = scmp.eq.s32.totalorder %s14, 1
    %p115 = por %p113, %p114
    %p116 = scmp.ne.s32.totalorder %s108, %s111
    %p117 = scmp.eq.s32.totalorder %s14, 0
    %p118 = por %p116, %p117
    %p119 = scmp.ne.s32.totalorder %s108, %s111
    %p120 = scmp.eq.s32.totalorder %s19, 1
    %p121 = por %p119, %p120
    %p122 = scmp.ne.s32.totalorder %s111, %s112
    %p123 = scmp.eq.s32.totalorder %s19, 0
    %p124 = por %p122, %p123
    %p125 = scmp.ne.s32.totalorder %s111, %s112
    %p126 = scmp.eq.s32.totalorder %s20, 1
    %p127 = por %p125, %p126
    %p129 = scmp.ne.s32.totalorder %s112, %s128
    %p130 = scmp.eq.s32.totalorder %s20, 0
    %p131 = por %p129, %p130
    %s132 = ssub.s32 %s21, %s33
    %s133 = ssub.s32 %s22, %s29
    %s134 = sor.u32 %s132, %s133
    %p135 = scmp.eq.s32.totalorder %s134, 0
    %s137 = sadd.s32 %s136, 1
    %s138 = scalar_select %p135, %s136, %s137
    %p141 = pneg %p135
    %p142 = scmp.eq.s32.totalorder %s14, 1
    %p143 = por %p141, %p142
    %p144 = scmp.ne.s32.totalorder %s136, %s139
    %p145 = scmp.eq.s32.totalorder %s14, 0
    %p146 = por %p144, %p145
    %p147 = scmp.ne.s32.totalorder %s136, %s139
    %p148 = scmp.eq.s32.totalorder %s19, 1
    %p149 = por %p147, %p148
    %p150 = scmp.ne.s32.totalorder %s139, %s140
    %p151 = scmp.eq.s32.totalorder %s19, 0
    %p152 = por %p150, %p151
    %p153 = scmp.ne.s32.totalorder %s139, %s140
    %p154 = scmp.eq.s32.totalorder %s20, 1
    %p155 = por %p153, %p154
    %p157 = scmp.ne.s32.totalorder %s140, %s156
    %p158 = scmp.eq.s32.totalorder %s20, 0
    %p159 = por %p157, %p158
    %s161 = sadd.s32 %s160, 1
    %p164 = scmp.eq.s32.totalorder %s14, 1
    %p165 = scmp.ne.s32.totalorder %s160, %s162
    %p166 = scmp.eq.s32.totalorder %s14, 0
    %p167 = por %p165, %p166
    %p168 = scmp.ne.s32.totalorder %s160, %s162
    %p169 = scmp.eq.s32.totalorder %s19, 1
    %p170 = por %p168, %p169
    %p171 = scmp.ne.s32.totalorder %s162, %s163
    %p172 = scmp.eq.s32.totalorder %s19, 0
    %p173 = por %p171, %p172
    %p174 = scmp.ne.s32.totalorder %s162, %s163
    %p175 = scmp.eq.s32.totalorder %s20, 1
    %p176 = por %p174, %p175
    %p178 = scmp.ne.s32.totalorder %s163, %s177
    %p179 = scmp.eq.s32.totalorder %s20, 0
    %p180 = por %p178, %p179
    %s182 = sadd.s32 %s181, 1
    %p185 = scmp.eq.s32.totalorder %s14, 1
    %p186 = scmp.ne.s32.totalorder %s181, %s183
    %p187 = scmp.eq.s32.totalorder %s14, 0
    %p188 = por %p186, %p187
    %p189 = scmp.ne.s32.totalorder %s181, %s183
    %p190 = scmp.eq.s32.totalorder %s19, 1
    %p191 = por %p189, %p190
    %p192 = scmp.ne.s32.totalorder %s183, %s184
    %p193 = scmp.eq.s32.totalorder %s19, 0
    %p194 = por %p192, %p193
    %p195 = scmp.ne.s32.totalorder %s183, %s184
    %p196 = scmp.eq.s32.totalorder %s20, 1
    %p197 = por %p195, %p196
    %p199 = scmp.ne.s32.totalorder %s184, %s198
    %p200 = scmp.eq.s32.totalorder %s20, 0
    %p201 = por %p199, %p200
    %s203 = sadd.s32 %s202, 1
    %p206 = scmp.eq.s32.totalorder %s14, 1
    %p207 = scmp.ne.s32.totalorder %s202, %s204
    %p208 = scmp.eq.s32.totalorder %s14, 0
    %p209 = por %p207, %p208
    %p210 = scmp.ne.s32.totalorder %s202, %s204
    %p211 = scmp.eq.s32.totalorder %s19, 1
    %p212 = por %p210, %p211
    %p213 = scmp.ne.s32.totalorder %s204, %s205
    %p214 = scmp.eq.s32.totalorder %s19, 0
    %p215 = por %p213, %p214
    %p216 = scmp.ne.s32.totalorder %s204, %s205
    %p217 = scmp.eq.s32.totalorder %s20, 1
    %p218 = por %p216, %p217
    %p220 = scmp.ne.s32.totalorder %s205, %s219
    %p221 = scmp.eq.s32.totalorder %s20, 0
    %p222 = por %p220, %p221
    %s223 = ssub.s32 %s21, %s33
    %s224 = ssub.s32 %s22, %s29
    %s225 = sor.u32 %s223, %s224
    %p226 = scmp.eq.s32.totalorder %s225, 0
    %s228 = sadd.s32 %s227, 1
    %s229 = scalar_select %p226, %s227, %s228
    %p232 = pneg %p226
    %p233 = scmp.eq.s32.totalorder %s14, 1
    %p234 = por %p232, %p233
    %p235 = scmp.ne.s32.totalorder %s227, %s230
    %p236 = scmp.eq.s32.totalorder %s14, 0
    %p237 = por %p235, %p236
    %p238 = scmp.ne.s32.totalorder %s227, %s230
    %p239 = scmp.eq.s32.totalorder %s19, 1
    %p240 = por %p238, %p239
    %p241 = scmp.ne.s32.totalorder %s230, %s231
    %p242 = scmp.eq.s32.totalorder %s19, 0
    %p243 = por %p241, %p242
    %p244 = scmp.ne.s32.totalorder %s230, %s231
    %p245 = scmp.eq.s32.totalorder %s20, 1
    %p246 = por %p244, %p245
    %p248 = scmp.ne.s32.totalorder %s231, %s247
    %p249 = scmp.eq.s32.totalorder %s20, 0
    %p250 = por %p248, %p249
    %p251 = scmp.le.s32.totalorder 1, %s14
    %p252 = scmp.lt.s32.totalorder %s14, 3
    %p253 = pnand %p251, %p252
    %p254 = pneg %p253
    // Predicated region
    $region9: #{csp_forward.5} parent=5 // pred_check
      _
    $region10: #{csp_forward.5} parent=5 // pred_check_branch
      %256 = sbr.rel (%p253) target = $region12
    $region11: #{csp_forward.5} parent=5 // pred_region
      %s257 = ssub.s32 %s14, 1
      // Predicated region
      $region13: #{csp_forward.5} parent=11 // pred_check
        %p258 = pneg %p75
      $region14: #{csp_forward.5} parent=11 // pred_check_branch
        %260 = sbr.rel (%p258) target = $region16
      $region15: #{csp_forward.5} parent=11 // pred_region
        _
      $region16: #{csp_forward.5} parent=11 // pred_fallthru
        _
      // Predicated region
      $region17: #{csp_forward.5} parent=11 // pred_check
        %p261 = pneg %p96
      $region18: #{csp_forward.5} parent=11 // pred_check_branch
        %263 = sbr.rel (%p261) target = $region20
      $region19: #{csp_forward.5} parent=11 // pred_region
        _
      $region20: #{csp_forward.5} parent=11 // pred_fallthru
        _
      // Predicated region
      $region21: #{csp_forward.5} parent=11 // pred_check
        %p264 = pneg %p173
      $region22: #{csp_forward.5} parent=11 // pred_check_branch
        %266 = sbr.rel (%p264) target = $region24
      $region23: #{csp_forward.5} parent=11 // pred_region
        _
      $region24: #{csp_forward.5} parent=11 // pred_fallthru
        _
      // Predicated region
      $region25: #{csp_forward.5} parent=11 // pred_check
        %p267 = pneg %p194
      $region26: #{csp_forward.5} parent=11 // pred_check_branch
        %269 = sbr.rel (%p267) target = $region28
      $region27: #{csp_forward.5} parent=11 // pred_region
        _
      $region28: #{csp_forward.5} parent=11 // pred_fallthru
        _
      // Predicated region
      $region29: #{csp_forward.5} parent=11 // pred_check
        %p270 = pneg %p215
      $region30: #{csp_forward.5} parent=11 // pred_check_branch
        %272 = sbr.rel (%p270) target = $region32
      $region31: #{csp_forward.5} parent=11 // pred_region
        _
      $region32: #{csp_forward.5} parent=11 // pred_fallthru
        _
    $region12: #{csp_forward.5} parent=5 // pred_fallthru
      _
    %p273 = scmp.lt.s32.totalorder %s14, 2
    // Predicated region
    $region33: #{csp_forward.5} parent=5 // pred_check
      %p274 = pneg %p273
    $region34: #{csp_forward.5} parent=5 // pred_check_branch
      %276 = sbr.rel (%p274) target = $region36
    $region35: #{csp_forward.5} parent=5 // pred_region
      // Predicated region
      $region37: #{csp_forward.5} parent=35 // pred_check
        %p277 = pneg %p48
      $region38: #{csp_forward.5} parent=35 // pred_check_branch
        %279 = sbr.rel (%p277) target = $region40
      $region39: #{csp_forward.5} parent=35 // pred_region
        %p280 = scmp.lt.s32.totalorder %s21, 1
        %s281 = scalar_select %p280, %s21, 1
        %p282 = scmp.lt.s32.totalorder %s22, 0
        %s283 = scalar_select %p282, %s22, 0
        %s284 = smul.addr %s283, 54
        %s285 = smul.addr %s281, 54
        %s286 = sadd.s32 %s284, %s285
        %s287 = smul.addr %s286, 4
        %s288 = scalar_lea.vmem %s0, %s287
      $region40: #{csp_forward.5} parent=35 // pred_fallthru
        _
      // Predicated region
      $region41: #{csp_forward.5} parent=35 // pred_check
        %p289 = pneg %p118
      $region42: #{csp_forward.5} parent=35 // pred_check_branch
        %291 = sbr.rel (%p289) target = $region44
      $region43: #{csp_forward.5} parent=35 // pred_region
        %p292 = scmp.lt.s32.totalorder %s21, 1
        %s293 = scalar_select %p292, %s21, 1
        %p294 = scmp.lt.s32.totalorder %s22, 0
        %s295 = scalar_select %p294, %s22, 0
        %s296 = smul.addr %s295, 32
        %s297 = smul.addr %s293, 32
        %s298 = sadd.s32 %s296, %s297
        %s299 = smul.addr %s298, 4
        %s300 = scalar_lea.vmem %s3, %s299
      $region44: #{csp_forward.5} parent=35 // pred_fallthru
        _
      // Predicated region
      $region45: #{csp_forward.5} parent=35 // pred_check
        %p301 = pneg %p146
      $region46: #{csp_forward.5} parent=35 // pred_check_branch
        %303 = sbr.rel (%p301) target = $region48
      $region47: #{csp_forward.5} parent=35 // pred_region
        %p304 = scmp.lt.s32.totalorder %s21, 1
        %s305 = scalar_select %p304, %s21, 1
        %p306 = scmp.lt.s32.totalorder %s22, 0
        %s307 = scalar_select %p306, %s22, 0
        %s308 = smul.addr %s307, 32
        %s309 = smul.addr %s305, 32
        %s310 = sadd.s32 %s308, %s309
        %s311 = smul.addr %s310, 4
        %s312 = scalar_lea.vmem %s4, %s311
      $region48: #{csp_forward.5} parent=35 // pred_fallthru
        _
    $region36: #{csp_forward.5} parent=5 // pred_fallthru
      _
    %p313 = scmp.le.s32.totalorder 1, %s14
    %p314 = scmp.lt.s32.totalorder %s14, 3
    %p315 = pnand %p313, %p314
    %p316 = pneg %p315
    // Predicated region
    $region49: #{csp_forward.5} parent=5 // pred_check
      _
    $region50: #{csp_forward.5} parent=5 // pred_check_branch
      %318 = sbr.rel (%p315) target = $region52
    $region51: #{csp_forward.5} parent=5 // pred_region
      %s319 = ssub.s32 %s14, 1
      %p320 = scmp.lt.s32.totalorder %s23, 1
      %s321 = scalar_select %p320, %s23, 1
      %p322 = scmp.lt.s32.totalorder %s24, 0
      %s323 = scalar_select %p322, %s24, 0
      %s324 = smul.addr %s323, 54
      %s325 = smul.addr %s321, 54
      %s326 = sadd.s32 %s324, %s325
      %s327 = smul.addr %s326, 4
      %s328 = scalar_lea.vmem %s0, %s327
      %p329 = pneg %p54
      %p330 = pneg %p51
      %p331 = pneg %p75
      %p332 = pneg %p72
      %p333 = pneg %p96
      %p334 = pneg %p93
      %p335 = scmp.lt.s32.totalorder %s23, 1
      %s336 = scalar_select %p335, %s23, 1
      %p337 = scmp.lt.s32.totalorder %s24, 0
      %s338 = scalar_select %p337, %s24, 0
      %s339 = smul.addr %s338, 32
      %s340 = smul.addr %s336, 32
      %s341 = sadd.s32 %s339, %s340
      %s342 = smul.addr %s341, 4
      %s343 = scalar_lea.vmem %s3, %s342
      %p344 = pneg %p124
      %p345 = pneg %p121
      %p346 = scmp.lt.s32.totalorder %s23, 1
      %s347 = scalar_select %p346, %s23, 1
      %p348 = scmp.lt.s32.totalorder %s24, 0
      %s349 = scalar_select %p348, %s24, 0
      %s350 = smul.addr %s349, 32
      %s351 = smul.addr %s347, 32
      %s352 = sadd.s32 %s350, %s351
      %s353 = smul.addr %s352, 4
      %s354 = scalar_lea.vmem %s4, %s353
      %p355 = pneg %p152
      %p356 = pneg %p149
      %p357 = pneg %p173
      %p358 = pneg %p170
      %p359 = pneg %p194
      %p360 = pneg %p191
      %p361 = pneg %p215
      %p362 = pneg %p212
      %p363 = pneg %p243
      %p364 = pneg %p240
      %p365 = scmp.lt.s32.totalorder %s23, 1
      %s366 = scalar_select %p365, %s23, 1
      %p367 = scmp.lt.s32.totalorder %s24, 0
      %s368 = scalar_select %p367, %s24, 0
      %s369 = smul.addr %s368, 32
      %s370 = smul.addr %s366, 32
      %s371 = sadd.s32 %s369, %s370
      %s372 = smul.addr %s371, 8
      %s373 = scalar_lea.vmem %s8, %s372
      %p374 = scmp.lt.s32.totalorder %s23, 1
      %s375 = scalar_select %p374, %s23, 1
      %p376 = scmp.lt.s32.totalorder %s24, 0
      %s377 = scalar_select %p376, %s24, 0
      %s378 = smul.addr %s377, 54
      %s379 = smul.addr %s375, 54
      %s380 = sadd.s32 %s378, %s379
      %s381 = smul.addr %s380, 4
      %s382 = scalar_lea.vmem %s0, %s381
      %p383 = scmp.lt.s32.totalorder %s23, 1
      %s384 = scalar_select %p383, %s23, 1
      %p385 = scmp.lt.s32.totalorder %s24, 0
      %s386 = scalar_select %p385, %s24, 0
      %s387 = smul.addr %s386, 32
      %s388 = smul.addr %s384, 32
      %s389 = sadd.s32 %s387, %s388
      %s390 = smul.addr %s389, 4
      %s391 = scalar_lea.vmem %s3, %s390
      %p392 = scmp.lt.s32.totalorder %s23, 1
      %s393 = scalar_select %p392, %s23, 1
      %p394 = scmp.lt.s32.totalorder %s24, 0
      %s395 = scalar_select %p394, %s24, 0
      %s396 = smul.addr %s395, 32
      %s397 = smul.addr %s393, 32
      %s398 = sadd.s32 %s396, %s397
      %s399 = smul.addr %s398, 4
      %s400 = scalar_lea.vmem %s4, %s399
      %p401 = scmp.lt.s32.totalorder %s23, 1
      %s402 = scalar_select %p401, %s23, 1
      %p403 = scmp.lt.s32.totalorder %s24, 0
      %s404 = scalar_select %p403, %s24, 0
      %s405 = smul.addr %s404, 32
      %s406 = smul.addr %s402, 32
      %s407 = sadd.s32 %s405, %s406
      %s408 = smul.addr %s407, 8
      %s409 = scalar_lea.vmem %s8, %s408
      %v411 = vld [vmem:[%s382] sm:$0xf]
      %v412 = vld [vmem:[%s382 + $0x4] sm:$0xf]
      %v413 = vld [vmem:[%s382 + $0xc] sm:$0xf]
      %v414 = vld [vmem:[%s382 + $0x10] sm:$0xf]
      %v415 = vld [vmem:[%s382 + $0x18] sm:$0xf]
      %v416 = vld [vmem:[%s382 + $0x1c] sm:$0xf]
      %v417 = vld [vmem:[%s382 + $0x24] sm:$0xf]
      %v418 = vld [vmem:[%s382 + $0x28] sm:$0xf]
      %v419 = vld [vmem:[%s382 + $0x30] sm:$0xf]
      %v420 = vld [vmem:[%s382 + $0x34] sm:$0xf]
      %v421 = vld [vmem:[%s382 + $0x3c] sm:$0xf]
      %v422 = vld [vmem:[%s382 + $0x40] sm:$0xf]
      %v423 = vld [vmem:[%s382 + $0x48] sm:$0xf]
      %v424 = vld [vmem:[%s382 + $0x4c] sm:$0xf]
      %v425 = vld [vmem:[%s382 + $0x54] sm:$0xf]
      %v426 = vld [vmem:[%s382 + $0x58] sm:$0xf]
      %v427 = vld [vmem:[%s382 + $0x60] sm:$0xf]
      %v428 = vld [vmem:[%s382 + $0x64] sm:$0xf]
      %v429 = vld [vmem:[%s382 + $0x6c] sm:$0xf]
      %v430 = vld [vmem:[%s382 + $0x70] sm:$0xf]
      %v431 = vld [vmem:[%s382 + $0x78] sm:$0xf]
      %v432 = vld [vmem:[%s382 + $0x7c] sm:$0xf]
      %v433 = vld [vmem:[%s382 + $0x84] sm:$0xf]
      %v434 = vld [vmem:[%s382 + $0x88] sm:$0xf]
      %v435 = vld [vmem:[%s382 + $0x90] sm:$0xf]
      %v436 = vld [vmem:[%s382 + $0x94] sm:$0xf]
      %v437 = vld [vmem:[%s382 + $0x9c] sm:$0xf]
      %v438 = vld [vmem:[%s382 + $0xa0] sm:$0xf]
      %v439 = vld [vmem:[%s382 + $0xa8] sm:$0xf]
      %v440 = vld [vmem:[%s382 + $0xac] sm:$0xf]
      %v441 = vld [vmem:[%s382 + $0xb4] sm:$0xf]
      %v442 = vld [vmem:[%s382 + $0xb8] sm:$0xf]
      %v443 = vld [vmem:[%s382 + $0x8] sm:$0x1]
      %v444 = vld [vmem:[%s382 + $0x14] sm:$0x1]
      %v445 = vld [vmem:[%s382 + $0x20] sm:$0x1]
      %v446 = vld [vmem:[%s382 + $0x2c] sm:$0x1]
      %v447 = vld [vmem:[%s382 + $0x38] sm:$0x1]
      %v448 = vld [vmem:[%s382 + $0x44] sm:$0x1]
      %v449 = vld [vmem:[%s382 + $0x50] sm:$0x1]
      %v450 = vld [vmem:[%s382 + $0x5c] sm:$0x1]
      %v451 = vld [vmem:[%s382 + $0x68] sm:$0x1]
      %v452 = vld [vmem:[%s382 + $0x74] sm:$0x1]
      %v453 = vld [vmem:[%s382 + $0x80] sm:$0x1]
      %v454 = vld [vmem:[%s382 + $0x8c] sm:$0x1]
      %v455 = vld [vmem:[%s382 + $0x98] sm:$0x1]
      %v456 = vld [vmem:[%s382 + $0xa4] sm:$0x1]
      %v457 = vld [vmem:[%s382 + $0xb0] sm:$0x1]
      %v458 = vld [vmem:[%s382 + $0xbc] sm:$0x1]
      %v459 = vld [vmem:[%s382] sm:$0xe]
      %v460 = vld [vmem:[%s382 + $0xc] sm:$0xe]
      %v461 = vld [vmem:[%s382 + $0x18] sm:$0xe]
      %v462 = vld [vmem:[%s382 + $0x24] sm:$0xe]
      %v463 = vld [vmem:[%s382 + $0x30] sm:$0xe]
      %v464 = vld [vmem:[%s382 + $0x3c] sm:$0xe]
      %v465 = vld [vmem:[%s382 + $0x48] sm:$0xe]
      %v466 = vld [vmem:[%s382 + $0x54] sm:$0xe]
      %v467 = vld [vmem:[%s382 + $0x60] sm:$0xe]
      %v468 = vld [vmem:[%s382 + $0x6c] sm:$0xe]
      %v469 = vld [vmem:[%s382 + $0x78] sm:$0xe]
      %v470 = vld [vmem:[%s382 + $0x84] sm:$0xe]
      %v471 = vld [vmem:[%s382 + $0x90] sm:$0xe]
      %v472 = vld [vmem:[%s382 + $0x9c] sm:$0xe]
      %v473 = vld [vmem:[%s382 + $0xa8] sm:$0xe]
      %v474 = vld [vmem:[%s382 + $0xb4] sm:$0xe]
      %s475 = scalar_lea.vmem %s382, 12
      %v476 = vld [vmem:[%s475] sm:$0xf]
      %v477 = vld [vmem:[%s475 + $0x4] sm:$0xf]
      %v478 = vld [vmem:[%s475 + $0xc] sm:$0xf]
      %v479 = vld [vmem:[%s475 + $0x10] sm:$0xf]
      %v480 = vld [vmem:[%s475 + $0x18] sm:$0xf]
      %v481 = vld [vmem:[%s475 + $0x1c] sm:$0xf]
      %v482 = vld [vmem:[%s475 + $0x24] sm:$0xf]
      %v483 = vld [vmem:[%s475 + $0x28] sm:$0xf]
      %v484 = vld [vmem:[%s475 + $0x30] sm:$0xf]
      %v485 = vld [vmem:[%s475 + $0x34] sm:$0xf]
      %v486 = vld [vmem:[%s475 + $0x3c] sm:$0xf]
      %v487 = vld [vmem:[%s475 + $0x40] sm:$0xf]
      %v488 = vld [vmem:[%s475 + $0x48] sm:$0xf]
      %v489 = vld [vmem:[%s475 + $0x4c] sm:$0xf]
      %v490 = vld [vmem:[%s475 + $0x54] sm:$0xf]
      %v491 = vld [vmem:[%s475 + $0x58] sm:$0xf]
      %v492 = vld [vmem:[%s475 + $0x60] sm:$0xf]
      %v493 = vld [vmem:[%s475 + $0x64] sm:$0xf]
      %v494 = vld [vmem:[%s475 + $0x6c] sm:$0xf]
      %v495 = vld [vmem:[%s475 + $0x70] sm:$0xf]
      %v496 = vld [vmem:[%s475 + $0x78] sm:$0xf]
      %v497 = vld [vmem:[%s475 + $0x7c] sm:$0xf]
      %v498 = vld [vmem:[%s475 + $0x84] sm:$0xf]
      %v499 = vld [vmem:[%s475 + $0x88] sm:$0xf]
      %v500 = vld [vmem:[%s475 + $0x90] sm:$0xf]
      %v501 = vld [vmem:[%s475 + $0x94] sm:$0xf]
      %v502 = vld [vmem:[%s475 + $0x9c] sm:$0xf]
      %v503 = vld [vmem:[%s475 + $0xa0] sm:$0xf]
      %v504 = vld [vmem:[%s475 + $0xa8] sm:$0xf]
      %v505 = vld [vmem:[%s475 + $0xac] sm:$0xf]
      %v506 = vld [vmem:[%s475 + $0xb4] sm:$0xf]
      %v507 = vld [vmem:[%s475 + $0xb8] sm:$0xf]
      %v508 = vld [vmem:[%s475 + $0x8] sm:$0x1]
      %v509 = vld [vmem:[%s475 + $0x14] sm:$0x1]
      %v510 = vld [vmem:[%s475 + $0x20] sm:$0x1]
      %v511 = vld [vmem:[%s475 + $0x2c] sm:$0x1]
      %v512 = vld [vmem:[%s475 + $0x38] sm:$0x1]
      %v513 = vld [vmem:[%s475 + $0x44] sm:$0x1]
      %v514 = vld [vmem:[%s475 + $0x50] sm:$0x1]
      %v515 = vld [vmem:[%s475 + $0x5c] sm:$0x1]
      %v516 = vld [vmem:[%s475 + $0x68] sm:$0x1]
      %v517 = vld [vmem:[%s475 + $0x74] sm:$0x1]
      %v518 = vld [vmem:[%s475 + $0x80] sm:$0x1]
      %v519 = vld [vmem:[%s475 + $0x8c] sm:$0x1]
      %v520 = vld [vmem:[%s475 + $0x98] sm:$0x1]
      %v521 = vld [vmem:[%s475 + $0xa4] sm:$0x1]
      %v522 = vld [vmem:[%s475 + $0xb0] sm:$0x1]
      %v523 = vld [vmem:[%s475 + $0xbc] sm:$0x1]
      %v524 = vld [vmem:[%s475] sm:$0xe]
      %v525 = vld [vmem:[%s475 + $0xc] sm:$0xe]
      %v526 = vld [vmem:[%s475 + $0x18] sm:$0xe]
      %v527 = vld [vmem:[%s475 + $0x24] sm:$0xe]
      %v528 = vld [vmem:[%s475 + $0x30] sm:$0xe]
      %v529 = vld [vmem:[%s475 + $0x3c] sm:$0xe]
      %v530 = vld [vmem:[%s475 + $0x48] sm:$0xe]
      %v531 = vld [vmem:[%s475 + $0x54] sm:$0xe]
      %v532 = vld [vmem:[%s475 + $0x60] sm:$0xe]
      %v533 = vld [vmem:[%s475 + $0x6c] sm:$0xe]
      %v534 = vld [vmem:[%s475 + $0x78] sm:$0xe]
      %v535 = vld [vmem:[%s475 + $0x84] sm:$0xe]
      %v536 = vld [vmem:[%s475 + $0x90] sm:$0xe]
      %v537 = vld [vmem:[%s475 + $0x9c] sm:$0xe]
      %v538 = vld [vmem:[%s475 + $0xa8] sm:$0xe]
      %v539 = vld [vmem:[%s475 + $0xb4] sm:$0xe]
      %s540 = scalar_lea.vmem %s382, 24
      %v541 = vld [vmem:[%s540] sm:$0xf]
      %v542 = vld [vmem:[%s540 + $0x4] sm:$0xf]
      %v543 = vld [vmem:[%s540 + $0xc] sm:$0xf]
      %v544 = vld [vmem:[%s540 + $0x10] sm:$0xf]
      %v545 = vld [vmem:[%s540 + $0x18] sm:$0xf]
      %v546 = vld [vmem:[%s540 + $0x1c] sm:$0xf]
      %v547 = vld [vmem:[%s540 + $0x24] sm:$0xf]
      %v548 = vld [vmem:[%s540 + $0x28] sm:$0xf]
      %v549 = vld [vmem:[%s540 + $0x30] sm:$0xf]
      %v550 = vld [vmem:[%s540 + $0x34] sm:$0xf]
      %v551 = vld [vmem:[%s540 + $0x3c] sm:$0xf]
      %v552 = vld [vmem:[%s540 + $0x40] sm:$0xf]
      %v553 = vld [vmem:[%s540 + $0x48] sm:$0xf]
      %v554 = vld [vmem:[%s540 + $0x4c] sm:$0xf]
      %v555 = vld [vmem:[%s540 + $0x54] sm:$0xf]
      %v556 = vld [vmem:[%s540 + $0x58] sm:$0xf]
      %v557 = vld [vmem:[%s540 + $0x60] sm:$0xf]
      %v558 = vld [vmem:[%s540 + $0x64] sm:$0xf]
      %v559 = vld [vmem:[%s540 + $0x6c] sm:$0xf]
      %v560 = vld [vmem:[%s540 + $0x70] sm:$0xf]
      %v561 = vld [vmem:[%s540 + $0x78] sm:$0xf]
      %v562 = vld [vmem:[%s540 + $0x7c] sm:$0xf]
      %v563 = vld [vmem:[%s540 + $0x84] sm:$0xf]
      %v564 = vld [vmem:[%s540 + $0x88] sm:$0xf]
      %v565 = vld [vmem:[%s540 + $0x90] sm:$0xf]
      %v566 = vld [vmem:[%s540 + $0x94] sm:$0xf]
      %v567 = vld [vmem:[%s540 + $0x9c] sm:$0xf]
      %v568 = vld [vmem:[%s540 + $0xa0] sm:$0xf]
      %v569 = vld [vmem:[%s540 + $0xa8] sm:$0xf]
      %v570 = vld [vmem:[%s540 + $0xac] sm:$0xf]
      %v571 = vld [vmem:[%s540 + $0xb4] sm:$0xf]
      %v572 = vld [vmem:[%s540 + $0xb8] sm:$0xf]
      %v573 = vld [vmem:[%s540 + $0x8] sm:$0x1]
      %v574 = vld [vmem:[%s540 + $0x14] sm:$0x1]
      %v575 = vld [vmem:[%s540 + $0x20] sm:$0x1]
      %v576 = vld [vmem:[%s540 + $0x2c] sm:$0x1]
      %v577 = vld [vmem:[%s540 + $0x38] sm:$0x1]
      %v578 = vld [vmem:[%s540 + $0x44] sm:$0x1]
      %v579 = vld [vmem:[%s540 + $0x50] sm:$0x1]
      %v580 = vld [vmem:[%s540 + $0x5c] sm:$0x1]
      %v581 = vld [vmem:[%s540 + $0x68] sm:$0x1]
      %v582 = vld [vmem:[%s540 + $0x74] sm:$0x1]
      %v583 = vld [vmem:[%s540 + $0x80] sm:$0x1]
      %v584 = vld [vmem:[%s540 + $0x8c] sm:$0x1]
      %v585 = vld [vmem:[%s540 + $0x98] sm:$0x1]
      %v586 = vld [vmem:[%s540 + $0xa4] sm:$0x1]
      %v587 = vld [vmem:[%s540 + $0xb0] sm:$0x1]
      %v588 = vld [vmem:[%s540 + $0xbc] sm:$0x1]
      %v589 = vld [vmem:[%s540] sm:$0xe]
      %v590 = vld [vmem:[%s540 + $0xc] sm:$0xe]
      %v591 = vld [vmem:[%s540 + $0x18] sm:$0xe]
      %v592 = vld [vmem:[%s540 + $0x24] sm:$0xe]
      %v593 = vld [vmem:[%s540 + $0x30] sm:$0xe]
      %v594 = vld [vmem:[%s540 + $0x3c] sm:$0xe]
      %v595 = vld [vmem:[%s540 + $0x48] sm:$0xe]
      %v596 = vld [vmem:[%s540 + $0x54] sm:$0xe]
      %v597 = vld [vmem:[%s540 + $0x60] sm:$0xe]
      %v598 = vld [vmem:[%s540 + $0x6c] sm:$0xe]
      %v599 = vld [vmem:[%s540 + $0x78] sm:$0xe]
      %v600 = vld [vmem:[%s540 + $0x84] sm:$0xe]
      %v601 = vld [vmem:[%s540 + $0x90] sm:$0xe]
      %v602 = vld [vmem:[%s540 + $0x9c] sm:$0xe]
      %v603 = vld [vmem:[%s540 + $0xa8] sm:$0xe]
      %v604 = vld [vmem:[%s540 + $0xb4] sm:$0xe]
      %v637 = vunpack.c.l.b16 %v411
      %v638 = vunpack.c.l.b16 %v412
      %v639 = vunpack.c.l.b16 %v413
      %v640 = vunpack.c.l.b16 %v414
      %v641 = vunpack.c.l.b16 %v415
      %v642 = vunpack.c.l.b16 %v416
      %v643 = vunpack.c.l.b16 %v417
      %v644 = vunpack.c.l.b16 %v418
      %v645 = vunpack.c.l.b16 %v419
      %v646 = vunpack.c.l.b16 %v420
      %v647 = vunpack.c.l.b16 %v421
      %v648 = vunpack.c.l.b16 %v422
      %v649 = vunpack.c.l.b16 %v423
      %v650 = vunpack.c.l.b16 %v424
      %v651 = vunpack.c.l.b16 %v425
      %v652 = vunpack.c.l.b16 %v426
      %v653 = vunpack.c.l.b16 %v427
      %v654 = vunpack.c.l.b16 %v428
      %v655 = vunpack.c.l.b16 %v429
      %v656 = vunpack.c.l.b16 %v430
      %v657 = vunpack.c.l.b16 %v431
      %v658 = vunpack.c.l.b16 %v432
      %v659 = vunpack.c.l.b16 %v433
      %v660 = vunpack.c.l.b16 %v434
      %v661 = vunpack.c.l.b16 %v435
      %v662 = vunpack.c.l.b16 %v436
      %v663 = vunpack.c.l.b16 %v437
      %v664 = vunpack.c.l.b16 %v438
      %v665 = vunpack.c.l.b16 %v439
      %v666 = vunpack.c.l.b16 %v440
      %v667 = vunpack.c.l.b16 %v441
      %v668 = vunpack.c.l.b16 %v442
      %v669 = vpack.c.b16 %v638, %v637
      %v670 = vpack.c.b16 %v640, %v639
      %v671 = vpack.c.b16 %v642, %v641
      %v672 = vpack.c.b16 %v644, %v643
      %v673 = vpack.c.b16 %v646, %v645
      %v674 = vpack.c.b16 %v648, %v647
      %v675 = vpack.c.b16 %v650, %v649
      %v676 = vpack.c.b16 %v652, %v651
      %v677 = vpack.c.b16 %v654, %v653
      %v678 = vpack.c.b16 %v656, %v655
      %v679 = vpack.c.b16 %v658, %v657
      %v680 = vpack.c.b16 %v660, %v659
      %v681 = vpack.c.b16 %v662, %v661
      %v682 = vpack.c.b16 %v664, %v663
      %v683 = vpack.c.b16 %v666, %v665
      %v684 = vpack.c.b16 %v668, %v667
      %v717 = vunpack.c.l.b16 %v443
      %v718 = vunpack.c.l.b16 %v444
      %v719 = vunpack.c.l.b16 %v445
      %v720 = vunpack.c.l.b16 %v446
      %v721 = vunpack.c.l.b16 %v447
      %v722 = vunpack.c.l.b16 %v448
      %v723 = vunpack.c.l.b16 %v449
      %v724 = vunpack.c.l.b16 %v450
      %v725 = vunpack.c.l.b16 %v451
      %v726 = vunpack.c.l.b16 %v452
      %v727 = vunpack.c.l.b16 %v453
      %v728 = vunpack.c.l.b16 %v454
      %v729 = vunpack.c.l.b16 %v455
      %v730 = vunpack.c.l.b16 %v456
      %v731 = vunpack.c.l.b16 %v457
      %v732 = vunpack.c.l.b16 %v458
      %v733 = vpack.c.b16 %v717, %v717
      %v734 = vpack.c.b16 %v718, %v718
      %v735 = vpack.c.b16 %v719, %v719
      %v736 = vpack.c.b16 %v720, %v720
      %v737 = vpack.c.b16 %v721, %v721
      %v738 = vpack.c.b16 %v722, %v722
      %v739 = vpack.c.b16 %v723, %v723
      %v740 = vpack.c.b16 %v724, %v724
      %v741 = vpack.c.b16 %v725, %v725
      %v742 = vpack.c.b16 %v726, %v726
      %v743 = vpack.c.b16 %v727, %v727
      %v744 = vpack.c.b16 %v728, %v728
      %v745 = vpack.c.b16 %v729, %v729
      %v746 = vpack.c.b16 %v730, %v730
      %v747 = vpack.c.b16 %v731, %v731
      %v748 = vpack.c.b16 %v732, %v732
      %vm749 = vsmask.f32 7424
      %v751 = vshrl.u32 %v669, 16
      %v753 = vshll.u32 %v669, 16
      %v755 = vrot.slane %v753, 1
      %v756 = vor.u32 %v751, %v755
      %v758 = vshll.u32 %v733, 16
      %v760 = vrot.slane %v758, 1
      %v761 = vsel %vm749, %v756, %v760
      %v763 = vshrl.u32 %v670, 16
      %v765 = vshll.u32 %v670, 16
      %v767 = vrot.slane %v765, 1
      %v768 = vor.u32 %v763, %v767
      %v770 = vshll.u32 %v734, 16
      %v772 = vrot.slane %v770, 1
      %v773 = vsel %vm749, %v768, %v772
      %v775 = vshrl.u32 %v671, 16
      %v777 = vshll.u32 %v671, 16
      %v779 = vrot.slane %v777, 1
      %v780 = vor.u32 %v775, %v779
      %v782 = vshll.u32 %v735, 16
      %v784 = vrot.slane %v782, 1
      %v785 = vsel %vm749, %v780, %v784
      %v787 = vshrl.u32 %v672, 16
      %v789 = vshll.u32 %v672, 16
      %v791 = vrot.slane %v789, 1
      %v792 = vor.u32 %v787, %v791
      %v794 = vshll.u32 %v736, 16
      %v796 = vrot.slane %v794, 1
      %v797 = vsel %vm749, %v792, %v796
      %v799 = vshrl.u32 %v673, 16
      %v801 = vshll.u32 %v673, 16
      %v803 = vrot.slane %v801, 1
      %v804 = vor.u32 %v799, %v803
      %v806 = vshll.u32 %v737, 16
      %v808 = vrot.slane %v806, 1
      %v809 = vsel %vm749, %v804, %v808
      %v811 = vshrl.u32 %v674, 16
      %v813 = vshll.u32 %v674, 16
      %v815 = vrot.slane %v813, 1
      %v816 = vor.u32 %v811, %v815
      %v818 = vshll.u32 %v738, 16
      %v820 = vrot.slane %v818, 1
      %v821 = vsel %vm749, %v816, %v820
      %v823 = vshrl.u32 %v675, 16
      %v825 = vshll.u32 %v675, 16
      %v827 = vrot.slane %v825, 1
      %v828 = vor.u32 %v823, %v827
      %v830 = vshll.u32 %v739, 16
      %v832 = vrot.slane %v830, 1
      %v833 = vsel %vm749, %v828, %v832
      %v835 = vshrl.u32 %v676, 16
      %v837 = vshll.u32 %v676, 16
      %v839 = vrot.slane %v837, 1
      %v840 = vor.u32 %v835, %v839
      %v842 = vshll.u32 %v740, 16
      %v844 = vrot.slane %v842, 1
      %v845 = vsel %vm749, %v840, %v844
      %v847 = vshrl.u32 %v677, 16
      %v849 = vshll.u32 %v677, 16
      %v851 = vrot.slane %v849, 1
      %v852 = vor.u32 %v847, %v851
      %v854 = vshll.u32 %v741, 16
      %v856 = vrot.slane %v854, 1
      %v857 = vsel %vm749, %v852, %v856
      %v859 = vshrl.u32 %v678, 16
      %v861 = vshll.u32 %v678, 16
      %v863 = vrot.slane %v861, 1
      %v864 = vor.u32 %v859, %v863
      %v866 = vshll.u32 %v742, 16
      %v868 = vrot.slane %v866, 1
      %v869 = vsel %vm749, %v864, %v868
      %v871 = vshrl.u32 %v679, 16
      %v873 = vshll.u32 %v679, 16
      %v875 = vrot.slane %v873, 1
      %v876 = vor.u32 %v871, %v875
      %v878 = vshll.u32 %v743, 16
      %v880 = vrot.slane %v878, 1
      %v881 = vsel %vm749, %v876, %v880
      %v883 = vshrl.u32 %v680, 16
      %v885 = vshll.u32 %v680, 16
      %v887 = vrot.slane %v885, 1
      %v888 = vor.u32 %v883, %v887
      %v890 = vshll.u32 %v744, 16
      %v892 = vrot.slane %v890, 1
      %v893 = vsel %vm749, %v888, %v892
      %v895 = vshrl.u32 %v681, 16
      %v897 = vshll.u32 %v681, 16
      %v899 = vrot.slane %v897, 1
      %v900 = vor.u32 %v895, %v899
      %v902 = vshll.u32 %v745, 16
      %v904 = vrot.slane %v902, 1
      %v905 = vsel %vm749, %v900, %v904
      %v907 = vshrl.u32 %v682, 16
      %v909 = vshll.u32 %v682, 16
      %v911 = vrot.slane %v909, 1
      %v912 = vor.u32 %v907, %v911
      %v914 = vshll.u32 %v746, 16
      %v916 = vrot.slane %v914, 1
      %v917 = vsel %vm749, %v912, %v916
      %v919 = vshrl.u32 %v683, 16
      %v921 = vshll.u32 %v683, 16
      %v923 = vrot.slane %v921, 1
      %v924 = vor.u32 %v919, %v923
      %v926 = vshll.u32 %v747, 16
      %v928 = vrot.slane %v926, 1
      %v929 = vsel %vm749, %v924, %v928
      %v931 = vshrl.u32 %v684, 16
      %v933 = vshll.u32 %v684, 16
      %v935 = vrot.slane %v933, 1
      %v936 = vor.u32 %v931, %v935
      %v938 = vshll.u32 %v748, 16
      %v940 = vrot.slane %v938, 1
      %v941 = vsel %vm749, %v936, %v940
      %v974 = vunpack.c.l.b16 %v459
      %v975 = vunpack.c.l.b16 %v460
      %v976 = vunpack.c.l.b16 %v461
      %v977 = vunpack.c.l.b16 %v462
      %v978 = vunpack.c.l.b16 %v463
      %v979 = vunpack.c.l.b16 %v464
      %v980 = vunpack.c.l.b16 %v465
      %v981 = vunpack.c.l.b16 %v466
      %v982 = vunpack.c.l.b16 %v467
      %v983 = vunpack.c.l.b16 %v468
      %v984 = vunpack.c.l.b16 %v469
      %v985 = vunpack.c.l.b16 %v470
      %v986 = vunpack.c.l.b16 %v471
      %v987 = vunpack.c.l.b16 %v472
      %v988 = vunpack.c.l.b16 %v473
      %v989 = vunpack.c.l.b16 %v474
      %v990 = vpack.c.b16 %v638, %v974
      %v991 = vpack.c.b16 %v640, %v975
      %v992 = vpack.c.b16 %v642, %v976
      %v993 = vpack.c.b16 %v644, %v977
      %v994 = vpack.c.b16 %v646, %v978
      %v995 = vpack.c.b16 %v648, %v979
      %v996 = vpack.c.b16 %v650, %v980
      %v997 = vpack.c.b16 %v652, %v981
      %v998 = vpack.c.b16 %v654, %v982
      %v999 = vpack.c.b16 %v656, %v983
      %v1000 = vpack.c.b16 %v658, %v984
      %v1001 = vpack.c.b16 %v660, %v985
      %v1002 = vpack.c.b16 %v662, %v986
      %v1003 = vpack.c.b16 %v664, %v987
      %v1004 = vpack.c.b16 %v666, %v988
      %v1005 = vpack.c.b16 %v668, %v989
      %vm1006 = vcmask 1046528
      %v1007 = vrot.slane %v990, 1
      %v1008 = vrot.slane %v733, 1
      %v1009 = vsel %vm1006, %v1007, %v1008
      %v1010 = vrot.slane %v991, 1
      %v1011 = vrot.slane %v734, 1
      %v1012 = vsel %vm1006, %v1010, %v1011
      %v1013 = vrot.slane %v992, 1
      %v1014 = vrot.slane %v735, 1
      %v1015 = vsel %vm1006, %v1013, %v1014
      %v1016 = vrot.slane %v993, 1
      %v1017 = vrot.slane %v736, 1
      %v1018 = vsel %vm1006, %v1016, %v1017
      %v1019 = vrot.slane %v994, 1
      %v1020 = vrot.slane %v737, 1
      %v1021 = vsel %vm1006, %v1019, %v1020
      %v1022 = vrot.slane %v995, 1
      %v1023 = vrot.slane %v738, 1
      %v1024 = vsel %vm1006, %v1022, %v1023
      %v1025 = vrot.slane %v996, 1
      %v1026 = vrot.slane %v739, 1
      %v1027 = vsel %vm1006, %v1025, %v1026
      %v1028 = vrot.slane %v997, 1
      %v1029 = vrot.slane %v740, 1
      %v1030 = vsel %vm1006, %v1028, %v1029
      %v1031 = vrot.slane %v998, 1
      %v1032 = vrot.slane %v741, 1
      %v1033 = vsel %vm1006, %v1031, %v1032
      %v1034 = vrot.slane %v999, 1
      %v1035 = vrot.slane %v742, 1
      %v1036 = vsel %vm1006, %v1034, %v1035
      %v1037 = vrot.slane %v1000, 1
      %v1038 = vrot.slane %v743, 1
      %v1039 = vsel %vm1006, %v1037, %v1038
      %v1040 = vrot.slane %v1001, 1
      %v1041 = vrot.slane %v744, 1
      %v1042 = vsel %vm1006, %v1040, %v1041
      %v1043 = vrot.slane %v1002, 1
      %v1044 = vrot.slane %v745, 1
      %v1045 = vsel %vm1006, %v1043, %v1044
      %v1046 = vrot.slane %v1003, 1
      %v1047 = vrot.slane %v746, 1
      %v1048 = vsel %vm1006, %v1046, %v1047
      %v1049 = vrot.slane %v1004, 1
      %v1050 = vrot.slane %v747, 1
      %v1051 = vsel %vm1006, %v1049, %v1050
      %v1052 = vrot.slane %v1005, 1
      %v1053 = vrot.slane %v748, 1
      %v1054 = vsel %vm1006, %v1052, %v1053
      %v1103 = vunpack.c.l.b16 %v476
      %v1104 = vunpack.c.l.b16 %v477
      %v1105 = vunpack.c.l.b16 %v478
      %v1106 = vunpack.c.l.b16 %v479
      %v1107 = vunpack.c.l.b16 %v480
      %v1108 = vunpack.c.l.b16 %v481
      %v1109 = vunpack.c.l.b16 %v482
      %v1110 = vunpack.c.l.b16 %v483
      %v1111 = vunpack.c.l.b16 %v484
      %v1112 = vunpack.c.l.b16 %v485
      %v1113 = vunpack.c.l.b16 %v486
      %v1114 = vunpack.c.l.b16 %v487
      %v1115 = vunpack.c.l.b16 %v488
      %v1116 = vunpack.c.l.b16 %v489
      %v1117 = vunpack.c.l.b16 %v490
      %v1118 = vunpack.c.l.b16 %v491
      %v1119 = vunpack.c.l.b16 %v492
      %v1120 = vunpack.c.l.b16 %v493
      %v1121 = vunpack.c.l.b16 %v494
      %v1122 = vunpack.c.l.b16 %v495
      %v1123 = vunpack.c.l.b16 %v496
      %v1124 = vunpack.c.l.b16 %v497
      %v1125 = vunpack.c.l.b16 %v498
      %v1126 = vunpack.c.l.b16 %v499
      %v1127 = vunpack.c.l.b16 %v500
      %v1128 = vunpack.c.l.b16 %v501
      %v1129 = vunpack.c.l.b16 %v502
      %v1130 = vunpack.c.l.b16 %v503
      %v1131 = vunpack.c.l.b16 %v504
      %v1132 = vunpack.c.l.b16 %v505
      %v1133 = vunpack.c.l.b16 %v506
      %v1134 = vunpack.c.l.b16 %v507
      %v1135 = vpack.c.b16 %v1104, %v1103
      %v1136 = vpack.c.b16 %v1106, %v1105
      %v1137 = vpack.c.b16 %v1108, %v1107
      %v1138 = vpack.c.b16 %v1110, %v1109
      %v1139 = vpack.c.b16 %v1112, %v1111
      %v1140 = vpack.c.b16 %v1114, %v1113
      %v1141 = vpack.c.b16 %v1116, %v1115
      %v1142 = vpack.c.b16 %v1118, %v1117
      %v1143 = vpack.c.b16 %v1120, %v1119
      %v1144 = vpack.c.b16 %v1122, %v1121
      %v1145 = vpack.c.b16 %v1124, %v1123
      %v1146 = vpack.c.b16 %v1126, %v1125
      %v1147 = vpack.c.b16 %v1128, %v1127
      %v1148 = vpack.c.b16 %v1130, %v1129
      %v1149 = vpack.c.b16 %v1132, %v1131
      %v1150 = vpack.c.b16 %v1134, %v1133
      %v1183 = vunpack.c.l.b16 %v508
      %v1184 = vunpack.c.l.b16 %v509
      %v1185 = vunpack.c.l.b16 %v510
      %v1186 = vunpack.c.l.b16 %v511
      %v1187 = vunpack.c.l.b16 %v512
      %v1188 = vunpack.c.l.b16 %v513
      %v1189 = vunpack.c.l.b16 %v514
      %v1190 = vunpack.c.l.b16 %v515
      %v1191 = vunpack.c.l.b16 %v516
      %v1192 = vunpack.c.l.b16 %v517
      %v1193 = vunpack.c.l.b16 %v518
      %v1194 = vunpack.c.l.b16 %v519
      %v1195 = vunpack.c.l.b16 %v520
      %v1196 = vunpack.c.l.b16 %v521
      %v1197 = vunpack.c.l.b16 %v522
      %v1198 = vunpack.c.l.b16 %v523
      %v1199 = vpack.c.b16 %v1183, %v1183
      %v1200 = vpack.c.b16 %v1184, %v1184
      %v1201 = vpack.c.b16 %v1185, %v1185
      %v1202 = vpack.c.b16 %v1186, %v1186
      %v1203 = vpack.c.b16 %v1187, %v1187
      %v1204 = vpack.c.b16 %v1188, %v1188
      %v1205 = vpack.c.b16 %v1189, %v1189
      %v1206 = vpack.c.b16 %v1190, %v1190
      %v1207 = vpack.c.b16 %v1191, %v1191
      %v1208 = vpack.c.b16 %v1192, %v1192
      %v1209 = vpack.c.b16 %v1193, %v1193
      %v1210 = vpack.c.b16 %v1194, %v1194
      %v1211 = vpack.c.b16 %v1195, %v1195
      %v1212 = vpack.c.b16 %v1196, %v1196
      %v1213 = vpack.c.b16 %v1197, %v1197
      %v1214 = vpack.c.b16 %v1198, %v1198
      %v1216 = vshrl.u32 %v1135, 16
      %v1218 = vshll.u32 %v1135, 16
      %v1220 = vrot.slane %v1218, 1
      %v1221 = vor.u32 %v1216, %v1220
      %v1223 = vshll.u32 %v1199, 16
      %v1225 = vrot.slane %v1223, 1
      %v1226 = vsel %vm749, %v1221, %v1225
      %v1228 = vshrl.u32 %v1136, 16
      %v1230 = vshll.u32 %v1136, 16
      %v1232 = vrot.slane %v1230, 1
      %v1233 = vor.u32 %v1228, %v1232
      %v1235 = vshll.u32 %v1200, 16
      %v1237 = vrot.slane %v1235, 1
      %v1238 = vsel %vm749, %v1233, %v1237
      %v1240 = vshrl.u32 %v1137, 16
      %v1242 = vshll.u32 %v1137, 16
      %v1244 = vrot.slane %v1242, 1
      %v1245 = vor.u32 %v1240, %v1244
      %v1247 = vshll.u32 %v1201, 16
      %v1249 = vrot.slane %v1247, 1
      %v1250 = vsel %vm749, %v1245, %v1249
      %v1252 = vshrl.u32 %v1138, 16
      %v1254 = vshll.u32 %v1138, 16
      %v1256 = vrot.slane %v1254, 1
      %v1257 = vor.u32 %v1252, %v1256
      %v1259 = vshll.u32 %v1202, 16
      %v1261 = vrot.slane %v1259, 1
      %v1262 = vsel %vm749, %v1257, %v1261
      %v1264 = vshrl.u32 %v1139, 16
      %v1266 = vshll.u32 %v1139, 16
      %v1268 = vrot.slane %v1266, 1
      %v1269 = vor.u32 %v1264, %v1268
      %v1271 = vshll.u32 %v1203, 16
      %v1273 = vrot.slane %v1271, 1
      %v1274 = vsel %vm749, %v1269, %v1273
      %v1276 = vshrl.u32 %v1140, 16
      %v1278 = vshll.u32 %v1140, 16
      %v1280 = vrot.slane %v1278, 1
      %v1281 = vor.u32 %v1276, %v1280
      %v1283 = vshll.u32 %v1204, 16
      %v1285 = vrot.slane %v1283, 1
      %v1286 = vsel %vm749, %v1281, %v1285
      %v1288 = vshrl.u32 %v1141, 16
      %v1290 = vshll.u32 %v1141, 16
      %v1292 = vrot.slane %v1290, 1
      %v1293 = vor.u32 %v1288, %v1292
      %v1295 = vshll.u32 %v1205, 16
      %v1297 = vrot.slane %v1295, 1
      %v1298 = vsel %vm749, %v1293, %v1297
      %v1300 = vshrl.u32 %v1142, 16
      %v1302 = vshll.u32 %v1142, 16
      %v1304 = vrot.slane %v1302, 1
      %v1305 = vor.u32 %v1300, %v1304
      %v1307 = vshll.u32 %v1206, 16
      %v1309 = vrot.slane %v1307, 1
      %v1310 = vsel %vm749, %v1305, %v1309
      %v1312 = vshrl.u32 %v1143, 16
      %v1314 = vshll.u32 %v1143, 16
      %v1316 = vrot.slane %v1314, 1
      %v1317 = vor.u32 %v1312, %v1316
      %v1319 = vshll.u32 %v1207, 16
      %v1321 = vrot.slane %v1319, 1
      %v1322 = vsel %vm749, %v1317, %v1321
      %v1324 = vshrl.u32 %v1144, 16
      %v1326 = vshll.u32 %v1144, 16
      %v1328 = vrot.slane %v1326, 1
      %v1329 = vor.u32 %v1324, %v1328
      %v1331 = vshll.u32 %v1208, 16
      %v1333 = vrot.slane %v1331, 1
      %v1334 = vsel %vm749, %v1329, %v1333
      %v1336 = vshrl.u32 %v1145, 16
      %v1338 = vshll.u32 %v1145, 16
      %v1340 = vrot.slane %v1338, 1
      %v1341 = vor.u32 %v1336, %v1340
      %v1343 = vshll.u32 %v1209, 16
      %v1345 = vrot.slane %v1343, 1
      %v1346 = vsel %vm749, %v1341, %v1345
      %v1348 = vshrl.u32 %v1146, 16
      %v1350 = vshll.u32 %v1146, 16
      %v1352 = vrot.slane %v1350, 1
      %v1353 = vor.u32 %v1348, %v1352
      %v1355 = vshll.u32 %v1210, 16
      %v1357 = vrot.slane %v1355, 1
      %v1358 = vsel %vm749, %v1353, %v1357
      %v1360 = vshrl.u32 %v1147, 16
      %v1362 = vshll.u32 %v1147, 16
      %v1364 = vrot.slane %v1362, 1
      %v1365 = vor.u32 %v1360, %v1364
      %v1367 = vshll.u32 %v1211, 16
      %v1369 = vrot.slane %v1367, 1
      %v1370 = vsel %vm749, %v1365, %v1369
      %v1372 = vshrl.u32 %v1148, 16
      %v1374 = vshll.u32 %v1148, 16
      %v1376 = vrot.slane %v1374, 1
      %v1377 = vor.u32 %v1372, %v1376
      %v1379 = vshll.u32 %v1212, 16
      %v1381 = vrot.slane %v1379, 1
      %v1382 = vsel %vm749, %v1377, %v1381
      %v1384 = vshrl.u32 %v1149, 16
      %v1386 = vshll.u32 %v1149, 16
      %v1388 = vrot.slane %v1386, 1
      %v1389 = vor.u32 %v1384, %v1388
      %v1391 = vshll.u32 %v1213, 16
      %v1393 = vrot.slane %v1391, 1
      %v1394 = vsel %vm749, %v1389, %v1393
      %v1396 = vshrl.u32 %v1150, 16
      %v1398 = vshll.u32 %v1150, 16
      %v1400 = vrot.slane %v1398, 1
      %v1401 = vor.u32 %v1396, %v1400
      %v1403 = vshll.u32 %v1214, 16
      %v1405 = vrot.slane %v1403, 1
      %v1406 = vsel %vm749, %v1401, %v1405
      %v1439 = vunpack.c.l.b16 %v524
      %v1440 = vunpack.c.l.b16 %v525
      %v1441 = vunpack.c.l.b16 %v526
      %v1442 = vunpack.c.l.b16 %v527
      %v1443 = vunpack.c.l.b16 %v528
      %v1444 = vunpack.c.l.b16 %v529
      %v1445 = vunpack.c.l.b16 %v530
      %v1446 = vunpack.c.l.b16 %v531
      %v1447 = vunpack.c.l.b16 %v532
      %v1448 = vunpack.c.l.b16 %v533
      %v1449 = vunpack.c.l.b16 %v534
      %v1450 = vunpack.c.l.b16 %v535
      %v1451 = vunpack.c.l.b16 %v536
      %v1452 = vunpack.c.l.b16 %v537
      %v1453 = vunpack.c.l.b16 %v538
      %v1454 = vunpack.c.l.b16 %v539
      %v1455 = vpack.c.b16 %v1104, %v1439
      %v1456 = vpack.c.b16 %v1106, %v1440
      %v1457 = vpack.c.b16 %v1108, %v1441
      %v1458 = vpack.c.b16 %v1110, %v1442
      %v1459 = vpack.c.b16 %v1112, %v1443
      %v1460 = vpack.c.b16 %v1114, %v1444
      %v1461 = vpack.c.b16 %v1116, %v1445
      %v1462 = vpack.c.b16 %v1118, %v1446
      %v1463 = vpack.c.b16 %v1120, %v1447
      %v1464 = vpack.c.b16 %v1122, %v1448
      %v1465 = vpack.c.b16 %v1124, %v1449
      %v1466 = vpack.c.b16 %v1126, %v1450
      %v1467 = vpack.c.b16 %v1128, %v1451
      %v1468 = vpack.c.b16 %v1130, %v1452
      %v1469 = vpack.c.b16 %v1132, %v1453
      %v1470 = vpack.c.b16 %v1134, %v1454
      %v1471 = vrot.slane %v1455, 1
      %v1472 = vrot.slane %v1199, 1
      %v1473 = vsel %vm1006, %v1471, %v1472
      %v1474 = vrot.slane %v1456, 1
      %v1475 = vrot.slane %v1200, 1
      %v1476 = vsel %vm1006, %v1474, %v1475
      %v1477 = vrot.slane %v1457, 1
      %v1478 = vrot.slane %v1201, 1
      %v1479 = vsel %vm1006, %v1477, %v1478
      %v1480 = vrot.slane %v1458, 1
      %v1481 = vrot.slane %v1202, 1
      %v1482 = vsel %vm1006, %v1480, %v1481
      %v1483 = vrot.slane %v1459, 1
      %v1484 = vrot.slane %v1203, 1
      %v1485 = vsel %vm1006, %v1483, %v1484
      %v1486 = vrot.slane %v1460, 1
      %v1487 = vrot.slane %v1204, 1
      %v1488 = vsel %vm1006, %v1486, %v1487
      %v1489 = vrot.slane %v1461, 1
      %v1490 = vrot.slane %v1205, 1
      %v1491 = vsel %vm1006, %v1489, %v1490
      %v1492 = vrot.slane %v1462, 1
      %v1493 = vrot.slane %v1206, 1
      %v1494 = vsel %vm1006, %v1492, %v1493
      %v1495 = vrot.slane %v1463, 1
      %v1496 = vrot.slane %v1207, 1
      %v1497 = vsel %vm1006, %v1495, %v1496
      %v1498 = vrot.slane %v1464, 1
      %v1499 = vrot.slane %v1208, 1
      %v1500 = vsel %vm1006, %v1498, %v1499
      %v1501 = vrot.slane %v1465, 1
      %v1502 = vrot.slane %v1209, 1
      %v1503 = vsel %vm1006, %v1501, %v1502
      %v1504 = vrot.slane %v1466, 1
      %v1505 = vrot.slane %v1210, 1
      %v1506 = vsel %vm1006, %v1504, %v1505
      %v1507 = vrot.slane %v1467, 1
      %v1508 = vrot.slane %v1211, 1
      %v1509 = vsel %vm1006, %v1507, %v1508
      %v1510 = vrot.slane %v1468, 1
      %v1511 = vrot.slane %v1212, 1
      %v1512 = vsel %vm1006, %v1510, %v1511
      %v1513 = vrot.slane %v1469, 1
      %v1514 = vrot.slane %v1213, 1
      %v1515 = vsel %vm1006, %v1513, %v1514
      %v1516 = vrot.slane %v1470, 1
      %v1517 = vrot.slane %v1214, 1
      %v1518 = vsel %vm1006, %v1516, %v1517
      %v1567 = vunpack.c.l.b16 %v541
      %v1568 = vunpack.c.l.b16 %v542
      %v1569 = vunpack.c.l.b16 %v543
      %v1570 = vunpack.c.l.b16 %v544
      %v1571 = vunpack.c.l.b16 %v545
      %v1572 = vunpack.c.l.b16 %v546
      %v1573 = vunpack.c.l.b16 %v547
      %v1574 = vunpack.c.l.b16 %v548
      %v1575 = vunpack.c.l.b16 %v549
      %v1576 = vunpack.c.l.b16 %v550
      %v1577 = vunpack.c.l.b16 %v551
      %v1578 = vunpack.c.l.b16 %v552
      %v1579 = vunpack.c.l.b16 %v553
      %v1580 = vunpack.c.l.b16 %v554
      %v1581 = vunpack.c.l.b16 %v555
      %v1582 = vunpack.c.l.b16 %v556
      %v1583 = vunpack.c.l.b16 %v557
      %v1584 = vunpack.c.l.b16 %v558
      %v1585 = vunpack.c.l.b16 %v559
      %v1586 = vunpack.c.l.b16 %v560
      %v1587 = vunpack.c.l.b16 %v561
      %v1588 = vunpack.c.l.b16 %v562
      %v1589 = vunpack.c.l.b16 %v563
      %v1590 = vunpack.c.l.b16 %v564
      %v1591 = vunpack.c.l.b16 %v565
      %v1592 = vunpack.c.l.b16 %v566
      %v1593 = vunpack.c.l.b16 %v567
      %v1594 = vunpack.c.l.b16 %v568
      %v1595 = vunpack.c.l.b16 %v569
      %v1596 = vunpack.c.l.b16 %v570
      %v1597 = vunpack.c.l.b16 %v571
      %v1598 = vunpack.c.l.b16 %v572
      %v1599 = vpack.c.b16 %v1568, %v1567
      %v1600 = vpack.c.b16 %v1570, %v1569
      %v1601 = vpack.c.b16 %v1572, %v1571
      %v1602 = vpack.c.b16 %v1574, %v1573
      %v1603 = vpack.c.b16 %v1576, %v1575
      %v1604 = vpack.c.b16 %v1578, %v1577
      %v1605 = vpack.c.b16 %v1580, %v1579
      %v1606 = vpack.c.b16 %v1582, %v1581
      %v1607 = vpack.c.b16 %v1584, %v1583
      %v1608 = vpack.c.b16 %v1586, %v1585
      %v1609 = vpack.c.b16 %v1588, %v1587
      %v1610 = vpack.c.b16 %v1590, %v1589
      %v1611 = vpack.c.b16 %v1592, %v1591
      %v1612 = vpack.c.b16 %v1594, %v1593
      %v1613 = vpack.c.b16 %v1596, %v1595
      %v1614 = vpack.c.b16 %v1598, %v1597
      %v1647 = vunpack.c.l.b16 %v573
      %v1648 = vunpack.c.l.b16 %v574
      %v1649 = vunpack.c.l.b16 %v575
      %v1650 = vunpack.c.l.b16 %v576
      %v1651 = vunpack.c.l.b16 %v577
      %v1652 = vunpack.c.l.b16 %v578
      %v1653 = vunpack.c.l.b16 %v579
      %v1654 = vunpack.c.l.b16 %v580
      %v1655 = vunpack.c.l.b16 %v581
      %v1656 = vunpack.c.l.b16 %v582
      %v1657 = vunpack.c.l.b16 %v583
      %v1658 = vunpack.c.l.b16 %v584
      %v1659 = vunpack.c.l.b16 %v585
      %v1660 = vunpack.c.l.b16 %v586
      %v1661 = vunpack.c.l.b16 %v587
      %v1662 = vunpack.c.l.b16 %v588
      %v1663 = vpack.c.b16 %v1647, %v1647
      %v1664 = vpack.c.b16 %v1648, %v1648
      %v1665 = vpack.c.b16 %v1649, %v1649
      %v1666 = vpack.c.b16 %v1650, %v1650
      %v1667 = vpack.c.b16 %v1651, %v1651
      %v1668 = vpack.c.b16 %v1652, %v1652
      %v1669 = vpack.c.b16 %v1653, %v1653
      %v1670 = vpack.c.b16 %v1654, %v1654
      %v1671 = vpack.c.b16 %v1655, %v1655
      %v1672 = vpack.c.b16 %v1656, %v1656
      %v1673 = vpack.c.b16 %v1657, %v1657
      %v1674 = vpack.c.b16 %v1658, %v1658
      %v1675 = vpack.c.b16 %v1659, %v1659
      %v1676 = vpack.c.b16 %v1660, %v1660
      %v1677 = vpack.c.b16 %v1661, %v1661
      %v1678 = vpack.c.b16 %v1662, %v1662
      %v1680 = vshrl.u32 %v1599, 16
      %v1682 = vshll.u32 %v1599, 16
      %v1684 = vrot.slane %v1682, 1
      %v1685 = vor.u32 %v1680, %v1684
      %v1687 = vshll.u32 %v1663, 16
      %v1689 = vrot.slane %v1687, 1
      %v1690 = vsel %vm749, %v1685, %v1689
      %v1692 = vshrl.u32 %v1600, 16
      %v1694 = vshll.u32 %v1600, 16
      %v1696 = vrot.slane %v1694, 1
      %v1697 = vor.u32 %v1692, %v1696
      %v1699 = vshll.u32 %v1664, 16
      %v1701 = vrot.slane %v1699, 1
      %v1702 = vsel %vm749, %v1697, %v1701
      %v1704 = vshrl.u32 %v1601, 16
      %v1706 = vshll.u32 %v1601, 16
      %v1708 = vrot.slane %v1706, 1
      %v1709 = vor.u32 %v1704, %v1708
      %v1711 = vshll.u32 %v1665, 16
      %v1713 = vrot.slane %v1711, 1
      %v1714 = vsel %vm749, %v1709, %v1713
      %v1716 = vshrl.u32 %v1602, 16
      %v1718 = vshll.u32 %v1602, 16
      %v1720 = vrot.slane %v1718, 1
      %v1721 = vor.u32 %v1716, %v1720
      %v1723 = vshll.u32 %v1666, 16
      %v1725 = vrot.slane %v1723, 1
      %v1726 = vsel %vm749, %v1721, %v1725
      %v1728 = vshrl.u32 %v1603, 16
      %v1730 = vshll.u32 %v1603, 16
      %v1732 = vrot.slane %v1730, 1
      %v1733 = vor.u32 %v1728, %v1732
      %v1735 = vshll.u32 %v1667, 16
      %v1737 = vrot.slane %v1735, 1
      %v1738 = vsel %vm749, %v1733, %v1737
      %v1740 = vshrl.u32 %v1604, 16
      %v1742 = vshll.u32 %v1604, 16
      %v1744 = vrot.slane %v1742, 1
      %v1745 = vor.u32 %v1740, %v1744
      %v1747 = vshll.u32 %v1668, 16
      %v1749 = vrot.slane %v1747, 1
      %v1750 = vsel %vm749, %v1745, %v1749
      %v1752 = vshrl.u32 %v1605, 16
      %v1754 = vshll.u32 %v1605, 16
      %v1756 = vrot.slane %v1754, 1
      %v1757 = vor.u32 %v1752, %v1756
      %v1759 = vshll.u32 %v1669, 16
      %v1761 = vrot.slane %v1759, 1
      %v1762 = vsel %vm749, %v1757, %v1761
      %v1764 = vshrl.u32 %v1606, 16
      %v1766 = vshll.u32 %v1606, 16
      %v1768 = vrot.slane %v1766, 1
      %v1769 = vor.u32 %v1764, %v1768
      %v1771 = vshll.u32 %v1670, 16
      %v1773 = vrot.slane %v1771, 1
      %v1774 = vsel %vm749, %v1769, %v1773
      %v1776 = vshrl.u32 %v1607, 16
      %v1778 = vshll.u32 %v1607, 16
      %v1780 = vrot.slane %v1778, 1
      %v1781 = vor.u32 %v1776, %v1780
      %v1783 = vshll.u32 %v1671, 16
      %v1785 = vrot.slane %v1783, 1
      %v1786 = vsel %vm749, %v1781, %v1785
      %v1788 = vshrl.u32 %v1608, 16
      %v1790 = vshll.u32 %v1608, 16
      %v1792 = vrot.slane %v1790, 1
      %v1793 = vor.u32 %v1788, %v1792
      %v1795 = vshll.u32 %v1672, 16
      %v1797 = vrot.slane %v1795, 1
      %v1798 = vsel %vm749, %v1793, %v1797
      %v1800 = vshrl.u32 %v1609, 16
      %v1802 = vshll.u32 %v1609, 16
      %v1804 = vrot.slane %v1802, 1
      %v1805 = vor.u32 %v1800, %v1804
      %v1807 = vshll.u32 %v1673, 16
      %v1809 = vrot.slane %v1807, 1
      %v1810 = vsel %vm749, %v1805, %v1809
      %v1812 = vshrl.u32 %v1610, 16
      %v1814 = vshll.u32 %v1610, 16
      %v1816 = vrot.slane %v1814, 1
      %v1817 = vor.u32 %v1812, %v1816
      %v1819 = vshll.u32 %v1674, 16
      %v1821 = vrot.slane %v1819, 1
      %v1822 = vsel %vm749, %v1817, %v1821
      %v1824 = vshrl.u32 %v1611, 16
      %v1826 = vshll.u32 %v1611, 16
      %v1828 = vrot.slane %v1826, 1
      %v1829 = vor.u32 %v1824, %v1828
      %v1831 = vshll.u32 %v1675, 16
      %v1833 = vrot.slane %v1831, 1
      %v1834 = vsel %vm749, %v1829, %v1833
      %v1836 = vshrl.u32 %v1612, 16
      %v1838 = vshll.u32 %v1612, 16
      %v1840 = vrot.slane %v1838, 1
      %v1841 = vor.u32 %v1836, %v1840
      %v1843 = vshll.u32 %v1676, 16
      %v1845 = vrot.slane %v1843, 1
      %v1846 = vsel %vm749, %v1841, %v1845
      %v1848 = vshrl.u32 %v1613, 16
      %v1850 = vshll.u32 %v1613, 16
      %v1852 = vrot.slane %v1850, 1
      %v1853 = vor.u32 %v1848, %v1852
      %v1855 = vshll.u32 %v1677, 16
      %v1857 = vrot.slane %v1855, 1
      %v1858 = vsel %vm749, %v1853, %v1857
      %v1860 = vshrl.u32 %v1614, 16
      %v1862 = vshll.u32 %v1614, 16
      %v1864 = vrot.slane %v1862, 1
      %v1865 = vor.u32 %v1860, %v1864
      %v1867 = vshll.u32 %v1678, 16
      %v1869 = vrot.slane %v1867, 1
      %v1870 = vsel %vm749, %v1865, %v1869
      %v1903 = vunpack.c.l.b16 %v589
      %v1904 = vunpack.c.l.b16 %v590
      %v1905 = vunpack.c.l.b16 %v591
      %v1906 = vunpack.c.l.b16 %v592
      %v1907 = vunpack.c.l.b16 %v593
      %v1908 = vunpack.c.l.b16 %v594
      %v1909 = vunpack.c.l.b16 %v595
      %v1910 = vunpack.c.l.b16 %v596
      %v1911 = vunpack.c.l.b16 %v597
      %v1912 = vunpack.c.l.b16 %v598
      %v1913 = vunpack.c.l.b16 %v599
      %v1914 = vunpack.c.l.b16 %v600
      %v1915 = vunpack.c.l.b16 %v601
      %v1916 = vunpack.c.l.b16 %v602
      %v1917 = vunpack.c.l.b16 %v603
      %v1918 = vunpack.c.l.b16 %v604
      %v1919 = vpack.c.b16 %v1568, %v1903
      %v1920 = vpack.c.b16 %v1570, %v1904
      %v1921 = vpack.c.b16 %v1572, %v1905
      %v1922 = vpack.c.b16 %v1574, %v1906
      %v1923 = vpack.c.b16 %v1576, %v1907
      %v1924 = vpack.c.b16 %v1578, %v1908
      %v1925 = vpack.c.b16 %v1580, %v1909
      %v1926 = vpack.c.b16 %v1582, %v1910
      %v1927 = vpack.c.b16 %v1584, %v1911
      %v1928 = vpack.c.b16 %v1586, %v1912
      %v1929 = vpack.c.b16 %v1588, %v1913
      %v1930 = vpack.c.b16 %v1590, %v1914
      %v1931 = vpack.c.b16 %v1592, %v1915
      %v1932 = vpack.c.b16 %v1594, %v1916
      %v1933 = vpack.c.b16 %v1596, %v1917
      %v1934 = vpack.c.b16 %v1598, %v1918
      %v1935 = vrot.slane %v1919, 1
      %v1936 = vrot.slane %v1663, 1
      %v1937 = vsel %vm1006, %v1935, %v1936
      %v1938 = vrot.slane %v1920, 1
      %v1939 = vrot.slane %v1664, 1
      %v1940 = vsel %vm1006, %v1938, %v1939
      %v1941 = vrot.slane %v1921, 1
      %v1942 = vrot.slane %v1665, 1
      %v1943 = vsel %vm1006, %v1941, %v1942
      %v1944 = vrot.slane %v1922, 1
      %v1945 = vrot.slane %v1666, 1
      %v1946 = vsel %vm1006, %v1944, %v1945
      %v1947 = vrot.slane %v1923, 1
      %v1948 = vrot.slane %v1667, 1
      %v1949 = vsel %vm1006, %v1947, %v1948
      %v1950 = vrot.slane %v1924, 1
      %v1951 = vrot.slane %v1668, 1
      %v1952 = vsel %vm1006, %v1950, %v1951
      %v1953 = vrot.slane %v1925, 1
      %v1954 = vrot.slane %v1669, 1
      %v1955 = vsel %vm1006, %v1953, %v1954
      %v1956 = vrot.slane %v1926, 1
      %v1957 = vrot.slane %v1670, 1
      %v1958 = vsel %vm1006, %v1956, %v1957
      %v1959 = vrot.slane %v1927, 1
      %v1960 = vrot.slane %v1671, 1
      %v1961 = vsel %vm1006, %v1959, %v1960
      %v1962 = vrot.slane %v1928, 1
      %v1963 = vrot.slane %v1672, 1
      %v1964 = vsel %vm1006, %v1962, %v1963
      %v1965 = vrot.slane %v1929, 1
      %v1966 = vrot.slane %v1673, 1
      %v1967 = vsel %vm1006, %v1965, %v1966
      %v1968 = vrot.slane %v1930, 1
      %v1969 = vrot.slane %v1674, 1
      %v1970 = vsel %vm1006, %v1968, %v1969
      %v1971 = vrot.slane %v1931, 1
      %v1972 = vrot.slane %v1675, 1
      %v1973 = vsel %vm1006, %v1971, %v1972
      %v1974 = vrot.slane %v1932, 1
      %v1975 = vrot.slane %v1676, 1
      %v1976 = vsel %vm1006, %v1974, %v1975
      %v1977 = vrot.slane %v1933, 1
      %v1978 = vrot.slane %v1677, 1
      %v1979 = vsel %vm1006, %v1977, %v1978
      %v1980 = vrot.slane %v1934, 1
      %v1981 = vrot.slane %v1678, 1
      %v1982 = vsel %vm1006, %v1980, %v1981
      %v1999 = vld [vmem:[%s1] sm:$0xf]
      %v2000 = vld [vmem:[%s1 + $0x4] sm:$0xf]
      %v2001 = vld [vmem:[%s1 + $0x8] sm:$0xf]
      %v2002 = vld [vmem:[%s1 + $0xc] sm:$0xf]
      %v2003 = vld [vmem:[%s1 + $0x10] sm:$0xf]
      %v2004 = vld [vmem:[%s1 + $0x14] sm:$0xf]
      %v2005 = vld [vmem:[%s1 + $0x18] sm:$0xf]
      %v2006 = vld [vmem:[%s1 + $0x1c] sm:$0xf]
      %v2007 = vld [vmem:[%s1 + $0x20] sm:$0xf]
      %v2008 = vld [vmem:[%s1 + $0x24] sm:$0xf]
      %v2009 = vld [vmem:[%s1 + $0x28] sm:$0xf]
      %v2010 = vld [vmem:[%s1 + $0x2c] sm:$0xf]
      %v2011 = vld [vmem:[%s1 + $0x30] sm:$0xf]
      %v2012 = vld [vmem:[%s1 + $0x34] sm:$0xf]
      %v2013 = vld [vmem:[%s1 + $0x38] sm:$0xf]
      %v2014 = vld [vmem:[%s1 + $0x3c] sm:$0xf]
      %v2015 = vld [vmem:[%s1 + $0x40] sm:$0xf]
      %v2016 = vld [vmem:[%s1 + $0x44] sm:$0xf]
      %v2017 = vld [vmem:[%s1 + $0x48] sm:$0xf]
      %v2018 = vld [vmem:[%s1 + $0x4c] sm:$0xf]
      %v2019 = vld [vmem:[%s1 + $0x50] sm:$0xf]
      %v2020 = vld [vmem:[%s1 + $0x54] sm:$0xf]
      %v2021 = vld [vmem:[%s1 + $0x58] sm:$0xf]
      %v2022 = vld [vmem:[%s1 + $0x5c] sm:$0xf]
      %v2023 = vld [vmem:[%s1 + $0x60] sm:$0xf]
      %v2024 = vld [vmem:[%s1 + $0x64] sm:$0xf]
      %v2025 = vld [vmem:[%s1 + $0x68] sm:$0xf]
      %v2026 = vld [vmem:[%s1 + $0x6c] sm:$0xf]
      %v2027 = vld [vmem:[%s1 + $0x70] sm:$0xf]
      %v2028 = vld [vmem:[%s1 + $0x74] sm:$0xf]
      %v2029 = vld [vmem:[%s1 + $0x78] sm:$0xf]
      %v2030 = vld [vmem:[%s1 + $0x7c] sm:$0xf]
      %v2031 = vld [vmem:[%s1 + $0x80] sm:$0xf]
      %v2032 = vld [vmem:[%s1 + $0x84] sm:$0xf]
      %v2033 = vld [vmem:[%s1 + $0x88] sm:$0xf]
      %v2034 = vld [vmem:[%s1 + $0x8c] sm:$0xf]
      %v2035 = vld [vmem:[%s1 + $0x90] sm:$0xf]
      %v2036 = vld [vmem:[%s1 + $0x94] sm:$0xf]
      %v2037 = vld [vmem:[%s1 + $0x98] sm:$0xf]
      %v2038 = vld [vmem:[%s1 + $0x9c] sm:$0xf]
      %v2039 = vld [vmem:[%s1 + $0xa0] sm:$0xf]
      %v2040 = vld [vmem:[%s1 + $0xa4] sm:$0xf]
      %v2041 = vld [vmem:[%s1 + $0xa8] sm:$0xf]
      %v2042 = vld [vmem:[%s1 + $0xac] sm:$0xf]
      %v2043 = vld [vmem:[%s1 + $0xb0] sm:$0xf]
      %v2044 = vld [vmem:[%s1 + $0xb4] sm:$0xf]
      %v2045 = vld [vmem:[%s1 + $0xb8] sm:$0xf]
      %v2046 = vld [vmem:[%s1 + $0xbc] sm:$0xf]
      %v2047 = vld [vmem:[%s1 + $0xc0] sm:$0xf]
      %v2048 = vld [vmem:[%s1 + $0xc4] sm:$0xf]
      %v2049 = vld [vmem:[%s1 + $0xc8] sm:$0xf]
      %v2050 = vld [vmem:[%s1 + $0xcc] sm:$0xf]
      %v2051 = vld [vmem:[%s1 + $0xd0] sm:$0xf]
      %v2052 = vld [vmem:[%s1 + $0xd4] sm:$0xf]
      %v2053 = vld [vmem:[%s1 + $0xd8] sm:$0xf]
      %v2054 = vld [vmem:[%s1 + $0xdc] sm:$0xf]
      %v2055 = vld [vmem:[%s1 + $0xe0] sm:$0xf]
      %v2056 = vld [vmem:[%s1 + $0xe4] sm:$0xf]
      %v2057 = vld [vmem:[%s1 + $0xe8] sm:$0xf]
      %v2058 = vld [vmem:[%s1 + $0xec] sm:$0xf]
      %v2059 = vld [vmem:[%s1 + $0xf0] sm:$0xf]
      %v2060 = vld [vmem:[%s1 + $0xf4] sm:$0xf]
      %v2061 = vld [vmem:[%s1 + $0xf8] sm:$0xf]
      %v2062 = vld [vmem:[%s1 + $0xfc] sm:$0xf]
      %v2063 = vld [vmem:[%s1 + $0x100] sm:$0xf]
      %v2064 = vld [vmem:[%s1 + $0x104] sm:$0xf]
      %v2065 = vld [vmem:[%s1 + $0x108] sm:$0xf]
      %v2066 = vld [vmem:[%s1 + $0x10c] sm:$0xf]
      %v2067 = vld [vmem:[%s1 + $0x110] sm:$0xf]
      %v2068 = vld [vmem:[%s1 + $0x114] sm:$0xf]
      %v2069 = vld [vmem:[%s1 + $0x118] sm:$0xf]
      %v2070 = vld [vmem:[%s1 + $0x11c] sm:$0xf]
      %v2071 = vld [vmem:[%s1 + $0x120] sm:$0xf]
      %v2072 = vld [vmem:[%s1 + $0x124] sm:$0xf]
      %v2073 = vld [vmem:[%s1 + $0x128] sm:$0xf]
      %v2074 = vld [vmem:[%s1 + $0x12c] sm:$0xf]
      %v2075 = vld [vmem:[%s1 + $0x130] sm:$0xf]
      %v2076 = vld [vmem:[%s1 + $0x134] sm:$0xf]
      %v2077 = vld [vmem:[%s1 + $0x138] sm:$0xf]
      %v2078 = vld [vmem:[%s1 + $0x13c] sm:$0xf]
      %v2079 = vld [vmem:[%s1 + $0x140] sm:$0xf]
      %v2080 = vld [vmem:[%s1 + $0x144] sm:$0xf]
      %v2081 = vld [vmem:[%s1 + $0x148] sm:$0xf]
      %v2082 = vld [vmem:[%s1 + $0x14c] sm:$0xf]
      %v2083 = vld [vmem:[%s1 + $0x150] sm:$0xf]
      %v2084 = vld [vmem:[%s1 + $0x154] sm:$0xf]
      %v2085 = vld [vmem:[%s1 + $0x158] sm:$0xf]
      %v2086 = vld [vmem:[%s1 + $0x15c] sm:$0xf]
      %v2087 = vld [vmem:[%s1 + $0x160] sm:$0xf]
      %v2088 = vld [vmem:[%s1 + $0x164] sm:$0xf]
      %v2089 = vld [vmem:[%s1 + $0x168] sm:$0xf]
      %v2090 = vld [vmem:[%s1 + $0x16c] sm:$0xf]
      %v2091 = vld [vmem:[%s1 + $0x170] sm:$0xf]
      %v2092 = vld [vmem:[%s1 + $0x174] sm:$0xf]
      %v2093 = vld [vmem:[%s1 + $0x178] sm:$0xf]
      %v2094 = vld [vmem:[%s1 + $0x17c] sm:$0xf]
      %v2095 = vld [vmem:[%s1 + $0x180] sm:$0xf]
      %v2096 = vld [vmem:[%s1 + $0x184] sm:$0xf]
      %v2097 = vld [vmem:[%s1 + $0x188] sm:$0xf]
      %v2098 = vld [vmem:[%s1 + $0x18c] sm:$0xf]
      %v2099 = vld [vmem:[%s1 + $0x190] sm:$0xf]
      %v2100 = vld [vmem:[%s1 + $0x194] sm:$0xf]
      %v2101 = vld [vmem:[%s1 + $0x198] sm:$0xf]
      %v2102 = vld [vmem:[%s1 + $0x19c] sm:$0xf]
      %v2103 = vld [vmem:[%s1 + $0x1a0] sm:$0xf]
      %v2104 = vld [vmem:[%s1 + $0x1a4] sm:$0xf]
      %v2105 = vld [vmem:[%s1 + $0x1a8] sm:$0xf]
      %v2106 = vld [vmem:[%s1 + $0x1ac] sm:$0xf]
      %v2107 = vld [vmem:[%s1 + $0x1b0] sm:$0xf]
      %v2108 = vld [vmem:[%s1 + $0x1b4] sm:$0xf]
      %v2109 = vld [vmem:[%s1 + $0x1b8] sm:$0xf]
      %v2110 = vld [vmem:[%s1 + $0x1bc] sm:$0xf]
      %v2111 = vld [vmem:[%s1 + $0x1c0] sm:$0xf]
      %v2112 = vld [vmem:[%s1 + $0x1c4] sm:$0xf]
      %v2113 = vld [vmem:[%s1 + $0x1c8] sm:$0xf]
      %v2114 = vld [vmem:[%s1 + $0x1cc] sm:$0xf]
      %v2115 = vld [vmem:[%s1 + $0x1d0] sm:$0xf]
      %v2116 = vld [vmem:[%s1 + $0x1d4] sm:$0xf]
      %v2117 = vld [vmem:[%s1 + $0x1d8] sm:$0xf]
      %v2118 = vld [vmem:[%s1 + $0x1dc] sm:$0xf]
      %v2119 = vld [vmem:[%s1 + $0x1e0] sm:$0xf]
      %v2120 = vld [vmem:[%s1 + $0x1e4] sm:$0xf]
      %v2121 = vld [vmem:[%s1 + $0x1e8] sm:$0xf]
      %v2122 = vld [vmem:[%s1 + $0x1ec] sm:$0xf]
      %v2123 = vld [vmem:[%s1 + $0x1f0] sm:$0xf]
      %v2124 = vld [vmem:[%s1 + $0x1f4] sm:$0xf]
      %v2125 = vld [vmem:[%s1 + $0x1f8] sm:$0xf]
      %v2126 = vld [vmem:[%s1 + $0x1fc] sm:$0xf]
      %v2127 = vld [vmem:[%s1 + $0x200] sm:$0xf]
      %v2128 = vld [vmem:[%s1 + $0x204] sm:$0xf]
      %v2129 = vld [vmem:[%s1 + $0x208] sm:$0xf]
      %v2130 = vld [vmem:[%s1 + $0x20c] sm:$0xf]
      %v2131 = vld [vmem:[%s1 + $0x210] sm:$0xf]
      %v2132 = vld [vmem:[%s1 + $0x214] sm:$0xf]
      %v2133 = vld [vmem:[%s1 + $0x218] sm:$0xf]
      %v2134 = vld [vmem:[%s1 + $0x21c] sm:$0xf]
      %v2135 = vld [vmem:[%s1 + $0x220] sm:$0xf]
      %v2136 = vld [vmem:[%s1 + $0x224] sm:$0xf]
      %v2137 = vld [vmem:[%s1 + $0x228] sm:$0xf]
      %v2138 = vld [vmem:[%s1 + $0x22c] sm:$0xf]
      %v2139 = vld [vmem:[%s1 + $0x230] sm:$0xf]
      %v2140 = vld [vmem:[%s1 + $0x234] sm:$0xf]
      %v2141 = vld [vmem:[%s1 + $0x238] sm:$0xf]
      %v2142 = vld [vmem:[%s1 + $0x23c] sm:$0xf]
      %v2143 = vld [vmem:[%s2] sm:$0x1]
      %v2145 = vlaneseq
      %v2146 = vshrl.u32 %v2145, 7
      %v2147 = vsub.s32 0, %v2146
      %v2148 = vrot.slane %v2143, %v2147
      %v2294 = vunpack.c.l.b16 %v1999
      %v2295 = vunpack.c.l.b16 %v2000
      %v2296 = vunpack.c.l.b16 %v2001
      %v2297 = vunpack.c.l.b16 %v2002
      %v2298 = vunpack.c.l.b16 %v2003
      %v2299 = vunpack.c.l.b16 %v2004
      %v2300 = vunpack.c.l.b16 %v2005
      %v2301 = vunpack.c.l.b16 %v2006
      %v2302 = vunpack.c.l.b16 %v2007
      %v2303 = vunpack.c.l.b16 %v2008
      %v2304 = vunpack.c.l.b16 %v2009
      %v2305 = vunpack.c.l.b16 %v2010
      %v2306 = vunpack.c.l.b16 %v2011
      %v2307 = vunpack.c.l.b16 %v2012
      %v2308 = vunpack.c.l.b16 %v2013
      %v2309 = vunpack.c.l.b16 %v2014
      %v2310 = vunpack.c.l.b16 %v2015
      %v2311 = vunpack.c.l.b16 %v2016
      %v2312 = vunpack.c.l.b16 %v2017
      %v2313 = vunpack.c.l.b16 %v2018
      %v2314 = vunpack.c.l.b16 %v2019
      %v2315 = vunpack.c.l.b16 %v2020
      %v2316 = vunpack.c.l.b16 %v2021
      %v2317 = vunpack.c.l.b16 %v2022
      %v2318 = vunpack.c.l.b16 %v2023
      %v2319 = vunpack.c.l.b16 %v2024
      %v2320 = vunpack.c.l.b16 %v2025
      %v2321 = vunpack.c.l.b16 %v2026
      %v2322 = vunpack.c.l.b16 %v2027
      %v2323 = vunpack.c.l.b16 %v2028
      %v2324 = vunpack.c.l.b16 %v2029
      %v2325 = vunpack.c.l.b16 %v2030
      %v2326 = vunpack.c.l.b16 %v2031
      %v2327 = vunpack.c.l.b16 %v2032
      %v2328 = vunpack.c.l.b16 %v2033
      %v2329 = vunpack.c.l.b16 %v2034
      %v2330 = vunpack.c.l.b16 %v2035
      %v2331 = vunpack.c.l.b16 %v2036
      %v2332 = vunpack.c.l.b16 %v2037
      %v2333 = vunpack.c.l.b16 %v2038
      %v2334 = vunpack.c.l.b16 %v2039
      %v2335 = vunpack.c.l.b16 %v2040
      %v2336 = vunpack.c.l.b16 %v2041
      %v2337 = vunpack.c.l.b16 %v2042
      %v2338 = vunpack.c.l.b16 %v2043
      %v2339 = vunpack.c.l.b16 %v2044
      %v2340 = vunpack.c.l.b16 %v2045
      %v2341 = vunpack.c.l.b16 %v2046
      %v2342 = vunpack.c.l.b16 %v2047
      %v2343 = vunpack.c.l.b16 %v2048
      %v2344 = vunpack.c.l.b16 %v2049
      %v2345 = vunpack.c.l.b16 %v2050
      %v2346 = vunpack.c.l.b16 %v2051
      %v2347 = vunpack.c.l.b16 %v2052
      %v2348 = vunpack.c.l.b16 %v2053
      %v2349 = vunpack.c.l.b16 %v2054
      %v2350 = vunpack.c.l.b16 %v2055
      %v2351 = vunpack.c.l.b16 %v2056
      %v2352 = vunpack.c.l.b16 %v2057
      %v2353 = vunpack.c.l.b16 %v2058
      %v2354 = vunpack.c.l.b16 %v2059
      %v2355 = vunpack.c.l.b16 %v2060
      %v2356 = vunpack.c.l.b16 %v2061
      %v2357 = vunpack.c.l.b16 %v2062
      %v2358 = vunpack.c.l.b16 %v2063
      %v2359 = vunpack.c.l.b16 %v2064
      %v2360 = vunpack.c.l.b16 %v2065
      %v2361 = vunpack.c.l.b16 %v2066
      %v2362 = vunpack.c.l.b16 %v2067
      %v2363 = vunpack.c.l.b16 %v2068
      %v2364 = vunpack.c.l.b16 %v2069
      %v2365 = vunpack.c.l.b16 %v2070
      %v2366 = vunpack.c.l.b16 %v2071
      %v2367 = vunpack.c.l.b16 %v2072
      %v2368 = vunpack.c.l.b16 %v2073
      %v2369 = vunpack.c.l.b16 %v2074
      %v2370 = vunpack.c.l.b16 %v2075
      %v2371 = vunpack.c.l.b16 %v2076
      %v2372 = vunpack.c.l.b16 %v2077
      %v2373 = vunpack.c.l.b16 %v2078
      %v2374 = vunpack.c.l.b16 %v2079
      %v2375 = vunpack.c.l.b16 %v2080
      %v2376 = vunpack.c.l.b16 %v2081
      %v2377 = vunpack.c.l.b16 %v2082
      %v2378 = vunpack.c.l.b16 %v2083
      %v2379 = vunpack.c.l.b16 %v2084
      %v2380 = vunpack.c.l.b16 %v2085
      %v2381 = vunpack.c.l.b16 %v2086
      %v2382 = vunpack.c.l.b16 %v2087
      %v2383 = vunpack.c.l.b16 %v2088
      %v2384 = vunpack.c.l.b16 %v2089
      %v2385 = vunpack.c.l.b16 %v2090
      %v2386 = vunpack.c.l.b16 %v2091
      %v2387 = vunpack.c.l.b16 %v2092
      %v2388 = vunpack.c.l.b16 %v2093
      %v2389 = vunpack.c.l.b16 %v2094
      %v2390 = vunpack.c.l.b16 %v2095
      %v2391 = vunpack.c.l.b16 %v2096
      %v2392 = vunpack.c.l.b16 %v2097
      %v2393 = vunpack.c.l.b16 %v2098
      %v2394 = vunpack.c.l.b16 %v2099
      %v2395 = vunpack.c.l.b16 %v2100
      %v2396 = vunpack.c.l.b16 %v2101
      %v2397 = vunpack.c.l.b16 %v2102
      %v2398 = vunpack.c.l.b16 %v2103
      %v2399 = vunpack.c.l.b16 %v2104
      %v2400 = vunpack.c.l.b16 %v2105
      %v2401 = vunpack.c.l.b16 %v2106
      %v2402 = vunpack.c.l.b16 %v2107
      %v2403 = vunpack.c.l.b16 %v2108
      %v2404 = vunpack.c.l.b16 %v2109
      %v2405 = vunpack.c.l.b16 %v2110
      %v2406 = vunpack.c.l.b16 %v2111
      %v2407 = vunpack.c.l.b16 %v2112
      %v2408 = vunpack.c.l.b16 %v2113
      %v2409 = vunpack.c.l.b16 %v2114
      %v2410 = vunpack.c.l.b16 %v2115
      %v2411 = vunpack.c.l.b16 %v2116
      %v2412 = vunpack.c.l.b16 %v2117
      %v2413 = vunpack.c.l.b16 %v2118
      %v2414 = vunpack.c.l.b16 %v2119
      %v2415 = vunpack.c.l.b16 %v2120
      %v2416 = vunpack.c.l.b16 %v2121
      %v2417 = vunpack.c.l.b16 %v2122
      %v2418 = vunpack.c.l.b16 %v2123
      %v2419 = vunpack.c.l.b16 %v2124
      %v2420 = vunpack.c.l.b16 %v2125
      %v2421 = vunpack.c.l.b16 %v2126
      %v2422 = vunpack.c.l.b16 %v2127
      %v2423 = vunpack.c.l.b16 %v2128
      %v2424 = vunpack.c.l.b16 %v2129
      %v2425 = vunpack.c.l.b16 %v2130
      %v2426 = vunpack.c.l.b16 %v2131
      %v2427 = vunpack.c.l.b16 %v2132
      %v2428 = vunpack.c.l.b16 %v2133
      %v2429 = vunpack.c.l.b16 %v2134
      %v2430 = vunpack.c.l.b16 %v2135
      %v2431 = vunpack.c.l.b16 %v2136
      %v2432 = vunpack.c.l.b16 %v2137
      %v2433 = vunpack.c.l.b16 %v2138
      %v2434 = vunpack.c.l.b16 %v2139
      %v2435 = vunpack.c.l.b16 %v2140
      %v2436 = vunpack.c.l.b16 %v2141
      %v2437 = vunpack.c.l.b16 %v2142
      %v2438 = vpack.c.b16 %v2295, %v2294
      %v2439 = vpack.c.b16 %v2297, %v2296
      %v2440 = vpack.c.b16 %v2299, %v2298
      %v2441 = vpack.c.b16 %v2301, %v2300
      %v2442 = vpack.c.b16 %v2303, %v2302
      %v2443 = vpack.c.b16 %v2305, %v2304
      %v2444 = vpack.c.b16 %v2307, %v2306
      %v2445 = vpack.c.b16 %v2309, %v2308
      %v2446 = vpack.c.b16 %v2311, %v2310
      %v2447 = vpack.c.b16 %v2313, %v2312
      %v2448 = vpack.c.b16 %v2315, %v2314
      %v2449 = vpack.c.b16 %v2317, %v2316
      %v2450 = vpack.c.b16 %v2319, %v2318
      %v2451 = vpack.c.b16 %v2321, %v2320
      %v2452 = vpack.c.b16 %v2323, %v2322
      %v2453 = vpack.c.b16 %v2325, %v2324
      %v2454 = vpack.c.b16 %v2327, %v2326
      %v2455 = vpack.c.b16 %v2329, %v2328
      %v2456 = vpack.c.b16 %v2331, %v2330
      %v2457 = vpack.c.b16 %v2333, %v2332
      %v2458 = vpack.c.b16 %v2335, %v2334
      %v2459 = vpack.c.b16 %v2337, %v2336
      %v2460 = vpack.c.b16 %v2339, %v2338
      %v2461 = vpack.c.b16 %v2341, %v2340
      %v2462 = vpack.c.b16 %v2343, %v2342
      %v2463 = vpack.c.b16 %v2345, %v2344
      %v2464 = vpack.c.b16 %v2347, %v2346
      %v2465 = vpack.c.b16 %v2349, %v2348
      %v2466 = vpack.c.b16 %v2351, %v2350
      %v2467 = vpack.c.b16 %v2353, %v2352
      %v2468 = vpack.c.b16 %v2355, %v2354
      %v2469 = vpack.c.b16 %v2357, %v2356
      %v2470 = vpack.c.b16 %v2359, %v2358
      %v2471 = vpack.c.b16 %v2361, %v2360
      %v2472 = vpack.c.b16 %v2363, %v2362
      %v2473 = vpack.c.b16 %v2365, %v2364
      %v2474 = vpack.c.b16 %v2367, %v2366
      %v2475 = vpack.c.b16 %v2369, %v2368
      %v2476 = vpack.c.b16 %v2371, %v2370
      %v2477 = vpack.c.b16 %v2373, %v2372
      %v2478 = vpack.c.b16 %v2375, %v2374
      %v2479 = vpack.c.b16 %v2377, %v2376
      %v2480 = vpack.c.b16 %v2379, %v2378
      %v2481 = vpack.c.b16 %v2381, %v2380
      %v2482 = vpack.c.b16 %v2383, %v2382
      %v2483 = vpack.c.b16 %v2385, %v2384
      %v2484 = vpack.c.b16 %v2387, %v2386
      %v2485 = vpack.c.b16 %v2389, %v2388
      %v2486 = vpack.c.b16 %v2391, %v2390
      %v2487 = vpack.c.b16 %v2393, %v2392
      %v2488 = vpack.c.b16 %v2395, %v2394
      %v2489 = vpack.c.b16 %v2397, %v2396
      %v2490 = vpack.c.b16 %v2399, %v2398
      %v2491 = vpack.c.b16 %v2401, %v2400
      %v2492 = vpack.c.b16 %v2403, %v2402
      %v2493 = vpack.c.b16 %v2405, %v2404
      %v2494 = vpack.c.b16 %v2407, %v2406
      %v2495 = vpack.c.b16 %v2409, %v2408
      %v2496 = vpack.c.b16 %v2411, %v2410
      %v2497 = vpack.c.b16 %v2413, %v2412
      %v2498 = vpack.c.b16 %v2415, %v2414
      %v2499 = vpack.c.b16 %v2417, %v2416
      %v2500 = vpack.c.b16 %v2419, %v2418
      %v2501 = vpack.c.b16 %v2421, %v2420
      %v2502 = vpack.c.b16 %v2423, %v2422
      %v2503 = vpack.c.b16 %v2425, %v2424
      %v2504 = vpack.c.b16 %v2427, %v2426
      %v2505 = vpack.c.b16 %v2429, %v2428
      %v2506 = vpack.c.b16 %v2431, %v2430
      %v2507 = vpack.c.b16 %v2433, %v2432
      %v2508 = vpack.c.b16 %v2435, %v2434
      %v2509 = vpack.c.b16 %v2437, %v2436
      %2582 = vmatprep.subr.bf16.mxu0 0
      %2583 = vmatpush1.bf16.msra.mxu0 %v2438
      %2584 = vmatprep.subr.bf16.mxu0 0
      %2585 = vmatpush1.bf16.msra.mxu0 %v2439
      %2586 = vmatprep.subr.bf16.mxu0 0
      %2587 = vmatpush1.bf16.msra.mxu0 %v2440
      %2588 = vmatprep.subr.bf16.mxu0 0
      %2589 = vmatpush1.bf16.msra.mxu0 %v2441
      %2590 = vmatprep.subr.bf16.mxu0 0
      %2591 = vmatpush1.bf16.msra.mxu0 %v2442
      %2592 = vmatprep.subr.bf16.mxu0 0
      %2593 = vmatpush1.bf16.msra.mxu0 %v2443
      %2594 = vmatprep.subr.bf16.mxu0 0
      %2595 = vmatpush1.bf16.msra.mxu0 %v2444
      %2596 = vmatprep.subr.bf16.mxu0 0
      %2597 = vmatpush1.bf16.msra.mxu0 %v2445
      %2598 = vmatprep.subr.bf16.mxu0 0
      %2599 = vmatpush1.bf16.msra.mxu0 %v2446
      %2600 = vmatprep.subr.bf16.mxu0 0
      %2601 = vmatpush1.bf16.msra.mxu0 %v2447
      %2602 = vmatprep.subr.bf16.mxu0 0
      %2603 = vmatpush1.bf16.msra.mxu0 %v2448
      %2604 = vmatprep.subr.bf16.mxu0 0
      %2605 = vmatpush1.bf16.msra.mxu0 %v2449
      %2606 = vmatprep.subr.bf16.mxu0 0
      %2607 = vmatpush1.bf16.msra.mxu0 %v2450
      %2608 = vmatprep.subr.bf16.mxu0 0
      %2609 = vmatpush1.bf16.msra.mxu0 %v2451
      %2610 = vmatprep.subr.bf16.mxu0 0
      %2611 = vmatpush1.bf16.msra.mxu0 %v2452
      %2612 = vmatprep.subr.bf16.mxu0 0
      %2613 = vmatpush1.bf16.msra.mxu0 %v2453
      %2614 = vmatprep.mubr.bf16.mxu0 %v761
      %2615 = vmatmul.mubr.bf16.gmra.mrb[0].mxu0 %v669
      %v2616 = vpop.f32.mrb[0].mxu0
      %v2617 = vadd.f32 %v2148, %v2616
      %v2618 = vpop.f32.mrb[0].mxu0
      %v2619 = vpop.f32.mrb[0].mxu0
      %v2620 = vadd.f32 %v2148, %v2619
      %v2621 = vpop.f32.mrb[0].mxu0
      %2622 = vmatprep.mubr.bf16.mxu0 %v773
      %2623 = vmatmul.mubr.bf16.gmra.mrb[0].mxu0 %v670
      %v2624 = vpop.f32.mrb[0].mxu0
      %v2625 = vadd.f32 %v2148, %v2624
      %v2626 = vpop.f32.mrb[0].mxu0
      %v2627 = vpop.f32.mrb[0].mxu0
      %v2628 = vadd.f32 %v2148, %v2627
      %v2629 = vpop.f32.mrb[0].mxu0
      %2630 = vmatprep.mubr.bf16.mxu0 %v785
      %2631 = vmatmul.mubr.bf16.gmra.mrb[0].mxu0 %v671
      %v2632 = vpop.f32.mrb[0].mxu0
      %v2633 = vadd.f32 %v2148, %v2632
      %v2634 = vpop.f32.mrb[0].mxu0
      %v2635 = vpop.f32.mrb[0].mxu0
      %v2636 = vadd.f32 %v2148, %v2635
      %v2637 = vpop.f32.mrb[0].mxu0
      %2638 = vmatprep.mubr.bf16.mxu0 %v797
      %2639 = vmatmul.mubr.bf16.gmra.mrb[0].mxu0 %v672
      %v2640 = vpop.f32.mrb[0].mxu0
      %v2641 = vadd.f32 %v2148, %v2640
      %v2642 = vpop.f32.mrb[0].mxu0
      %v2643 = vpop.f32.mrb[0].mxu0
      %v2644 = vadd.f32 %v2148, %v2643
      %v2645 = vpop.f32.mrb[0].mxu0
      %2646 = vmatprep.mubr.bf16.mxu0 %v809
      %2647 = vmatmul.mubr.bf16.gmra.mrb[0].mxu0 %v673
      %v2648 = vpop.f32.mrb[0].mxu0
      %v2649 = vadd.f32 %v2148, %v2648
      %v2650 = vpop.f32.mrb[0].mxu0
      %v2651 = vpop.f32.mrb[0].mxu0
      %v2652 = vadd.f32 %v2148, %v2651
      %v2653 = vpop.f32.mrb[0].mxu0
      %2654 = vmatprep.mubr.bf16.mxu0 %v821
      %2655 = vmatmul.mubr.bf16.gmra.mrb[0].mxu0 %v674
      %v2656 = vpop.f32.mrb[0].mxu0
      %v2657 = vadd.f32 %v2148, %v2656
      %v2658 = vpop.f32.mrb[0].mxu0
      %v2659 = vpop.f32.mrb[0].mxu0
      %v2660 = vadd.f32 %v2148, %v2659
      %v2661 = vpop.f32.mrb[0].mxu0
      %2662 = vmatprep.mubr.bf16.mxu0 %v833
      %2663 = vmatmul.mubr.bf16.gmra.mrb[0].mxu0 %v675
      %v2664 = vpop.f32.mrb[0].mxu0
      %v2665 = vadd.f32 %v2148, %v2664
      %v2666 = vpop.f32.mrb[0].mxu0
      %v2667 = vpop.f32.mrb[0].mxu0
      %v2668 = vadd.f32 %v2148, %v2667
      %v2669 = vpop.f32.mrb[0].mxu0
      %2670 = vmatprep.mubr.bf16.mxu0 %v845
      %2671 = vmatmul.mubr.bf16.gmra.mrb[0].mxu0 %v676
      %v2672 = vpop.f32.mrb[0].mxu0
      %v2673 = vadd.f32 %v2148, %v2672
      %v2674 = vpop.f32.mrb[0].mxu0
      %v2675 = vpop.f32.mrb[0].mxu0
      %v2676 = vadd.f32 %v2148, %v2675
      %v2677 = vpop.f32.mrb[0].mxu0
      %2678 = vmatprep.mubr.bf16.mxu0 %v857
      %2679 = vmatmul.mubr.bf16.gmra.mrb[0].mxu0 %v677
      %v2680 = vpop.f32.mrb[0].mxu0
      %v2681 = vadd.f32 %v2148, %v2680
      %v2682 = vpop.f32.mrb[0].mxu0
      %v2683 = vpop.f32.mrb[0].mxu0
      %v2684 = vadd.f32 %v2148, %v2683
      %v2685 = vpop.f32.mrb[0].mxu0
      %2686 = vmatprep.mubr.bf16.mxu0 %v869
      %2687 = vmatmul.mubr.bf16.gmra.mrb[0].mxu0 %v678
      %v2688 = vpop.f32.mrb[0].mxu0
      %v2689 = vadd.f32 %v2148, %v2688
      %v2690 = vpop.f32.mrb[0].mxu0
      %v2691 = vpop.f32.mrb[0].mxu0
      %v2692 = vadd.f32 %v2148, %v2691
      %v2693 = vpop.f32.mrb[0].mxu0
      %2694 = vmatprep.mubr.bf16.mxu0 %v881
      %2695 = vmatmul.mubr.bf16.gmra.mrb[0].mxu0 %v679
      %v2696 = vpop.f32.mrb[0].mxu0
      %v2697 = vadd.f32 %v2148, %v2696
      %v2698 = vpop.f32.mrb[0].mxu0
      %v2699 = vpop.f32.mrb[0].mxu0
      %v2700 = vadd.f32 %v2148, %v2699
      %v2701 = vpop.f32.mrb[0].mxu0
      %2702 = vmatprep.mubr.bf16.mxu0 %v893
      %2703 = vmatmul.mubr.bf16.gmra.mrb[0].mxu0 %v680
      %v2704 = vpop.f32.mrb[0].mxu0
      %v2705 = vadd.f32 %v2148, %v2704
      %v2706 = vpop.f32.mrb[0].mxu0
      %v2707 = vpop.f32.mrb[0].mxu0
      %v2708 = vadd.f32 %v2148, %v2707
      %v2709 = vpop.f32.mrb[0].mxu0
      %2710 = vmatprep.mubr.bf16.mxu0 %v905
      %2711 = vmatmul.mubr.bf16.gmra.mrb[0].mxu0 %v681
      %v2712 = vpop.f32.mrb[0].mxu0
      %v2713 = vadd.f32 %v2148, %v2712
      %v2714 = vpop.f32.mrb[0].mxu0
      %v2715 = vpop.f32.mrb[0].mxu0
      %v2716 = vadd.f32 %v2148, %v2715
      %v2717 = vpop.f32.mrb[0].mxu0
      %2718 = vmatprep.mubr.bf16.mxu0 %v917
      %2719 = vmatmul.mubr.bf16.gmra.mrb[0].mxu0 %v682
      %v2720 = vpop.f32.mrb[0].mxu0
      %v2721 = vadd.f32 %v2148, %v2720
      %v2722 = vpop.f32.mrb[0].mxu0
      %v2723 = vpop.f32.mrb[0].mxu0
      %v2724 = vadd.f32 %v2148, %v2723
      %v2725 = vpop.f32.mrb[0].mxu0
      %2726 = vmatprep.mubr.bf16.mxu0 %v929
      %2727 = vmatmul.mubr.bf16.gmra.mrb[0].mxu0 %v683
      %v2728 = vpop.f32.mrb[0].mxu0
      %v2729 = vadd.f32 %v2148, %v2728
      %v2730 = vpop.f32.mrb[0].mxu0
      %v2731 = vpop.f32.mrb[0].mxu0
      %v2732 = vadd.f32 %v2148, %v2731
      %v2733 = vpop.f32.mrb[0].mxu0
      %2734 = vmatprep.mubr.bf16.mxu0 %v941
      %2735 = vmatmul.mubr.bf16.gmra.mrb[0].mxu0 %v684
      %v2736 = vpop.f32.mrb[0].mxu0
      %v2737 = vadd.f32 %v2148, %v2736
      %v2738 = vpop.f32.mrb[0].mxu0
      %v2739 = vpop.f32.mrb[0].mxu0
      %v2740 = vadd.f32 %v2148, %v2739
      %v2741 = vpop.f32.mrb[0].mxu0
      %2742 = vdwg.mxu0
      %2743 = vmatprep.subr.bf16.mxu0 0
      %2744 = vmatpush1.bf16.msra.mxu0 %v2454
      %2745 = vmatprep.subr.bf16.mxu0 0
      %2746 = vmatpush1.bf16.msra.mxu0 %v2455
      %2747 = vmatprep.subr.bf16.mxu0 0
      %2748 = vmatpush1.bf16.msra.mxu0 %v2456
      %2749 = vmatprep.subr.bf16.mxu0 0
      %2750 = vmatpush1.bf16.msra.mxu0 %v2457
      %2751 = vmatprep.subr.bf16.mxu0 0
      %2752 = vmatpush1.bf16.msra.mxu0 %v2458
      %2753 = vmatprep.subr.bf16.mxu0 0
      %2754 = vmatpush1.bf16.msra.mxu0 %v2459
      %2755 = vmatprep.subr.bf16.mxu0 0
      %2756 = vmatpush1.bf16.msra.mxu0 %v2460
      %2757 = vmatprep.subr.bf16.mxu0 0
      %2758 = vmatpush1.bf16.msra.mxu0 %v2461
      %2759 = vmatprep.subr.bf16.mxu0 0
      %2760 = vmatpush1.bf16.msra.mxu0 %v2462
      %2761 = vmatprep.subr.bf16.mxu0 0
      %2762 = vmatpush1.bf16.msra.mxu0 %v2463
      %2763 = vmatprep.subr.bf16.mxu0 0
      %2764 = vmatpush1.bf16.msra.mxu0 %v2464
      %2765 = vmatprep.subr.bf16.mxu0 0
      %2766 = vmatpush1.bf16.msra.mxu0 %v2465
      %2767 = vmatprep.subr.bf16.mxu0 0
      %2768 = vmatpush1.bf16.msra.mxu0 %v2466
      %2769 = vmatprep.subr.bf16.mxu0 0
      %2770 = vmatpush1.bf16.msra.mxu0 %v2467
      %2771 = vmatprep.subr.bf16.mxu0 0
      %2772 = vmatpush1.bf16.msra.mxu0 %v2468
      %2773 = vmatprep.subr.bf16.mxu0 0
      %2774 = vmatpush1.bf16.msra.mxu0 %v2469
      %2775 = vmatprep.mubr.bf16.mxu0 %v1135
      %2776 = vmatmul.mubr.bf16.gmra.mrb[0].mxu0 %v1009
      %v2777 = vpop.f32.mrb[0].mxu0
      %v2778 = vadd.f32 %v2617, %v2777
      %v2779 = vpop.f32.mrb[0].mxu0
      %v2780 = vpop.f32.mrb[0].mxu0
      %v2781 = vadd.f32 %v2620, %v2780
      %v2782 = vpop.f32.mrb[0].mxu0
      %2783 = vmatprep.mubr.bf16.mxu0 %v1136
      %2784 = vmatmul.mubr.bf16.gmra.mrb[0].mxu0 %v1012
      %v2785 = vpop.f32.mrb[0].mxu0
      %v2786 = vadd.f32 %v2625, %v2785
      %v2787 = vpop.f32.mrb[0].mxu0
      %v2788 = vpop.f32.mrb[0].mxu0
      %v2789 = vadd.f32 %v2628, %v2788
      %v2790 = vpop.f32.mrb[0].mxu0
      %2791 = vmatprep.mubr.bf16.mxu0 %v1137
      %2792 = vmatmul.mubr.bf16.gmra.mrb[0].mxu0 %v1015
      %v2793 = vpop.f32.mrb[0].mxu0
      %v2794 = vadd.f32 %v2633, %v2793
      %v2795 = vpop.f32.mrb[0].mxu0
      %v2796 = vpop.f32.mrb[0].mxu0
      %v2797 = vadd.f32 %v2636, %v2796
      %v2798 = vpop.f32.mrb[0].mxu0
      %2799 = vmatprep.mubr.bf16.mxu0 %v1138
      %2800 = vmatmul.mubr.bf16.gmra.mrb[0].mxu0 %v1018
      %v2801 = vpop.f32.mrb[0].mxu0
      %v2802 = vadd.f32 %v2641, %v2801
      %v2803 = vpop.f32.mrb[0].mxu0
      %v2804 = vpop.f32.mrb[0].mxu0
      %v2805 = vadd.f32 %v2644, %v2804
      %v2806 = vpop.f32.mrb[0].mxu0
      %2807 = vmatprep.mubr.bf16.mxu0 %v1139
      %2808 = vmatmul.mubr.bf16.gmra.mrb[0].mxu0 %v1021
      %v2809 = vpop.f32.mrb[0].mxu0
      %v2810 = vadd.f32 %v2649, %v2809
      %v2811 = vpop.f32.mrb[0].mxu0
      %v2812 = vpop.f32.mrb[0].mxu0
      %v2813 = vadd.f32 %v2652, %v2812
      %v2814 = vpop.f32.mrb[0].mxu0
      %2815 = vmatprep.mubr.bf16.mxu0 %v1140
      %2816 = vmatmul.mubr.bf16.gmra.mrb[0].mxu0 %v1024
      %v2817 = vpop.f32.mrb[0].mxu0
      %v2818 = vadd.f32 %v2657, %v2817
      %v2819 = vpop.f32.mrb[0].mxu0
      %v2820 = vpop.f32.mrb[0].mxu0
      %v2821 = vadd.f32 %v2660, %v2820
      %v2822 = vpop.f32.mrb[0].mxu0
      %2823 = vmatprep.mubr.bf16.mxu0 %v1141
      %2824 = vmatmul.mubr.bf16.gmra.mrb[0].mxu0 %v1027
      %v2825 = vpop.f32.mrb[0].mxu0
      %v2826 = vadd.f32 %v2665, %v2825
      %v2827 = vpop.f32.mrb[0].mxu0
      %v2828 = vpop.f32.mrb[0].mxu0
      %v2829 = vadd.f32 %v2668, %v2828
      %v2830 = vpop.f32.mrb[0].mxu0
      %2831 = vmatprep.mubr.bf16.mxu0 %v1142
      %2832 = vmatmul.mubr.bf16.gmra.mrb[0].mxu0 %v1030
      %v2833 = vpop.f32.mrb[0].mxu0
      %v2834 = vadd.f32 %v2673, %v2833
      %v2835 = vpop.f32.mrb[0].mxu0
      %v2836 = vpop.f32.mrb[0].mxu0
      %v2837 = vadd.f32 %v2676, %v2836
      %v2838 = vpop.f32.mrb[0].mxu0
      %2839 = vmatprep.mubr.bf16.mxu0 %v1143
      %2840 = vmatmul.mubr.bf16.gmra.mrb[0].mxu0 %v1033
      %v2841 = vpop.f32.mrb[0].mxu0
      %v2842 = vadd.f32 %v2681, %v2841
      %v2843 = vpop.f32.mrb[0].mxu0
      %v2844 = vpop.f32.mrb[0].mxu0
      %v2845 = vadd.f32 %v2684, %v2844
      %v2846 = vpop.f32.mrb[0].mxu0
      %2847 = vmatprep.mubr.bf16.mxu0 %v1144
      %2848 = vmatmul.mubr.bf16.gmra.mrb[0].mxu0 %v1036
      %v2849 = vpop.f32.mrb[0].mxu0
      %v2850 = vadd.f32 %v2689, %v2849
      %v2851 = vpop.f32.mrb[0].mxu0
      %v2852 = vpop.f32.mrb[0].mxu0
      %v2853 = vadd.f32 %v2692, %v2852
      %v2854 = vpop.f32.mrb[0].mxu0
      %2855 = vmatprep.mubr.bf16.mxu0 %v1145
      %2856 = vmatmul.mubr.bf16.gmra.mrb[0].mxu0 %v1039
      %v2857 = vpop.f32.mrb[0].mxu0
      %v2858 = vadd.f32 %v2697, %v2857
      %v2859 = vpop.f32.mrb[0].mxu0
      %v2860 = vpop.f32.mrb[0].mxu0
      %v2861 = vadd.f32 %v2700, %v2860
      %v2862 = vpop.f32.mrb[0].mxu0
      %2863 = vmatprep.mubr.bf16.mxu0 %v1146
      %2864 = vmatmul.mubr.bf16.gmra.mrb[0].mxu0 %v1042
      %v2865 = vpop.f32.mrb[0].mxu0
      %v2866 = vadd.f32 %v2705, %v2865
      %v2867 = vpop.f32.mrb[0].mxu0
      %v2868 = vpop.f32.mrb[0].mxu0
      %v2869 = vadd.f32 %v2708, %v2868
      %v2870 = vpop.f32.mrb[0].mxu0
      %2871 = vmatprep.mubr.bf16.mxu0 %v1147
      %2872 = vmatmul.mubr.bf16.gmra.mrb[0].mxu0 %v1045
      %v2873 = vpop.f32.mrb[0].mxu0
      %v2874 = vadd.f32 %v2713, %v2873
      %v2875 = vpop.f32.mrb[0].mxu0
      %v2876 = vpop.f32.mrb[0].mxu0
      %v2877 = vadd.f32 %v2716, %v2876
      %v2878 = vpop.f32.mrb[0].mxu0
      %2879 = vmatprep.mubr.bf16.mxu0 %v1148
      %2880 = vmatmul.mubr.bf16.gmra.mrb[0].mxu0 %v1048
      %v2881 = vpop.f32.mrb[0].mxu0
      %v2882 = vadd.f32 %v2721, %v2881
      %v2883 = vpop.f32.mrb[0].mxu0
      %v2884 = vpop.f32.mrb[0].mxu0
      %v2885 = vadd.f32 %v2724, %v2884
      %v2886 = vpop.f32.mrb[0].mxu0
      %2887 = vmatprep.mubr.bf16.mxu0 %v1149
      %2888 = vmatmul.mubr.bf16.gmra.mrb[0].mxu0 %v1051
      %v2889 = vpop.f32.mrb[0].mxu0
      %v2890 = vadd.f32 %v2729, %v2889
      %v2891 = vpop.f32.mrb[0].mxu0
      %v2892 = vpop.f32.mrb[0].mxu0
      %v2893 = vadd.f32 %v2732, %v2892
      %v2894 = vpop.f32.mrb[0].mxu0
      %2895 = vmatprep.mubr.bf16.mxu0 %v1150
      %2896 = vmatmul.mubr.bf16.gmra.mrb[0].mxu0 %v1054
      %v2897 = vpop.f32.mrb[0].mxu0
      %v2898 = vadd.f32 %v2737, %v2897
      %v2899 = vpop.f32.mrb[0].mxu0
      %v2900 = vpop.f32.mrb[0].mxu0
      %v2901 = vadd.f32 %v2740, %v2900
      %v2902 = vpop.f32.mrb[0].mxu0
      %2903 = vdwg.mxu0
      %2904 = vmatprep.subr.bf16.mxu0 0
      %2905 = vmatpush1.bf16.msra.mxu0 %v2470
      %2906 = vmatprep.subr.bf16.mxu0 0
      %2907 = vmatpush1.bf16.msra.mxu0 %v2471
      %2908 = vmatprep.subr.bf16.mxu0 0
      %2909 = vmatpush1.bf16.msra.mxu0 %v2472
      %2910 = vmatprep.subr.bf16.mxu0 0
      %2911 = vmatpush1.bf16.msra.mxu0 %v2473
      %2912 = vmatprep.subr.bf16.mxu0 0
      %2913 = vmatpush1.bf16.msra.mxu0 %v2474
      %2914 = vmatprep.subr.bf16.mxu0 0
      %2915 = vmatpush1.bf16.msra.mxu0 %v2475
      %2916 = vmatprep.subr.bf16.mxu0 0
      %2917 = vmatpush1.bf16.msra.mxu0 %v2476
      %2918 = vmatprep.subr.bf16.mxu0 0
      %2919 = vmatpush1.bf16.msra.mxu0 %v2477
      %2920 = vmatprep.subr.bf16.mxu0 0
      %2921 = vmatpush1.bf16.msra.mxu0 %v2478
      %2922 = vmatprep.subr.bf16.mxu0 0
      %2923 = vmatpush1.bf16.msra.mxu0 %v2479
      %2924 = vmatprep.subr.bf16.mxu0 0
      %2925 = vmatpush1.bf16.msra.mxu0 %v2480
      %2926 = vmatprep.subr.bf16.mxu0 0
      %2927 = vmatpush1.bf16.msra.mxu0 %v2481
      %2928 = vmatprep.subr.bf16.mxu0 0
      %2929 = vmatpush1.bf16.msra.mxu0 %v2482
      %2930 = vmatprep.subr.bf16.mxu0 0
      %2931 = vmatpush1.bf16.msra.mxu0 %v2483
      %2932 = vmatprep.subr.bf16.mxu0 0
      %2933 = vmatpush1.bf16.msra.mxu0 %v2484
      %2934 = vmatprep.subr.bf16.mxu0 0
      %2935 = vmatpush1.bf16.msra.mxu0 %v2485
      %2936 = vmatprep.mubr.bf16.mxu0 %v1473
      %2937 = vmatmul.mubr.bf16.gmra.mrb[0].mxu0 %v1226
      %v2938 = vpop.f32.mrb[0].mxu0
      %v2939 = vadd.f32 %v2778, %v2938
      %v2940 = vpop.f32.mrb[0].mxu0
      %v2941 = vpop.f32.mrb[0].mxu0
      %v2942 = vadd.f32 %v2781, %v2941
      %v2943 = vpop.f32.mrb[0].mxu0
      %2944 = vmatprep.mubr.bf16.mxu0 %v1476
      %2945 = vmatmul.mubr.bf16.gmra.mrb[0].mxu0 %v1238
      %v2946 = vpop.f32.mrb[0].mxu0
      %v2947 = vadd.f32 %v2786, %v2946
      %v2948 = vpop.f32.mrb[0].mxu0
      %v2949 = vpop.f32.mrb[0].mxu0
      %v2950 = vadd.f32 %v2789, %v2949
      %v2951 = vpop.f32.mrb[0].mxu0
      %2952 = vmatprep.mubr.bf16.mxu0 %v1479
      %2953 = vmatmul.mubr.bf16.gmra.mrb[0].mxu0 %v1250
      %v2954 = vpop.f32.mrb[0].mxu0
      %v2955 = vadd.f32 %v2794, %v2954
      %v2956 = vpop.f32.mrb[0].mxu0
      %v2957 = vpop.f32.mrb[0].mxu0
      %v2958 = vadd.f32 %v2797, %v2957
      %v2959 = vpop.f32.mrb[0].mxu0
      %2960 = vmatprep.mubr.bf16.mxu0 %v1482
      %2961 = vmatmul.mubr.bf16.gmra.mrb[0].mxu0 %v1262
      %v2962 = vpop.f32.mrb[0].mxu0
      %v2963 = vadd.f32 %v2802, %v2962
      %v2964 = vpop.f32.mrb[0].mxu0
      %v2965 = vpop.f32.mrb[0].mxu0
      %v2966 = vadd.f32 %v2805, %v2965
      %v2967 = vpop.f32.mrb[0].mxu0
      %2968 = vmatprep.mubr.bf16.mxu0 %v1485
      %2969 = vmatmul.mubr.bf16.gmra.mrb[0].mxu0 %v1274
      %v2970 = vpop.f32.mrb[0].mxu0
      %v2971 = vadd.f32 %v2810, %v2970
      %v2972 = vpop.f32.mrb[0].mxu0
      %v2973 = vpop.f32.mrb[0].mxu0
      %v2974 = vadd.f32 %v2813, %v2973
      %v2975 = vpop.f32.mrb[0].mxu0
      %2976 = vmatprep.mubr.bf16.mxu0 %v1488
      %2977 = vmatmul.mubr.bf16.gmra.mrb[0].mxu0 %v1286
      %v2978 = vpop.f32.mrb[0].mxu0
      %v2979 = vadd.f32 %v2818, %v2978
      %v2980 = vpop.f32.mrb[0].mxu0
      %v2981 = vpop.f32.mrb[0].mxu0
      %v2982 = vadd.f32 %v2821, %v2981
      %v2983 = vpop.f32.mrb[0].mxu0
      %2984 = vmatprep.mubr.bf16.mxu0 %v1491
      %2985 = vmatmul.mubr.bf16.gmra.mrb[0].mxu0 %v1298
      %v2986 = vpop.f32.mrb[0].mxu0
      %v2987 = vadd.f32 %v2826, %v2986
      %v2988 = vpop.f32.mrb[0].mxu0
      %v2989 = vpop.f32.mrb[0].mxu0
      %v2990 = vadd.f32 %v2829, %v2989
      %v2991 = vpop.f32.mrb[0].mxu0
      %2992 = vmatprep.mubr.bf16.mxu0 %v1494
      %2993 = vmatmul.mubr.bf16.gmra.mrb[0].mxu0 %v1310
      %v2994 = vpop.f32.mrb[0].mxu0
      %v2995 = vadd.f32 %v2834, %v2994
      %v2996 = vpop.f32.mrb[0].mxu0
      %v2997 = vpop.f32.mrb[0].mxu0
      %v2998 = vadd.f32 %v2837, %v2997
      %v2999 = vpop.f32.mrb[0].mxu0
      %3000 = vmatprep.mubr.bf16.mxu0 %v1497
      %3001 = vmatmul.mubr.bf16.gmra.mrb[0].mxu0 %v1322
      %v3002 = vpop.f32.mrb[0].mxu0
      %v3003 = vadd.f32 %v2842, %v3002
      %v3004 = vpop.f32.mrb[0].mxu0
      %v3005 = vpop.f32.mrb[0].mxu0
      %v3006 = vadd.f32 %v2845, %v3005
      %v3007 = vpop.f32.mrb[0].mxu0
      %3008 = vmatprep.mubr.bf16.mxu0 %v1500
      %3009 = vmatmul.mubr.bf16.gmra.mrb[0].mxu0 %v1334
      %v3010 = vpop.f32.mrb[0].mxu0
      %v3011 = vadd.f32 %v2850, %v3010
      %v3012 = vpop.f32.mrb[0].mxu0
      %v3013 = vpop.f32.mrb[0].mxu0
      %v3014 = vadd.f32 %v2853, %v3013
      %v3015 = vpop.f32.mrb[0].mxu0
      %3016 = vmatprep.mubr.bf16.mxu0 %v1503
      %3017 = vmatmul.mubr.bf16.gmra.mrb[0].mxu0 %v1346
      %v3018 = vpop.f32.mrb[0].mxu0
      %v3019 = vadd.f32 %v2858, %v3018
      %v3020 = vpop.f32.mrb[0].mxu0
      %v3021 = vpop.f32.mrb[0].mxu0
      %v3022 = vadd.f32 %v2861, %v3021
      %v3023 = vpop.f32.mrb[0].mxu0
      %3024 = vmatprep.mubr.bf16.mxu0 %v1506
      %3025 = vmatmul.mubr.bf16.gmra.mrb[0].mxu0 %v1358
      %v3026 = vpop.f32.mrb[0].mxu0
      %v3027 = vadd.f32 %v2866, %v3026
      %v3028 = vpop.f32.mrb[0].mxu0
      %v3029 = vpop.f32.mrb[0].mxu0
      %v3030 = vadd.f32 %v2869, %v3029
      %v3031 = vpop.f32.mrb[0].mxu0
      %3032 = vmatprep.mubr.bf16.mxu0 %v1509
      %3033 = vmatmul.mubr.bf16.gmra.mrb[0].mxu0 %v1370
      %v3034 = vpop.f32.mrb[0].mxu0
      %v3035 = vadd.f32 %v2874, %v3034
      %v3036 = vpop.f32.mrb[0].mxu0
      %v3037 = vpop.f32.mrb[0].mxu0
      %v3038 = vadd.f32 %v2877, %v3037
      %v3039 = vpop.f32.mrb[0].mxu0
      %3040 = vmatprep.mubr.bf16.mxu0 %v1512
      %3041 = vmatmul.mubr.bf16.gmra.mrb[0].mxu0 %v1382
      %v3042 = vpop.f32.mrb[0].mxu0
      %v3043 = vadd.f32 %v2882, %v3042
      %v3044 = vpop.f32.mrb[0].mxu0
      %v3045 = vpop.f32.mrb[0].mxu0
      %v3046 = vadd.f32 %v2885, %v3045
      %v3047 = vpop.f32.mrb[0].mxu0
      %3048 = vmatprep.mubr.bf16.mxu0 %v1515
      %3049 = vmatmul.mubr.bf16.gmra.mrb[0].mxu0 %v1394
      %v3050 = vpop.f32.mrb[0].mxu0
      %v3051 = vadd.f32 %v2890, %v3050
      %v3052 = vpop.f32.mrb[0].mxu0
      %v3053 = vpop.f32.mrb[0].mxu0
      %v3054 = vadd.f32 %v2893, %v3053
      %v3055 = vpop.f32.mrb[0].mxu0
      %3056 = vmatprep.mubr.bf16.mxu0 %v1518
      %3057 = vmatmul.mubr.bf16.gmra.mrb[0].mxu0 %v1406
      %v3058 = vpop.f32.mrb[0].mxu0
      %v3059 = vadd.f32 %v2898, %v3058
      %v3060 = vpop.f32.mrb[0].mxu0
      %v3061 = vpop.f32.mrb[0].mxu0
      %v3062 = vadd.f32 %v2901, %v3061
      %v3063 = vpop.f32.mrb[0].mxu0
      %3064 = vdwg.mxu0
      %3065 = vmatprep.subr.bf16.mxu0 0
      %3066 = vmatpush1.bf16.msra.mxu0 %v2486
      %3067 = vmatprep.subr.bf16.mxu0 0
      %3068 = vmatpush1.bf16.msra.mxu0 %v2487
      %3069 = vmatprep.subr.bf16.mxu0 0
      %3070 = vmatpush1.bf16.msra.mxu0 %v2488
      %3071 = vmatprep.subr.bf16.mxu0 0
      %3072 = vmatpush1.bf16.msra.mxu0 %v2489
      %3073 = vmatprep.subr.bf16.mxu0 0
      %3074 = vmatpush1.bf16.msra.mxu0 %v2490
      %3075 = vmatprep.subr.bf16.mxu0 0
      %3076 = vmatpush1.bf16.msra.mxu0 %v2491
      %3077 = vmatprep.subr.bf16.mxu0 0
      %3078 = vmatpush1.bf16.msra.mxu0 %v2492
      %3079 = vmatprep.subr.bf16.mxu0 0
      %3080 = vmatpush1.bf16.msra.mxu0 %v2493
      %3081 = vmatprep.subr.bf16.mxu0 0
      %3082 = vmatpush1.bf16.msra.mxu0 %v2494
      %3083 = vmatprep.subr.bf16.mxu0 0
      %3084 = vmatpush1.bf16.msra.mxu0 %v2495
      %3085 = vmatprep.subr.bf16.mxu0 0
      %3086 = vmatpush1.bf16.msra.mxu0 %v2496
      %3087 = vmatprep.subr.bf16.mxu0 0
      %3088 = vmatpush1.bf16.msra.mxu0 %v2497
      %3089 = vmatprep.subr.bf16.mxu0 0
      %3090 = vmatpush1.bf16.msra.mxu0 %v2498
      %3091 = vmatprep.subr.bf16.mxu0 0
      %3092 = vmatpush1.bf16.msra.mxu0 %v2499
      %3093 = vmatprep.subr.bf16.mxu0 0
      %3094 = vmatpush1.bf16.msra.mxu0 %v2500
      %3095 = vmatprep.subr.bf16.mxu0 0
      %3096 = vmatpush1.bf16.msra.mxu0 %v2501
      %3097 = vmatprep.mubr.bf16.mxu0 %v1690
      %3098 = vmatmul.mubr.bf16.gmra.mrb[0].mxu0 %v1599
      %v3099 = vpop.f32.mrb[0].mxu0
      %v3100 = vadd.f32 %v2939, %v3099
      %v3101 = vpop.f32.mrb[0].mxu0
      %v3102 = vpop.f32.mrb[0].mxu0
      %v3103 = vadd.f32 %v2942, %v3102
      %v3104 = vpop.f32.mrb[0].mxu0
      %3105 = vmatprep.mubr.bf16.mxu0 %v1702
      %3106 = vmatmul.mubr.bf16.gmra.mrb[0].mxu0 %v1600
      %v3107 = vpop.f32.mrb[0].mxu0
      %v3108 = vadd.f32 %v2947, %v3107
      %v3109 = vpop.f32.mrb[0].mxu0
      %v3110 = vpop.f32.mrb[0].mxu0
      %v3111 = vadd.f32 %v2950, %v3110
      %v3112 = vpop.f32.mrb[0].mxu0
      %3113 = vmatprep.mubr.bf16.mxu0 %v1714
      %3114 = vmatmul.mubr.bf16.gmra.mrb[0].mxu0 %v1601
      %v3115 = vpop.f32.mrb[0].mxu0
      %v3116 = vadd.f32 %v2955, %v3115
      %v3117 = vpop.f32.mrb[0].mxu0
      %v3118 = vpop.f32.mrb[0].mxu0
      %v3119 = vadd.f32 %v2958, %v3118
      %v3120 = vpop.f32.mrb[0].mxu0
      %3121 = vmatprep.mubr.bf16.mxu0 %v1726
      %3122 = vmatmul.mubr.bf16.gmra.mrb[0].mxu0 %v1602
      %v3123 = vpop.f32.mrb[0].mxu0
      %v3124 = vadd.f32 %v2963, %v3123
      %v3125 = vpop.f32.mrb[0].mxu0
      %v3126 = vpop.f32.mrb[0].mxu0
      %v3127 = vadd.f32 %v2966, %v3126
      %v3128 = vpop.f32.mrb[0].mxu0
      %3129 = vmatprep.mubr.bf16.mxu0 %v1738
      %3130 = vmatmul.mubr.bf16.gmra.mrb[0].mxu0 %v1603
      %v3131 = vpop.f32.mrb[0].mxu0
      %v3132 = vadd.f32 %v2971, %v3131
      %v3133 = vpop.f32.mrb[0].mxu0
      %v3134 = vpop.f32.mrb[0].mxu0
      %v3135 = vadd.f32 %v2974, %v3134
      %v3136 = vpop.f32.mrb[0].mxu0
      %3137 = vmatprep.mubr.bf16.mxu0 %v1750
      %3138 = vmatmul.mubr.bf16.gmra.mrb[0].mxu0 %v1604
      %v3139 = vpop.f32.mrb[0].mxu0
      %v3140 = vadd.f32 %v2979, %v3139
      %v3141 = vpop.f32.mrb[0].mxu0
      %v3142 = vpop.f32.mrb[0].mxu0
      %v3143 = vadd.f32 %v2982, %v3142
      %v3144 = vpop.f32.mrb[0].mxu0
      %3145 = vmatprep.mubr.bf16.mxu0 %v1762
      %3146 = vmatmul.mubr.bf16.gmra.mrb[0].mxu0 %v1605
      %v3147 = vpop.f32.mrb[0].mxu0
      %v3148 = vadd.f32 %v2987, %v3147
      %v3149 = vpop.f32.mrb[0].mxu0
      %v3150 = vpop.f32.mrb[0].mxu0
      %v3151 = vadd.f32 %v2990, %v3150
      %v3152 = vpop.f32.mrb[0].mxu0
      %3153 = vmatprep.mubr.bf16.mxu0 %v1774
      %3154 = vmatmul.mubr.bf16.gmra.mrb[0].mxu0 %v1606
      %v3155 = vpop.f32.mrb[0].mxu0
      %v3156 = vadd.f32 %v2995, %v3155
      %v3157 = vpop.f32.mrb[0].mxu0
      %v3158 = vpop.f32.mrb[0].mxu0
      %v3159 = vadd.f32 %v2998, %v3158
      %v3160 = vpop.f32.mrb[0].mxu0
      %3161 = vmatprep.mubr.bf16.mxu0 %v1786
      %3162 = vmatmul.mubr.bf16.gmra.mrb[0].mxu0 %v1607
      %v3163 = vpop.f32.mrb[0].mxu0
      %v3164 = vadd.f32 %v3003, %v3163
      %v3165 = vpop.f32.mrb[0].mxu0
      %v3166 = vpop.f32.mrb[0].mxu0
      %v3167 = vadd.f32 %v3006, %v3166
      %v3168 = vpop.f32.mrb[0].mxu0
      %3169 = vmatprep.mubr.bf16.mxu0 %v1798
      %3170 = vmatmul.mubr.bf16.gmra.mrb[0].mxu0 %v1608
      %v3171 = vpop.f32.mrb[0].mxu0
      %v3172 = vadd.f32 %v3011, %v3171
      %v3173 = vpop.f32.mrb[0].mxu0
      %v3174 = vpop.f32.mrb[0].mxu0
      %v3175 = vadd.f32 %v3014, %v3174
      %v3176 = vpop.f32.mrb[0].mxu0
      %3177 = vmatprep.mubr.bf16.mxu0 %v1810
      %3178 = vmatmul.mubr.bf16.gmra.mrb[0].mxu0 %v1609
      %v3179 = vpop.f32.mrb[0].mxu0
      %v3180 = vadd.f32 %v3019, %v3179
      %v3181 = vpop.f32.mrb[0].mxu0
      %v3182 = vpop.f32.mrb[0].mxu0
      %v3183 = vadd.f32 %v3022, %v3182
      %v3184 = vpop.f32.mrb[0].mxu0
      %3185 = vmatprep.mubr.bf16.mxu0 %v1822
      %3186 = vmatmul.mubr.bf16.gmra.mrb[0].mxu0 %v1610
      %v3187 = vpop.f32.mrb[0].mxu0
      %v3188 = vadd.f32 %v3027, %v3187
      %v3189 = vpop.f32.mrb[0].mxu0
      %v3190 = vpop.f32.mrb[0].mxu0
      %v3191 = vadd.f32 %v3030, %v3190
      %v3192 = vpop.f32.mrb[0].mxu0
      %3193 = vmatprep.mubr.bf16.mxu0 %v1834
      %3194 = vmatmul.mubr.bf16.gmra.mrb[0].mxu0 %v1611
      %v3195 = vpop.f32.mrb[0].mxu0
      %v3196 = vadd.f32 %v3035, %v3195
      %v3197 = vpop.f32.mrb[0].mxu0
      %v3198 = vpop.f32.mrb[0].mxu0
      %v3199 = vadd.f32 %v3038, %v3198
      %v3200 = vpop.f32.mrb[0].mxu0
      %3201 = vmatprep.mubr.bf16.mxu0 %v1846
      %3202 = vmatmul.mubr.bf16.gmra.mrb[0].mxu0 %v1612
      %v3203 = vpop.f32.mrb[0].mxu0
      %v3204 = vadd.f32 %v3043, %v3203
      %v3205 = vpop.f32.mrb[0].mxu0
      %v3206 = vpop.f32.mrb[0].mxu0
      %v3207 = vadd.f32 %v3046, %v3206
      %v3208 = vpop.f32.mrb[0].mxu0
      %3209 = vmatprep.mubr.bf16.mxu0 %v1858
      %3210 = vmatmul.mubr.bf16.gmra.mrb[0].mxu0 %v1613
      %v3211 = vpop.f32.mrb[0].mxu0
      %v3212 = vadd.f32 %v3051, %v3211
      %v3213 = vpop.f32.mrb[0].mxu0
      %v3214 = vpop.f32.mrb[0].mxu0
      %v3215 = vadd.f32 %v3054, %v3214
      %v3216 = vpop.f32.mrb[0].mxu0
      %3217 = vmatprep.mubr.bf16.mxu0 %v1870
      %3218 = vmatmul.mubr.bf16.gmra.mrb[0].mxu0 %v1614
      %v3219 = vpop.f32.mrb[0].mxu0
      %v3220 = vadd.f32 %v3059, %v3219
      %v3221 = vpop.f32.mrb[0].mxu0
      %v3222 = vpop.f32.mrb[0].mxu0
      %v3223 = vadd.f32 %v3062, %v3222
      %v3224 = vpop.f32.mrb[0].mxu0
      %3225 = vdwg.mxu0
      %3226 = vmatprep.subr.bf16.mxu0 0
      %3227 = vmatpush1.bf16.msra.mxu0 %v2502
      %3228 = vmatprep.subr.bf16.mxu0 0
      %3229 = vmatpush1.bf16.msra.mxu0 %v2503
      %3230 = vmatprep.subr.bf16.mxu0 0
      %3231 = vmatpush1.bf16.msra.mxu0 %v2504
      %3232 = vmatprep.subr.bf16.mxu0 0
      %3233 = vmatpush1.bf16.msra.mxu0 %v2505
      %3234 = vmatprep.subr.bf16.mxu0 0
      %3235 = vmatpush1.bf16.msra.mxu0 %v2506
      %3236 = vmatprep.subr.bf16.mxu0 0
      %3237 = vmatpush1.bf16.msra.mxu0 %v2507
      %3238 = vmatprep.subr.bf16.mxu0 0
      %3239 = vmatpush1.bf16.msra.mxu0 %v2508
      %3240 = vmatprep.subr.bf16.mxu0 0
      %3241 = vmatpush1.bf16.msra.mxu0 %v2509
      %3242 = vmatprep.subr.bf16.mxu0 0
      %3243 = vmatpush1.bf16.msra.mxu0 0
      %3244 = vmatprep.subr.bf16.mxu0 0
      %3245 = vmatpush1.bf16.msra.mxu0 0
      %3246 = vmatprep.subr.bf16.mxu0 0
      %3247 = vmatpush1.bf16.msra.mxu0 0
      %3248 = vmatprep.subr.bf16.mxu0 0
      %3249 = vmatpush1.bf16.msra.mxu0 0
      %3250 = vmatprep.subr.bf16.mxu0 0
      %3251 = vmatpush1.bf16.msra.mxu0 0
      %3252 = vmatprep.subr.bf16.mxu0 0
      %3253 = vmatpush1.bf16.msra.mxu0 0
      %3254 = vmatprep.subr.bf16.mxu0 0
      %3255 = vmatpush1.bf16.msra.mxu0 0
      %3256 = vmatprep.subr.bf16.mxu0 0
      %3257 = vmatpush1.bf16.msra.mxu0 0
      %3258 = vmatprep.mubr.bf16.mxu0 0
      %3259 = vmatmul.mubr.bf16.gmra.mrb[0].mxu0 %v1937
      %v3260 = vpop.f32.mrb[0].mxu0
      %v3261 = vadd.f32 %v3100, %v3260
      %v3262 = vpop.f32.mrb[0].mxu0
      %v3263 = vpop.f32.mrb[0].mxu0
      %v3264 = vadd.f32 %v3103, %v3263
      %v3265 = vpop.f32.mrb[0].mxu0
      %3266 = vmatprep.mubr.bf16.mxu0 0
      %3267 = vmatmul.mubr.bf16.gmra.mrb[0].mxu0 %v1940
      %v3268 = vpop.f32.mrb[0].mxu0
      %v3269 = vadd.f32 %v3108, %v3268
      %v3270 = vpop.f32.mrb[0].mxu0
      %v3271 = vpop.f32.mrb[0].mxu0
      %v3272 = vadd.f32 %v3111, %v3271
      %v3273 = vpop.f32.mrb[0].mxu0
      %3274 = vmatprep.mubr.bf16.mxu0 0
      %3275 = vmatmul.mubr.bf16.gmra.mrb[0].mxu0 %v1943
      %v3276 = vpop.f32.mrb[0].mxu0
      %v3277 = vadd.f32 %v3116, %v3276
      %v3278 = vpop.f32.mrb[0].mxu0
      %v3279 = vpop.f32.mrb[0].mxu0
      %v3280 = vadd.f32 %v3119, %v3279
      %v3281 = vpop.f32.mrb[0].mxu0
      %3282 = vmatprep.mubr.bf16.mxu0 0
      %3283 = vmatmul.mubr.bf16.gmra.mrb[0].mxu0 %v1946
      %v3284 = vpop.f32.mrb[0].mxu0
      %v3285 = vadd.f32 %v3124, %v3284
      %v3286 = vpop.f32.mrb[0].mxu0
      %v3287 = vpop.f32.mrb[0].mxu0
      %v3288 = vadd.f32 %v3127, %v3287
      %v3289 = vpop.f32.mrb[0].mxu0
      %3290 = vmatprep.mubr.bf16.mxu0 0
      %3291 = vmatmul.mubr.bf16.gmra.mrb[0].mxu0 %v1949
      %v3292 = vpop.f32.mrb[0].mxu0
      %v3293 = vadd.f32 %v3132, %v3292
      %v3294 = vpop.f32.mrb[0].mxu0
      %v3295 = vpop.f32.mrb[0].mxu0
      %v3296 = vadd.f32 %v3135, %v3295
      %v3297 = vpop.f32.mrb[0].mxu0
      %3298 = vmatprep.mubr.bf16.mxu0 0
      %3299 = vmatmul.mubr.bf16.gmra.mrb[0].mxu0 %v1952
      %v3300 = vpop.f32.mrb[0].mxu0
      %v3301 = vadd.f32 %v3140, %v3300
      %v3302 = vpop.f32.mrb[0].mxu0
      %v3303 = vpop.f32.mrb[0].mxu0
      %v3304 = vadd.f32 %v3143, %v3303
      %v3305 = vpop.f32.mrb[0].mxu0
      %3306 = vmatprep.mubr.bf16.mxu0 0
      %3307 = vmatmul.mubr.bf16.gmra.mrb[0].mxu0 %v1955
      %v3308 = vpop.f32.mrb[0].mxu0
      %v3309 = vadd.f32 %v3148, %v3308
      %v3310 = vpop.f32.mrb[0].mxu0
      %v3311 = vpop.f32.mrb[0].mxu0
      %v3312 = vadd.f32 %v3151, %v3311
      %v3313 = vpop.f32.mrb[0].mxu0
      %3314 = vmatprep.mubr.bf16.mxu0 0
      %3315 = vmatmul.mubr.bf16.gmra.mrb[0].mxu0 %v1958
      %v3316 = vpop.f32.mrb[0].mxu0
      %v3317 = vadd.f32 %v3156, %v3316
      %v3318 = vpop.f32.mrb[0].mxu0
      %v3319 = vpop.f32.mrb[0].mxu0
      %v3320 = vadd.f32 %v3159, %v3319
      %v3321 = vpop.f32.mrb[0].mxu0
      %3322 = vmatprep.mubr.bf16.mxu0 0
      %3323 = vmatmul.mubr.bf16.gmra.mrb[0].mxu0 %v1961
      %v3324 = vpop.f32.mrb[0].mxu0
      %v3325 = vadd.f32 %v3164, %v3324
      %v3326 = vpop.f32.mrb[0].mxu0
      %v3327 = vpop.f32.mrb[0].mxu0
      %v3328 = vadd.f32 %v3167, %v3327
      %v3329 = vpop.f32.mrb[0].mxu0
      %3330 = vmatprep.mubr.bf16.mxu0 0
      %3331 = vmatmul.mubr.bf16.gmra.mrb[0].mxu0 %v1964
      %v3332 = vpop.f32.mrb[0].mxu0
      %v3333 = vadd.f32 %v3172, %v3332
      %v3334 = vpop.f32.mrb[0].mxu0
      %v3335 = vpop.f32.mrb[0].mxu0
      %v3336 = vadd.f32 %v3175, %v3335
      %v3337 = vpop.f32.mrb[0].mxu0
      %3338 = vmatprep.mubr.bf16.mxu0 0
      %3339 = vmatmul.mubr.bf16.gmra.mrb[0].mxu0 %v1967
      %v3340 = vpop.f32.mrb[0].mxu0
      %v3341 = vadd.f32 %v3180, %v3340
      %v3342 = vpop.f32.mrb[0].mxu0
      %v3343 = vpop.f32.mrb[0].mxu0
      %v3344 = vadd.f32 %v3183, %v3343
      %v3345 = vpop.f32.mrb[0].mxu0
      %3346 = vmatprep.mubr.bf16.mxu0 0
      %3347 = vmatmul.mubr.bf16.gmra.mrb[0].mxu0 %v1970
      %v3348 = vpop.f32.mrb[0].mxu0
      %v3349 = vadd.f32 %v3188, %v3348
      %v3350 = vpop.f32.mrb[0].mxu0
      %v3351 = vpop.f32.mrb[0].mxu0
      %v3352 = vadd.f32 %v3191, %v3351
      %v3353 = vpop.f32.mrb[0].mxu0
      %3354 = vmatprep.mubr.bf16.mxu0 0
      %3355 = vmatmul.mubr.bf16.gmra.mrb[0].mxu0 %v1973
      %v3356 = vpop.f32.mrb[0].mxu0
      %v3357 = vadd.f32 %v3196, %v3356
      %v3358 = vpop.f32.mrb[0].mxu0
      %v3359 = vpop.f32.mrb[0].mxu0
      %v3360 = vadd.f32 %v3199, %v3359
      %v3361 = vpop.f32.mrb[0].mxu0
      %3362 = vmatprep.mubr.bf16.mxu0 0
      %3363 = vmatmul.mubr.bf16.gmra.mrb[0].mxu0 %v1976
      %v3364 = vpop.f32.mrb[0].mxu0
      %v3365 = vadd.f32 %v3204, %v3364
      %v3366 = vpop.f32.mrb[0].mxu0
      %v3367 = vpop.f32.mrb[0].mxu0
      %v3368 = vadd.f32 %v3207, %v3367
      %v3369 = vpop.f32.mrb[0].mxu0
      %3370 = vmatprep.mubr.bf16.mxu0 0
      %3371 = vmatmul.mubr.bf16.gmra.mrb[0].mxu0 %v1979
      %v3372 = vpop.f32.mrb[0].mxu0
      %v3373 = vadd.f32 %v3212, %v3372
      %v3374 = vpop.f32.mrb[0].mxu0
      %v3375 = vpop.f32.mrb[0].mxu0
      %v3376 = vadd.f32 %v3215, %v3375
      %v3377 = vpop.f32.mrb[0].mxu0
      %3378 = vmatprep.mubr.bf16.mxu0 0
      %3379 = vmatmul.mubr.bf16.gmra.mrb[0].mxu0 %v1982
      %v3380 = vpop.f32.mrb[0].mxu0
      %v3381 = vadd.f32 %v3220, %v3380
      %v3382 = vpop.f32.mrb[0].mxu0
      %v3383 = vpop.f32.mrb[0].mxu0
      %v3384 = vadd.f32 %v3223, %v3383
      %v3385 = vpop.f32.mrb[0].mxu0
      %3386 = vdwg.mxu0
      %v3387 = vxor.u32 %v3261, 2147483648
      %v3388 = vxor.u32 %v3264, 2147483648
      %v3389 = vxor.u32 %v3269, 2147483648
      %v3390 = vxor.u32 %v3272, 2147483648
      %v3391 = vxor.u32 %v3277, 2147483648
      %v3392 = vxor.u32 %v3280, 2147483648
      %v3393 = vxor.u32 %v3285, 2147483648
      %v3394 = vxor.u32 %v3288, 2147483648
      %v3395 = vxor.u32 %v3293, 2147483648
      %v3396 = vxor.u32 %v3296, 2147483648
      %v3397 = vxor.u32 %v3301, 2147483648
      %v3398 = vxor.u32 %v3304, 2147483648
      %v3399 = vxor.u32 %v3309, 2147483648
      %v3400 = vxor.u32 %v3312, 2147483648
      %v3401 = vxor.u32 %v3317, 2147483648
      %v3402 = vxor.u32 %v3320, 2147483648
      %v3403 = vxor.u32 %v3325, 2147483648
      %v3404 = vxor.u32 %v3328, 2147483648
      %v3405 = vxor.u32 %v3333, 2147483648
      %v3406 = vxor.u32 %v3336, 2147483648
      %v3407 = vxor.u32 %v3341, 2147483648
      %v3408 = vxor.u32 %v3344, 2147483648
      %v3409 = vxor.u32 %v3349, 2147483648
      %v3410 = vxor.u32 %v3352, 2147483648
      %v3411 = vxor.u32 %v3357, 2147483648
      %v3412 = vxor.u32 %v3360, 2147483648
      %v3413 = vxor.u32 %v3365, 2147483648
      %v3414 = vxor.u32 %v3368, 2147483648
      %v3415 = vxor.u32 %v3373, 2147483648
      %v3416 = vxor.u32 %v3376, 2147483648
      %v3417 = vxor.u32 %v3381, 2147483648
      %v3418 = vxor.u32 %v3384, 2147483648
      %v3419 = vmul.f32 %v3387, 1.442695
      %v3420 = vpow.pop %v3419
      %v3421 = vmul.f32 %v3388, 1.442695
      %v3422 = vpow.pop %v3421
      %v3423 = vmul.f32 %v3389, 1.442695
      %v3424 = vpow.pop %v3423
      %v3425 = vmul.f32 %v3390, 1.442695
      %v3426 = vpow.pop %v3425
      %v3427 = vmul.f32 %v3391, 1.442695
      %v3428 = vpow.pop %v3427
      %v3429 = vmul.f32 %v3392, 1.442695
      %v3430 = vpow.pop %v3429
      %v3431 = vmul.f32 %v3393, 1.442695
      %v3432 = vpow.pop %v3431
      %v3433 = vmul.f32 %v3394, 1.442695
      %v3434 = vpow.pop %v3433
      %v3435 = vmul.f32 %v3395, 1.442695
      %v3436 = vpow.pop %v3435
      %v3437 = vmul.f32 %v3396, 1.442695
      %v3438 = vpow.pop %v3437
      %v3439 = vmul.f32 %v3397, 1.442695
      %v3440 = vpow.pop %v3439
      %v3441 = vmul.f32 %v3398, 1.442695
      %v3442 = vpow.pop %v3441
      %v3443 = vmul.f32 %v3399, 1.442695
      %v3444 = vpow.pop %v3443
      %v3445 = vmul.f32 %v3400, 1.442695
      %v3446 = vpow.pop %v3445
      %v3447 = vmul.f32 %v3401, 1.442695
      %v3448 = vpow.pop %v3447
      %v3449 = vmul.f32 %v3402, 1.442695
      %v3450 = vpow.pop %v3449
      %v3451 = vmul.f32 %v3403, 1.442695
      %v3452 = vpow.pop %v3451
      %v3453 = vmul.f32 %v3404, 1.442695
      %v3454 = vpow.pop %v3453
      %v3455 = vmul.f32 %v3405, 1.442695
      %v3456 = vpow.pop %v3455
      %v3457 = vmul.f32 %v3406, 1.442695
      %v3458 = vpow.pop %v3457
      %v3459 = vmul.f32 %v3407, 1.442695
      %v3460 = vpow.pop %v3459
      %v3461 = vmul.f32 %v3408, 1.442695
      %v3462 = vpow.pop %v3461
      %v3463 = vmul.f32 %v3409, 1.442695
      %v3464 = vpow.pop %v3463
      %v3465 = vmul.f32 %v3410, 1.442695
      %v3466 = vpow.pop %v3465
      %v3467 = vmul.f32 %v3411, 1.442695
      %v3468 = vpow.pop %v3467
      %v3469 = vmul.f32 %v3412, 1.442695
      %v3470 = vpow.pop %v3469
      %v3471 = vmul.f32 %v3413, 1.442695
      %v3472 = vpow.pop %v3471
      %v3473 = vmul.f32 %v3414, 1.442695
      %v3474 = vpow.pop %v3473
      %v3475 = vmul.f32 %v3415, 1.442695
      %v3476 = vpow.pop %v3475
      %v3477 = vmul.f32 %v3416, 1.442695
      %v3478 = vpow.pop %v3477
      %v3479 = vmul.f32 %v3417, 1.442695
      %v3480 = vpow.pop %v3479
      %v3481 = vmul.f32 %v3418, 1.442695
      %v3482 = vpow.pop %v3481
      %v3483 = vadd.f32 %v3420, 1.0
      %v3484 = vadd.f32 %v3422, 1.0
      %v3485 = vadd.f32 %v3424, 1.0
      %v3486 = vadd.f32 %v3426, 1.0
      %v3487 = vadd.f32 %v3428, 1.0
      %v3488 = vadd.f32 %v3430, 1.0
      %v3489 = vadd.f32 %v3432, 1.0
      %v3490 = vadd.f32 %v3434, 1.0
      %v3491 = vadd.f32 %v3436, 1.0
      %v3492 = vadd.f32 %v3438, 1.0
      %v3493 = vadd.f32 %v3440, 1.0
      %v3494 = vadd.f32 %v3442, 1.0
      %v3495 = vadd.f32 %v3444, 1.0
      %v3496 = vadd.f32 %v3446, 1.0
      %v3497 = vadd.f32 %v3448, 1.0
      %v3498 = vadd.f32 %v3450, 1.0
      %v3499 = vadd.f32 %v3452, 1.0
      %v3500 = vadd.f32 %v3454, 1.0
      %v3501 = vadd.f32 %v3456, 1.0
      %v3502 = vadd.f32 %v3458, 1.0
      %v3503 = vadd.f32 %v3460, 1.0
      %v3504 = vadd.f32 %v3462, 1.0
      %v3505 = vadd.f32 %v3464, 1.0
      %v3506 = vadd.f32 %v3466, 1.0
      %v3507 = vadd.f32 %v3468, 1.0
      %v3508 = vadd.f32 %v3470, 1.0
      %v3509 = vadd.f32 %v3472, 1.0
      %v3510 = vadd.f32 %v3474, 1.0
      %v3511 = vadd.f32 %v3476, 1.0
      %v3512 = vadd.f32 %v3478, 1.0
      %v3513 = vadd.f32 %v3480, 1.0
      %v3514 = vadd.f32 %v3482, 1.0
      %v3515 = vrcp.pop %v3483
      %v3516 = vmul.f32 1.0, %v3515
      %v3517 = vrcp.pop %v3484
      %v3518 = vmul.f32 1.0, %v3517
      %v3519 = vrcp.pop %v3485
      %v3520 = vmul.f32 1.0, %v3519
      %v3521 = vrcp.pop %v3486
      %v3522 = vmul.f32 1.0, %v3521
      %v3523 = vrcp.pop %v3487
      %v3524 = vmul.f32 1.0, %v3523
      %v3525 = vrcp.pop %v3488
      %v3526 = vmul.f32 1.0, %v3525
      %v3527 = vrcp.pop %v3489
      %v3528 = vmul.f32 1.0, %v3527
      %v3529 = vrcp.pop %v3490
      %v3530 = vmul.f32 1.0, %v3529
      %v3531 = vrcp.pop %v3491
      %v3532 = vmul.f32 1.0, %v3531
      %v3533 = vrcp.pop %v3492
      %v3534 = vmul.f32 1.0, %v3533
      %v3535 = vrcp.pop %v3493
      %v3536 = vmul.f32 1.0, %v3535
      %v3537 = vrcp.pop %v3494
      %v3538 = vmul.f32 1.0, %v3537
      %v3539 = vrcp.pop %v3495
      %v3540 = vmul.f32 1.0, %v3539
      %v3541 = vrcp.pop %v3496
      %v3542 = vmul.f32 1.0, %v3541
      %v3543 = vrcp.pop %v3497
      %v3544 = vmul.f32 1.0, %v3543
      %v3545 = vrcp.pop %v3498
      %v3546 = vmul.f32 1.0, %v3545
      %v3547 = vrcp.pop %v3499
      %v3548 = vmul.f32 1.0, %v3547
      %v3549 = vrcp.pop %v3500
      %v3550 = vmul.f32 1.0, %v3549
      %v3551 = vrcp.pop %v3501
      %v3552 = vmul.f32 1.0, %v3551
      %v3553 = vrcp.pop %v3502
      %v3554 = vmul.f32 1.0, %v3553
      %v3555 = vrcp.pop %v3503
      %v3556 = vmul.f32 1.0, %v3555
      %v3557 = vrcp.pop %v3504
      %v3558 = vmul.f32 1.0, %v3557
      %v3559 = vrcp.pop %v3505
      %v3560 = vmul.f32 1.0, %v3559
      %v3561 = vrcp.pop %v3506
      %v3562 = vmul.f32 1.0, %v3561
      %v3563 = vrcp.pop %v3507
      %v3564 = vmul.f32 1.0, %v3563
      %v3565 = vrcp.pop %v3508
      %v3566 = vmul.f32 1.0, %v3565
      %v3567 = vrcp.pop %v3509
      %v3568 = vmul.f32 1.0, %v3567
      %v3569 = vrcp.pop %v3510
      %v3570 = vmul.f32 1.0, %v3569
      %v3571 = vrcp.pop %v3511
      %v3572 = vmul.f32 1.0, %v3571
      %v3573 = vrcp.pop %v3512
      %v3574 = vmul.f32 1.0, %v3573
      %v3575 = vrcp.pop %v3513
      %v3576 = vmul.f32 1.0, %v3575
      %v3577 = vrcp.pop %v3514
      %v3578 = vmul.f32 1.0, %v3577
      %v3579 = vmul.f32 %v3261, %v3516
      %v3580 = vmul.f32 %v3264, %v3518
      %v3581 = vmul.f32 %v3269, %v3520
      %v3582 = vmul.f32 %v3272, %v3522
      %v3583 = vmul.f32 %v3277, %v3524
      %v3584 = vmul.f32 %v3280, %v3526
      %v3585 = vmul.f32 %v3285, %v3528
      %v3586 = vmul.f32 %v3288, %v3530
      %v3587 = vmul.f32 %v3293, %v3532
      %v3588 = vmul.f32 %v3296, %v3534
      %v3589 = vmul.f32 %v3301, %v3536
      %v3590 = vmul.f32 %v3304, %v3538
      %v3591 = vmul.f32 %v3309, %v3540
      %v3592 = vmul.f32 %v3312, %v3542
      %v3593 = vmul.f32 %v3317, %v3544
      %v3594 = vmul.f32 %v3320, %v3546
      %v3595 = vmul.f32 %v3325, %v3548
      %v3596 = vmul.f32 %v3328, %v3550
      %v3597 = vmul.f32 %v3333, %v3552
      %v3598 = vmul.f32 %v3336, %v3554
      %v3599 = vmul.f32 %v3341, %v3556
      %v3600 = vmul.f32 %v3344, %v3558
      %v3601 = vmul.f32 %v3349, %v3560
      %v3602 = vmul.f32 %v3352, %v3562
      %v3603 = vmul.f32 %v3357, %v3564
      %v3604 = vmul.f32 %v3360, %v3566
      %v3605 = vmul.f32 %v3365, %v3568
      %v3606 = vmul.f32 %v3368, %v3570
      %v3607 = vmul.f32 %v3373, %v3572
      %v3608 = vmul.f32 %v3376, %v3574
      %v3609 = vmul.f32 %v3381, %v3576
      %v3610 = vmul.f32 %v3384, %v3578
      %v3611 = vld [vmem:[%s391] sm:$0xf]
      %v3612 = vld [vmem:[%s391 + $0x4] sm:$0xf]
      %v3613 = vld [vmem:[%s391 + $0x8] sm:$0xf]
      %v3614 = vld [vmem:[%s391 + $0xc] sm:$0xf]
      %v3615 = vld [vmem:[%s391 + $0x10] sm:$0xf]
      %v3616 = vld [vmem:[%s391 + $0x14] sm:$0xf]
      %v3617 = vld [vmem:[%s391 + $0x18] sm:$0xf]
      %v3618 = vld [vmem:[%s391 + $0x1c] sm:$0xf]
      %v3619 = vld [vmem:[%s391 + $0x20] sm:$0xf]
      %v3620 = vld [vmem:[%s391 + $0x24] sm:$0xf]
      %v3621 = vld [vmem:[%s391 + $0x28] sm:$0xf]
      %v3622 = vld [vmem:[%s391 + $0x2c] sm:$0xf]
      %v3623 = vld [vmem:[%s391 + $0x30] sm:$0xf]
      %v3624 = vld [vmem:[%s391 + $0x34] sm:$0xf]
      %v3625 = vld [vmem:[%s391 + $0x38] sm:$0xf]
      %v3626 = vld [vmem:[%s391 + $0x3c] sm:$0xf]
      %v3627 = vld [vmem:[%s391 + $0x40] sm:$0xf]
      %v3628 = vld [vmem:[%s391 + $0x44] sm:$0xf]
      %v3629 = vld [vmem:[%s391 + $0x48] sm:$0xf]
      %v3630 = vld [vmem:[%s391 + $0x4c] sm:$0xf]
      %v3631 = vld [vmem:[%s391 + $0x50] sm:$0xf]
      %v3632 = vld [vmem:[%s391 + $0x54] sm:$0xf]
      %v3633 = vld [vmem:[%s391 + $0x58] sm:$0xf]
      %v3634 = vld [vmem:[%s391 + $0x5c] sm:$0xf]
      %v3635 = vld [vmem:[%s391 + $0x60] sm:$0xf]
      %v3636 = vld [vmem:[%s391 + $0x64] sm:$0xf]
      %v3637 = vld [vmem:[%s391 + $0x68] sm:$0xf]
      %v3638 = vld [vmem:[%s391 + $0x6c] sm:$0xf]
      %v3639 = vld [vmem:[%s391 + $0x70] sm:$0xf]
      %v3640 = vld [vmem:[%s391 + $0x74] sm:$0xf]
      %v3641 = vld [vmem:[%s391 + $0x78] sm:$0xf]
      %v3642 = vld [vmem:[%s391 + $0x7c] sm:$0xf]
      %v3643 = vunpack.c.l.bf16 %v3611
      %v3644 = vunpack.c.l.bf16 %v3612
      %v3645 = vunpack.c.l.bf16 %v3613
      %v3646 = vunpack.c.l.bf16 %v3614
      %v3647 = vunpack.c.l.bf16 %v3615
      %v3648 = vunpack.c.l.bf16 %v3616
      %v3649 = vunpack.c.l.bf16 %v3617
      %v3650 = vunpack.c.l.bf16 %v3618
      %v3651 = vunpack.c.l.bf16 %v3619
      %v3652 = vunpack.c.l.bf16 %v3620
      %v3653 = vunpack.c.l.bf16 %v3621
      %v3654 = vunpack.c.l.bf16 %v3622
      %v3655 = vunpack.c.l.bf16 %v3623
      %v3656 = vunpack.c.l.bf16 %v3624
      %v3657 = vunpack.c.l.bf16 %v3625
      %v3658 = vunpack.c.l.bf16 %v3626
      %v3659 = vunpack.c.l.bf16 %v3627
      %v3660 = vunpack.c.l.bf16 %v3628
      %v3661 = vunpack.c.l.bf16 %v3629
      %v3662 = vunpack.c.l.bf16 %v3630
      %v3663 = vunpack.c.l.bf16 %v3631
      %v3664 = vunpack.c.l.bf16 %v3632
      %v3665 = vunpack.c.l.bf16 %v3633
      %v3666 = vunpack.c.l.bf16 %v3634
      %v3667 = vunpack.c.l.bf16 %v3635
      %v3668 = vunpack.c.l.bf16 %v3636
      %v3669 = vunpack.c.l.bf16 %v3637
      %v3670 = vunpack.c.l.bf16 %v3638
      %v3671 = vunpack.c.l.bf16 %v3639
      %v3672 = vunpack.c.l.bf16 %v3640
      %v3673 = vunpack.c.l.bf16 %v3641
      %v3674 = vunpack.c.l.bf16 %v3642
      %v3675 = vadd.f32 %v3579, %v3643
      %v3676 = vadd.f32 %v3580, %v3644
      %v3677 = vadd.f32 %v3581, %v3645
      %v3678 = vadd.f32 %v3582, %v3646
      %v3679 = vadd.f32 %v3583, %v3647
      %v3680 = vadd.f32 %v3584, %v3648
      %v3681 = vadd.f32 %v3585, %v3649
      %v3682 = vadd.f32 %v3586, %v3650
      %v3683 = vadd.f32 %v3587, %v3651
      %v3684 = vadd.f32 %v3588, %v3652
      %v3685 = vadd.f32 %v3589, %v3653
      %v3686 = vadd.f32 %v3590, %v3654
      %v3687 = vadd.f32 %v3591, %v3655
      %v3688 = vadd.f32 %v3592, %v3656
      %v3689 = vadd.f32 %v3593, %v3657
      %v3690 = vadd.f32 %v3594, %v3658
      %v3691 = vadd.f32 %v3595, %v3659
      %v3692 = vadd.f32 %v3596, %v3660
      %v3693 = vadd.f32 %v3597, %v3661
      %v3694 = vadd.f32 %v3598, %v3662
      %v3695 = vadd.f32 %v3599, %v3663
      %v3696 = vadd.f32 %v3600, %v3664
      %v3697 = vadd.f32 %v3601, %v3665
      %v3698 = vadd.f32 %v3602, %v3666
      %v3699 = vadd.f32 %v3603, %v3667
      %v3700 = vadd.f32 %v3604, %v3668
      %v3701 = vadd.f32 %v3605, %v3669
      %v3702 = vadd.f32 %v3606, %v3670
      %v3703 = vadd.f32 %v3607, %v3671
      %v3704 = vadd.f32 %v3608, %v3672
      %v3705 = vadd.f32 %v3609, %v3673
      %v3706 = vadd.f32 %v3610, %v3674
      %v3707 = vpack.c.bf16 %v3676, %v3675
      %v3708 = vpack.c.bf16 %v3678, %v3677
      %v3709 = vpack.c.bf16 %v3680, %v3679
      %v3710 = vpack.c.bf16 %v3682, %v3681
      %v3711 = vpack.c.bf16 %v3684, %v3683
      %v3712 = vpack.c.bf16 %v3686, %v3685
      %v3713 = vpack.c.bf16 %v3688, %v3687
      %v3714 = vpack.c.bf16 %v3690, %v3689
      %v3715 = vpack.c.bf16 %v3692, %v3691
      %v3716 = vpack.c.bf16 %v3694, %v3693
      %v3717 = vpack.c.bf16 %v3696, %v3695
      %v3718 = vpack.c.bf16 %v3698, %v3697
      %v3719 = vpack.c.bf16 %v3700, %v3699
      %v3720 = vpack.c.bf16 %v3702, %v3701
      %v3721 = vpack.c.bf16 %v3704, %v3703
      %v3722 = vpack.c.bf16 %v3706, %v3705
      %v3723 = vld [vmem:[%s5] sm:$0xf]
      %v3724 = vld [vmem:[%s5 + $0x4] sm:$0xf]
      %v3725 = vld [vmem:[%s5 + $0x8] sm:$0xf]
      %v3726 = vld [vmem:[%s5 + $0xc] sm:$0xf]
      %v3727 = vld [vmem:[%s5 + $0x10] sm:$0xf]
      %v3728 = vld [vmem:[%s5 + $0x14] sm:$0xf]
      %v3729 = vld [vmem:[%s5 + $0x18] sm:$0xf]
      %v3730 = vld [vmem:[%s5 + $0x1c] sm:$0xf]
      %v3731 = vld [vmem:[%s5 + $0x20] sm:$0xf]
      %v3732 = vld [vmem:[%s5 + $0x24] sm:$0xf]
      %v3733 = vld [vmem:[%s5 + $0x28] sm:$0xf]
      %v3734 = vld [vmem:[%s5 + $0x2c] sm:$0xf]
      %v3735 = vld [vmem:[%s5 + $0x30] sm:$0xf]
      %v3736 = vld [vmem:[%s5 + $0x34] sm:$0xf]
      %v3737 = vld [vmem:[%s5 + $0x38] sm:$0xf]
      %v3738 = vld [vmem:[%s5 + $0x3c] sm:$0xf]
      %v3739 = vld [vmem:[%s400] sm:$0xf]
      %v3740 = vld [vmem:[%s400 + $0x4] sm:$0xf]
      %v3741 = vld [vmem:[%s400 + $0x8] sm:$0xf]
      %v3742 = vld [vmem:[%s400 + $0xc] sm:$0xf]
      %v3743 = vld [vmem:[%s400 + $0x10] sm:$0xf]
      %v3744 = vld [vmem:[%s400 + $0x14] sm:$0xf]
      %v3745 = vld [vmem:[%s400 + $0x18] sm:$0xf]
      %v3746 = vld [vmem:[%s400 + $0x1c] sm:$0xf]
      %v3747 = vld [vmem:[%s400 + $0x20] sm:$0xf]
      %v3748 = vld [vmem:[%s400 + $0x24] sm:$0xf]
      %v3749 = vld [vmem:[%s400 + $0x28] sm:$0xf]
      %v3750 = vld [vmem:[%s400 + $0x2c] sm:$0xf]
      %v3751 = vld [vmem:[%s400 + $0x30] sm:$0xf]
      %v3752 = vld [vmem:[%s400 + $0x34] sm:$0xf]
      %v3753 = vld [vmem:[%s400 + $0x38] sm:$0xf]
      %v3754 = vld [vmem:[%s400 + $0x3c] sm:$0xf]
      %v3755 = vld [vmem:[%s400 + $0x40] sm:$0xf]
      %v3756 = vld [vmem:[%s400 + $0x44] sm:$0xf]
      %v3757 = vld [vmem:[%s400 + $0x48] sm:$0xf]
      %v3758 = vld [vmem:[%s400 + $0x4c] sm:$0xf]
      %v3759 = vld [vmem:[%s400 + $0x50] sm:$0xf]
      %v3760 = vld [vmem:[%s400 + $0x54] sm:$0xf]
      %v3761 = vld [vmem:[%s400 + $0x58] sm:$0xf]
      %v3762 = vld [vmem:[%s400 + $0x5c] sm:$0xf]
      %v3763 = vld [vmem:[%s400 + $0x60] sm:$0xf]
      %v3764 = vld [vmem:[%s400 + $0x64] sm:$0xf]
      %v3765 = vld [vmem:[%s400 + $0x68] sm:$0xf]
      %v3766 = vld [vmem:[%s400 + $0x6c] sm:$0xf]
      %v3767 = vld [vmem:[%s400 + $0x70] sm:$0xf]
      %v3768 = vld [vmem:[%s400 + $0x74] sm:$0xf]
      %v3769 = vld [vmem:[%s400 + $0x78] sm:$0xf]
      %v3770 = vld [vmem:[%s400 + $0x7c] sm:$0xf]
      %v3771 = vld [vmem:[%s6] sm:$0xf]
      %v3772 = vld [vmem:[%s6 + $0x4] sm:$0xf]
      %v3773 = vld [vmem:[%s6 + $0x8] sm:$0xf]
      %v3774 = vld [vmem:[%s6 + $0xc] sm:$0xf]
      %v3775 = vld [vmem:[%s6 + $0x10] sm:$0xf]
      %v3776 = vld [vmem:[%s6 + $0x14] sm:$0xf]
      %v3777 = vld [vmem:[%s6 + $0x18] sm:$0xf]
      %v3778 = vld [vmem:[%s6 + $0x1c] sm:$0xf]
      %v3779 = vld [vmem:[%s6 + $0x20] sm:$0xf]
      %v3780 = vld [vmem:[%s6 + $0x24] sm:$0xf]
      %v3781 = vld [vmem:[%s6 + $0x28] sm:$0xf]
      %v3782 = vld [vmem:[%s6 + $0x2c] sm:$0xf]
      %v3783 = vld [vmem:[%s6 + $0x30] sm:$0xf]
      %v3784 = vld [vmem:[%s6 + $0x34] sm:$0xf]
      %v3785 = vld [vmem:[%s6 + $0x38] sm:$0xf]
      %v3786 = vld [vmem:[%s6 + $0x3c] sm:$0xf]
      %v3819 = vunpack.c.l.b16 %v3739
      %v3820 = vunpack.c.l.b16 %v3740
      %v3821 = vunpack.c.l.b16 %v3741
      %v3822 = vunpack.c.l.b16 %v3742
      %v3823 = vunpack.c.l.b16 %v3743
      %v3824 = vunpack.c.l.b16 %v3744
      %v3825 = vunpack.c.l.b16 %v3745
      %v3826 = vunpack.c.l.b16 %v3746
      %v3827 = vunpack.c.l.b16 %v3747
      %v3828 = vunpack.c.l.b16 %v3748
      %v3829 = vunpack.c.l.b16 %v3749
      %v3830 = vunpack.c.l.b16 %v3750
      %v3831 = vunpack.c.l.b16 %v3751
      %v3832 = vunpack.c.l.b16 %v3752
      %v3833 = vunpack.c.l.b16 %v3753
      %v3834 = vunpack.c.l.b16 %v3754
      %v3835 = vunpack.c.l.b16 %v3755
      %v3836 = vunpack.c.l.b16 %v3756
      %v3837 = vunpack.c.l.b16 %v3757
      %v3838 = vunpack.c.l.b16 %v3758
      %v3839 = vunpack.c.l.b16 %v3759
      %v3840 = vunpack.c.l.b16 %v3760
      %v3841 = vunpack.c.l.b16 %v3761
      %v3842 = vunpack.c.l.b16 %v3762
      %v3843 = vunpack.c.l.b16 %v3763
      %v3844 = vunpack.c.l.b16 %v3764
      %v3845 = vunpack.c.l.b16 %v3765
      %v3846 = vunpack.c.l.b16 %v3766
      %v3847 = vunpack.c.l.b16 %v3767
      %v3848 = vunpack.c.l.b16 %v3768
      %v3849 = vunpack.c.l.b16 %v3769
      %v3850 = vunpack.c.l.b16 %v3770
      %v3851 = vpack.c.b16 %v3820, %v3819
      %v3852 = vpack.c.b16 %v3822, %v3821
      %v3853 = vpack.c.b16 %v3824, %v3823
      %v3854 = vpack.c.b16 %v3826, %v3825
      %v3855 = vpack.c.b16 %v3828, %v3827
      %v3856 = vpack.c.b16 %v3830, %v3829
      %v3857 = vpack.c.b16 %v3832, %v3831
      %v3858 = vpack.c.b16 %v3834, %v3833
      %v3859 = vpack.c.b16 %v3836, %v3835
      %v3860 = vpack.c.b16 %v3838, %v3837
      %v3861 = vpack.c.b16 %v3840, %v3839
      %v3862 = vpack.c.b16 %v3842, %v3841
      %v3863 = vpack.c.b16 %v3844, %v3843
      %v3864 = vpack.c.b16 %v3846, %v3845
      %v3865 = vpack.c.b16 %v3848, %v3847
      %v3866 = vpack.c.b16 %v3850, %v3849
      %v3899 = vunpack.c.l.b16 %v3771
      %v3900 = vunpack.c.l.b16 %v3772
      %v3901 = vunpack.c.l.b16 %v3773
      %v3902 = vunpack.c.l.b16 %v3774
      %v3903 = vunpack.c.l.b16 %v3775
      %v3904 = vunpack.c.l.b16 %v3776
      %v3905 = vunpack.c.l.b16 %v3777
      %v3906 = vunpack.c.l.b16 %v3778
      %v3907 = vunpack.c.l.b16 %v3779
      %v3908 = vunpack.c.l.b16 %v3780
      %v3909 = vunpack.c.l.b16 %v3781
      %v3910 = vunpack.c.l.b16 %v3782
      %v3911 = vunpack.c.l.b16 %v3783
      %v3912 = vunpack.c.l.b16 %v3784
      %v3913 = vunpack.c.l.b16 %v3785
      %v3914 = vunpack.c.l.b16 %v3786
      %v3915 = vpack.c.b16 %v3900, %v3899
      %v3916 = vpack.c.b16 %v3902, %v3901
      %v3917 = vpack.c.b16 %v3904, %v3903
      %v3918 = vpack.c.b16 %v3906, %v3905
      %v3919 = vpack.c.b16 %v3908, %v3907
      %v3920 = vpack.c.b16 %v3910, %v3909
      %v3921 = vpack.c.b16 %v3912, %v3911
      %v3922 = vpack.c.b16 %v3914, %v3913
      %3931 = vmatprep.subr.bf16.mxu0 0
      %3932 = vmatpush1.bf16.msra.mxu0 %v3915
      %3933 = vmatprep.subr.bf16.mxu0 0
      %3934 = vmatpush1.bf16.msra.mxu0 %v3916
      %3935 = vmatprep.subr.bf16.mxu0 0
      %3936 = vmatpush1.bf16.msra.mxu0 %v3917
      %3937 = vmatprep.subr.bf16.mxu0 0
      %3938 = vmatpush1.bf16.msra.mxu0 %v3918
      %3939 = vmatprep.subr.bf16.mxu0 0
      %3940 = vmatpush1.bf16.msra.mxu0 %v3919
      %3941 = vmatprep.subr.bf16.mxu0 0
      %3942 = vmatpush1.bf16.msra.mxu0 %v3920
      %3943 = vmatprep.subr.bf16.mxu0 0
      %3944 = vmatpush1.bf16.msra.mxu0 %v3921
      %3945 = vmatprep.subr.bf16.mxu0 0
      %3946 = vmatpush1.bf16.msra.mxu0 %v3922
      %3947 = vmatprep.subr.bf16.mxu0 0
      %3948 = vmatpush1.bf16.msra.mxu0 0
      %3949 = vmatprep.subr.bf16.mxu0 0
      %3950 = vmatpush1.bf16.msra.mxu0 0
      %3951 = vmatprep.subr.bf16.mxu0 0
      %3952 = vmatpush1.bf16.msra.mxu0 0
      %3953 = vmatprep.subr.bf16.mxu0 0
      %3954 = vmatpush1.bf16.msra.mxu0 0
      %3955 = vmatprep.subr.bf16.mxu0 0
      %3956 = vmatpush1.bf16.msra.mxu0 0
      %3957 = vmatprep.subr.bf16.mxu0 0
      %3958 = vmatpush1.bf16.msra.mxu0 0
      %3959 = vmatprep.subr.bf16.mxu0 0
      %3960 = vmatpush1.bf16.msra.mxu0 0
      %3961 = vmatprep.subr.bf16.mxu0 0
      %3962 = vmatpush1.bf16.msra.mxu0 0
      %3963 = vmatprep.mubr.bf16.mxu0 0
      %3964 = vmatmul.mubr.bf16.gmra.mrb[0].mxu0 %v3851
      %v3965 = vpop.f32.mrb[0].mxu0
      %v3966 = vadd.f32 0.0, %v3965
      %v3967 = vpop.f32.mrb[0].mxu0
      %v3968 = vpop.f32.mrb[0].mxu0
      %v3969 = vadd.f32 0.0, %v3968
      %v3970 = vpop.f32.mrb[0].mxu0
      %3971 = vmatprep.mubr.bf16.mxu0 0
      %3972 = vmatmul.mubr.bf16.gmra.mrb[0].mxu0 %v3852
      %v3973 = vpop.f32.mrb[0].mxu0
      %v3974 = vadd.f32 0.0, %v3973
      %v3975 = vpop.f32.mrb[0].mxu0
      %v3976 = vpop.f32.mrb[0].mxu0
      %v3977 = vadd.f32 0.0, %v3976
      %v3978 = vpop.f32.mrb[0].mxu0
      %3979 = vmatprep.mubr.bf16.mxu0 0
      %3980 = vmatmul.mubr.bf16.gmra.mrb[0].mxu0 %v3853
      %v3981 = vpop.f32.mrb[0].mxu0
      %v3982 = vadd.f32 0.0, %v3981
      %v3983 = vpop.f32.mrb[0].mxu0
      %v3984 = vpop.f32.mrb[0].mxu0
      %v3985 = vadd.f32 0.0, %v3984
      %v3986 = vpop.f32.mrb[0].mxu0
      %3987 = vmatprep.mubr.bf16.mxu0 0
      %3988 = vmatmul.mubr.bf16.gmra.mrb[0].mxu0 %v3854
      %v3989 = vpop.f32.mrb[0].mxu0
      %v3990 = vadd.f32 0.0, %v3989
      %v3991 = vpop.f32.mrb[0].mxu0
      %v3992 = vpop.f32.mrb[0].mxu0
      %v3993 = vadd.f32 0.0, %v3992
      %v3994 = vpop.f32.mrb[0].mxu0
      %3995 = vmatprep.mubr.bf16.mxu0 0
      %3996 = vmatmul.mubr.bf16.gmra.mrb[0].mxu0 %v3855
      %v3997 = vpop.f32.mrb[0].mxu0
      %v3998 = vadd.f32 0.0, %v3997
      %v3999 = vpop.f32.mrb[0].mxu0
      %v4000 = vpop.f32.mrb[0].mxu0
      %v4001 = vadd.f32 0.0, %v4000
      %v4002 = vpop.f32.mrb[0].mxu0
      %4003 = vmatprep.mubr.bf16.mxu0 0
      %4004 = vmatmul.mubr.bf16.gmra.mrb[0].mxu0 %v3856
      %v4005 = vpop.f32.mrb[0].mxu0
      %v4006 = vadd.f32 0.0, %v4005
      %v4007 = vpop.f32.mrb[0].mxu0
      %v4008 = vpop.f32.mrb[0].mxu0
      %v4009 = vadd.f32 0.0, %v4008
      %v4010 = vpop.f32.mrb[0].mxu0
      %4011 = vmatprep.mubr.bf16.mxu0 0
      %4012 = vmatmul.mubr.bf16.gmra.mrb[0].mxu0 %v3857
      %v4013 = vpop.f32.mrb[0].mxu0
      %v4014 = vadd.f32 0.0, %v4013
      %v4015 = vpop.f32.mrb[0].mxu0
      %v4016 = vpop.f32.mrb[0].mxu0
      %v4017 = vadd.f32 0.0, %v4016
      %v4018 = vpop.f32.mrb[0].mxu0
      %4019 = vmatprep.mubr.bf16.mxu0 0
      %4020 = vmatmul.mubr.bf16.gmra.mrb[0].mxu0 %v3858
      %v4021 = vpop.f32.mrb[0].mxu0
      %v4022 = vadd.f32 0.0, %v4021
      %v4023 = vpop.f32.mrb[0].mxu0
      %v4024 = vpop.f32.mrb[0].mxu0
      %v4025 = vadd.f32 0.0, %v4024
      %v4026 = vpop.f32.mrb[0].mxu0
      %4027 = vmatprep.mubr.bf16.mxu0 0
      %4028 = vmatmul.mubr.bf16.gmra.mrb[0].mxu0 %v3859
      %v4029 = vpop.f32.mrb[0].mxu0
      %v4030 = vadd.f32 0.0, %v4029
      %v4031 = vpop.f32.mrb[0].mxu0
      %v4032 = vpop.f32.mrb[0].mxu0
      %v4033 = vadd.f32 0.0, %v4032
      %v4034 = vpop.f32.mrb[0].mxu0
      %4035 = vmatprep.mubr.bf16.mxu0 0
      %4036 = vmatmul.mubr.bf16.gmra.mrb[0].mxu0 %v3860
      %v4037 = vpop.f32.mrb[0].mxu0
      %v4038 = vadd.f32 0.0, %v4037
      %v4039 = vpop.f32.mrb[0].mxu0
      %v4040 = vpop.f32.mrb[0].mxu0
      %v4041 = vadd.f32 0.0, %v4040
      %v4042 = vpop.f32.mrb[0].mxu0
      %4043 = vmatprep.mubr.bf16.mxu0 0
      %4044 = vmatmul.mubr.bf16.gmra.mrb[0].mxu0 %v3861
      %v4045 = vpop.f32.mrb[0].mxu0
      %v4046 = vadd.f32 0.0, %v4045
      %v4047 = vpop.f32.mrb[0].mxu0
      %v4048 = vpop.f32.mrb[0].mxu0
      %v4049 = vadd.f32 0.0, %v4048
      %v4050 = vpop.f32.mrb[0].mxu0
      %4051 = vmatprep.mubr.bf16.mxu0 0
      %4052 = vmatmul.mubr.bf16.gmra.mrb[0].mxu0 %v3862
      %v4053 = vpop.f32.mrb[0].mxu0
      %v4054 = vadd.f32 0.0, %v4053
      %v4055 = vpop.f32.mrb[0].mxu0
      %v4056 = vpop.f32.mrb[0].mxu0
      %v4057 = vadd.f32 0.0, %v4056
      %v4058 = vpop.f32.mrb[0].mxu0
      %4059 = vmatprep.mubr.bf16.mxu0 0
      %4060 = vmatmul.mubr.bf16.gmra.mrb[0].mxu0 %v3863
      %v4061 = vpop.f32.mrb[0].mxu0
      %v4062 = vadd.f32 0.0, %v4061
      %v4063 = vpop.f32.mrb[0].mxu0
      %v4064 = vpop.f32.mrb[0].mxu0
      %v4065 = vadd.f32 0.0, %v4064
      %v4066 = vpop.f32.mrb[0].mxu0
      %4067 = vmatprep.mubr.bf16.mxu0 0
      %4068 = vmatmul.mubr.bf16.gmra.mrb[0].mxu0 %v3864
      %v4069 = vpop.f32.mrb[0].mxu0
      %v4070 = vadd.f32 0.0, %v4069
      %v4071 = vpop.f32.mrb[0].mxu0
      %v4072 = vpop.f32.mrb[0].mxu0
      %v4073 = vadd.f32 0.0, %v4072
      %v4074 = vpop.f32.mrb[0].mxu0
      %4075 = vmatprep.mubr.bf16.mxu0 0
      %4076 = vmatmul.mubr.bf16.gmra.mrb[0].mxu0 %v3865
      %v4077 = vpop.f32.mrb[0].mxu0
      %v4078 = vadd.f32 0.0, %v4077
      %v4079 = vpop.f32.mrb[0].mxu0
      %v4080 = vpop.f32.mrb[0].mxu0
      %v4081 = vadd.f32 0.0, %v4080
      %v4082 = vpop.f32.mrb[0].mxu0
      %4083 = vmatprep.mubr.bf16.mxu0 0
      %4084 = vmatmul.mubr.bf16.gmra.mrb[0].mxu0 %v3866
      %v4085 = vpop.f32.mrb[0].mxu0
      %v4086 = vadd.f32 0.0, %v4085
      %v4087 = vpop.f32.mrb[0].mxu0
      %v4088 = vpop.f32.mrb[0].mxu0
      %v4089 = vadd.f32 0.0, %v4088
      %v4090 = vpop.f32.mrb[0].mxu0
      %4091 = vdwg.mxu0
      %v4108 = vunpack.c.l.b16 %v3723
      %v4109 = vunpack.c.l.b16 %v3724
      %v4110 = vunpack.c.l.b16 %v3725
      %v4111 = vunpack.c.l.b16 %v3726
      %v4112 = vunpack.c.l.b16 %v3727
      %v4113 = vunpack.c.l.b16 %v3728
      %v4114 = vunpack.c.l.b16 %v3729
      %v4115 = vunpack.c.l.b16 %v3730
      %v4116 = vunpack.c.l.b16 %v3731
      %v4117 = vunpack.c.l.b16 %v3732
      %v4118 = vunpack.c.l.b16 %v3733
      %v4119 = vunpack.c.l.b16 %v3734
      %v4120 = vunpack.c.l.b16 %v3735
      %v4121 = vunpack.c.l.b16 %v3736
      %v4122 = vunpack.c.l.b16 %v3737
      %v4123 = vunpack.c.l.b16 %v3738
      %v4124 = vpack.c.b16 %v4109, %v4108
      %v4125 = vpack.c.b16 %v4111, %v4110
      %v4126 = vpack.c.b16 %v4113, %v4112
      %v4127 = vpack.c.b16 %v4115, %v4114
      %v4128 = vpack.c.b16 %v4117, %v4116
      %v4129 = vpack.c.b16 %v4119, %v4118
      %v4130 = vpack.c.b16 %v4121, %v4120
      %v4131 = vpack.c.b16 %v4123, %v4122
      %4140 = vmatprep.subr.bf16.mxu0 0
      %4141 = vmatpush1.bf16.msra.mxu0 %v4124
      %4142 = vmatprep.subr.bf16.mxu0 0
      %4143 = vmatpush1.bf16.msra.mxu0 %v4125
      %4144 = vmatprep.subr.bf16.mxu0 0
      %4145 = vmatpush1.bf16.msra.mxu0 %v4126
      %4146 = vmatprep.subr.bf16.mxu0 0
      %4147 = vmatpush1.bf16.msra.mxu0 %v4127
      %4148 = vmatprep.subr.bf16.mxu0 0
      %4149 = vmatpush1.bf16.msra.mxu0 %v4128
      %4150 = vmatprep.subr.bf16.mxu0 0
      %4151 = vmatpush1.bf16.msra.mxu0 %v4129
      %4152 = vmatprep.subr.bf16.mxu0 0
      %4153 = vmatpush1.bf16.msra.mxu0 %v4130
      %4154 = vmatprep.subr.bf16.mxu0 0
      %4155 = vmatpush1.bf16.msra.mxu0 %v4131
      %4156 = vmatprep.subr.bf16.mxu0 0
      %4157 = vmatpush1.bf16.msra.mxu0 0
      %4158 = vmatprep.subr.bf16.mxu0 0
      %4159 = vmatpush1.bf16.msra.mxu0 0
      %4160 = vmatprep.subr.bf16.mxu0 0
      %4161 = vmatpush1.bf16.msra.mxu0 0
      %4162 = vmatprep.subr.bf16.mxu0 0
      %4163 = vmatpush1.bf16.msra.mxu0 0
      %4164 = vmatprep.subr.bf16.mxu0 0
      %4165 = vmatpush1.bf16.msra.mxu0 0
      %4166 = vmatprep.subr.bf16.mxu0 0
      %4167 = vmatpush1.bf16.msra.mxu0 0
      %4168 = vmatprep.subr.bf16.mxu0 0
      %4169 = vmatpush1.bf16.msra.mxu0 0
      %4170 = vmatprep.subr.bf16.mxu0 0
      %4171 = vmatpush1.bf16.msra.mxu0 0
      %4172 = vmatprep.mubr.bf16.mxu0 0
      %4173 = vmatmul.mubr.bf16.gmra.mrb[0].mxu0 %v3707
      %v4174 = vpop.f32.mrb[0].mxu0
      %v4175 = vadd.f32 %v3966, %v4174
      %v4176 = vpop.f32.mrb[0].mxu0
      %v4177 = vpop.f32.mrb[0].mxu0
      %v4178 = vadd.f32 %v3969, %v4177
      %v4179 = vpop.f32.mrb[0].mxu0
      %4180 = vmatprep.mubr.bf16.mxu0 0
      %4181 = vmatmul.mubr.bf16.gmra.mrb[0].mxu0 %v3708
      %v4182 = vpop.f32.mrb[0].mxu0
      %v4183 = vadd.f32 %v3974, %v4182
      %v4184 = vpop.f32.mrb[0].mxu0
      %v4185 = vpop.f32.mrb[0].mxu0
      %v4186 = vadd.f32 %v3977, %v4185
      %v4187 = vpop.f32.mrb[0].mxu0
      %4188 = vmatprep.mubr.bf16.mxu0 0
      %4189 = vmatmul.mubr.bf16.gmra.mrb[0].mxu0 %v3709
      %v4190 = vpop.f32.mrb[0].mxu0
      %v4191 = vadd.f32 %v3982, %v4190
      %v4192 = vpop.f32.mrb[0].mxu0
      %v4193 = vpop.f32.mrb[0].mxu0
      %v4194 = vadd.f32 %v3985, %v4193
      %v4195 = vpop.f32.mrb[0].mxu0
      %4196 = vmatprep.mubr.bf16.mxu0 0
      %4197 = vmatmul.mubr.bf16.gmra.mrb[0].mxu0 %v3710
      %v4198 = vpop.f32.mrb[0].mxu0
      %v4199 = vadd.f32 %v3990, %v4198
      %v4200 = vpop.f32.mrb[0].mxu0
      %v4201 = vpop.f32.mrb[0].mxu0
      %v4202 = vadd.f32 %v3993, %v4201
      %v4203 = vpop.f32.mrb[0].mxu0
      %4204 = vmatprep.mubr.bf16.mxu0 0
      %4205 = vmatmul.mubr.bf16.gmra.mrb[0].mxu0 %v3711
      %v4206 = vpop.f32.mrb[0].mxu0
      %v4207 = vadd.f32 %v3998, %v4206
      %v4208 = vpop.f32.mrb[0].mxu0
      %v4209 = vpop.f32.mrb[0].mxu0
      %v4210 = vadd.f32 %v4001, %v4209
      %v4211 = vpop.f32.mrb[0].mxu0
      %4212 = vmatprep.mubr.bf16.mxu0 0
      %4213 = vmatmul.mubr.bf16.gmra.mrb[0].mxu0 %v3712
      %v4214 = vpop.f32.mrb[0].mxu0
      %v4215 = vadd.f32 %v4006, %v4214
      %v4216 = vpop.f32.mrb[0].mxu0
      %v4217 = vpop.f32.mrb[0].mxu0
      %v4218 = vadd.f32 %v4009, %v4217
      %v4219 = vpop.f32.mrb[0].mxu0
      %4220 = vmatprep.mubr.bf16.mxu0 0
      %4221 = vmatmul.mubr.bf16.gmra.mrb[0].mxu0 %v3713
      %v4222 = vpop.f32.mrb[0].mxu0
      %v4223 = vadd.f32 %v4014, %v4222
      %v4224 = vpop.f32.mrb[0].mxu0
      %v4225 = vpop.f32.mrb[0].mxu0
      %v4226 = vadd.f32 %v4017, %v4225
      %v4227 = vpop.f32.mrb[0].mxu0
      %4228 = vmatprep.mubr.bf16.mxu0 0
      %4229 = vmatmul.mubr.bf16.gmra.mrb[0].mxu0 %v3714
      %v4230 = vpop.f32.mrb[0].mxu0
      %v4231 = vadd.f32 %v4022, %v4230
      %v4232 = vpop.f32.mrb[0].mxu0
      %v4233 = vpop.f32.mrb[0].mxu0
      %v4234 = vadd.f32 %v4025, %v4233
      %v4235 = vpop.f32.mrb[0].mxu0
      %4236 = vmatprep.mubr.bf16.mxu0 0
      %4237 = vmatmul.mubr.bf16.gmra.mrb[0].mxu0 %v3715
      %v4238 = vpop.f32.mrb[0].mxu0
      %v4239 = vadd.f32 %v4030, %v4238
      %v4240 = vpop.f32.mrb[0].mxu0
      %v4241 = vpop.f32.mrb[0].mxu0
      %v4242 = vadd.f32 %v4033, %v4241
      %v4243 = vpop.f32.mrb[0].mxu0
      %4244 = vmatprep.mubr.bf16.mxu0 0
      %4245 = vmatmul.mubr.bf16.gmra.mrb[0].mxu0 %v3716
      %v4246 = vpop.f32.mrb[0].mxu0
      %v4247 = vadd.f32 %v4038, %v4246
      %v4248 = vpop.f32.mrb[0].mxu0
      %v4249 = vpop.f32.mrb[0].mxu0
      %v4250 = vadd.f32 %v4041, %v4249
      %v4251 = vpop.f32.mrb[0].mxu0
      %4252 = vmatprep.mubr.bf16.mxu0 0
      %4253 = vmatmul.mubr.bf16.gmra.mrb[0].mxu0 %v3717
      %v4254 = vpop.f32.mrb[0].mxu0
      %v4255 = vadd.f32 %v4046, %v4254
      %v4256 = vpop.f32.mrb[0].mxu0
      %v4257 = vpop.f32.mrb[0].mxu0
      %v4258 = vadd.f32 %v4049, %v4257
      %v4259 = vpop.f32.mrb[0].mxu0
      %4260 = vmatprep.mubr.bf16.mxu0 0
      %4261 = vmatmul.mubr.bf16.gmra.mrb[0].mxu0 %v3718
      %v4262 = vpop.f32.mrb[0].mxu0
      %v4263 = vadd.f32 %v4054, %v4262
      %v4264 = vpop.f32.mrb[0].mxu0
      %v4265 = vpop.f32.mrb[0].mxu0
      %v4266 = vadd.f32 %v4057, %v4265
      %v4267 = vpop.f32.mrb[0].mxu0
      %4268 = vmatprep.mubr.bf16.mxu0 0
      %4269 = vmatmul.mubr.bf16.gmra.mrb[0].mxu0 %v3719
      %v4270 = vpop.f32.mrb[0].mxu0
      %v4271 = vadd.f32 %v4062, %v4270
      %v4272 = vpop.f32.mrb[0].mxu0
      %v4273 = vpop.f32.mrb[0].mxu0
      %v4274 = vadd.f32 %v4065, %v4273
      %v4275 = vpop.f32.mrb[0].mxu0
      %4276 = vmatprep.mubr.bf16.mxu0 0
      %4277 = vmatmul.mubr.bf16.gmra.mrb[0].mxu0 %v3720
      %v4278 = vpop.f32.mrb[0].mxu0
      %v4279 = vadd.f32 %v4070, %v4278
      %v4280 = vpop.f32.mrb[0].mxu0
      %v4281 = vpop.f32.mrb[0].mxu0
      %v4282 = vadd.f32 %v4073, %v4281
      %v4283 = vpop.f32.mrb[0].mxu0
      %4284 = vmatprep.mubr.bf16.mxu0 0
      %4285 = vmatmul.mubr.bf16.gmra.mrb[0].mxu0 %v3721
      %v4286 = vpop.f32.mrb[0].mxu0
      %v4287 = vadd.f32 %v4078, %v4286
      %v4288 = vpop.f32.mrb[0].mxu0
      %v4289 = vpop.f32.mrb[0].mxu0
      %v4290 = vadd.f32 %v4081, %v4289
      %v4291 = vpop.f32.mrb[0].mxu0
      %4292 = vmatprep.mubr.bf16.mxu0 0
      %4293 = vmatmul.mubr.bf16.gmra.mrb[0].mxu0 %v3722
      %v4294 = vpop.f32.mrb[0].mxu0
      %v4295 = vadd.f32 %v4086, %v4294
      %v4296 = vpop.f32.mrb[0].mxu0
      %v4297 = vpop.f32.mrb[0].mxu0
      %v4298 = vadd.f32 %v4089, %v4297
      %v4299 = vpop.f32.mrb[0].mxu0
      %4300 = vdwg.mxu0
      %v4301 = vld [vmem:[%s7] sm:$0x1]
      %v4303 = vlaneseq
      %v4304 = vshrl.u32 %v4303, 7
      %v4305 = vsub.s32 0, %v4304
      %v4306 = vrot.slane %v4301, %v4305
      %v4308 = vadd.f32 %v4175, %v4306
      %v4309 = vadd.f32 %v4178, %v4306
      %v4310 = vadd.f32 %v4183, %v4306
      %v4311 = vadd.f32 %v4186, %v4306
      %v4312 = vadd.f32 %v4191, %v4306
      %v4313 = vadd.f32 %v4194, %v4306
      %v4314 = vadd.f32 %v4199, %v4306
      %v4315 = vadd.f32 %v4202, %v4306
      %v4316 = vadd.f32 %v4207, %v4306
      %v4317 = vadd.f32 %v4210, %v4306
      %v4318 = vadd.f32 %v4215, %v4306
      %v4319 = vadd.f32 %v4218, %v4306
      %v4320 = vadd.f32 %v4223, %v4306
      %v4321 = vadd.f32 %v4226, %v4306
      %v4322 = vadd.f32 %v4231, %v4306
      %v4323 = vadd.f32 %v4234, %v4306
      %v4324 = vadd.f32 %v4239, %v4306
      %v4325 = vadd.f32 %v4242, %v4306
      %v4326 = vadd.f32 %v4247, %v4306
      %v4327 = vadd.f32 %v4250, %v4306
      %v4328 = vadd.f32 %v4255, %v4306
      %v4329 = vadd.f32 %v4258, %v4306
      %v4330 = vadd.f32 %v4263, %v4306
      %v4331 = vadd.f32 %v4266, %v4306
      %v4332 = vadd.f32 %v4271, %v4306
      %v4333 = vadd.f32 %v4274, %v4306
      %v4334 = vadd.f32 %v4279, %v4306
      %v4335 = vadd.f32 %v4282, %v4306
      %v4336 = vadd.f32 %v4287, %v4306
      %v4337 = vadd.f32 %v4290, %v4306
      %v4338 = vadd.f32 %v4295, %v4306
      %v4339 = vadd.f32 %v4298, %v4306
      %v4340 = vxor.u32 %v4308, 2147483648
      %v4341 = vxor.u32 %v4309, 2147483648
      %v4342 = vxor.u32 %v4310, 2147483648
      %v4343 = vxor.u32 %v4311, 2147483648
      %v4344 = vxor.u32 %v4312, 2147483648
      %v4345 = vxor.u32 %v4313, 2147483648
      %v4346 = vxor.u32 %v4314, 2147483648
      %v4347 = vxor.u32 %v4315, 2147483648
      %v4348 = vxor.u32 %v4316, 2147483648
      %v4349 = vxor.u32 %v4317, 2147483648
      %v4350 = vxor.u32 %v4318, 2147483648
      %v4351 = vxor.u32 %v4319, 2147483648
      %v4352 = vxor.u32 %v4320, 2147483648
      %v4353 = vxor.u32 %v4321, 2147483648
      %v4354 = vxor.u32 %v4322, 2147483648
      %v4355 = vxor.u32 %v4323, 2147483648
      %v4356 = vxor.u32 %v4324, 2147483648
      %v4357 = vxor.u32 %v4325, 2147483648
      %v4358 = vxor.u32 %v4326, 2147483648
      %v4359 = vxor.u32 %v4327, 2147483648
      %v4360 = vxor.u32 %v4328, 2147483648
      %v4361 = vxor.u32 %v4329, 2147483648
      %v4362 = vxor.u32 %v4330, 2147483648
      %v4363 = vxor.u32 %v4331, 2147483648
      %v4364 = vxor.u32 %v4332, 2147483648
      %v4365 = vxor.u32 %v4333, 2147483648
      %v4366 = vxor.u32 %v4334, 2147483648
      %v4367 = vxor.u32 %v4335, 2147483648
      %v4368 = vxor.u32 %v4336, 2147483648
      %v4369 = vxor.u32 %v4337, 2147483648
      %v4370 = vxor.u32 %v4338, 2147483648
      %v4371 = vxor.u32 %v4339, 2147483648
      %v4372 = vmul.f32 %v4340, 1.442695
      %v4373 = vpow.pop %v4372
      %v4374 = vmul.f32 %v4341, 1.442695
      %v4375 = vpow.pop %v4374
      %v4376 = vmul.f32 %v4342, 1.442695
      %v4377 = vpow.pop %v4376
      %v4378 = vmul.f32 %v4343, 1.442695
      %v4379 = vpow.pop %v4378
      %v4380 = vmul.f32 %v4344, 1.442695
      %v4381 = vpow.pop %v4380
      %v4382 = vmul.f32 %v4345, 1.442695
      %v4383 = vpow.pop %v4382
      %v4384 = vmul.f32 %v4346, 1.442695
      %v4385 = vpow.pop %v4384
      %v4386 = vmul.f32 %v4347, 1.442695
      %v4387 = vpow.pop %v4386
      %v4388 = vmul.f32 %v4348, 1.442695
      %v4389 = vpow.pop %v4388
      %v4390 = vmul.f32 %v4349, 1.442695
      %v4391 = vpow.pop %v4390
      %v4392 = vmul.f32 %v4350, 1.442695
      %v4393 = vpow.pop %v4392
      %v4394 = vmul.f32 %v4351, 1.442695
      %v4395 = vpow.pop %v4394
      %v4396 = vmul.f32 %v4352, 1.442695
      %v4397 = vpow.pop %v4396
      %v4398 = vmul.f32 %v4353, 1.442695
      %v4399 = vpow.pop %v4398
      %v4400 = vmul.f32 %v4354, 1.442695
      %v4401 = vpow.pop %v4400
      %v4402 = vmul.f32 %v4355, 1.442695
      %v4403 = vpow.pop %v4402
      %v4404 = vmul.f32 %v4356, 1.442695
      %v4405 = vpow.pop %v4404
      %v4406 = vmul.f32 %v4357, 1.442695
      %v4407 = vpow.pop %v4406
      %v4408 = vmul.f32 %v4358, 1.442695
      %v4409 = vpow.pop %v4408
      %v4410 = vmul.f32 %v4359, 1.442695
      %v4411 = vpow.pop %v4410
      %v4412 = vmul.f32 %v4360, 1.442695
      %v4413 = vpow.pop %v4412
      %v4414 = vmul.f32 %v4361, 1.442695
      %v4415 = vpow.pop %v4414
      %v4416 = vmul.f32 %v4362, 1.442695
      %v4417 = vpow.pop %v4416
      %v4418 = vmul.f32 %v4363, 1.442695
      %v4419 = vpow.pop %v4418
      %v4420 = vmul.f32 %v4364, 1.442695
      %v4421 = vpow.pop %v4420
      %v4422 = vmul.f32 %v4365, 1.442695
      %v4423 = vpow.pop %v4422
      %v4424 = vmul.f32 %v4366, 1.442695
      %v4425 = vpow.pop %v4424
      %v4426 = vmul.f32 %v4367, 1.442695
      %v4427 = vpow.pop %v4426
      %v4428 = vmul.f32 %v4368, 1.442695
      %v4429 = vpow.pop %v4428
      %v4430 = vmul.f32 %v4369, 1.442695
      %v4431 = vpow.pop %v4430
      %v4432 = vmul.f32 %v4370, 1.442695
      %v4433 = vpow.pop %v4432
      %v4434 = vmul.f32 %v4371, 1.442695
      %v4435 = vpow.pop %v4434
      %v4436 = vadd.f32 %v4373, 1.0
      %v4437 = vadd.f32 %v4375, 1.0
      %v4438 = vadd.f32 %v4377, 1.0
      %v4439 = vadd.f32 %v4379, 1.0
      %v4440 = vadd.f32 %v4381, 1.0
      %v4441 = vadd.f32 %v4383, 1.0
      %v4442 = vadd.f32 %v4385, 1.0
      %v4443 = vadd.f32 %v4387, 1.0
      %v4444 = vadd.f32 %v4389, 1.0
      %v4445 = vadd.f32 %v4391, 1.0
      %v4446 = vadd.f32 %v4393, 1.0
      %v4447 = vadd.f32 %v4395, 1.0
      %v4448 = vadd.f32 %v4397, 1.0
      %v4449 = vadd.f32 %v4399, 1.0
      %v4450 = vadd.f32 %v4401, 1.0
      %v4451 = vadd.f32 %v4403, 1.0
      %v4452 = vadd.f32 %v4405, 1.0
      %v4453 = vadd.f32 %v4407, 1.0
      %v4454 = vadd.f32 %v4409, 1.0
      %v4455 = vadd.f32 %v4411, 1.0
      %v4456 = vadd.f32 %v4413, 1.0
      %v4457 = vadd.f32 %v4415, 1.0
      %v4458 = vadd.f32 %v4417, 1.0
      %v4459 = vadd.f32 %v4419, 1.0
      %v4460 = vadd.f32 %v4421, 1.0
      %v4461 = vadd.f32 %v4423, 1.0
      %v4462 = vadd.f32 %v4425, 1.0
      %v4463 = vadd.f32 %v4427, 1.0
      %v4464 = vadd.f32 %v4429, 1.0
      %v4465 = vadd.f32 %v4431, 1.0
      %v4466 = vadd.f32 %v4433, 1.0
      %v4467 = vadd.f32 %v4435, 1.0
      %v4468 = vrcp.pop %v4436
      %v4469 = vmul.f32 1.0, %v4468
      %v4470 = vrcp.pop %v4437
      %v4471 = vmul.f32 1.0, %v4470
      %v4472 = vrcp.pop %v4438
      %v4473 = vmul.f32 1.0, %v4472
      %v4474 = vrcp.pop %v4439
      %v4475 = vmul.f32 1.0, %v4474
      %v4476 = vrcp.pop %v4440
      %v4477 = vmul.f32 1.0, %v4476
      %v4478 = vrcp.pop %v4441
      %v4479 = vmul.f32 1.0, %v4478
      %v4480 = vrcp.pop %v4442
      %v4481 = vmul.f32 1.0, %v4480
      %v4482 = vrcp.pop %v4443
      %v4483 = vmul.f32 1.0, %v4482
      %v4484 = vrcp.pop %v4444
      %v4485 = vmul.f32 1.0, %v4484
      %v4486 = vrcp.pop %v4445
      %v4487 = vmul.f32 1.0, %v4486
      %v4488 = vrcp.pop %v4446
      %v4489 = vmul.f32 1.0, %v4488
      %v4490 = vrcp.pop %v4447
      %v4491 = vmul.f32 1.0, %v4490
      %v4492 = vrcp.pop %v4448
      %v4493 = vmul.f32 1.0, %v4492
      %v4494 = vrcp.pop %v4449
      %v4495 = vmul.f32 1.0, %v4494
      %v4496 = vrcp.pop %v4450
      %v4497 = vmul.f32 1.0, %v4496
      %v4498 = vrcp.pop %v4451
      %v4499 = vmul.f32 1.0, %v4498
      %v4500 = vrcp.pop %v4452
      %v4501 = vmul.f32 1.0, %v4500
      %v4502 = vrcp.pop %v4453
      %v4503 = vmul.f32 1.0, %v4502
      %v4504 = vrcp.pop %v4454
      %v4505 = vmul.f32 1.0, %v4504
      %v4506 = vrcp.pop %v4455
      %v4507 = vmul.f32 1.0, %v4506
      %v4508 = vrcp.pop %v4456
      %v4509 = vmul.f32 1.0, %v4508
      %v4510 = vrcp.pop %v4457
      %v4511 = vmul.f32 1.0, %v4510
      %v4512 = vrcp.pop %v4458
      %v4513 = vmul.f32 1.0, %v4512
      %v4514 = vrcp.pop %v4459
      %v4515 = vmul.f32 1.0, %v4514
      %v4516 = vrcp.pop %v4460
      %v4517 = vmul.f32 1.0, %v4516
      %v4518 = vrcp.pop %v4461
      %v4519 = vmul.f32 1.0, %v4518
      %v4520 = vrcp.pop %v4462
      %v4521 = vmul.f32 1.0, %v4520
      %v4522 = vrcp.pop %v4463
      %v4523 = vmul.f32 1.0, %v4522
      %v4524 = vrcp.pop %v4464
      %v4525 = vmul.f32 1.0, %v4524
      %v4526 = vrcp.pop %v4465
      %v4527 = vmul.f32 1.0, %v4526
      %v4528 = vrcp.pop %v4466
      %v4529 = vmul.f32 1.0, %v4528
      %v4530 = vrcp.pop %v4467
      %v4531 = vmul.f32 1.0, %v4530
      %v4532 = vmul.f32 %v4308, %v4469
      %v4533 = vmul.f32 %v4309, %v4471
      %v4534 = vmul.f32 %v4310, %v4473
      %v4535 = vmul.f32 %v4311, %v4475
      %v4536 = vmul.f32 %v4312, %v4477
      %v4537 = vmul.f32 %v4313, %v4479
      %v4538 = vmul.f32 %v4314, %v4481
      %v4539 = vmul.f32 %v4315, %v4483
      %v4540 = vmul.f32 %v4316, %v4485
      %v4541 = vmul.f32 %v4317, %v4487
      %v4542 = vmul.f32 %v4318, %v4489
      %v4543 = vmul.f32 %v4319, %v4491
      %v4544 = vmul.f32 %v4320, %v4493
      %v4545 = vmul.f32 %v4321, %v4495
      %v4546 = vmul.f32 %v4322, %v4497
      %v4547 = vmul.f32 %v4323, %v4499
      %v4548 = vmul.f32 %v4324, %v4501
      %v4549 = vmul.f32 %v4325, %v4503
      %v4550 = vmul.f32 %v4326, %v4505
      %v4551 = vmul.f32 %v4327, %v4507
      %v4552 = vmul.f32 %v4328, %v4509
      %v4553 = vmul.f32 %v4329, %v4511
      %v4554 = vmul.f32 %v4330, %v4513
      %v4555 = vmul.f32 %v4331, %v4515
      %v4556 = vmul.f32 %v4332, %v4517
      %v4557 = vmul.f32 %v4333, %v4519
      %v4558 = vmul.f32 %v4334, %v4521
      %v4559 = vmul.f32 %v4335, %v4523
      %v4560 = vmul.f32 %v4336, %v4525
      %v4561 = vmul.f32 %v4337, %v4527
      %v4562 = vmul.f32 %v4338, %v4529
      %v4563 = vmul.f32 %v4339, %v4531
      %4564 = vst [vmem:[%s409] sm:$0xff] %v4532
      %4565 = vst [vmem:[%s409 + $0x8] sm:$0xff] %v4533
      %4566 = vst [vmem:[%s409 + $0x10] sm:$0xff] %v4534
      %4567 = vst [vmem:[%s409 + $0x18] sm:$0xff] %v4535
      %4568 = vst [vmem:[%s409 + $0x20] sm:$0xff] %v4536
      %4569 = vst [vmem:[%s409 + $0x28] sm:$0xff] %v4537
      %4570 = vst [vmem:[%s409 + $0x30] sm:$0xff] %v4538
      %4571 = vst [vmem:[%s409 + $0x38] sm:$0xff] %v4539
      %4572 = vst [vmem:[%s409 + $0x40] sm:$0xff] %v4540
      %4573 = vst [vmem:[%s409 + $0x48] sm:$0xff] %v4541
      %4574 = vst [vmem:[%s409 + $0x50] sm:$0xff] %v4542
      %4575 = vst [vmem:[%s409 + $0x58] sm:$0xff] %v4543
      %4576 = vst [vmem:[%s409 + $0x60] sm:$0xff] %v4544
      %4577 = vst [vmem:[%s409 + $0x68] sm:$0xff] %v4545
      %4578 = vst [vmem:[%s409 + $0x70] sm:$0xff] %v4546
      %4579 = vst [vmem:[%s409 + $0x78] sm:$0xff] %v4547
      %4580 = vst [vmem:[%s409 + $0x80] sm:$0xff] %v4548
      %4581 = vst [vmem:[%s409 + $0x88] sm:$0xff] %v4549
      %4582 = vst [vmem:[%s409 + $0x90] sm:$0xff] %v4550
      %4583 = vst [vmem:[%s409 + $0x98] sm:$0xff] %v4551
      %4584 = vst [vmem:[%s409 + $0xa0] sm:$0xff] %v4552
      %4585 = vst [vmem:[%s409 + $0xa8] sm:$0xff] %v4553
      %4586 = vst [vmem:[%s409 + $0xb0] sm:$0xff] %v4554
      %4587 = vst [vmem:[%s409 + $0xb8] sm:$0xff] %v4555
      %4588 = vst [vmem:[%s409 + $0xc0] sm:$0xff] %v4556
      %4589 = vst [vmem:[%s409 + $0xc8] sm:$0xff] %v4557
      %4590 = vst [vmem:[%s409 + $0xd0] sm:$0xff] %v4558
      %4591 = vst [vmem:[%s409 + $0xd8] sm:$0xff] %v4559
      %4592 = vst [vmem:[%s409 + $0xe0] sm:$0xff] %v4560
      %4593 = vst [vmem:[%s409 + $0xe8] sm:$0xff] %v4561
      %4594 = vst [vmem:[%s409 + $0xf0] sm:$0xff] %v4562
      %4595 = vst [vmem:[%s409 + $0xf8] sm:$0xff] %v4563
      %p4596 = scmp.lt.s32.totalorder %s23, 1
      %s4597 = scalar_select %p4596, %s23, 1
      %p4598 = scmp.lt.s32.totalorder %s24, 0
      %s4599 = scalar_select %p4598, %s24, 0
      %s4600 = smul.addr %s4599, 32
      %s4601 = smul.addr %s4597, 32
      %s4602 = sadd.s32 %s4600, %s4601
      %s4603 = smul.addr %s4602, 8
      %s4604 = scalar_lea.vmem %s8, %s4603
      // Predicated region
      $region53: #{csp_forward.5} parent=51 // pred_check
        %p4605 = pneg %p240
      $region54: #{csp_forward.5} parent=51 // pred_check_branch
        %4607 = sbr.rel (%p4605) target = $region56
      $region55: #{csp_forward.5} parent=51 // pred_region
        _
      $region56: #{csp_forward.5} parent=51 // pred_fallthru
        _
    $region52: #{csp_forward.5} parent=5 // pred_fallthru
      _
    %p4608 = scmp.le.s32.totalorder 2, %s14
    // Predicated region
    $region57: #{csp_forward.5} parent=5 // pred_check
      %p4609 = pneg %p4608
    $region58: #{csp_forward.5} parent=5 // pred_check_branch
      %4611 = sbr.rel (%p4609) target = $region60
    $region59: #{csp_forward.5} parent=5 // pred_region
      %s4612 = ssub.s32 %s14, 2
      // Predicated region
      $region61: #{csp_forward.5} parent=59 // pred_check
        %p4613 = pneg %p246
      $region62: #{csp_forward.5} parent=59 // pred_check_branch
        %4615 = sbr.rel (%p4613) target = $region64
      $region63: #{csp_forward.5} parent=59 // pred_region
        %p4616 = scmp.lt.s32.totalorder %s25, 1
        %s4617 = scalar_select %p4616, %s25, 1
        %p4618 = scmp.lt.s32.totalorder %s26, 0
        %s4619 = scalar_select %p4618, %s26, 0
        %s4620 = smul.addr %s4619, 32
        %s4621 = smul.addr %s4617, 32
        %s4622 = sadd.s32 %s4620, %s4621
        %s4623 = smul.addr %s4622, 8
        %s4624 = scalar_lea.vmem %s8, %s4623
      $region64: #{csp_forward.5} parent=59 // pred_fallthru
        _
    $region60: #{csp_forward.5} parent=5 // pred_fallthru
      _
  $region6: #{csp_forward.5} parent=0 // loop_footer
    %s18 = sadd.s32 1, %s14
  $region7: #{csp_forward.5} parent=0 // loop_footer_branch
    %13 = sbr.rel target = $region3
  $region8: #{csp_forward.5} parent=0 // loop_exit
    _

</llo_original>
